<compile_context>
chip_gen: v5e
topology: v5e:2x2
jax: 0.10.0
libtpu: 0.0.40
codegen_flags: <defaults>
</compile_context>

<pallas_src>
import functools

import jax
import jax.numpy as jnp
from jax import lax
from jax.experimental import pallas as pl
from jax.experimental.pallas import tpu as pltpu


# ----------------------------------------------------------------------------
# Pallas kernel
# ----------------------------------------------------------------------------
def _msca_kernel(x_ref,
                 w0_ref, b0_ref,
                 w01_ref, b01_ref, w02_ref, b02_ref,
                 w11_ref, b11_ref, w12_ref, b12_ref,
                 w21_ref, b21_ref, w22_ref, b22_ref,
                 w3_ref, b3_ref,
                 o_ref,
                 padB, padH,
                 *, H, W, C, RB0, CB0, RH0):
    WC = W * C
    RB = padB.shape[0]
    LB = padB.shape[1]
    RH = padH.shape[0]

    # ---- zero only the halo strips (aligned stores; redone every step so the
    # ---- batch grid axis can safely be 'parallel' across TensorCores) ------
    padB[:, 0:CB0] = jnp.zeros((RB, CB0), jnp.float32)
    padB[:, CB0 + WC:] = jnp.zeros((RB, LB - CB0 - WC), jnp.float32)
    padB[0:RB0, CB0:CB0 + WC] = jnp.zeros((RB0, WC), jnp.float32)
    padB[RB0 + H:, CB0:CB0 + WC] = jnp.zeros((RB - RB0 - H, WC), jnp.float32)
    padH[0:RH0, :] = jnp.zeros((RH0, WC), jnp.float32)
    padH[RH0 + H:, :] = jnp.zeros((RH - RH0 - H, WC), jnp.float32)

    # ---- conv0: depthwise 5x5, padding 2 ------------------------------------
    padB[RB0:RB0 + H, CB0:CB0 + WC] = x_ref[0]
    acc = jnp.zeros((H, WC), jnp.float32)
    for i in range(5):
        r0 = RB0 - 2 + i
        for j in range(5):
            c0 = CB0 + (j - 2) * C
            tap = i * 5 + j
            acc = acc + padB[r0:r0 + H, c0:c0 + WC] * w0_ref[tap:tap + 1, :]
    attn = acc + b0_ref[...]                       # conv0 output, (H, WC)

    # ---- three separable depthwise branches ---------------------------------
    # padB interior now holds `attn`; all three (1,K) convs read from it,
    # so the padded copy of attn is stored only once.
    padB[RB0:RB0 + H, CB0:CB0 + WC] = attn

    def conv_w(w_ref, b_ref, K):                   # depthwise (1, K), pad K//2
        p = K // 2
        r = jnp.zeros((H, WC), jnp.float32)
        for k in range(K):
            c0 = CB0 + (k - p) * C
            r = r + padB[RB0:RB0 + H, c0:c0 + WC] * w_ref[k:k + 1, :]
        return r + b_ref[...]

    def conv_h(w_ref, b_ref, K):                   # depthwise (K, 1), pad K//2
        p = K // 2
        r = jnp.zeros((H, WC), jnp.float32)
        for k in range(K):
            r0 = RH0 + (k - p)
            r = r + padH[r0:r0 + H, :] * w_ref[k:k + 1, :]
        return r + b_ref[...]

    out = attn                                     # attn + attn_0 + attn_1 + attn_2
    for (wa_ref, ba_ref, wb_ref, bb_ref, K) in (
            (w01_ref, b01_ref, w02_ref, b02_ref, 7),
            (w11_ref, b11_ref, w12_ref, b12_ref, 11),
            (w21_ref, b21_ref, w22_ref, b22_ref, 21)):
        padH[RH0:RH0 + H, :] = conv_w(wa_ref, ba_ref, K)
        out = out + conv_h(wb_ref, bb_ref, K)      # accumulate in place

    # ---- 1x1 conv (single block-diagonal MXU matmul) + residual gating -----
    mixed = jnp.dot(out, w3_ref[...],
                    preferred_element_type=jnp.float32) + b3_ref[...]
    o_ref[0] = mixed * x_ref[0]                    # one lane-dense store


# ----------------------------------------------------------------------------
# Parameter repacking for the lane-dense layout
# ----------------------------------------------------------------------------
def _make_kernel_params(tp, W):
    """Pre-tile per-channel depthwise weights/biases W times along the lane
    axis, and build the block-diagonal 1x1-conv weight."""
    def row(v):                       # (C,) -> (1, W*C) with value[w*C+c] = v[c]
        return jnp.tile(v, W)[None, :]

    def tab(rows):                    # list of (C,) -> (K, W*C)
        return jnp.stack([jnp.tile(r, W) for r in rows])

    w0 = tp['conv0_w'][:, 0]          # (C, 5, 5)
    w0_tab = tab([w0[:, i, j] for i in range(5) for j in range(5)])

    def tab_1k(wt):                   # torch (C, 1, 1, K)
        return tab([wt[:, 0, 0, k] for k in range(wt.shape[-1])])

    def tab_k1(wt):                   # torch (C, 1, K, 1)
        return tab([wt[:, 0, k, 0] for k in range(wt.shape[2])])

    w3 = tp['conv3_w'][:, :, 0, 0]    # (C_out, C_in)
    w3_blk = jnp.kron(jnp.eye(W, dtype=jnp.float32), w3.T)   # (W*C, W*C)

    return (
        w0_tab, row(tp['conv0_b']),
        tab_1k(tp['conv01_w']), row(tp['conv01_b']),
        tab_k1(tp['conv02_w']), row(tp['conv02_b']),
        tab_1k(tp['conv11_w']), row(tp['conv11_b']),
        tab_k1(tp['conv12_w']), row(tp['conv12_b']),
        tab_1k(tp['conv21_w']), row(tp['conv21_b']),
        tab_k1(tp['conv22_w']), row(tp['conv22_b']),
        w3_blk, row(tp['conv3_b']),
    )


# ----------------------------------------------------------------------------
# Wrapper
# ----------------------------------------------------------------------------
def msca_attention(x_nhwc, tp):
    """x_nhwc: (B, H, W, C) float32 (torch NCHW transposed).  Returns same shape."""
    B, H, W, C = x_nhwc.shape
    WC = W * C
    params = _make_kernel_params(tp, W)

    RB0 = 8                                   # row pad of padB  (needs >= 2)
    CB0 = ((10 * C + 127) // 128) * 128       # col pad of padB  (needs >= 10*C)
    RH0 = 16                                  # row pad of padH  (needs >= 10)

    x_flat = x_nhwc.reshape(B, H, WC)         # lane-dense view (free reshape)

    kernel = functools.partial(_msca_kernel, H=H, W=W, C=C,
                               RB0=RB0, CB0=CB0, RH0=RH0)

    in_specs = [pl.BlockSpec((1, H, WC), lambda b: (b, 0, 0))]
    in_specs += [pl.BlockSpec(p.shape, lambda b: (0, 0)) for p in params]

    # TODO(synk): for large feature maps (v7x has only 64 MiB VMEM) tile the
    # grid over H with a 10-row halo instead of one whole image per step; the
    # block-diagonal 1x1 weight should also be replaced by a (H*W, C)@(C, C)
    # matmul once C >= 128 makes the channel axis lane-dense on its own.
    out = pl.pallas_call(
        kernel,
        out_shape=jax.ShapeDtypeStruct((B, H, WC), jnp.float32),
        grid_spec=pltpu.PrefetchScalarGridSpec(
            num_scalar_prefetch=0,
            grid=(B,),
            in_specs=in_specs,
            out_specs=pl.BlockSpec((1, H, WC), lambda b: (b, 0, 0)),
            scratch_shapes=[
                pltpu.VMEM((RB0 + H + RB0, CB0 + WC + CB0), jnp.float32),  # padB
                pltpu.VMEM((RH0 + H + RH0, WC), jnp.float32),              # padH
            ]),
        compiler_params=pltpu.CompilerParams(
            dimension_semantics=("parallel",),          # shard batch across cores (v7x)
            vmem_limit_bytes=32 * 1024 * 1024),
    )(x_flat, *params)
    return out.reshape(B, H, W, C)


# ----------------------------------------------------------------------------
# Parameter init (deterministic, torch layout)
# ----------------------------------------------------------------------------
def init_params(key, dim):
    keys = jax.random.split(key, 16)

    def rnd(k, shape, scale=0.1):
        return scale * jax.random.normal(k, shape, jnp.float32)

    return {
        'conv0_w':  rnd(keys[0],  (dim, 1, 5, 5)),   'conv0_b':  rnd(keys[1],  (dim,)),
        'conv01_w': rnd(keys[2],  (dim, 1, 1, 7)),   'conv01_b': rnd(keys[3],  (dim,)),
        'conv02_w': rnd(keys[4],  (dim, 1, 7, 1)),   'conv02_b': rnd(keys[5],  (dim,)),
        'conv11_w': rnd(keys[6],  (dim, 1, 1, 11)),  'conv11_b': rnd(keys[7],  (dim,)),
        'conv12_w': rnd(keys[8],  (dim, 1, 11, 1)),  'conv12_b': rnd(keys[9],  (dim,)),
        'conv21_w': rnd(keys[10], (dim, 1, 1, 21)),  'conv21_b': rnd(keys[11], (dim,)),
        'conv22_w': rnd(keys[12], (dim, 1, 21, 1)),  'conv22_b': rnd(keys[13], (dim,)),
        'conv3_w':  rnd(keys[14], (dim, dim, 1, 1)), 'conv3_b':  rnd(keys[15], (dim,)),
    }


# ----------------------------------------------------------------------------
# Pure-JAX reference (mirrors the PyTorch forward) for verification
# ----------------------------------------------------------------------------
def reference_forward(x_nhwc, tp):
    C = x_nhwc.shape[-1]

    def dw(x, w_torch, b, pad):
        w = jnp.transpose(w_torch, (2, 3, 1, 0))             # (kh, kw, 1, C)
        y = lax.conv_general_dilated(
            x, w, window_strides=(1, 1),
            padding=((pad[0], pad[0]), (pad[1], pad[1])),
            dimension_numbers=('NHWC', 'HWIO', 'NHWC'),
            feature_group_count=C)
        return y + b.reshape(1, 1, 1, C)

    u = x_nhwc
    attn = dw(x_nhwc, tp['conv0_w'], tp['conv0_b'], (2, 2))
    a0 = dw(dw(attn, tp['conv01_w'], tp['conv01_b'], (0, 3)),
            tp['conv02_w'], tp['conv02_b'], (3, 0))
    a1 = dw(dw(attn, tp['conv11_w'], tp['conv11_b'], (0, 5)),
            tp['conv12_w'], tp['conv12_b'], (5, 0))
    a2 = dw(dw(attn, tp['conv21_w'], tp['conv21_b'], (0, 10)),
            tp['conv22_w'], tp['conv22_b'], (10, 0))
    attn = attn + a0 + a1 + a2
    w3 = tp['conv3_w'][:, :, 0, 0]
    attn = jnp.einsum('nhwc,oc->nhwo', attn, w3) + tp['conv3_b'].reshape(1, 1, 1, -1)
    return attn * u


# ----------------------------------------------------------------------------
if __name__ == "__main__":
    dim = 32
    B, H, W = 2, 16, 16

    key = jax.random.PRNGKey(0)
    kx, kp = jax.random.split(key)
    # NHWC input (equivalent to torch NCHW (B, dim, H, W) transposed)
    x = jax.random.normal(kx, (B, H, W, dim), jnp.float32)
    tp = init_params(kp, dim)

    out = msca_attention(x, tp)
    out = jax.block_until_ready(out)

    ref = reference_forward(x, tp)
    max_err = float(jnp.max(jnp.abs(out - ref)))
    if not jnp.allclose(out, ref, rtol=2e-4, atol=2e-4):
        raise AssertionError(f"Pallas kernel mismatch vs reference, max abs err={max_err}")

    print("KERNEL_OK")
</pallas_src>

<mosaic_0001>
module attributes {stable_mosaic.version = 11 : i64} {
  func.func @_msca_kernel(%arg0: i32, %arg1: memref<1x16x512xf32, #tpu.memory_space<vmem>>, %arg2: memref<25x512xf32, #tpu.memory_space<vmem>>, %arg3: memref<1x512xf32, #tpu.memory_space<vmem>>, %arg4: memref<7x512xf32, #tpu.memory_space<vmem>>, %arg5: memref<1x512xf32, #tpu.memory_space<vmem>>, %arg6: memref<7x512xf32, #tpu.memory_space<vmem>>, %arg7: memref<1x512xf32, #tpu.memory_space<vmem>>, %arg8: memref<11x512xf32, #tpu.memory_space<vmem>>, %arg9: memref<1x512xf32, #tpu.memory_space<vmem>>, %arg10: memref<11x512xf32, #tpu.memory_space<vmem>>, %arg11: memref<1x512xf32, #tpu.memory_space<vmem>>, %arg12: memref<21x512xf32, #tpu.memory_space<vmem>>, %arg13: memref<1x512xf32, #tpu.memory_space<vmem>>, %arg14: memref<21x512xf32, #tpu.memory_space<vmem>>, %arg15: memref<1x512xf32, #tpu.memory_space<vmem>>, %arg16: memref<512x512xf32, #tpu.memory_space<vmem>>, %arg17: memref<1x512xf32, #tpu.memory_space<vmem>>, %arg18: memref<1x16x512xf32, #tpu.memory_space<vmem>>, %arg19: memref<32x1280xf32, #tpu.memory_space<vmem>>, %arg20: memref<48x512xf32, #tpu.memory_space<vmem>>) attributes {dimension_semantics = [#tpu.dimension_semantics<parallel>], iteration_bounds = array<i64: 2>, scalar_prefetch = 0 : i64, scratch_operands = 2 : i64, tpu.core_type = #tpu.core_type<tc>, window_params = [{transform_indices = @transform_0, window_bounds = array<i64: 1, 16, 512>}, {pipeline_mode = #tpu.pipeline_mode<synchronous>, transform_indices = @transform_1, window_bounds = array<i64: 25, 512>}, {pipeline_mode = #tpu.pipeline_mode<synchronous>, transform_indices = @transform_2, window_bounds = array<i64: 1, 512>}, {pipeline_mode = #tpu.pipeline_mode<synchronous>, transform_indices = @transform_3, window_bounds = array<i64: 7, 512>}, {pipeline_mode = #tpu.pipeline_mode<synchronous>, transform_indices = @transform_4, window_bounds = array<i64: 1, 512>}, {pipeline_mode = #tpu.pipeline_mode<synchronous>, transform_indices = @transform_5, window_bounds = array<i64: 7, 512>}, {pipeline_mode = #tpu.pipeline_mode<synchronous>, transform_indices = @transform_6, window_bounds = array<i64: 1, 512>}, {pipeline_mode = #tpu.pipeline_mode<synchronous>, transform_indices = @transform_7, window_bounds = array<i64: 11, 512>}, {pipeline_mode = #tpu.pipeline_mode<synchronous>, transform_indices = @transform_8, window_bounds = array<i64: 1, 512>}, {pipeline_mode = #tpu.pipeline_mode<synchronous>, transform_indices = @transform_9, window_bounds = array<i64: 11, 512>}, {pipeline_mode = #tpu.pipeline_mode<synchronous>, transform_indices = @transform_10, window_bounds = array<i64: 1, 512>}, {pipeline_mode = #tpu.pipeline_mode<synchronous>, transform_indices = @transform_11, window_bounds = array<i64: 21, 512>}, {pipeline_mode = #tpu.pipeline_mode<synchronous>, transform_indices = @transform_12, window_bounds = array<i64: 1, 512>}, {pipeline_mode = #tpu.pipeline_mode<synchronous>, transform_indices = @transform_13, window_bounds = array<i64: 21, 512>}, {pipeline_mode = #tpu.pipeline_mode<synchronous>, transform_indices = @transform_14, window_bounds = array<i64: 1, 512>}, {pipeline_mode = #tpu.pipeline_mode<synchronous>, transform_indices = @transform_15, window_bounds = array<i64: 512, 512>}, {pipeline_mode = #tpu.pipeline_mode<synchronous>, transform_indices = @transform_16, window_bounds = array<i64: 1, 512>}, {transform_indices = @transform_17, window_bounds = array<i64: 1, 16, 512>}]} {
    %cst = arith.constant 0.000000e+00 : f32
    %0 = vector.broadcast %cst : f32 to vector<32x384xf32>
    %c0 = arith.constant 0 : index
    %c0_0 = arith.constant 0 : index
    %1 = vector.load %arg19[%c0, %c0_0] : memref<32x1280xf32, #tpu.memory_space<vmem>>, vector<32x384xf32>
    tpu.vector_store %arg19[%c0, %c0_0], %0 {strides = array<i32>} : memref<32x1280xf32, #tpu.memory_space<vmem>>, vector<32x384xf32>,
    %cst_1 = arith.constant 0.000000e+00 : f32
    %2 = vector.broadcast %cst_1 : f32 to vector<32x384xf32>
    %c0_2 = arith.constant 0 : index
    %c896 = arith.constant 896 : index
    %3 = vector.load %arg19[%c0_2, %c896] : memref<32x1280xf32, #tpu.memory_space<vmem>>, vector<32x384xf32>
    tpu.vector_store %arg19[%c0_2, %c896], %2 {strides = array<i32>} : memref<32x1280xf32, #tpu.memory_space<vmem>>, vector<32x384xf32>,
    %cst_3 = arith.constant 0.000000e+00 : f32
    %4 = vector.broadcast %cst_3 : f32 to vector<8x512xf32>
    %c0_4 = arith.constant 0 : index
    %c384 = arith.constant 384 : index
    %5 = vector.load %arg19[%c0_4, %c384] : memref<32x1280xf32, #tpu.memory_space<vmem>>, vector<8x512xf32>
    tpu.vector_store %arg19[%c0_4, %c384], %4 {strides = array<i32>} : memref<32x1280xf32, #tpu.memory_space<vmem>>, vector<8x512xf32>,
    %cst_5 = arith.constant 0.000000e+00 : f32
    %6 = vector.broadcast %cst_5 : f32 to vector<8x512xf32>
    %c24 = arith.constant 24 : index
    %c384_6 = arith.constant 384 : index
    %7 = vector.load %arg19[%c24, %c384_6] : memref<32x1280xf32, #tpu.memory_space<vmem>>, vector<8x512xf32>
    tpu.vector_store %arg19[%c24, %c384_6], %6 {strides = array<i32>} : memref<32x1280xf32, #tpu.memory_space<vmem>>, vector<8x512xf32>,
    %cst_7 = arith.constant 0.000000e+00 : f32
    %8 = vector.broadcast %cst_7 : f32 to vector<16x512xf32>
    %c0_8 = arith.constant 0 : index
    %c0_9 = arith.constant 0 : index
    %9 = vector.load %arg20[%c0_8, %c0_9] : memref<48x512xf32, #tpu.memory_space<vmem>>, vector<16x512xf32>
    tpu.vector_store %arg20[%c0_8, %c0_9], %8 {strides = array<i32>} : memref<48x512xf32, #tpu.memory_space<vmem>>, vector<16x512xf32>,
    %cst_10 = arith.constant 0.000000e+00 : f32
    %10 = vector.broadcast %cst_10 : f32 to vector<16x512xf32>
    %c32 = arith.constant 32 : index
    %c0_11 = arith.constant 0 : index
    %11 = vector.load %arg20[%c32, %c0_11] : memref<48x512xf32, #tpu.memory_space<vmem>>, vector<16x512xf32>
    tpu.vector_store %arg20[%c32, %c0_11], %10 {strides = array<i32>} : memref<48x512xf32, #tpu.memory_space<vmem>>, vector<16x512xf32>,
    %c0_12 = arith.constant 0 : index
    %c0_13 = arith.constant 0 : index
    %c0_14 = arith.constant 0 : index
    %12 = vector.load %arg1[%c0_12, %c0_13, %c0_14] : memref<1x16x512xf32, #tpu.memory_space<vmem>>, vector<1x16x512xf32>
    %13 = vector.shape_cast %12 : vector<1x16x512xf32> to vector<16x512xf32>
    %c8 = arith.constant 8 : index
    %c384_15 = arith.constant 384 : index
    %14 = vector.load %arg19[%c8, %c384_15] : memref<32x1280xf32, #tpu.memory_space<vmem>>, vector<16x512xf32>
    tpu.vector_store %arg19[%c8, %c384_15], %13 {strides = array<i32>} : memref<32x1280xf32, #tpu.memory_space<vmem>>, vector<16x512xf32>,
    %cst_16 = arith.constant 0.000000e+00 : f32
    %15 = vector.broadcast %cst_16 : f32 to vector<16x512xf32>
    %c6 = arith.constant 6 : index
    %c320 = arith.constant 320 : index
    %16 = vector.load %arg19[%c6, %c320] : memref<32x1280xf32, #tpu.memory_space<vmem>>, vector<16x512xf32>
    %c0_17 = arith.constant 0 : index
    %c0_18 = arith.constant 0 : index
    %17 = vector.load %arg2[%c0_17, %c0_18] : memref<25x512xf32, #tpu.memory_space<vmem>>, vector<1x512xf32>
    %18 = vector.broadcast %17 : vector<1x512xf32> to vector<16x512xf32>
    %19 = arith.mulf %16, %18 : vector<16x512xf32>
    %20 = arith.addf %15, %19 : vector<16x512xf32>
    %c6_19 = arith.constant 6 : index
    %c352 = arith.constant 352 : index
    %21 = vector.load %arg19[%c6_19, %c352] : memref<32x1280xf32, #tpu.memory_space<vmem>>, vector<16x512xf32>
    %c1 = arith.constant 1 : index
    %c0_20 = arith.constant 0 : index
    %22 = vector.load %arg2[%c1, %c0_20] : memref<25x512xf32, #tpu.memory_space<vmem>>, vector<1x512xf32>
    %23 = vector.broadcast %22 : vector<1x512xf32> to vector<16x512xf32>
    %24 = arith.mulf %21, %23 : vector<16x512xf32>
    %25 = arith.addf %20, %24 : vector<16x512xf32>
    %c6_21 = arith.constant 6 : index
    %c384_22 = arith.constant 384 : index
    %26 = vector.load %arg19[%c6_21, %c384_22] : memref<32x1280xf32, #tpu.memory_space<vmem>>, vector<16x512xf32>
    %c2 = arith.constant 2 : index
    %c0_23 = arith.constant 0 : index
    %27 = vector.load %arg2[%c2, %c0_23] : memref<25x512xf32, #tpu.memory_space<vmem>>, vector<1x512xf32>
    %28 = vector.broadcast %27 : vector<1x512xf32> to vector<16x512xf32>
    %29 = arith.mulf %26, %28 : vector<16x512xf32>
    %30 = arith.addf %25, %29 : vector<16x512xf32>
    %c6_24 = arith.constant 6 : index
    %c416 = arith.constant 416 : index
    %31 = vector.load %arg19[%c6_24, %c416] : memref<32x1280xf32, #tpu.memory_space<vmem>>, vector<16x512xf32>
    %c3 = arith.constant 3 : index
    %c0_25 = arith.constant 0 : index
    %32 = vector.load %arg2[%c3, %c0_25] : memref<25x512xf32, #tpu.memory_space<vmem>>, vector<1x512xf32>
    %33 = vector.broadcast %32 : vector<1x512xf32> to vector<16x512xf32>
    %34 = arith.mulf %31, %33 : vector<16x512xf32>
    %35 = arith.addf %30, %34 : vector<16x512xf32>
    %c6_26 = arith.constant 6 : index
    %c448 = arith.constant 448 : index
    %36 = vector.load %arg19[%c6_26, %c448] : memref<32x1280xf32, #tpu.memory_space<vmem>>, vector<16x512xf32>
    %c4 = arith.constant 4 : index
    %c0_27 = arith.constant 0 : index
    %37 = vector.load %arg2[%c4, %c0_27] : memref<25x512xf32, #tpu.memory_space<vmem>>, vector<1x512xf32>
    %38 = vector.broadcast %37 : vector<1x512xf32> to vector<16x512xf32>
    %39 = arith.mulf %36, %38 : vector<16x512xf32>
    %40 = arith.addf %35, %39 : vector<16x512xf32>
    %c7 = arith.constant 7 : index
    %c320_28 = arith.constant 320 : index
    %41 = vector.load %arg19[%c7, %c320_28] : memref<32x1280xf32, #tpu.memory_space<vmem>>, vector<16x512xf32>
    %c5 = arith.constant 5 : index
    %c0_29 = arith.constant 0 : index
    %42 = vector.load %arg2[%c5, %c0_29] : memref<25x512xf32, #tpu.memory_space<vmem>>, vector<1x512xf32>
    %43 = vector.broadcast %42 : vector<1x512xf32> to vector<16x512xf32>
    %44 = arith.mulf %41, %43 : vector<16x512xf32>
    %45 = arith.addf %40, %44 : vector<16x512xf32>
    %c7_30 = arith.constant 7 : index
    %c352_31 = arith.constant 352 : index
    %46 = vector.load %arg19[%c7_30, %c352_31] : memref<32x1280xf32, #tpu.memory_space<vmem>>, vector<16x512xf32>
    %c6_32 = arith.constant 6 : index
    %c0_33 = arith.constant 0 : index
    %47 = vector.load %arg2[%c6_32, %c0_33] : memref<25x512xf32, #tpu.memory_space<vmem>>, vector<1x512xf32>
    %48 = vector.broadcast %47 : vector<1x512xf32> to vector<16x512xf32>
    %49 = arith.mulf %46, %48 : vector<16x512xf32>
    %50 = arith.addf %45, %49 : vector<16x512xf32>
    %c7_34 = arith.constant 7 : index
    %c384_35 = arith.constant 384 : index
    %51 = vector.load %arg19[%c7_34, %c384_35] : memref<32x1280xf32, #tpu.memory_space<vmem>>, vector<16x512xf32>
    %c7_36 = arith.constant 7 : index
    %c0_37 = arith.constant 0 : index
    %52 = vector.load %arg2[%c7_36, %c0_37] : memref<25x512xf32, #tpu.memory_space<vmem>>, vector<1x512xf32>
    %53 = vector.broadcast %52 : vector<1x512xf32> to vector<16x512xf32>
    %54 = arith.mulf %51, %53 : vector<16x512xf32>
    %55 = arith.addf %50, %54 : vector<16x512xf32>
    %c7_38 = arith.constant 7 : index
    %c416_39 = arith.constant 416 : index
    %56 = vector.load %arg19[%c7_38, %c416_39] : memref<32x1280xf32, #tpu.memory_space<vmem>>, vector<16x512xf32>
    %c8_40 = arith.constant 8 : index
    %c0_41 = arith.constant 0 : index
    %57 = vector.load %arg2[%c8_40, %c0_41] : memref<25x512xf32, #tpu.memory_space<vmem>>, vector<1x512xf32>
    %58 = vector.broadcast %57 : vector<1x512xf32> to vector<16x512xf32>
    %59 = arith.mulf %56, %58 : vector<16x512xf32>
    %60 = arith.addf %55, %59 : vector<16x512xf32>
    %c7_42 = arith.constant 7 : index
    %c448_43 = arith.constant 448 : index
    %61 = vector.load %arg19[%c7_42, %c448_43] : memref<32x1280xf32, #tpu.memory_space<vmem>>, vector<16x512xf32>
    %c9 = arith.constant 9 : index
    %c0_44 = arith.constant 0 : index
    %62 = vector.load %arg2[%c9, %c0_44] : memref<25x512xf32, #tpu.memory_space<vmem>>, vector<1x512xf32>
    %63 = vector.broadcast %62 : vector<1x512xf32> to vector<16x512xf32>
    %64 = arith.mulf %61, %63 : vector<16x512xf32>
    %65 = arith.addf %60, %64 : vector<16x512xf32>
    %c8_45 = arith.constant 8 : index
    %c320_46 = arith.constant 320 : index
    %66 = vector.load %arg19[%c8_45, %c320_46] : memref<32x1280xf32, #tpu.memory_space<vmem>>, vector<16x512xf32>
    %c10 = arith.constant 10 : index
    %c0_47 = arith.constant 0 : index
    %67 = vector.load %arg2[%c10, %c0_47] : memref<25x512xf32, #tpu.memory_space<vmem>>, vector<1x512xf32>
    %68 = vector.broadcast %67 : vector<1x512xf32> to vector<16x512xf32>
    %69 = arith.mulf %66, %68 : vector<16x512xf32>
    %70 = arith.addf %65, %69 : vector<16x512xf32>
    %c8_48 = arith.constant 8 : index
    %c352_49 = arith.constant 352 : index
    %71 = vector.load %arg19[%c8_48, %c352_49] : memref<32x1280xf32, #tpu.memory_space<vmem>>, vector<16x512xf32>
    %c11 = arith.constant 11 : index
    %c0_50 = arith.constant 0 : index
    %72 = vector.load %arg2[%c11, %c0_50] : memref<25x512xf32, #tpu.memory_space<vmem>>, vector<1x512xf32>
    %73 = vector.broadcast %72 : vector<1x512xf32> to vector<16x512xf32>
    %74 = arith.mulf %71, %73 : vector<16x512xf32>
    %75 = arith.addf %70, %74 : vector<16x512xf32>
    %c8_51 = arith.constant 8 : index
    %c384_52 = arith.constant 384 : index
    %76 = vector.load %arg19[%c8_51, %c384_52] : memref<32x1280xf32, #tpu.memory_space<vmem>>, vector<16x512xf32>
    %c12 = arith.constant 12 : index
    %c0_53 = arith.constant 0 : index
    %77 = vector.load %arg2[%c12, %c0_53] : memref<25x512xf32, #tpu.memory_space<vmem>>, vector<1x512xf32>
    %78 = vector.broadcast %77 : vector<1x512xf32> to vector<16x512xf32>
    %79 = arith.mulf %76, %78 : vector<16x512xf32>
    %80 = arith.addf %75, %79 : vector<16x512xf32>
    %c8_54 = arith.constant 8 : index
    %c416_55 = arith.constant 416 : index
    %81 = vector.load %arg19[%c8_54, %c416_55] : memref<32x1280xf32, #tpu.memory_space<vmem>>, vector<16x512xf32>
    %c13 = arith.constant 13 : index
    %c0_56 = arith.constant 0 : index
    %82 = vector.load %arg2[%c13, %c0_56] : memref<25x512xf32, #tpu.memory_space<vmem>>, vector<1x512xf32>
    %83 = vector.broadcast %82 : vector<1x512xf32> to vector<16x512xf32>
    %84 = arith.mulf %81, %83 : vector<16x512xf32>
    %85 = arith.addf %80, %84 : vector<16x512xf32>
    %c8_57 = arith.constant 8 : index
    %c448_58 = arith.constant 448 : index
    %86 = vector.load %arg19[%c8_57, %c448_58] : memref<32x1280xf32, #tpu.memory_space<vmem>>, vector<16x512xf32>
    %c14 = arith.constant 14 : index
    %c0_59 = arith.constant 0 : index
    %87 = vector.load %arg2[%c14, %c0_59] : memref<25x512xf32, #tpu.memory_space<vmem>>, vector<1x512xf32>
    %88 = vector.broadcast %87 : vector<1x512xf32> to vector<16x512xf32>
    %89 = arith.mulf %86, %88 : vector<16x512xf32>
    %90 = arith.addf %85, %89 : vector<16x512xf32>
    %c9_60 = arith.constant 9 : index
    %c320_61 = arith.constant 320 : index
    %91 = vector.load %arg19[%c9_60, %c320_61] : memref<32x1280xf32, #tpu.memory_space<vmem>>, vector<16x512xf32>
    %c15 = arith.constant 15 : index
    %c0_62 = arith.constant 0 : index
    %92 = vector.load %arg2[%c15, %c0_62] : memref<25x512xf32, #tpu.memory_space<vmem>>, vector<1x512xf32>
    %93 = vector.broadcast %92 : vector<1x512xf32> to vector<16x512xf32>
    %94 = arith.mulf %91, %93 : vector<16x512xf32>
    %95 = arith.addf %90, %94 : vector<16x512xf32>
    %c9_63 = arith.constant 9 : index
    %c352_64 = arith.constant 352 : index
    %96 = vector.load %arg19[%c9_63, %c352_64] : memref<32x1280xf32, #tpu.memory_space<vmem>>, vector<16x512xf32>
    %c16 = arith.constant 16 : index
    %c0_65 = arith.constant 0 : index
    %97 = vector.load %arg2[%c16, %c0_65] : memref<25x512xf32, #tpu.memory_space<vmem>>, vector<1x512xf32>
    %98 = vector.broadcast %97 : vector<1x512xf32> to vector<16x512xf32>
    %99 = arith.mulf %96, %98 : vector<16x512xf32>
    %100 = arith.addf %95, %99 : vector<16x512xf32>
    %c9_66 = arith.constant 9 : index
    %c384_67 = arith.constant 384 : index
    %101 = vector.load %arg19[%c9_66, %c384_67] : memref<32x1280xf32, #tpu.memory_space<vmem>>, vector<16x512xf32>
    %c17 = arith.constant 17 : index
    %c0_68 = arith.constant 0 : index
    %102 = vector.load %arg2[%c17, %c0_68] : memref<25x512xf32, #tpu.memory_space<vmem>>, vector<1x512xf32>
    %103 = vector.broadcast %102 : vector<1x512xf32> to vector<16x512xf32>
    %104 = arith.mulf %101, %103 : vector<16x512xf32>
    %105 = arith.addf %100, %104 : vector<16x512xf32>
    %c9_69 = arith.constant 9 : index
    %c416_70 = arith.constant 416 : index
    %106 = vector.load %arg19[%c9_69, %c416_70] : memref<32x1280xf32, #tpu.memory_space<vmem>>, vector<16x512xf32>
    %c18 = arith.constant 18 : index
    %c0_71 = arith.constant 0 : index
    %107 = vector.load %arg2[%c18, %c0_71] : memref<25x512xf32, #tpu.memory_space<vmem>>, vector<1x512xf32>
    %108 = vector.broadcast %107 : vector<1x512xf32> to vector<16x512xf32>
    %109 = arith.mulf %106, %108 : vector<16x512xf32>
    %110 = arith.addf %105, %109 : vector<16x512xf32>
    %c9_72 = arith.constant 9 : index
    %c448_73 = arith.constant 448 : index
    %111 = vector.load %arg19[%c9_72, %c448_73] : memref<32x1280xf32, #tpu.memory_space<vmem>>, vector<16x512xf32>
    %c19 = arith.constant 19 : index
    %c0_74 = arith.constant 0 : index
    %112 = vector.load %arg2[%c19, %c0_74] : memref<25x512xf32, #tpu.memory_space<vmem>>, vector<1x512xf32>
    %113 = vector.broadcast %112 : vector<1x512xf32> to vector<16x512xf32>
    %114 = arith.mulf %111, %113 : vector<16x512xf32>
    %115 = arith.addf %110, %114 : vector<16x512xf32>
    %c10_75 = arith.constant 10 : index
    %c320_76 = arith.constant 320 : index
    %116 = vector.load %arg19[%c10_75, %c320_76] : memref<32x1280xf32, #tpu.memory_space<vmem>>, vector<16x512xf32>
    %c20 = arith.constant 20 : index
    %c0_77 = arith.constant 0 : index
    %117 = vector.load %arg2[%c20, %c0_77] : memref<25x512xf32, #tpu.memory_space<vmem>>, vector<1x512xf32>
    %118 = vector.broadcast %117 : vector<1x512xf32> to vector<16x512xf32>
    %119 = arith.mulf %116, %118 : vector<16x512xf32>
    %120 = arith.addf %115, %119 : vector<16x512xf32>
    %c10_78 = arith.constant 10 : index
    %c352_79 = arith.constant 352 : index
    %121 = vector.load %arg19[%c10_78, %c352_79] : memref<32x1280xf32, #tpu.memory_space<vmem>>, vector<16x512xf32>
    %c21 = arith.constant 21 : index
    %c0_80 = arith.constant 0 : index
    %122 = vector.load %arg2[%c21, %c0_80] : memref<25x512xf32, #tpu.memory_space<vmem>>, vector<1x512xf32>
    %123 = vector.broadcast %122 : vector<1x512xf32> to vector<16x512xf32>
    %124 = arith.mulf %121, %123 : vector<16x512xf32>
    %125 = arith.addf %120, %124 : vector<16x512xf32>
    %c10_81 = arith.constant 10 : index
    %c384_82 = arith.constant 384 : index
    %126 = vector.load %arg19[%c10_81, %c384_82] : memref<32x1280xf32, #tpu.memory_space<vmem>>, vector<16x512xf32>
    %c22 = arith.constant 22 : index
    %c0_83 = arith.constant 0 : index
    %127 = vector.load %arg2[%c22, %c0_83] : memref<25x512xf32, #tpu.memory_space<vmem>>, vector<1x512xf32>
    %128 = vector.broadcast %127 : vector<1x512xf32> to vector<16x512xf32>
    %129 = arith.mulf %126, %128 : vector<16x512xf32>
    %130 = arith.addf %125, %129 : vector<16x512xf32>
    %c10_84 = arith.constant 10 : index
    %c416_85 = arith.constant 416 : index
    %131 = vector.load %arg19[%c10_84, %c416_85] : memref<32x1280xf32, #tpu.memory_space<vmem>>, vector<16x512xf32>
    %c23 = arith.constant 23 : index
    %c0_86 = arith.constant 0 : index
    %132 = vector.load %arg2[%c23, %c0_86] : memref<25x512xf32, #tpu.memory_space<vmem>>, vector<1x512xf32>
    %133 = vector.broadcast %132 : vector<1x512xf32> to vector<16x512xf32>
    %134 = arith.mulf %131, %133 : vector<16x512xf32>
    %135 = arith.addf %130, %134 : vector<16x512xf32>
    %c10_87 = arith.constant 10 : index
    %c448_88 = arith.constant 448 : index
    %136 = vector.load %arg19[%c10_87, %c448_88] : memref<32x1280xf32, #tpu.memory_space<vmem>>, vector<16x512xf32>
    %c24_89 = arith.constant 24 : index
    %c0_90 = arith.constant 0 : index
    %137 = vector.load %arg2[%c24_89, %c0_90] : memref<25x512xf32, #tpu.memory_space<vmem>>, vector<1x512xf32>
    %138 = vector.broadcast %137 : vector<1x512xf32> to vector<16x512xf32>
    %139 = arith.mulf %136, %138 : vector<16x512xf32>
    %140 = arith.addf %135, %139 : vector<16x512xf32>
    %c0_91 = arith.constant 0 : index
    %c0_92 = arith.constant 0 : index
    %141 = vector.load %arg3[%c0_91, %c0_92] : memref<1x512xf32, #tpu.memory_space<vmem>>, vector<1x512xf32>
    %142 = vector.broadcast %141 : vector<1x512xf32> to vector<16x512xf32>
    %143 = arith.addf %140, %142 : vector<16x512xf32>
    %c8_93 = arith.constant 8 : index
    %c384_94 = arith.constant 384 : index
    %144 = vector.load %arg19[%c8_93, %c384_94] : memref<32x1280xf32, #tpu.memory_space<vmem>>, vector<16x512xf32>
    tpu.vector_store %arg19[%c8_93, %c384_94], %143 {strides = array<i32>} : memref<32x1280xf32, #tpu.memory_space<vmem>>, vector<16x512xf32>,
    %cst_95 = arith.constant 0.000000e+00 : f32
    %145 = vector.broadcast %cst_95 : f32 to vector<16x512xf32>
    %c8_96 = arith.constant 8 : index
    %c288 = arith.constant 288 : index
    %146 = vector.load %arg19[%c8_96, %c288] : memref<32x1280xf32, #tpu.memory_space<vmem>>, vector<16x512xf32>
    %c0_97 = arith.constant 0 : index
    %c0_98 = arith.constant 0 : index
    %147 = vector.load %arg4[%c0_97, %c0_98] : memref<7x512xf32, #tpu.memory_space<vmem>>, vector<1x512xf32>
    %148 = vector.broadcast %147 : vector<1x512xf32> to vector<16x512xf32>
    %149 = arith.mulf %146, %148 : vector<16x512xf32>
    %150 = arith.addf %145, %149 : vector<16x512xf32>
    %c8_99 = arith.constant 8 : index
    %c320_100 = arith.constant 320 : index
    %151 = vector.load %arg19[%c8_99, %c320_100] : memref<32x1280xf32, #tpu.memory_space<vmem>>, vector<16x512xf32>
    %c1_101 = arith.constant 1 : index
    %c0_102 = arith.constant 0 : index
    %152 = vector.load %arg4[%c1_101, %c0_102] : memref<7x512xf32, #tpu.memory_space<vmem>>, vector<1x512xf32>
    %153 = vector.broadcast %152 : vector<1x512xf32> to vector<16x512xf32>
    %154 = arith.mulf %151, %153 : vector<16x512xf32>
    %155 = arith.addf %150, %154 : vector<16x512xf32>
    %c8_103 = arith.constant 8 : index
    %c352_104 = arith.constant 352 : index
    %156 = vector.load %arg19[%c8_103, %c352_104] : memref<32x1280xf32, #tpu.memory_space<vmem>>, vector<16x512xf32>
    %c2_105 = arith.constant 2 : index
    %c0_106 = arith.constant 0 : index
    %157 = vector.load %arg4[%c2_105, %c0_106] : memref<7x512xf32, #tpu.memory_space<vmem>>, vector<1x512xf32>
    %158 = vector.broadcast %157 : vector<1x512xf32> to vector<16x512xf32>
    %159 = arith.mulf %156, %158 : vector<16x512xf32>
    %160 = arith.addf %155, %159 : vector<16x512xf32>
    %c8_107 = arith.constant 8 : index
    %c384_108 = arith.constant 384 : index
    %161 = vector.load %arg19[%c8_107, %c384_108] : memref<32x1280xf32, #tpu.memory_space<vmem>>, vector<16x512xf32>
    %c3_109 = arith.constant 3 : index
    %c0_110 = arith.constant 0 : index
    %162 = vector.load %arg4[%c3_109, %c0_110] : memref<7x512xf32, #tpu.memory_space<vmem>>, vector<1x512xf32>
    %163 = vector.broadcast %162 : vector<1x512xf32> to vector<16x512xf32>
    %164 = arith.mulf %161, %163 : vector<16x512xf32>
    %165 = arith.addf %160, %164 : vector<16x512xf32>
    %c8_111 = arith.constant 8 : index
    %c416_112 = arith.constant 416 : index
    %166 = vector.load %arg19[%c8_111, %c416_112] : memref<32x1280xf32, #tpu.memory_space<vmem>>, vector<16x512xf32>
    %c4_113 = arith.constant 4 : index
    %c0_114 = arith.constant 0 : index
    %167 = vector.load %arg4[%c4_113, %c0_114] : memref<7x512xf32, #tpu.memory_space<vmem>>, vector<1x512xf32>
    %168 = vector.broadcast %167 : vector<1x512xf32> to vector<16x512xf32>
    %169 = arith.mulf %166, %168 : vector<16x512xf32>
    %170 = arith.addf %165, %169 : vector<16x512xf32>
    %c8_115 = arith.constant 8 : index
    %c448_116 = arith.constant 448 : index
    %171 = vector.load %arg19[%c8_115, %c448_116] : memref<32x1280xf32, #tpu.memory_space<vmem>>, vector<16x512xf32>
    %c5_117 = arith.constant 5 : index
    %c0_118 = arith.constant 0 : index
    %172 = vector.load %arg4[%c5_117, %c0_118] : memref<7x512xf32, #tpu.memory_space<vmem>>, vector<1x512xf32>
    %173 = vector.broadcast %172 : vector<1x512xf32> to vector<16x512xf32>
    %174 = arith.mulf %171, %173 : vector<16x512xf32>
    %175 = arith.addf %170, %174 : vector<16x512xf32>
    %c8_119 = arith.constant 8 : index
    %c480 = arith.constant 480 : index
    %176 = vector.load %arg19[%c8_119, %c480] : memref<32x1280xf32, #tpu.memory_space<vmem>>, vector<16x512xf32>
    %c6_120 = arith.constant 6 : index
    %c0_121 = arith.constant 0 : index
    %177 = vector.load %arg4[%c6_120, %c0_121] : memref<7x512xf32, #tpu.memory_space<vmem>>, vector<1x512xf32>
    %178 = vector.broadcast %177 : vector<1x512xf32> to vector<16x512xf32>
    %179 = arith.mulf %176, %178 : vector<16x512xf32>
    %180 = arith.addf %175, %179 : vector<16x512xf32>
    %c0_122 = arith.constant 0 : index
    %c0_123 = arith.constant 0 : index
    %181 = vector.load %arg5[%c0_122, %c0_123] : memref<1x512xf32, #tpu.memory_space<vmem>>, vector<1x512xf32>
    %182 = vector.broadcast %181 : vector<1x512xf32> to vector<16x512xf32>
    %183 = arith.addf %180, %182 : vector<16x512xf32>
    %c16_124 = arith.constant 16 : index
    %c0_125 = arith.constant 0 : index
    %184 = vector.load %arg20[%c16_124, %c0_125] : memref<48x512xf32, #tpu.memory_space<vmem>>, vector<16x512xf32>
    tpu.vector_store %arg20[%c16_124, %c0_125], %183 {strides = array<i32>} : memref<48x512xf32, #tpu.memory_space<vmem>>, vector<16x512xf32>,
    %cst_126 = arith.constant 0.000000e+00 : f32
    %185 = vector.broadcast %cst_126 : f32 to vector<16x512xf32>
    %c13_127 = arith.constant 13 : index
    %c0_128 = arith.constant 0 : index
    %186 = vector.load %arg20[%c13_127, %c0_128] : memref<48x512xf32, #tpu.memory_space<vmem>>, vector<16x512xf32>
    %c0_129 = arith.constant 0 : index
    %c0_130 = arith.constant 0 : index
    %187 = vector.load %arg6[%c0_129, %c0_130] : memref<7x512xf32, #tpu.memory_space<vmem>>, vector<1x512xf32>
    %188 = vector.broadcast %187 : vector<1x512xf32> to vector<16x512xf32>
    %189 = arith.mulf %186, %188 : vector<16x512xf32>
    %190 = arith.addf %185, %189 : vector<16x512xf32>
    %c14_131 = arith.constant 14 : index
    %c0_132 = arith.constant 0 : index
    %191 = vector.load %arg20[%c14_131, %c0_132] : memref<48x512xf32, #tpu.memory_space<vmem>>, vector<16x512xf32>
    %c1_133 = arith.constant 1 : index
    %c0_134 = arith.constant 0 : index
    %192 = vector.load %arg6[%c1_133, %c0_134] : memref<7x512xf32, #tpu.memory_space<vmem>>, vector<1x512xf32>
    %193 = vector.broadcast %192 : vector<1x512xf32> to vector<16x512xf32>
    %194 = arith.mulf %191, %193 : vector<16x512xf32>
    %195 = arith.addf %190, %194 : vector<16x512xf32>
    %c15_135 = arith.constant 15 : index
    %c0_136 = arith.constant 0 : index
    %196 = vector.load %arg20[%c15_135, %c0_136] : memref<48x512xf32, #tpu.memory_space<vmem>>, vector<16x512xf32>
    %c2_137 = arith.constant 2 : index
    %c0_138 = arith.constant 0 : index
    %197 = vector.load %arg6[%c2_137, %c0_138] : memref<7x512xf32, #tpu.memory_space<vmem>>, vector<1x512xf32>
    %198 = vector.broadcast %197 : vector<1x512xf32> to vector<16x512xf32>
    %199 = arith.mulf %196, %198 : vector<16x512xf32>
    %200 = arith.addf %195, %199 : vector<16x512xf32>
    %c16_139 = arith.constant 16 : index
    %c0_140 = arith.constant 0 : index
    %201 = vector.load %arg20[%c16_139, %c0_140] : memref<48x512xf32, #tpu.memory_space<vmem>>, vector<16x512xf32>
    %c3_141 = arith.constant 3 : index
    %c0_142 = arith.constant 0 : index
    %202 = vector.load %arg6[%c3_141, %c0_142] : memref<7x512xf32, #tpu.memory_space<vmem>>, vector<1x512xf32>
    %203 = vector.broadcast %202 : vector<1x512xf32> to vector<16x512xf32>
    %204 = arith.mulf %201, %203 : vector<16x512xf32>
    %205 = arith.addf %200, %204 : vector<16x512xf32>
    %c17_143 = arith.constant 17 : index
    %c0_144 = arith.constant 0 : index
    %206 = vector.load %arg20[%c17_143, %c0_144] : memref<48x512xf32, #tpu.memory_space<vmem>>, vector<16x512xf32>
    %c4_145 = arith.constant 4 : index
    %c0_146 = arith.constant 0 : index
    %207 = vector.load %arg6[%c4_145, %c0_146] : memref<7x512xf32, #tpu.memory_space<vmem>>, vector<1x512xf32>
    %208 = vector.broadcast %207 : vector<1x512xf32> to vector<16x512xf32>
    %209 = arith.mulf %206, %208 : vector<16x512xf32>
    %210 = arith.addf %205, %209 : vector<16x512xf32>
    %c18_147 = arith.constant 18 : index
    %c0_148 = arith.constant 0 : index
    %211 = vector.load %arg20[%c18_147, %c0_148] : memref<48x512xf32, #tpu.memory_space<vmem>>, vector<16x512xf32>
    %c5_149 = arith.constant 5 : index
    %c0_150 = arith.constant 0 : index
    %212 = vector.load %arg6[%c5_149, %c0_150] : memref<7x512xf32, #tpu.memory_space<vmem>>, vector<1x512xf32>
    %213 = vector.broadcast %212 : vector<1x512xf32> to vector<16x512xf32>
    %214 = arith.mulf %211, %213 : vector<16x512xf32>
    %215 = arith.addf %210, %214 : vector<16x512xf32>
    %c19_151 = arith.constant 19 : index
    %c0_152 = arith.constant 0 : index
    %216 = vector.load %arg20[%c19_151, %c0_152] : memref<48x512xf32, #tpu.memory_space<vmem>>, vector<16x512xf32>
    %c6_153 = arith.constant 6 : index
    %c0_154 = arith.constant 0 : index
    %217 = vector.load %arg6[%c6_153, %c0_154] : memref<7x512xf32, #tpu.memory_space<vmem>>, vector<1x512xf32>
    %218 = vector.broadcast %217 : vector<1x512xf32> to vector<16x512xf32>
    %219 = arith.mulf %216, %218 : vector<16x512xf32>
    %220 = arith.addf %215, %219 : vector<16x512xf32>
    %c0_155 = arith.constant 0 : index
    %c0_156 = arith.constant 0 : index
    %221 = vector.load %arg7[%c0_155, %c0_156] : memref<1x512xf32, #tpu.memory_space<vmem>>, vector<1x512xf32>
    %222 = vector.broadcast %221 : vector<1x512xf32> to vector<16x512xf32>
    %223 = arith.addf %220, %222 : vector<16x512xf32>
    %224 = arith.addf %143, %223 : vector<16x512xf32>
    %cst_157 = arith.constant 0.000000e+00 : f32
    %225 = vector.broadcast %cst_157 : f32 to vector<16x512xf32>
    %c8_158 = arith.constant 8 : index
    %c224 = arith.constant 224 : index
    %226 = vector.load %arg19[%c8_158, %c224] : memref<32x1280xf32, #tpu.memory_space<vmem>>, vector<16x512xf32>
    %c0_159 = arith.constant 0 : index
    %c0_160 = arith.constant 0 : index
    %227 = vector.load %arg8[%c0_159, %c0_160] : memref<11x512xf32, #tpu.memory_space<vmem>>, vector<1x512xf32>
    %228 = vector.broadcast %227 : vector<1x512xf32> to vector<16x512xf32>
    %229 = arith.mulf %226, %228 : vector<16x512xf32>
    %230 = arith.addf %225, %229 : vector<16x512xf32>
    %c8_161 = arith.constant 8 : index
    %c256 = arith.constant 256 : index
    %231 = vector.load %arg19[%c8_161, %c256] : memref<32x1280xf32, #tpu.memory_space<vmem>>, vector<16x512xf32>
    %c1_162 = arith.constant 1 : index
    %c0_163 = arith.constant 0 : index
    %232 = vector.load %arg8[%c1_162, %c0_163] : memref<11x512xf32, #tpu.memory_space<vmem>>, vector<1x512xf32>
    %233 = vector.broadcast %232 : vector<1x512xf32> to vector<16x512xf32>
    %234 = arith.mulf %231, %233 : vector<16x512xf32>
    %235 = arith.addf %230, %234 : vector<16x512xf32>
    %c8_164 = arith.constant 8 : index
    %c288_165 = arith.constant 288 : index
    %236 = vector.load %arg19[%c8_164, %c288_165] : memref<32x1280xf32, #tpu.memory_space<vmem>>, vector<16x512xf32>
    %c2_166 = arith.constant 2 : index
    %c0_167 = arith.constant 0 : index
    %237 = vector.load %arg8[%c2_166, %c0_167] : memref<11x512xf32, #tpu.memory_space<vmem>>, vector<1x512xf32>
    %238 = vector.broadcast %237 : vector<1x512xf32> to vector<16x512xf32>
    %239 = arith.mulf %236, %238 : vector<16x512xf32>
    %240 = arith.addf %235, %239 : vector<16x512xf32>
    %c8_168 = arith.constant 8 : index
    %c320_169 = arith.constant 320 : index
    %241 = vector.load %arg19[%c8_168, %c320_169] : memref<32x1280xf32, #tpu.memory_space<vmem>>, vector<16x512xf32>
    %c3_170 = arith.constant 3 : index
    %c0_171 = arith.constant 0 : index
    %242 = vector.load %arg8[%c3_170, %c0_171] : memref<11x512xf32, #tpu.memory_space<vmem>>, vector<1x512xf32>
    %243 = vector.broadcast %242 : vector<1x512xf32> to vector<16x512xf32>
    %244 = arith.mulf %241, %243 : vector<16x512xf32>
    %245 = arith.addf %240, %244 : vector<16x512xf32>
    %c8_172 = arith.constant 8 : index
    %c352_173 = arith.constant 352 : index
    %246 = vector.load %arg19[%c8_172, %c352_173] : memref<32x1280xf32, #tpu.memory_space<vmem>>, vector<16x512xf32>
    %c4_174 = arith.constant 4 : index
    %c0_175 = arith.constant 0 : index
    %247 = vector.load %arg8[%c4_174, %c0_175] : memref<11x512xf32, #tpu.memory_space<vmem>>, vector<1x512xf32>
    %248 = vector.broadcast %247 : vector<1x512xf32> to vector<16x512xf32>
    %249 = arith.mulf %246, %248 : vector<16x512xf32>
    %250 = arith.addf %245, %249 : vector<16x512xf32>
    %c8_176 = arith.constant 8 : index
    %c384_177 = arith.constant 384 : index
    %251 = vector.load %arg19[%c8_176, %c384_177] : memref<32x1280xf32, #tpu.memory_space<vmem>>, vector<16x512xf32>
    %c5_178 = arith.constant 5 : index
    %c0_179 = arith.constant 0 : index
    %252 = vector.load %arg8[%c5_178, %c0_179] : memref<11x512xf32, #tpu.memory_space<vmem>>, vector<1x512xf32>
    %253 = vector.broadcast %252 : vector<1x512xf32> to vector<16x512xf32>
    %254 = arith.mulf %251, %253 : vector<16x512xf32>
    %255 = arith.addf %250, %254 : vector<16x512xf32>
    %c8_180 = arith.constant 8 : index
    %c416_181 = arith.constant 416 : index
    %256 = vector.load %arg19[%c8_180, %c416_181] : memref<32x1280xf32, #tpu.memory_space<vmem>>, vector<16x512xf32>
    %c6_182 = arith.constant 6 : index
    %c0_183 = arith.constant 0 : index
    %257 = vector.load %arg8[%c6_182, %c0_183] : memref<11x512xf32, #tpu.memory_space<vmem>>, vector<1x512xf32>
    %258 = vector.broadcast %257 : vector<1x512xf32> to vector<16x512xf32>
    %259 = arith.mulf %256, %258 : vector<16x512xf32>
    %260 = arith.addf %255, %259 : vector<16x512xf32>
    %c8_184 = arith.constant 8 : index
    %c448_185 = arith.constant 448 : index
    %261 = vector.load %arg19[%c8_184, %c448_185] : memref<32x1280xf32, #tpu.memory_space<vmem>>, vector<16x512xf32>
    %c7_186 = arith.constant 7 : index
    %c0_187 = arith.constant 0 : index
    %262 = vector.load %arg8[%c7_186, %c0_187] : memref<11x512xf32, #tpu.memory_space<vmem>>, vector<1x512xf32>
    %263 = vector.broadcast %262 : vector<1x512xf32> to vector<16x512xf32>
    %264 = arith.mulf %261, %263 : vector<16x512xf32>
    %265 = arith.addf %260, %264 : vector<16x512xf32>
    %c8_188 = arith.constant 8 : index
    %c480_189 = arith.constant 480 : index
    %266 = vector.load %arg19[%c8_188, %c480_189] : memref<32x1280xf32, #tpu.memory_space<vmem>>, vector<16x512xf32>
    %c8_190 = arith.constant 8 : index
    %c0_191 = arith.constant 0 : index
    %267 = vector.load %arg8[%c8_190, %c0_191] : memref<11x512xf32, #tpu.memory_space<vmem>>, vector<1x512xf32>
    %268 = vector.broadcast %267 : vector<1x512xf32> to vector<16x512xf32>
    %269 = arith.mulf %266, %268 : vector<16x512xf32>
    %270 = arith.addf %265, %269 : vector<16x512xf32>
    %c8_192 = arith.constant 8 : index
    %c512 = arith.constant 512 : index
    %271 = vector.load %arg19[%c8_192, %c512] : memref<32x1280xf32, #tpu.memory_space<vmem>>, vector<16x512xf32>
    %c9_193 = arith.constant 9 : index
    %c0_194 = arith.constant 0 : index
    %272 = vector.load %arg8[%c9_193, %c0_194] : memref<11x512xf32, #tpu.memory_space<vmem>>, vector<1x512xf32>
    %273 = vector.broadcast %272 : vector<1x512xf32> to vector<16x512xf32>
    %274 = arith.mulf %271, %273 : vector<16x512xf32>
    %275 = arith.addf %270, %274 : vector<16x512xf32>
    %c8_195 = arith.constant 8 : index
    %c544 = arith.constant 544 : index
    %276 = vector.load %arg19[%c8_195, %c544] : memref<32x1280xf32, #tpu.memory_space<vmem>>, vector<16x512xf32>
    %c10_196 = arith.constant 10 : index
    %c0_197 = arith.constant 0 : index
    %277 = vector.load %arg8[%c10_196, %c0_197] : memref<11x512xf32, #tpu.memory_space<vmem>>, vector<1x512xf32>
    %278 = vector.broadcast %277 : vector<1x512xf32> to vector<16x512xf32>
    %279 = arith.mulf %276, %278 : vector<16x512xf32>
    %280 = arith.addf %275, %279 : vector<16x512xf32>
    %c0_198 = arith.constant 0 : index
    %c0_199 = arith.constant 0 : index
    %281 = vector.load %arg9[%c0_198, %c0_199] : memref<1x512xf32, #tpu.memory_space<vmem>>, vector<1x512xf32>
    %282 = vector.broadcast %281 : vector<1x512xf32> to vector<16x512xf32>
    %283 = arith.addf %280, %282 : vector<16x512xf32>
    %c16_200 = arith.constant 16 : index
    %c0_201 = arith.constant 0 : index
    %284 = vector.load %arg20[%c16_200, %c0_201] : memref<48x512xf32, #tpu.memory_space<vmem>>, vector<16x512xf32>
    tpu.vector_store %arg20[%c16_200, %c0_201], %283 {strides = array<i32>} : memref<48x512xf32, #tpu.memory_space<vmem>>, vector<16x512xf32>,
    %cst_202 = arith.constant 0.000000e+00 : f32
    %285 = vector.broadcast %cst_202 : f32 to vector<16x512xf32>
    %c11_203 = arith.constant 11 : index
    %c0_204 = arith.constant 0 : index
    %286 = vector.load %arg20[%c11_203, %c0_204] : memref<48x512xf32, #tpu.memory_space<vmem>>, vector<16x512xf32>
    %c0_205 = arith.constant 0 : index
    %c0_206 = arith.constant 0 : index
    %287 = vector.load %arg10[%c0_205, %c0_206] : memref<11x512xf32, #tpu.memory_space<vmem>>, vector<1x512xf32>
    %288 = vector.broadcast %287 : vector<1x512xf32> to vector<16x512xf32>
    %289 = arith.mulf %286, %288 : vector<16x512xf32>
    %290 = arith.addf %285, %289 : vector<16x512xf32>
    %c12_207 = arith.constant 12 : index
    %c0_208 = arith.constant 0 : index
    %291 = vector.load %arg20[%c12_207, %c0_208] : memref<48x512xf32, #tpu.memory_space<vmem>>, vector<16x512xf32>
    %c1_209 = arith.constant 1 : index
    %c0_210 = arith.constant 0 : index
    %292 = vector.load %arg10[%c1_209, %c0_210] : memref<11x512xf32, #tpu.memory_space<vmem>>, vector<1x512xf32>
    %293 = vector.broadcast %292 : vector<1x512xf32> to vector<16x512xf32>
    %294 = arith.mulf %291, %293 : vector<16x512xf32>
    %295 = arith.addf %290, %294 : vector<16x512xf32>
    %c13_211 = arith.constant 13 : index
    %c0_212 = arith.constant 0 : index
    %296 = vector.load %arg20[%c13_211, %c0_212] : memref<48x512xf32, #tpu.memory_space<vmem>>, vector<16x512xf32>
    %c2_213 = arith.constant 2 : index
    %c0_214 = arith.constant 0 : index
    %297 = vector.load %arg10[%c2_213, %c0_214] : memref<11x512xf32, #tpu.memory_space<vmem>>, vector<1x512xf32>
    %298 = vector.broadcast %297 : vector<1x512xf32> to vector<16x512xf32>
    %299 = arith.mulf %296, %298 : vector<16x512xf32>
    %300 = arith.addf %295, %299 : vector<16x512xf32>
    %c14_215 = arith.constant 14 : index
    %c0_216 = arith.constant 0 : index
    %301 = vector.load %arg20[%c14_215, %c0_216] : memref<48x512xf32, #tpu.memory_space<vmem>>, vector<16x512xf32>
    %c3_217 = arith.constant 3 : index
    %c0_218 = arith.constant 0 : index
    %302 = vector.load %arg10[%c3_217, %c0_218] : memref<11x512xf32, #tpu.memory_space<vmem>>, vector<1x512xf32>
    %303 = vector.broadcast %302 : vector<1x512xf32> to vector<16x512xf32>
    %304 = arith.mulf %301, %303 : vector<16x512xf32>
    %305 = arith.addf %300, %304 : vector<16x512xf32>
    %c15_219 = arith.constant 15 : index
    %c0_220 = arith.constant 0 : index
    %306 = vector.load %arg20[%c15_219, %c0_220] : memref<48x512xf32, #tpu.memory_space<vmem>>, vector<16x512xf32>
    %c4_221 = arith.constant 4 : index
    %c0_222 = arith.constant 0 : index
    %307 = vector.load %arg10[%c4_221, %c0_222] : memref<11x512xf32, #tpu.memory_space<vmem>>, vector<1x512xf32>
    %308 = vector.broadcast %307 : vector<1x512xf32> to vector<16x512xf32>
    %309 = arith.mulf %306, %308 : vector<16x512xf32>
    %310 = arith.addf %305, %309 : vector<16x512xf32>
    %c16_223 = arith.constant 16 : index
    %c0_224 = arith.constant 0 : index
    %311 = vector.load %arg20[%c16_223, %c0_224] : memref<48x512xf32, #tpu.memory_space<vmem>>, vector<16x512xf32>
    %c5_225 = arith.constant 5 : index
    %c0_226 = arith.constant 0 : index
    %312 = vector.load %arg10[%c5_225, %c0_226] : memref<11x512xf32, #tpu.memory_space<vmem>>, vector<1x512xf32>
    %313 = vector.broadcast %312 : vector<1x512xf32> to vector<16x512xf32>
    %314 = arith.mulf %311, %313 : vector<16x512xf32>
    %315 = arith.addf %310, %314 : vector<16x512xf32>
    %c17_227 = arith.constant 17 : index
    %c0_228 = arith.constant 0 : index
    %316 = vector.load %arg20[%c17_227, %c0_228] : memref<48x512xf32, #tpu.memory_space<vmem>>, vector<16x512xf32>
    %c6_229 = arith.constant 6 : index
    %c0_230 = arith.constant 0 : index
    %317 = vector.load %arg10[%c6_229, %c0_230] : memref<11x512xf32, #tpu.memory_space<vmem>>, vector<1x512xf32>
    %318 = vector.broadcast %317 : vector<1x512xf32> to vector<16x512xf32>
    %319 = arith.mulf %316, %318 : vector<16x512xf32>
    %320 = arith.addf %315, %319 : vector<16x512xf32>
    %c18_231 = arith.constant 18 : index
    %c0_232 = arith.constant 0 : index
    %321 = vector.load %arg20[%c18_231, %c0_232] : memref<48x512xf32, #tpu.memory_space<vmem>>, vector<16x512xf32>
    %c7_233 = arith.constant 7 : index
    %c0_234 = arith.constant 0 : index
    %322 = vector.load %arg10[%c7_233, %c0_234] : memref<11x512xf32, #tpu.memory_space<vmem>>, vector<1x512xf32>
    %323 = vector.broadcast %322 : vector<1x512xf32> to vector<16x512xf32>
    %324 = arith.mulf %321, %323 : vector<16x512xf32>
    %325 = arith.addf %320, %324 : vector<16x512xf32>
    %c19_235 = arith.constant 19 : index
    %c0_236 = arith.constant 0 : index
    %326 = vector.load %arg20[%c19_235, %c0_236] : memref<48x512xf32, #tpu.memory_space<vmem>>, vector<16x512xf32>
    %c8_237 = arith.constant 8 : index
    %c0_238 = arith.constant 0 : index
    %327 = vector.load %arg10[%c8_237, %c0_238] : memref<11x512xf32, #tpu.memory_space<vmem>>, vector<1x512xf32>
    %328 = vector.broadcast %327 : vector<1x512xf32> to vector<16x512xf32>
    %329 = arith.mulf %326, %328 : vector<16x512xf32>
    %330 = arith.addf %325, %329 : vector<16x512xf32>
    %c20_239 = arith.constant 20 : index
    %c0_240 = arith.constant 0 : index
    %331 = vector.load %arg20[%c20_239, %c0_240] : memref<48x512xf32, #tpu.memory_space<vmem>>, vector<16x512xf32>
    %c9_241 = arith.constant 9 : index
    %c0_242 = arith.constant 0 : index
    %332 = vector.load %arg10[%c9_241, %c0_242] : memref<11x512xf32, #tpu.memory_space<vmem>>, vector<1x512xf32>
    %333 = vector.broadcast %332 : vector<1x512xf32> to vector<16x512xf32>
    %334 = arith.mulf %331, %333 : vector<16x512xf32>
    %335 = arith.addf %330, %334 : vector<16x512xf32>
    %c21_243 = arith.constant 21 : index
    %c0_244 = arith.constant 0 : index
    %336 = vector.load %arg20[%c21_243, %c0_244] : memref<48x512xf32, #tpu.memory_space<vmem>>, vector<16x512xf32>
    %c10_245 = arith.constant 10 : index
    %c0_246 = arith.constant 0 : index
    %337 = vector.load %arg10[%c10_245, %c0_246] : memref<11x512xf32, #tpu.memory_space<vmem>>, vector<1x512xf32>
    %338 = vector.broadcast %337 : vector<1x512xf32> to vector<16x512xf32>
    %339 = arith.mulf %336, %338 : vector<16x512xf32>
    %340 = arith.addf %335, %339 : vector<16x512xf32>
    %c0_247 = arith.constant 0 : index
    %c0_248 = arith.constant 0 : index
    %341 = vector.load %arg11[%c0_247, %c0_248] : memref<1x512xf32, #tpu.memory_space<vmem>>, vector<1x512xf32>
    %342 = vector.broadcast %341 : vector<1x512xf32> to vector<16x512xf32>
    %343 = arith.addf %340, %342 : vector<16x512xf32>
    %344 = arith.addf %224, %343 : vector<16x512xf32>
    %cst_249 = arith.constant 0.000000e+00 : f32
    %345 = vector.broadcast %cst_249 : f32 to vector<16x512xf32>
    %c8_250 = arith.constant 8 : index
    %c64 = arith.constant 64 : index
    %346 = vector.load %arg19[%c8_250, %c64] : memref<32x1280xf32, #tpu.memory_space<vmem>>, vector<16x512xf32>
    %c0_251 = arith.constant 0 : index
    %c0_252 = arith.constant 0 : index
    %347 = vector.load %arg12[%c0_251, %c0_252] : memref<21x512xf32, #tpu.memory_space<vmem>>, vector<1x512xf32>
    %348 = vector.broadcast %347 : vector<1x512xf32> to vector<16x512xf32>
    %349 = arith.mulf %346, %348 : vector<16x512xf32>
    %350 = arith.addf %345, %349 : vector<16x512xf32>
    %c8_253 = arith.constant 8 : index
    %c96 = arith.constant 96 : index
    %351 = vector.load %arg19[%c8_253, %c96] : memref<32x1280xf32, #tpu.memory_space<vmem>>, vector<16x512xf32>
    %c1_254 = arith.constant 1 : index
    %c0_255 = arith.constant 0 : index
    %352 = vector.load %arg12[%c1_254, %c0_255] : memref<21x512xf32, #tpu.memory_space<vmem>>, vector<1x512xf32>
    %353 = vector.broadcast %352 : vector<1x512xf32> to vector<16x512xf32>
    %354 = arith.mulf %351, %353 : vector<16x512xf32>
    %355 = arith.addf %350, %354 : vector<16x512xf32>
    %c8_256 = arith.constant 8 : index
    %c128 = arith.constant 128 : index
    %356 = vector.load %arg19[%c8_256, %c128] : memref<32x1280xf32, #tpu.memory_space<vmem>>, vector<16x512xf32>
    %c2_257 = arith.constant 2 : index
    %c0_258 = arith.constant 0 : index
    %357 = vector.load %arg12[%c2_257, %c0_258] : memref<21x512xf32, #tpu.memory_space<vmem>>, vector<1x512xf32>
    %358 = vector.broadcast %357 : vector<1x512xf32> to vector<16x512xf32>
    %359 = arith.mulf %356, %358 : vector<16x512xf32>
    %360 = arith.addf %355, %359 : vector<16x512xf32>
    %c8_259 = arith.constant 8 : index
    %c160 = arith.constant 160 : index
    %361 = vector.load %arg19[%c8_259, %c160] : memref<32x1280xf32, #tpu.memory_space<vmem>>, vector<16x512xf32>
    %c3_260 = arith.constant 3 : index
    %c0_261 = arith.constant 0 : index
    %362 = vector.load %arg12[%c3_260, %c0_261] : memref<21x512xf32, #tpu.memory_space<vmem>>, vector<1x512xf32>
    %363 = vector.broadcast %362 : vector<1x512xf32> to vector<16x512xf32>
    %364 = arith.mulf %361, %363 : vector<16x512xf32>
    %365 = arith.addf %360, %364 : vector<16x512xf32>
    %c8_262 = arith.constant 8 : index
    %c192 = arith.constant 192 : index
    %366 = vector.load %arg19[%c8_262, %c192] : memref<32x1280xf32, #tpu.memory_space<vmem>>, vector<16x512xf32>
    %c4_263 = arith.constant 4 : index
    %c0_264 = arith.constant 0 : index
    %367 = vector.load %arg12[%c4_263, %c0_264] : memref<21x512xf32, #tpu.memory_space<vmem>>, vector<1x512xf32>
    %368 = vector.broadcast %367 : vector<1x512xf32> to vector<16x512xf32>
    %369 = arith.mulf %366, %368 : vector<16x512xf32>
    %370 = arith.addf %365, %369 : vector<16x512xf32>
    %c8_265 = arith.constant 8 : index
    %c224_266 = arith.constant 224 : index
    %371 = vector.load %arg19[%c8_265, %c224_266] : memref<32x1280xf32, #tpu.memory_space<vmem>>, vector<16x512xf32>
    %c5_267 = arith.constant 5 : index
    %c0_268 = arith.constant 0 : index
    %372 = vector.load %arg12[%c5_267, %c0_268] : memref<21x512xf32, #tpu.memory_space<vmem>>, vector<1x512xf32>
    %373 = vector.broadcast %372 : vector<1x512xf32> to vector<16x512xf32>
    %374 = arith.mulf %371, %373 : vector<16x512xf32>
    %375 = arith.addf %370, %374 : vector<16x512xf32>
    %c8_269 = arith.constant 8 : index
    %c256_270 = arith.constant 256 : index
    %376 = vector.load %arg19[%c8_269, %c256_270] : memref<32x1280xf32, #tpu.memory_space<vmem>>, vector<16x512xf32>
    %c6_271 = arith.constant 6 : index
    %c0_272 = arith.constant 0 : index
    %377 = vector.load %arg12[%c6_271, %c0_272] : memref<21x512xf32, #tpu.memory_space<vmem>>, vector<1x512xf32>
    %378 = vector.broadcast %377 : vector<1x512xf32> to vector<16x512xf32>
    %379 = arith.mulf %376, %378 : vector<16x512xf32>
    %380 = arith.addf %375, %379 : vector<16x512xf32>
    %c8_273 = arith.constant 8 : index
    %c288_274 = arith.constant 288 : index
    %381 = vector.load %arg19[%c8_273, %c288_274] : memref<32x1280xf32, #tpu.memory_space<vmem>>, vector<16x512xf32>
    %c7_275 = arith.constant 7 : index
    %c0_276 = arith.constant 0 : index
    %382 = vector.load %arg12[%c7_275, %c0_276] : memref<21x512xf32, #tpu.memory_space<vmem>>, vector<1x512xf32>
    %383 = vector.broadcast %382 : vector<1x512xf32> to vector<16x512xf32>
    %384 = arith.mulf %381, %383 : vector<16x512xf32>
    %385 = arith.addf %380, %384 : vector<16x512xf32>
    %c8_277 = arith.constant 8 : index
    %c320_278 = arith.constant 320 : index
    %386 = vector.load %arg19[%c8_277, %c320_278] : memref<32x1280xf32, #tpu.memory_space<vmem>>, vector<16x512xf32>
    %c8_279 = arith.constant 8 : index
    %c0_280 = arith.constant 0 : index
    %387 = vector.load %arg12[%c8_279, %c0_280] : memref<21x512xf32, #tpu.memory_space<vmem>>, vector<1x512xf32>
    %388 = vector.broadcast %387 : vector<1x512xf32> to vector<16x512xf32>
    %389 = arith.mulf %386, %388 : vector<16x512xf32>
    %390 = arith.addf %385, %389 : vector<16x512xf32>
    %c8_281 = arith.constant 8 : index
    %c352_282 = arith.constant 352 : index
    %391 = vector.load %arg19[%c8_281, %c352_282] : memref<32x1280xf32, #tpu.memory_space<vmem>>, vector<16x512xf32>
    %c9_283 = arith.constant 9 : index
    %c0_284 = arith.constant 0 : index
    %392 = vector.load %arg12[%c9_283, %c0_284] : memref<21x512xf32, #tpu.memory_space<vmem>>, vector<1x512xf32>
    %393 = vector.broadcast %392 : vector<1x512xf32> to vector<16x512xf32>
    %394 = arith.mulf %391, %393 : vector<16x512xf32>
    %395 = arith.addf %390, %394 : vector<16x512xf32>
    %c8_285 = arith.constant 8 : index
    %c384_286 = arith.constant 384 : index
    %396 = vector.load %arg19[%c8_285, %c384_286] : memref<32x1280xf32, #tpu.memory_space<vmem>>, vector<16x512xf32>
    %c10_287 = arith.constant 10 : index
    %c0_288 = arith.constant 0 : index
    %397 = vector.load %arg12[%c10_287, %c0_288] : memref<21x512xf32, #tpu.memory_space<vmem>>, vector<1x512xf32>
    %398 = vector.broadcast %397 : vector<1x512xf32> to vector<16x512xf32>
    %399 = arith.mulf %396, %398 : vector<16x512xf32>
    %400 = arith.addf %395, %399 : vector<16x512xf32>
    %c8_289 = arith.constant 8 : index
    %c416_290 = arith.constant 416 : index
    %401 = vector.load %arg19[%c8_289, %c416_290] : memref<32x1280xf32, #tpu.memory_space<vmem>>, vector<16x512xf32>
    %c11_291 = arith.constant 11 : index
    %c0_292 = arith.constant 0 : index
    %402 = vector.load %arg12[%c11_291, %c0_292] : memref<21x512xf32, #tpu.memory_space<vmem>>, vector<1x512xf32>
    %403 = vector.broadcast %402 : vector<1x512xf32> to vector<16x512xf32>
    %404 = arith.mulf %401, %403 : vector<16x512xf32>
    %405 = arith.addf %400, %404 : vector<16x512xf32>
    %c8_293 = arith.constant 8 : index
    %c448_294 = arith.constant 448 : index
    %406 = vector.load %arg19[%c8_293, %c448_294] : memref<32x1280xf32, #tpu.memory_space<vmem>>, vector<16x512xf32>
    %c12_295 = arith.constant 12 : index
    %c0_296 = arith.constant 0 : index
    %407 = vector.load %arg12[%c12_295, %c0_296] : memref<21x512xf32, #tpu.memory_space<vmem>>, vector<1x512xf32>
    %408 = vector.broadcast %407 : vector<1x512xf32> to vector<16x512xf32>
    %409 = arith.mulf %406, %408 : vector<16x512xf32>
    %410 = arith.addf %405, %409 : vector<16x512xf32>
    %c8_297 = arith.constant 8 : index
    %c480_298 = arith.constant 480 : index
    %411 = vector.load %arg19[%c8_297, %c480_298] : memref<32x1280xf32, #tpu.memory_space<vmem>>, vector<16x512xf32>
    %c13_299 = arith.constant 13 : index
    %c0_300 = arith.constant 0 : index
    %412 = vector.load %arg12[%c13_299, %c0_300] : memref<21x512xf32, #tpu.memory_space<vmem>>, vector<1x512xf32>
    %413 = vector.broadcast %412 : vector<1x512xf32> to vector<16x512xf32>
    %414 = arith.mulf %411, %413 : vector<16x512xf32>
    %415 = arith.addf %410, %414 : vector<16x512xf32>
    %c8_301 = arith.constant 8 : index
    %c512_302 = arith.constant 512 : index
    %416 = vector.load %arg19[%c8_301, %c512_302] : memref<32x1280xf32, #tpu.memory_space<vmem>>, vector<16x512xf32>
    %c14_303 = arith.constant 14 : index
    %c0_304 = arith.constant 0 : index
    %417 = vector.load %arg12[%c14_303, %c0_304] : memref<21x512xf32, #tpu.memory_space<vmem>>, vector<1x512xf32>
    %418 = vector.broadcast %417 : vector<1x512xf32> to vector<16x512xf32>
    %419 = arith.mulf %416, %418 : vector<16x512xf32>
    %420 = arith.addf %415, %419 : vector<16x512xf32>
    %c8_305 = arith.constant 8 : index
    %c544_306 = arith.constant 544 : index
    %421 = vector.load %arg19[%c8_305, %c544_306] : memref<32x1280xf32, #tpu.memory_space<vmem>>, vector<16x512xf32>
    %c15_307 = arith.constant 15 : index
    %c0_308 = arith.constant 0 : index
    %422 = vector.load %arg12[%c15_307, %c0_308] : memref<21x512xf32, #tpu.memory_space<vmem>>, vector<1x512xf32>
    %423 = vector.broadcast %422 : vector<1x512xf32> to vector<16x512xf32>
    %424 = arith.mulf %421, %423 : vector<16x512xf32>
    %425 = arith.addf %420, %424 : vector<16x512xf32>
    %c8_309 = arith.constant 8 : index
    %c576 = arith.constant 576 : index
    %426 = vector.load %arg19[%c8_309, %c576] : memref<32x1280xf32, #tpu.memory_space<vmem>>, vector<16x512xf32>
    %c16_310 = arith.constant 16 : index
    %c0_311 = arith.constant 0 : index
    %427 = vector.load %arg12[%c16_310, %c0_311] : memref<21x512xf32, #tpu.memory_space<vmem>>, vector<1x512xf32>
    %428 = vector.broadcast %427 : vector<1x512xf32> to vector<16x512xf32>
    %429 = arith.mulf %426, %428 : vector<16x512xf32>
    %430 = arith.addf %425, %429 : vector<16x512xf32>
    %c8_312 = arith.constant 8 : index
    %c608 = arith.constant 608 : index
    %431 = vector.load %arg19[%c8_312, %c608] : memref<32x1280xf32, #tpu.memory_space<vmem>>, vector<16x512xf32>
    %c17_313 = arith.constant 17 : index
    %c0_314 = arith.constant 0 : index
    %432 = vector.load %arg12[%c17_313, %c0_314] : memref<21x512xf32, #tpu.memory_space<vmem>>, vector<1x512xf32>
    %433 = vector.broadcast %432 : vector<1x512xf32> to vector<16x512xf32>
    %434 = arith.mulf %431, %433 : vector<16x512xf32>
    %435 = arith.addf %430, %434 : vector<16x512xf32>
    %c8_315 = arith.constant 8 : index
    %c640 = arith.constant 640 : index
    %436 = vector.load %arg19[%c8_315, %c640] : memref<32x1280xf32, #tpu.memory_space<vmem>>, vector<16x512xf32>
    %c18_316 = arith.constant 18 : index
    %c0_317 = arith.constant 0 : index
    %437 = vector.load %arg12[%c18_316, %c0_317] : memref<21x512xf32, #tpu.memory_space<vmem>>, vector<1x512xf32>
    %438 = vector.broadcast %437 : vector<1x512xf32> to vector<16x512xf32>
    %439 = arith.mulf %436, %438 : vector<16x512xf32>
    %440 = arith.addf %435, %439 : vector<16x512xf32>
    %c8_318 = arith.constant 8 : index
    %c672 = arith.constant 672 : index
    %441 = vector.load %arg19[%c8_318, %c672] : memref<32x1280xf32, #tpu.memory_space<vmem>>, vector<16x512xf32>
    %c19_319 = arith.constant 19 : index
    %c0_320 = arith.constant 0 : index
    %442 = vector.load %arg12[%c19_319, %c0_320] : memref<21x512xf32, #tpu.memory_space<vmem>>, vector<1x512xf32>
    %443 = vector.broadcast %442 : vector<1x512xf32> to vector<16x512xf32>
    %444 = arith.mulf %441, %443 : vector<16x512xf32>
    %445 = arith.addf %440, %444 : vector<16x512xf32>
    %c8_321 = arith.constant 8 : index
    %c704 = arith.constant 704 : index
    %446 = vector.load %arg19[%c8_321, %c704] : memref<32x1280xf32, #tpu.memory_space<vmem>>, vector<16x512xf32>
    %c20_322 = arith.constant 20 : index
    %c0_323 = arith.constant 0 : index
    %447 = vector.load %arg12[%c20_322, %c0_323] : memref<21x512xf32, #tpu.memory_space<vmem>>, vector<1x512xf32>
    %448 = vector.broadcast %447 : vector<1x512xf32> to vector<16x512xf32>
    %449 = arith.mulf %446, %448 : vector<16x512xf32>
    %450 = arith.addf %445, %449 : vector<16x512xf32>
    %c0_324 = arith.constant 0 : index
    %c0_325 = arith.constant 0 : index
    %451 = vector.load %arg13[%c0_324, %c0_325] : memref<1x512xf32, #tpu.memory_space<vmem>>, vector<1x512xf32>
    %452 = vector.broadcast %451 : vector<1x512xf32> to vector<16x512xf32>
    %453 = arith.addf %450, %452 : vector<16x512xf32>
    %c16_326 = arith.constant 16 : index
    %c0_327 = arith.constant 0 : index
    %454 = vector.load %arg20[%c16_326, %c0_327] : memref<48x512xf32, #tpu.memory_space<vmem>>, vector<16x512xf32>
    tpu.vector_store %arg20[%c16_326, %c0_327], %453 {strides = array<i32>} : memref<48x512xf32, #tpu.memory_space<vmem>>, vector<16x512xf32>,
    %cst_328 = arith.constant 0.000000e+00 : f32
    %455 = vector.broadcast %cst_328 : f32 to vector<16x512xf32>
    %c6_329 = arith.constant 6 : index
    %c0_330 = arith.constant 0 : index
    %456 = vector.load %arg20[%c6_329, %c0_330] : memref<48x512xf32, #tpu.memory_space<vmem>>, vector<16x512xf32>
    %c0_331 = arith.constant 0 : index
    %c0_332 = arith.constant 0 : index
    %457 = vector.load %arg14[%c0_331, %c0_332] : memref<21x512xf32, #tpu.memory_space<vmem>>, vector<1x512xf32>
    %458 = vector.broadcast %457 : vector<1x512xf32> to vector<16x512xf32>
    %459 = arith.mulf %456, %458 : vector<16x512xf32>
    %460 = arith.addf %455, %459 : vector<16x512xf32>
    %c7_333 = arith.constant 7 : index
    %c0_334 = arith.constant 0 : index
    %461 = vector.load %arg20[%c7_333, %c0_334] : memref<48x512xf32, #tpu.memory_space<vmem>>, vector<16x512xf32>
    %c1_335 = arith.constant 1 : index
    %c0_336 = arith.constant 0 : index
    %462 = vector.load %arg14[%c1_335, %c0_336] : memref<21x512xf32, #tpu.memory_space<vmem>>, vector<1x512xf32>
    %463 = vector.broadcast %462 : vector<1x512xf32> to vector<16x512xf32>
    %464 = arith.mulf %461, %463 : vector<16x512xf32>
    %465 = arith.addf %460, %464 : vector<16x512xf32>
    %c8_337 = arith.constant 8 : index
    %c0_338 = arith.constant 0 : index
    %466 = vector.load %arg20[%c8_337, %c0_338] : memref<48x512xf32, #tpu.memory_space<vmem>>, vector<16x512xf32>
    %c2_339 = arith.constant 2 : index
    %c0_340 = arith.constant 0 : index
    %467 = vector.load %arg14[%c2_339, %c0_340] : memref<21x512xf32, #tpu.memory_space<vmem>>, vector<1x512xf32>
    %468 = vector.broadcast %467 : vector<1x512xf32> to vector<16x512xf32>
    %469 = arith.mulf %466, %468 : vector<16x512xf32>
    %470 = arith.addf %465, %469 : vector<16x512xf32>
    %c9_341 = arith.constant 9 : index
    %c0_342 = arith.constant 0 : index
    %471 = vector.load %arg20[%c9_341, %c0_342] : memref<48x512xf32, #tpu.memory_space<vmem>>, vector<16x512xf32>
    %c3_343 = arith.constant 3 : index
    %c0_344 = arith.constant 0 : index
    %472 = vector.load %arg14[%c3_343, %c0_344] : memref<21x512xf32, #tpu.memory_space<vmem>>, vector<1x512xf32>
    %473 = vector.broadcast %472 : vector<1x512xf32> to vector<16x512xf32>
    %474 = arith.mulf %471, %473 : vector<16x512xf32>
    %475 = arith.addf %470, %474 : vector<16x512xf32>
    %c10_345 = arith.constant 10 : index
    %c0_346 = arith.constant 0 : index
    %476 = vector.load %arg20[%c10_345, %c0_346] : memref<48x512xf32, #tpu.memory_space<vmem>>, vector<16x512xf32>
    %c4_347 = arith.constant 4 : index
    %c0_348 = arith.constant 0 : index
    %477 = vector.load %arg14[%c4_347, %c0_348] : memref<21x512xf32, #tpu.memory_space<vmem>>, vector<1x512xf32>
    %478 = vector.broadcast %477 : vector<1x512xf32> to vector<16x512xf32>
    %479 = arith.mulf %476, %478 : vector<16x512xf32>
    %480 = arith.addf %475, %479 : vector<16x512xf32>
    %c11_349 = arith.constant 11 : index
    %c0_350 = arith.constant 0 : index
    %481 = vector.load %arg20[%c11_349, %c0_350] : memref<48x512xf32, #tpu.memory_space<vmem>>, vector<16x512xf32>
    %c5_351 = arith.constant 5 : index
    %c0_352 = arith.constant 0 : index
    %482 = vector.load %arg14[%c5_351, %c0_352] : memref<21x512xf32, #tpu.memory_space<vmem>>, vector<1x512xf32>
    %483 = vector.broadcast %482 : vector<1x512xf32> to vector<16x512xf32>
    %484 = arith.mulf %481, %483 : vector<16x512xf32>
    %485 = arith.addf %480, %484 : vector<16x512xf32>
    %c12_353 = arith.constant 12 : index
    %c0_354 = arith.constant 0 : index
    %486 = vector.load %arg20[%c12_353, %c0_354] : memref<48x512xf32, #tpu.memory_space<vmem>>, vector<16x512xf32>
    %c6_355 = arith.constant 6 : index
    %c0_356 = arith.constant 0 : index
    %487 = vector.load %arg14[%c6_355, %c0_356] : memref<21x512xf32, #tpu.memory_space<vmem>>, vector<1x512xf32>
    %488 = vector.broadcast %487 : vector<1x512xf32> to vector<16x512xf32>
    %489 = arith.mulf %486, %488 : vector<16x512xf32>
    %490 = arith.addf %485, %489 : vector<16x512xf32>
    %c13_357 = arith.constant 13 : index
    %c0_358 = arith.constant 0 : index
    %491 = vector.load %arg20[%c13_357, %c0_358] : memref<48x512xf32, #tpu.memory_space<vmem>>, vector<16x512xf32>
    %c7_359 = arith.constant 7 : index
    %c0_360 = arith.constant 0 : index
    %492 = vector.load %arg14[%c7_359, %c0_360] : memref<21x512xf32, #tpu.memory_space<vmem>>, vector<1x512xf32>
    %493 = vector.broadcast %492 : vector<1x512xf32> to vector<16x512xf32>
    %494 = arith.mulf %491, %493 : vector<16x512xf32>
    %495 = arith.addf %490, %494 : vector<16x512xf32>
    %c14_361 = arith.constant 14 : index
    %c0_362 = arith.constant 0 : index
    %496 = vector.load %arg20[%c14_361, %c0_362] : memref<48x512xf32, #tpu.memory_space<vmem>>, vector<16x512xf32>
    %c8_363 = arith.constant 8 : index
    %c0_364 = arith.constant 0 : index
    %497 = vector.load %arg14[%c8_363, %c0_364] : memref<21x512xf32, #tpu.memory_space<vmem>>, vector<1x512xf32>
    %498 = vector.broadcast %497 : vector<1x512xf32> to vector<16x512xf32>
    %499 = arith.mulf %496, %498 : vector<16x512xf32>
    %500 = arith.addf %495, %499 : vector<16x512xf32>
    %c15_365 = arith.constant 15 : index
    %c0_366 = arith.constant 0 : index
    %501 = vector.load %arg20[%c15_365, %c0_366] : memref<48x512xf32, #tpu.memory_space<vmem>>, vector<16x512xf32>
    %c9_367 = arith.constant 9 : index
    %c0_368 = arith.constant 0 : index
    %502 = vector.load %arg14[%c9_367, %c0_368] : memref<21x512xf32, #tpu.memory_space<vmem>>, vector<1x512xf32>
    %503 = vector.broadcast %502 : vector<1x512xf32> to vector<16x512xf32>
    %504 = arith.mulf %501, %503 : vector<16x512xf32>
    %505 = arith.addf %500, %504 : vector<16x512xf32>
    %c16_369 = arith.constant 16 : index
    %c0_370 = arith.constant 0 : index
    %506 = vector.load %arg20[%c16_369, %c0_370] : memref<48x512xf32, #tpu.memory_space<vmem>>, vector<16x512xf32>
    %c10_371 = arith.constant 10 : index
    %c0_372 = arith.constant 0 : index
    %507 = vector.load %arg14[%c10_371, %c0_372] : memref<21x512xf32, #tpu.memory_space<vmem>>, vector<1x512xf32>
    %508 = vector.broadcast %507 : vector<1x512xf32> to vector<16x512xf32>
    %509 = arith.mulf %506, %508 : vector<16x512xf32>
    %510 = arith.addf %505, %509 : vector<16x512xf32>
    %c17_373 = arith.constant 17 : index
    %c0_374 = arith.constant 0 : index
    %511 = vector.load %arg20[%c17_373, %c0_374] : memref<48x512xf32, #tpu.memory_space<vmem>>, vector<16x512xf32>
    %c11_375 = arith.constant 11 : index
    %c0_376 = arith.constant 0 : index
    %512 = vector.load %arg14[%c11_375, %c0_376] : memref<21x512xf32, #tpu.memory_space<vmem>>, vector<1x512xf32>
    %513 = vector.broadcast %512 : vector<1x512xf32> to vector<16x512xf32>
    %514 = arith.mulf %511, %513 : vector<16x512xf32>
    %515 = arith.addf %510, %514 : vector<16x512xf32>
    %c18_377 = arith.constant 18 : index
    %c0_378 = arith.constant 0 : index
    %516 = vector.load %arg20[%c18_377, %c0_378] : memref<48x512xf32, #tpu.memory_space<vmem>>, vector<16x512xf32>
    %c12_379 = arith.constant 12 : index
    %c0_380 = arith.constant 0 : index
    %517 = vector.load %arg14[%c12_379, %c0_380] : memref<21x512xf32, #tpu.memory_space<vmem>>, vector<1x512xf32>
    %518 = vector.broadcast %517 : vector<1x512xf32> to vector<16x512xf32>
    %519 = arith.mulf %516, %518 : vector<16x512xf32>
    %520 = arith.addf %515, %519 : vector<16x512xf32>
    %c19_381 = arith.constant 19 : index
    %c0_382 = arith.constant 0 : index
    %521 = vector.load %arg20[%c19_381, %c0_382] : memref<48x512xf32, #tpu.memory_space<vmem>>, vector<16x512xf32>
    %c13_383 = arith.constant 13 : index
    %c0_384 = arith.constant 0 : index
    %522 = vector.load %arg14[%c13_383, %c0_384] : memref<21x512xf32, #tpu.memory_space<vmem>>, vector<1x512xf32>
    %523 = vector.broadcast %522 : vector<1x512xf32> to vector<16x512xf32>
    %524 = arith.mulf %521, %523 : vector<16x512xf32>
    %525 = arith.addf %520, %524 : vector<16x512xf32>
    %c20_385 = arith.constant 20 : index
    %c0_386 = arith.constant 0 : index
    %526 = vector.load %arg20[%c20_385, %c0_386] : memref<48x512xf32, #tpu.memory_space<vmem>>, vector<16x512xf32>
    %c14_387 = arith.constant 14 : index
    %c0_388 = arith.constant 0 : index
    %527 = vector.load %arg14[%c14_387, %c0_388] : memref<21x512xf32, #tpu.memory_space<vmem>>, vector<1x512xf32>
    %528 = vector.broadcast %527 : vector<1x512xf32> to vector<16x512xf32>
    %529 = arith.mulf %526, %528 : vector<16x512xf32>
    %530 = arith.addf %525, %529 : vector<16x512xf32>
    %c21_389 = arith.constant 21 : index
    %c0_390 = arith.constant 0 : index
    %531 = vector.load %arg20[%c21_389, %c0_390] : memref<48x512xf32, #tpu.memory_space<vmem>>, vector<16x512xf32>
    %c15_391 = arith.constant 15 : index
    %c0_392 = arith.constant 0 : index
    %532 = vector.load %arg14[%c15_391, %c0_392] : memref<21x512xf32, #tpu.memory_space<vmem>>, vector<1x512xf32>
    %533 = vector.broadcast %532 : vector<1x512xf32> to vector<16x512xf32>
    %534 = arith.mulf %531, %533 : vector<16x512xf32>
    %535 = arith.addf %530, %534 : vector<16x512xf32>
    %c22_393 = arith.constant 22 : index
    %c0_394 = arith.constant 0 : index
    %536 = vector.load %arg20[%c22_393, %c0_394] : memref<48x512xf32, #tpu.memory_space<vmem>>, vector<16x512xf32>
    %c16_395 = arith.constant 16 : index
    %c0_396 = arith.constant 0 : index
    %537 = vector.load %arg14[%c16_395, %c0_396] : memref<21x512xf32, #tpu.memory_space<vmem>>, vector<1x512xf32>
    %538 = vector.broadcast %537 : vector<1x512xf32> to vector<16x512xf32>
    %539 = arith.mulf %536, %538 : vector<16x512xf32>
    %540 = arith.addf %535, %539 : vector<16x512xf32>
    %c23_397 = arith.constant 23 : index
    %c0_398 = arith.constant 0 : index
    %541 = vector.load %arg20[%c23_397, %c0_398] : memref<48x512xf32, #tpu.memory_space<vmem>>, vector<16x512xf32>
    %c17_399 = arith.constant 17 : index
    %c0_400 = arith.constant 0 : index
    %542 = vector.load %arg14[%c17_399, %c0_400] : memref<21x512xf32, #tpu.memory_space<vmem>>, vector<1x512xf32>
    %543 = vector.broadcast %542 : vector<1x512xf32> to vector<16x512xf32>
    %544 = arith.mulf %541, %543 : vector<16x512xf32>
    %545 = arith.addf %540, %544 : vector<16x512xf32>
    %c24_401 = arith.constant 24 : index
    %c0_402 = arith.constant 0 : index
    %546 = vector.load %arg20[%c24_401, %c0_402] : memref<48x512xf32, #tpu.memory_space<vmem>>, vector<16x512xf32>
    %c18_403 = arith.constant 18 : index
    %c0_404 = arith.constant 0 : index
    %547 = vector.load %arg14[%c18_403, %c0_404] : memref<21x512xf32, #tpu.memory_space<vmem>>, vector<1x512xf32>
    %548 = vector.broadcast %547 : vector<1x512xf32> to vector<16x512xf32>
    %549 = arith.mulf %546, %548 : vector<16x512xf32>
    %550 = arith.addf %545, %549 : vector<16x512xf32>
    %c25 = arith.constant 25 : index
    %c0_405 = arith.constant 0 : index
    %551 = vector.load %arg20[%c25, %c0_405] : memref<48x512xf32, #tpu.memory_space<vmem>>, vector<16x512xf32>
    %c19_406 = arith.constant 19 : index
    %c0_407 = arith.constant 0 : index
    %552 = vector.load %arg14[%c19_406, %c0_407] : memref<21x512xf32, #tpu.memory_space<vmem>>, vector<1x512xf32>
    %553 = vector.broadcast %552 : vector<1x512xf32> to vector<16x512xf32>
    %554 = arith.mulf %551, %553 : vector<16x512xf32>
    %555 = arith.addf %550, %554 : vector<16x512xf32>
    %c26 = arith.constant 26 : index
    %c0_408 = arith.constant 0 : index
    %556 = vector.load %arg20[%c26, %c0_408] : memref<48x512xf32, #tpu.memory_space<vmem>>, vector<16x512xf32>
    %c20_409 = arith.constant 20 : index
    %c0_410 = arith.constant 0 : index
    %557 = vector.load %arg14[%c20_409, %c0_410] : memref<21x512xf32, #tpu.memory_space<vmem>>, vector<1x512xf32>
    %558 = vector.broadcast %557 : vector<1x512xf32> to vector<16x512xf32>
    %559 = arith.mulf %556, %558 : vector<16x512xf32>
    %560 = arith.addf %555, %559 : vector<16x512xf32>
    %c0_411 = arith.constant 0 : index
    %c0_412 = arith.constant 0 : index
    %561 = vector.load %arg15[%c0_411, %c0_412] : memref<1x512xf32, #tpu.memory_space<vmem>>, vector<1x512xf32>
    %562 = vector.broadcast %561 : vector<1x512xf32> to vector<16x512xf32>
    %563 = arith.addf %560, %562 : vector<16x512xf32>
    %564 = arith.addf %344, %563 : vector<16x512xf32>
    %c0_413 = arith.constant 0 : index
    %c0_414 = arith.constant 0 : index
    %565 = vector.load %arg16[%c0_413, %c0_414] : memref<512x512xf32, #tpu.memory_space<vmem>>, vector<512x512xf32>
    %cst_415 = arith.constant dense<0.000000e+00> : vector<16x512xf32>
    %566 = tpu.matmul %564, %565, %cst_415 {dimension_numbers = #tpu.dot_dimension_numbers<[1], [0], [0], [1], [0, 0, 1, 1], [], []>} : vector<16x512xf32>, vector<512x512xf32>, vector<16x512xf32> -> vector<16x512xf32>
    %c0_416 = arith.constant 0 : index
    %c0_417 = arith.constant 0 : index
    %567 = vector.load %arg17[%c0_416, %c0_417] : memref<1x512xf32, #tpu.memory_space<vmem>>, vector<1x512xf32>
    %568 = vector.broadcast %567 : vector<1x512xf32> to vector<16x512xf32>
    %569 = arith.addf %566, %568 : vector<16x512xf32>
    %c0_418 = arith.constant 0 : index
    %c0_419 = arith.constant 0 : index
    %c0_420 = arith.constant 0 : index
    %570 = vector.load %arg1[%c0_418, %c0_419, %c0_420] : memref<1x16x512xf32, #tpu.memory_space<vmem>>, vector<1x16x512xf32>
    %571 = vector.shape_cast %570 : vector<1x16x512xf32> to vector<16x512xf32>
    %572 = arith.mulf %569, %571 : vector<16x512xf32>
    %c0_421 = arith.constant 0 : index
    %c0_422 = arith.constant 0 : index
    %c0_423 = arith.constant 0 : index
    %573 = vector.load %arg18[%c0_421, %c0_422, %c0_423] : memref<1x16x512xf32, #tpu.memory_space<vmem>>, vector<1x16x512xf32>
    %574 = vector.shape_cast %573 : vector<1x16x512xf32> to vector<16x512xf32>
    %575 = vector.shape_cast %572 : vector<16x512xf32> to vector<1x16x512xf32>
    tpu.vector_store %arg18[%c0_421, %c0_422, %c0_423], %575 {strides = array<i32>} : memref<1x16x512xf32, #tpu.memory_space<vmem>>, vector<1x16x512xf32>,
    return
  }
  func.func @transform_0(%arg0: i32) -> (i32, i32, i32) {
    %c0_i32 = arith.constant 0 : i32
    %c0_i32_0 = arith.constant 0 : i32
    %c0_i32_1 = arith.constant 0 : i32
    return %arg0, %c0_i32, %c0_i32_0 : i32, i32, i32
  }
  func.func @transform_1(%arg0: i32) -> (i32, i32) {
    %c0_i32 = arith.constant 0 : i32
    %c0_i32_0 = arith.constant 0 : i32
    %c0_i32_1 = arith.constant 0 : i32
    return %c0_i32, %c0_i32_0 : i32, i32
  }
  func.func @transform_2(%arg0: i32) -> (i32, i32) {
    %c0_i32 = arith.constant 0 : i32
    %c0_i32_0 = arith.constant 0 : i32
    %c0_i32_1 = arith.constant 0 : i32
    return %c0_i32, %c0_i32_0 : i32, i32
  }
  func.func @transform_3(%arg0: i32) -> (i32, i32) {
    %c0_i32 = arith.constant 0 : i32
    %c0_i32_0 = arith.constant 0 : i32
    %c0_i32_1 = arith.constant 0 : i32
    return %c0_i32, %c0_i32_0 : i32, i32
  }
  func.func @transform_4(%arg0: i32) -> (i32, i32) {
    %c0_i32 = arith.constant 0 : i32
    %c0_i32_0 = arith.constant 0 : i32
    %c0_i32_1 = arith.constant 0 : i32
    return %c0_i32, %c0_i32_0 : i32, i32
  }
  func.func @transform_5(%arg0: i32) -> (i32, i32) {
    %c0_i32 = arith.constant 0 : i32
    %c0_i32_0 = arith.constant 0 : i32
    %c0_i32_1 = arith.constant 0 : i32
    return %c0_i32, %c0_i32_0 : i32, i32
  }
  func.func @transform_6(%arg0: i32) -> (i32, i32) {
    %c0_i32 = arith.constant 0 : i32
    %c0_i32_0 = arith.constant 0 : i32
    %c0_i32_1 = arith.constant 0 : i32
    return %c0_i32, %c0_i32_0 : i32, i32
  }
  func.func @transform_7(%arg0: i32) -> (i32, i32) {
    %c0_i32 = arith.constant 0 : i32
    %c0_i32_0 = arith.constant 0 : i32
    %c0_i32_1 = arith.constant 0 : i32
    return %c0_i32, %c0_i32_0 : i32, i32
  }
  func.func @transform_8(%arg0: i32) -> (i32, i32) {
    %c0_i32 = arith.constant 0 : i32
    %c0_i32_0 = arith.constant 0 : i32
    %c0_i32_1 = arith.constant 0 : i32
    return %c0_i32, %c0_i32_0 : i32, i32
  }
  func.func @transform_9(%arg0: i32) -> (i32, i32) {
    %c0_i32 = arith.constant 0 : i32
    %c0_i32_0 = arith.constant 0 : i32
    %c0_i32_1 = arith.constant 0 : i32
    return %c0_i32, %c0_i32_0 : i32, i32
  }
  func.func @transform_10(%arg0: i32) -> (i32, i32) {
    %c0_i32 = arith.constant 0 : i32
    %c0_i32_0 = arith.constant 0 : i32
    %c0_i32_1 = arith.constant 0 : i32
    return %c0_i32, %c0_i32_0 : i32, i32
  }
  func.func @transform_11(%arg0: i32) -> (i32, i32) {
    %c0_i32 = arith.constant 0 : i32
    %c0_i32_0 = arith.constant 0 : i32
    %c0_i32_1 = arith.constant 0 : i32
    return %c0_i32, %c0_i32_0 : i32, i32
  }
  func.func @transform_12(%arg0: i32) -> (i32, i32) {
    %c0_i32 = arith.constant 0 : i32
    %c0_i32_0 = arith.constant 0 : i32
    %c0_i32_1 = arith.constant 0 : i32
    return %c0_i32, %c0_i32_0 : i32, i32
  }
  func.func @transform_13(%arg0: i32) -> (i32, i32) {
    %c0_i32 = arith.constant 0 : i32
    %c0_i32_0 = arith.constant 0 : i32
    %c0_i32_1 = arith.constant 0 : i32
    return %c0_i32, %c0_i32_0 : i32, i32
  }
  func.func @transform_14(%arg0: i32) -> (i32, i32) {
    %c0_i32 = arith.constant 0 : i32
    %c0_i32_0 = arith.constant 0 : i32
    %c0_i32_1 = arith.constant 0 : i32
    return %c0_i32, %c0_i32_0 : i32, i32
  }
  func.func @transform_15(%arg0: i32) -> (i32, i32) {
    %c0_i32 = arith.constant 0 : i32
    %c0_i32_0 = arith.constant 0 : i32
    %c0_i32_1 = arith.constant 0 : i32
    return %c0_i32, %c0_i32_0 : i32, i32
  }
  func.func @transform_16(%arg0: i32) -> (i32, i32) {
    %c0_i32 = arith.constant 0 : i32
    %c0_i32_0 = arith.constant 0 : i32
    %c0_i32_1 = arith.constant 0 : i32
    return %c0_i32, %c0_i32_0 : i32, i32
  }
  func.func @transform_17(%arg0: i32) -> (i32, i32, i32) {
    %c0_i32 = arith.constant 0 : i32
    %c0_i32_0 = arith.constant 0 : i32
    %c0_i32_1 = arith.constant 0 : i32
    return %arg0, %c0_i32, %c0_i32_0 : i32, i32, i32
  }
}

</mosaic_0001>

<llo_original>
// kernel: tpu_custom_call.1
$region0: #{tpu_custom_call.1}
  #allocation0 [shape = 'u32[]', space=smem, size = 0x4, offset = 0x4, fixed_abs, tag = 'smem constant byte address 0x4 - core index']
  #allocation1 [shape = 'u32[72,128]{1,0:T(1,128)}', space=vmem, size = 0x9000, scoped, tag = 'internal scratch']
  #allocation2 [shape = 'f32[32,1280]{1,0:T(8,128)}', space=vmem, size = 0x28000, scoped, tag = 'scratch operand']
  #allocation3 [shape = 'f32[48,512]{1,0:T(8,128)}', space=vmem, size = 0x18000, scoped, tag = 'scratch operand']
  %s0 = inlined_call_operand.hbm [shape: f32[2,16,512], index: 0, kind: input, shape index: {}]
  %s1 = inlined_call_operand.hbm [shape: f32[25,512], index: 1, kind: input, shape index: {}]
  %s2 = inlined_call_operand.hbm [shape: f32[1,512], index: 2, kind: input, shape index: {}]
  %s3 = inlined_call_operand.hbm [shape: f32[7,512], index: 3, kind: input, shape index: {}]
  %s4 = inlined_call_operand.hbm [shape: f32[1,512], index: 4, kind: input, shape index: {}]
  %s5 = inlined_call_operand.hbm [shape: f32[7,512], index: 5, kind: input, shape index: {}]
  %s6 = inlined_call_operand.vmem [shape: f32[1,512], index: 6, kind: input, shape index: {}]
  %s7 = inlined_call_operand.hbm [shape: f32[11,512], index: 7, kind: input, shape index: {}]
  %s8 = inlined_call_operand.hbm [shape: f32[1,512], index: 8, kind: input, shape index: {}]
  %s9 = inlined_call_operand.hbm [shape: f32[11,512], index: 9, kind: input, shape index: {}]
  %s10 = inlined_call_operand.vmem [shape: f32[1,512], index: 10, kind: input, shape index: {}]
  %s11 = inlined_call_operand.hbm [shape: f32[21,512], index: 11, kind: input, shape index: {}]
  %s12 = inlined_call_operand.hbm [shape: f32[1,512], index: 12, kind: input, shape index: {}]
  %s13 = inlined_call_operand.hbm [shape: f32[21,512], index: 13, kind: input, shape index: {}]
  %s14 = inlined_call_operand.vmem [shape: f32[1,512], index: 14, kind: input, shape index: {}]
  %s15 = inlined_call_operand.hbm [shape: f32[512,512], index: 15, kind: input, shape index: {}]
  %s16 = inlined_call_operand.hbm [shape: f32[1,512], index: 16, kind: input, shape index: {}]
  %s17 = inlined_call_operand.hbm [shape: f32[2,16,512], index: 17, kind: output, shape index: {}]
  %s18 = sld [smem:[#allocation0]]
  $region157: #{tpu_custom_call.1} parent=0
    _
  %s20 = ssub.s32 1, %s18
  %s21 = scalar_select 0, %s20, %s18
  $region1: #{tpu_custom_call.1} parent=0
    #allocation4 [shape = 'u8[65536]{0}', space=vmem, size = 0x10000, scoped, tag = 'input window, operand 0']
    #allocation5 [shape = 's32[2]{0}', space=sflag, size = 0x8, scoped, tag = 'scoped memory for tpu_custom_call.1']
    #allocation6 [shape = 's32[2]{0}', space=sflag, size = 0x8, scoped, tag = 'scoped memory for tpu_custom_call.1']
    #allocation7 [shape = 'u8[65536]{0}', space=vmem, size = 0x10000, scoped, tag = 'input window, operand 1, single buffered']
    #allocation8 [shape = 's32[1]{0}', space=sflag, size = 0x4, scoped, tag = 'scoped memory for tpu_custom_call.1']
    #allocation9 [shape = 'u8[2048]{0}', space=vmem, size = 0x800, scoped, tag = 'input window, operand 2, single buffered']
    #allocation10 [shape = 'u8[16384]{0}', space=vmem, size = 0x4000, scoped, tag = 'input window, operand 3, single buffered']
    #allocation11 [shape = 's32[1]{0}', space=sflag, size = 0x4, scoped, tag = 'scoped memory for tpu_custom_call.1']
    #allocation12 [shape = 'u8[2048]{0}', space=vmem, size = 0x800, scoped, tag = 'input window, operand 4, single buffered']
    #allocation13 [shape = 'u8[16384]{0}', space=vmem, size = 0x4000, scoped, tag = 'input window, operand 5, single buffered']
    #allocation14 [shape = 's32[1]{0}', space=sflag, size = 0x4, scoped, tag = 'scoped memory for tpu_custom_call.1']
    #allocation15 [shape = 'u8[32768]{0}', space=vmem, size = 0x8000, scoped, tag = 'input window, operand 7, single buffered']
    #allocation16 [shape = 'u8[2048]{0}', space=vmem, size = 0x800, scoped, tag = 'input window, operand 8, single buffered']
    #allocation17 [shape = 's32[1]{0}', space=sflag, size = 0x4, scoped, tag = 'scoped memory for tpu_custom_call.1']
    #allocation18 [shape = 'u8[32768]{0}', space=vmem, size = 0x8000, scoped, tag = 'input window, operand 9, single buffered']
    #allocation19 [shape = 'u8[49152]{0}', space=vmem, size = 0xc000, scoped, tag = 'input window, operand 11, single buffered']
    #allocation20 [shape = 's32[1]{0}', space=sflag, size = 0x4, scoped, tag = 'scoped memory for tpu_custom_call.1']
    #allocation21 [shape = 'u8[2048]{0}', space=vmem, size = 0x800, scoped, tag = 'input window, operand 12, single buffered']
    #allocation22 [shape = 'u8[49152]{0}', space=vmem, size = 0xc000, scoped, tag = 'input window, operand 13, single buffered']
    #allocation23 [shape = 's32[1]{0}', space=sflag, size = 0x4, scoped, tag = 'scoped memory for tpu_custom_call.1']
    #allocation24 [shape = 'u8[1048576]{0}', space=vmem, size = 0x100000, scoped, tag = 'input window, operand 15, single buffered']
    #allocation25 [shape = 'u8[2048]{0}', space=vmem, size = 0x800, scoped, tag = 'input window, operand 16, single buffered']
    #allocation26 [shape = 's32[1]{0}', space=sflag, size = 0x4, scoped, tag = 'scoped memory for tpu_custom_call.1']
    #allocation27 [shape = 'u8[65536]{0}', space=vmem, size = 0x10000, scoped, tag = 'output window, operand 0']
    %22 = vsyncpa [#allocation5], 0
    %s23 = scalar_lea.sflag [#allocation5], 1
    %24 = vsyncpa %s23, 0
    %25 = vsyncpa [#allocation8], 0
    %26 = vsyncpa [#allocation11], 0
    %27 = vsyncpa [#allocation14], 0
    %28 = vsyncpa [#allocation17], 0
    %29 = vsyncpa [#allocation20], 0
    %30 = vsyncpa [#allocation23], 0
    %31 = vsyncpa [#allocation26], 0
    %32 = vsyncpa [#allocation6], 0
    %s33 = scalar_lea.sflag [#allocation6], 1
    %34 = vsyncpa %s33, 0
    loop: start=0, step=1, limit=4
    $region2: #{tpu_custom_call.1} parent=1 // loop_pre_header
      _
    $region3: #{tpu_custom_call.1} parent=1 // loop_header
      %s36 = sphi 0, %s40
      %p37 = scmp.ge.s32.totalorder %s36, 4
      %s46 = sphi 0, %s48
      %s49 = sphi 0, %s46
      %s50 = sphi 0, %s49
      %s66 = sphi 0, %s50
      %s70 = sphi 0, %s70
      %s72 = sphi 0, %s70
      %s73 = sphi 0, %s72
      %s87 = sphi 0, %s73
      %s91 = sphi 0, %s91
      %s93 = sphi 0, %s91
      %s94 = sphi 0, %s93
      %s108 = sphi 0, %s94
      %s112 = sphi 0, %s112
      %s114 = sphi 0, %s112
      %s115 = sphi 0, %s114
      %s129 = sphi 0, %s115
      %s133 = sphi 0, %s133
      %s135 = sphi 0, %s133
      %s136 = sphi 0, %s135
      %s150 = sphi 0, %s136
      %s154 = sphi 0, %s154
      %s156 = sphi 0, %s154
      %s157 = sphi 0, %s156
      %s171 = sphi 0, %s157
      %s175 = sphi 0, %s175
      %s177 = sphi 0, %s175
      %s178 = sphi 0, %s177
      %s192 = sphi 0, %s178
      %s196 = sphi 0, %s196
      %s198 = sphi 0, %s196
      %s199 = sphi 0, %s198
      %s213 = sphi 0, %s199
      %s217 = sphi 0, %s217
      %s219 = sphi 0, %s217
      %s220 = sphi 0, %s219
      %s234 = sphi 0, %s220
      %s238 = sphi 0, %s238
      %s240 = sphi 0, %s238
      %s241 = sphi 0, %s240
      %s255 = sphi 0, %s241
      %s259 = sphi 0, %s259
      %s261 = sphi 0, %s259
      %s262 = sphi 0, %s261
      %s276 = sphi 0, %s262
      %s280 = sphi 0, %s280
      %s282 = sphi 0, %s280
      %s283 = sphi 0, %s282
      %s297 = sphi 0, %s283
      %s301 = sphi 0, %s301
      %s303 = sphi 0, %s301
      %s304 = sphi 0, %s303
      %s318 = sphi 0, %s304
      %s322 = sphi 0, %s322
      %s324 = sphi 0, %s322
      %s325 = sphi 0, %s324
      %s339 = sphi 0, %s325
      %s343 = sphi 0, %s343
      %s345 = sphi 0, %s343
      %s346 = sphi 0, %s345
      %s360 = sphi 0, %s346
      %s364 = sphi 0, %s364
      %s366 = sphi 0, %s364
      %s367 = sphi 0, %s366
      %s381 = sphi 0, %s367
      %s385 = sphi 0, %s385
      %s387 = sphi 0, %s385
      %s388 = sphi 0, %s387
      %s402 = sphi 0, %s388
      %s408 = sphi 0, %s410
      %s411 = sphi 0, %s408
      %s412 = sphi 0, %s411
      %s428 = sphi 0, %s412
    $region4: #{tpu_custom_call.1} parent=1 // loop_header_branch
      %39 = sbr.rel (%p37) target = $region8
    $region5: #{tpu_custom_call.1} parent=1 // loop_body
      %s41 = ssub.s32 %s36, 1
      %s42 = ssub.s32 %s36, 2
      %s43 = sadd.s32 %s36, 1
      %s44 = ssub.s32 %s36, %s43
      %p45 = scmp.eq.s32.totalorder %s44, 0
      %s47 = sadd.s32 %s46, 1
      %s48 = scalar_select %p45, %s46, %s47
      %p51 = pneg %p45
      %p52 = scmp.eq.s32.totalorder %s36, 1
      %p53 = por %p51, %p52
      %p54 = scmp.ne.s32.totalorder %s46, %s49
      %p55 = scmp.eq.s32.totalorder %s36, 0
      %p56 = por %p54, %p55
      %p57 = scmp.ne.s32.totalorder %s46, %s49
      %p58 = scmp.eq.s32.totalorder %s41, 1
      %p59 = por %p57, %p58
      %p60 = scmp.ne.s32.totalorder %s49, %s50
      %p61 = scmp.eq.s32.totalorder %s41, 0
      %p62 = por %p60, %p61
      %p63 = scmp.ne.s32.totalorder %s49, %s50
      %p64 = scmp.eq.s32.totalorder %s42, 1
      %p65 = por %p63, %p64
      %p67 = scmp.ne.s32.totalorder %s50, %s66
      %p68 = scmp.eq.s32.totalorder %s42, 0
      %p69 = por %p67, %p68
      %s71 = sadd.s32 %s70, 1
      %p74 = scmp.eq.s32.totalorder %s36, 1
      %p75 = scmp.ne.s32.totalorder %s70, %s72
      %p76 = scmp.eq.s32.totalorder %s36, 0
      %p77 = por %p75, %p76
      %p78 = scmp.ne.s32.totalorder %s70, %s72
      %p79 = scmp.eq.s32.totalorder %s41, 1
      %p80 = por %p78, %p79
      %p81 = scmp.ne.s32.totalorder %s72, %s73
      %p82 = scmp.eq.s32.totalorder %s41, 0
      %p83 = por %p81, %p82
      %p84 = scmp.ne.s32.totalorder %s72, %s73
      %p85 = scmp.eq.s32.totalorder %s42, 1
      %p86 = por %p84, %p85
      %p88 = scmp.ne.s32.totalorder %s73, %s87
      %p89 = scmp.eq.s32.totalorder %s42, 0
      %p90 = por %p88, %p89
      %s92 = sadd.s32 %s91, 1
      %p95 = scmp.eq.s32.totalorder %s36, 1
      %p96 = scmp.ne.s32.totalorder %s91, %s93
      %p97 = scmp.eq.s32.totalorder %s36, 0
      %p98 = por %p96, %p97
      %p99 = scmp.ne.s32.totalorder %s91, %s93
      %p100 = scmp.eq.s32.totalorder %s41, 1
      %p101 = por %p99, %p100
      %p102 = scmp.ne.s32.totalorder %s93, %s94
      %p103 = scmp.eq.s32.totalorder %s41, 0
      %p104 = por %p102, %p103
      %p105 = scmp.ne.s32.totalorder %s93, %s94
      %p106 = scmp.eq.s32.totalorder %s42, 1
      %p107 = por %p105, %p106
      %p109 = scmp.ne.s32.totalorder %s94, %s108
      %p110 = scmp.eq.s32.totalorder %s42, 0
      %p111 = por %p109, %p110
      %s113 = sadd.s32 %s112, 1
      %p116 = scmp.eq.s32.totalorder %s36, 1
      %p117 = scmp.ne.s32.totalorder %s112, %s114
      %p118 = scmp.eq.s32.totalorder %s36, 0
      %p119 = por %p117, %p118
      %p120 = scmp.ne.s32.totalorder %s112, %s114
      %p121 = scmp.eq.s32.totalorder %s41, 1
      %p122 = por %p120, %p121
      %p123 = scmp.ne.s32.totalorder %s114, %s115
      %p124 = scmp.eq.s32.totalorder %s41, 0
      %p125 = por %p123, %p124
      %p126 = scmp.ne.s32.totalorder %s114, %s115
      %p127 = scmp.eq.s32.totalorder %s42, 1
      %p128 = por %p126, %p127
      %p130 = scmp.ne.s32.totalorder %s115, %s129
      %p131 = scmp.eq.s32.totalorder %s42, 0
      %p132 = por %p130, %p131
      %s134 = sadd.s32 %s133, 1
      %p137 = scmp.eq.s32.totalorder %s36, 1
      %p138 = scmp.ne.s32.totalorder %s133, %s135
      %p139 = scmp.eq.s32.totalorder %s36, 0
      %p140 = por %p138, %p139
      %p141 = scmp.ne.s32.totalorder %s133, %s135
      %p142 = scmp.eq.s32.totalorder %s41, 1
      %p143 = por %p141, %p142
      %p144 = scmp.ne.s32.totalorder %s135, %s136
      %p145 = scmp.eq.s32.totalorder %s41, 0
      %p146 = por %p144, %p145
      %p147 = scmp.ne.s32.totalorder %s135, %s136
      %p148 = scmp.eq.s32.totalorder %s42, 1
      %p149 = por %p147, %p148
      %p151 = scmp.ne.s32.totalorder %s136, %s150
      %p152 = scmp.eq.s32.totalorder %s42, 0
      %p153 = por %p151, %p152
      %s155 = sadd.s32 %s154, 1
      %p158 = scmp.eq.s32.totalorder %s36, 1
      %p159 = scmp.ne.s32.totalorder %s154, %s156
      %p160 = scmp.eq.s32.totalorder %s36, 0
      %p161 = por %p159, %p160
      %p162 = scmp.ne.s32.totalorder %s154, %s156
      %p163 = scmp.eq.s32.totalorder %s41, 1
      %p164 = por %p162, %p163
      %p165 = scmp.ne.s32.totalorder %s156, %s157
      %p166 = scmp.eq.s32.totalorder %s41, 0
      %p167 = por %p165, %p166
      %p168 = scmp.ne.s32.totalorder %s156, %s157
      %p169 = scmp.eq.s32.totalorder %s42, 1
      %p170 = por %p168, %p169
      %p172 = scmp.ne.s32.totalorder %s157, %s171
      %p173 = scmp.eq.s32.totalorder %s42, 0
      %p174 = por %p172, %p173
      %s176 = sadd.s32 %s175, 1
      %p179 = scmp.eq.s32.totalorder %s36, 1
      %p180 = scmp.ne.s32.totalorder %s175, %s177
      %p181 = scmp.eq.s32.totalorder %s36, 0
      %p182 = por %p180, %p181
      %p183 = scmp.ne.s32.totalorder %s175, %s177
      %p184 = scmp.eq.s32.totalorder %s41, 1
      %p185 = por %p183, %p184
      %p186 = scmp.ne.s32.totalorder %s177, %s178
      %p187 = scmp.eq.s32.totalorder %s41, 0
      %p188 = por %p186, %p187
      %p189 = scmp.ne.s32.totalorder %s177, %s178
      %p190 = scmp.eq.s32.totalorder %s42, 1
      %p191 = por %p189, %p190
      %p193 = scmp.ne.s32.totalorder %s178, %s192
      %p194 = scmp.eq.s32.totalorder %s42, 0
      %p195 = por %p193, %p194
      %s197 = sadd.s32 %s196, 1
      %p200 = scmp.eq.s32.totalorder %s36, 1
      %p201 = scmp.ne.s32.totalorder %s196, %s198
      %p202 = scmp.eq.s32.totalorder %s36, 0
      %p203 = por %p201, %p202
      %p204 = scmp.ne.s32.totalorder %s196, %s198
      %p205 = scmp.eq.s32.totalorder %s41, 1
      %p206 = por %p204, %p205
      %p207 = scmp.ne.s32.totalorder %s198, %s199
      %p208 = scmp.eq.s32.totalorder %s41, 0
      %p209 = por %p207, %p208
      %p210 = scmp.ne.s32.totalorder %s198, %s199
      %p211 = scmp.eq.s32.totalorder %s42, 1
      %p212 = por %p210, %p211
      %p214 = scmp.ne.s32.totalorder %s199, %s213
      %p215 = scmp.eq.s32.totalorder %s42, 0
      %p216 = por %p214, %p215
      %s218 = sadd.s32 %s217, 1
      %p221 = scmp.eq.s32.totalorder %s36, 1
      %p222 = scmp.ne.s32.totalorder %s217, %s219
      %p223 = scmp.eq.s32.totalorder %s36, 0
      %p224 = por %p222, %p223
      %p225 = scmp.ne.s32.totalorder %s217, %s219
      %p226 = scmp.eq.s32.totalorder %s41, 1
      %p227 = por %p225, %p226
      %p228 = scmp.ne.s32.totalorder %s219, %s220
      %p229 = scmp.eq.s32.totalorder %s41, 0
      %p230 = por %p228, %p229
      %p231 = scmp.ne.s32.totalorder %s219, %s220
      %p232 = scmp.eq.s32.totalorder %s42, 1
      %p233 = por %p231, %p232
      %p235 = scmp.ne.s32.totalorder %s220, %s234
      %p236 = scmp.eq.s32.totalorder %s42, 0
      %p237 = por %p235, %p236
      %s239 = sadd.s32 %s238, 1
      %p242 = scmp.eq.s32.totalorder %s36, 1
      %p243 = scmp.ne.s32.totalorder %s238, %s240
      %p244 = scmp.eq.s32.totalorder %s36, 0
      %p245 = por %p243, %p244
      %p246 = scmp.ne.s32.totalorder %s238, %s240
      %p247 = scmp.eq.s32.totalorder %s41, 1
      %p248 = por %p246, %p247
      %p249 = scmp.ne.s32.totalorder %s240, %s241
      %p250 = scmp.eq.s32.totalorder %s41, 0
      %p251 = por %p249, %p250
      %p252 = scmp.ne.s32.totalorder %s240, %s241
      %p253 = scmp.eq.s32.totalorder %s42, 1
      %p254 = por %p252, %p253
      %p256 = scmp.ne.s32.totalorder %s241, %s255
      %p257 = scmp.eq.s32.totalorder %s42, 0
      %p258 = por %p256, %p257
      %s260 = sadd.s32 %s259, 1
      %p263 = scmp.eq.s32.totalorder %s36, 1
      %p264 = scmp.ne.s32.totalorder %s259, %s261
      %p265 = scmp.eq.s32.totalorder %s36, 0
      %p266 = por %p264, %p265
      %p267 = scmp.ne.s32.totalorder %s259, %s261
      %p268 = scmp.eq.s32.totalorder %s41, 1
      %p269 = por %p267, %p268
      %p270 = scmp.ne.s32.totalorder %s261, %s262
      %p271 = scmp.eq.s32.totalorder %s41, 0
      %p272 = por %p270, %p271
      %p273 = scmp.ne.s32.totalorder %s261, %s262
      %p274 = scmp.eq.s32.totalorder %s42, 1
      %p275 = por %p273, %p274
      %p277 = scmp.ne.s32.totalorder %s262, %s276
      %p278 = scmp.eq.s32.totalorder %s42, 0
      %p279 = por %p277, %p278
      %s281 = sadd.s32 %s280, 1
      %p284 = scmp.eq.s32.totalorder %s36, 1
      %p285 = scmp.ne.s32.totalorder %s280, %s282
      %p286 = scmp.eq.s32.totalorder %s36, 0
      %p287 = por %p285, %p286
      %p288 = scmp.ne.s32.totalorder %s280, %s282
      %p289 = scmp.eq.s32.totalorder %s41, 1
      %p290 = por %p288, %p289
      %p291 = scmp.ne.s32.totalorder %s282, %s283
      %p292 = scmp.eq.s32.totalorder %s41, 0
      %p293 = por %p291, %p292
      %p294 = scmp.ne.s32.totalorder %s282, %s283
      %p295 = scmp.eq.s32.totalorder %s42, 1
      %p296 = por %p294, %p295
      %p298 = scmp.ne.s32.totalorder %s283, %s297
      %p299 = scmp.eq.s32.totalorder %s42, 0
      %p300 = por %p298, %p299
      %s302 = sadd.s32 %s301, 1
      %p305 = scmp.eq.s32.totalorder %s36, 1
      %p306 = scmp.ne.s32.totalorder %s301, %s303
      %p307 = scmp.eq.s32.totalorder %s36, 0
      %p308 = por %p306, %p307
      %p309 = scmp.ne.s32.totalorder %s301, %s303
      %p310 = scmp.eq.s32.totalorder %s41, 1
      %p311 = por %p309, %p310
      %p312 = scmp.ne.s32.totalorder %s303, %s304
      %p313 = scmp.eq.s32.totalorder %s41, 0
      %p314 = por %p312, %p313
      %p315 = scmp.ne.s32.totalorder %s303, %s304
      %p316 = scmp.eq.s32.totalorder %s42, 1
      %p317 = por %p315, %p316
      %p319 = scmp.ne.s32.totalorder %s304, %s318
      %p320 = scmp.eq.s32.totalorder %s42, 0
      %p321 = por %p319, %p320
      %s323 = sadd.s32 %s322, 1
      %p326 = scmp.eq.s32.totalorder %s36, 1
      %p327 = scmp.ne.s32.totalorder %s322, %s324
      %p328 = scmp.eq.s32.totalorder %s36, 0
      %p329 = por %p327, %p328
      %p330 = scmp.ne.s32.totalorder %s322, %s324
      %p331 = scmp.eq.s32.totalorder %s41, 1
      %p332 = por %p330, %p331
      %p333 = scmp.ne.s32.totalorder %s324, %s325
      %p334 = scmp.eq.s32.totalorder %s41, 0
      %p335 = por %p333, %p334
      %p336 = scmp.ne.s32.totalorder %s324, %s325
      %p337 = scmp.eq.s32.totalorder %s42, 1
      %p338 = por %p336, %p337
      %p340 = scmp.ne.s32.totalorder %s325, %s339
      %p341 = scmp.eq.s32.totalorder %s42, 0
      %p342 = por %p340, %p341
      %s344 = sadd.s32 %s343, 1
      %p347 = scmp.eq.s32.totalorder %s36, 1
      %p348 = scmp.ne.s32.totalorder %s343, %s345
      %p349 = scmp.eq.s32.totalorder %s36, 0
      %p350 = por %p348, %p349
      %p351 = scmp.ne.s32.totalorder %s343, %s345
      %p352 = scmp.eq.s32.totalorder %s41, 1
      %p353 = por %p351, %p352
      %p354 = scmp.ne.s32.totalorder %s345, %s346
      %p355 = scmp.eq.s32.totalorder %s41, 0
      %p356 = por %p354, %p355
      %p357 = scmp.ne.s32.totalorder %s345, %s346
      %p358 = scmp.eq.s32.totalorder %s42, 1
      %p359 = por %p357, %p358
      %p361 = scmp.ne.s32.totalorder %s346, %s360
      %p362 = scmp.eq.s32.totalorder %s42, 0
      %p363 = por %p361, %p362
      %s365 = sadd.s32 %s364, 1
      %p368 = scmp.eq.s32.totalorder %s36, 1
      %p369 = scmp.ne.s32.totalorder %s364, %s366
      %p370 = scmp.eq.s32.totalorder %s36, 0
      %p371 = por %p369, %p370
      %p372 = scmp.ne.s32.totalorder %s364, %s366
      %p373 = scmp.eq.s32.totalorder %s41, 1
      %p374 = por %p372, %p373
      %p375 = scmp.ne.s32.totalorder %s366, %s367
      %p376 = scmp.eq.s32.totalorder %s41, 0
      %p377 = por %p375, %p376
      %p378 = scmp.ne.s32.totalorder %s366, %s367
      %p379 = scmp.eq.s32.totalorder %s42, 1
      %p380 = por %p378, %p379
      %p382 = scmp.ne.s32.totalorder %s367, %s381
      %p383 = scmp.eq.s32.totalorder %s42, 0
      %p384 = por %p382, %p383
      %s386 = sadd.s32 %s385, 1
      %p389 = scmp.eq.s32.totalorder %s36, 1
      %p390 = scmp.ne.s32.totalorder %s385, %s387
      %p391 = scmp.eq.s32.totalorder %s36, 0
      %p392 = por %p390, %p391
      %p393 = scmp.ne.s32.totalorder %s385, %s387
      %p394 = scmp.eq.s32.totalorder %s41, 1
      %p395 = por %p393, %p394
      %p396 = scmp.ne.s32.totalorder %s387, %s388
      %p397 = scmp.eq.s32.totalorder %s41, 0
      %p398 = por %p396, %p397
      %p399 = scmp.ne.s32.totalorder %s387, %s388
      %p400 = scmp.eq.s32.totalorder %s42, 1
      %p401 = por %p399, %p400
      %p403 = scmp.ne.s32.totalorder %s388, %s402
      %p404 = scmp.eq.s32.totalorder %s42, 0
      %p405 = por %p403, %p404
      %s406 = ssub.s32 %s36, %s43
      %p407 = scmp.eq.s32.totalorder %s406, 0
      %s409 = sadd.s32 %s408, 1
      %s410 = scalar_select %p407, %s408, %s409
      %p413 = pneg %p407
      %p414 = scmp.eq.s32.totalorder %s36, 1
      %p415 = por %p413, %p414
      %p416 = scmp.ne.s32.totalorder %s408, %s411
      %p417 = scmp.eq.s32.totalorder %s36, 0
      %p418 = por %p416, %p417
      %p419 = scmp.ne.s32.totalorder %s408, %s411
      %p420 = scmp.eq.s32.totalorder %s41, 1
      %p421 = por %p419, %p420
      %p422 = scmp.ne.s32.totalorder %s411, %s412
      %p423 = scmp.eq.s32.totalorder %s41, 0
      %p424 = por %p422, %p423
      %p425 = scmp.ne.s32.totalorder %s411, %s412
      %p426 = scmp.eq.s32.totalorder %s42, 1
      %p427 = por %p425, %p426
      %p429 = scmp.ne.s32.totalorder %s412, %s428
      %p430 = scmp.eq.s32.totalorder %s42, 0
      %p431 = por %p429, %p430
      %p432 = scmp.le.s32.totalorder 1, %s36
      %p433 = scmp.lt.s32.totalorder %s36, 3
      %p434 = pnand %p432, %p433
      %p435 = pneg %p434
      // Predicated region
      $region9: #{tpu_custom_call.1} parent=5 // pred_check
        _
      $region10: #{tpu_custom_call.1} parent=5 // pred_check_branch
        %437 = sbr.rel (%p434) target = $region12
      $region11: #{tpu_custom_call.1} parent=5 // pred_region
        %s438 = ssub.s32 %s36, 1
        // Predicated region
        $region13: #{tpu_custom_call.1} parent=11 // pred_check
          %p439 = pneg %p83
        $region14: #{tpu_custom_call.1} parent=11 // pred_check_branch
          %441 = sbr.rel (%p439) target = $region16
        $region15: #{tpu_custom_call.1} parent=11 // pred_region
          %443 = vsyncadd [#allocation8], 0
          %s444 = sshll.u32 %s1, 4
          %s445 = int_to_ptr.hbm [resolvable:$true] %s444
          %s446 = sshll.u32 [#allocation7], 4
          %s447 = int_to_ptr.vmem [resolvable:$true] %s446
          %452 = dma.hbm_to_vmem [thread:$0]  %s445, 2048, %s447, [#allocation8], 512, 512, 32
        $region16: #{tpu_custom_call.1} parent=11 // pred_fallthru
          _
        // Predicated region
        $region17: #{tpu_custom_call.1} parent=11 // pred_check
          %p453 = pneg %p104
        $region18: #{tpu_custom_call.1} parent=11 // pred_check_branch
          %455 = sbr.rel (%p453) target = $region20
        $region19: #{tpu_custom_call.1} parent=11 // pred_region
          %457 = vsyncadd [#allocation8], 0
          %s459 = sshll.u32 %s2, 4
          %s460 = int_to_ptr.hbm [resolvable:$true] %s459
          %s461 = sshll.u32 [#allocation9], 4
          %s462 = int_to_ptr.vmem [resolvable:$true] %s461
          %464 = dma.hbm_to_vmem [thread:$0]  %s460, 64, %s462, [#allocation8]
        $region20: #{tpu_custom_call.1} parent=11 // pred_fallthru
          _
        // Predicated region
        $region21: #{tpu_custom_call.1} parent=11 // pred_check
          %p465 = pneg %p125
        $region22: #{tpu_custom_call.1} parent=11 // pred_check_branch
          %467 = sbr.rel (%p465) target = $region24
        $region23: #{tpu_custom_call.1} parent=11 // pred_region
          %469 = vsyncadd [#allocation11], 0
          %s471 = sshll.u32 %s3, 4
          %s472 = int_to_ptr.hbm [resolvable:$true] %s471
          %s473 = sshll.u32 [#allocation10], 4
          %s474 = int_to_ptr.vmem [resolvable:$true] %s473
          %476 = dma.hbm_to_vmem [thread:$0]  %s472, 512, %s474, [#allocation11]
        $region24: #{tpu_custom_call.1} parent=11 // pred_fallthru
          _
        // Predicated region
        $region25: #{tpu_custom_call.1} parent=11 // pred_check
          %p477 = pneg %p146
        $region26: #{tpu_custom_call.1} parent=11 // pred_check_branch
          %479 = sbr.rel (%p477) target = $region28
        $region27: #{tpu_custom_call.1} parent=11 // pred_region
          %481 = vsyncadd [#allocation11], 0
          %s483 = sshll.u32 %s4, 4
          %s484 = int_to_ptr.hbm [resolvable:$true] %s483
          %s485 = sshll.u32 [#allocation12], 4
          %s486 = int_to_ptr.vmem [resolvable:$true] %s485
          %488 = dma.hbm_to_vmem [thread:$0]  %s484, 64, %s486, [#allocation11]
        $region28: #{tpu_custom_call.1} parent=11 // pred_fallthru
          _
        // Predicated region
        $region29: #{tpu_custom_call.1} parent=11 // pred_check
          %p489 = pneg %p167
        $region30: #{tpu_custom_call.1} parent=11 // pred_check_branch
          %491 = sbr.rel (%p489) target = $region32
        $region31: #{tpu_custom_call.1} parent=11 // pred_region
          %493 = vsyncadd [#allocation14], 0
          %s495 = sshll.u32 %s5, 4
          %s496 = int_to_ptr.hbm [resolvable:$true] %s495
          %s497 = sshll.u32 [#allocation13], 4
          %s498 = int_to_ptr.vmem [resolvable:$true] %s497
          %500 = dma.hbm_to_vmem [thread:$0]  %s496, 512, %s498, [#allocation14]
        $region32: #{tpu_custom_call.1} parent=11 // pred_fallthru
          _
        // Predicated region
        $region33: #{tpu_custom_call.1} parent=11 // pred_check
          %p501 = pneg %p188
        $region34: #{tpu_custom_call.1} parent=11 // pred_check_branch
          %503 = sbr.rel (%p501) target = $region36
        $region35: #{tpu_custom_call.1} parent=11 // pred_region
          _
        $region36: #{tpu_custom_call.1} parent=11 // pred_fallthru
          _
        // Predicated region
        $region37: #{tpu_custom_call.1} parent=11 // pred_check
          %p504 = pneg %p209
        $region38: #{tpu_custom_call.1} parent=11 // pred_check_branch
          %506 = sbr.rel (%p504) target = $region40
        $region39: #{tpu_custom_call.1} parent=11 // pred_region
          %508 = vsyncadd [#allocation14], 0
          %s509 = sshll.u32 %s7, 4
          %s510 = int_to_ptr.hbm [resolvable:$true] %s509
          %s511 = sshll.u32 [#allocation15], 4
          %s512 = int_to_ptr.vmem [resolvable:$true] %s511
          %517 = dma.hbm_to_vmem [thread:$0]  %s510, 1024, %s512, [#allocation14], 512, 512, 32
        $region40: #{tpu_custom_call.1} parent=11 // pred_fallthru
          _
        // Predicated region
        $region41: #{tpu_custom_call.1} parent=11 // pred_check
          %p518 = pneg %p230
        $region42: #{tpu_custom_call.1} parent=11 // pred_check_branch
          %520 = sbr.rel (%p518) target = $region44
        $region43: #{tpu_custom_call.1} parent=11 // pred_region
          %522 = vsyncadd [#allocation17], 0
          %s524 = sshll.u32 %s8, 4
          %s525 = int_to_ptr.hbm [resolvable:$true] %s524
          %s526 = sshll.u32 [#allocation16], 4
          %s527 = int_to_ptr.vmem [resolvable:$true] %s526
          %529 = dma.hbm_to_vmem [thread:$0]  %s525, 64, %s527, [#allocation17]
        $region44: #{tpu_custom_call.1} parent=11 // pred_fallthru
          _
        // Predicated region
        $region45: #{tpu_custom_call.1} parent=11 // pred_check
          %p530 = pneg %p251
        $region46: #{tpu_custom_call.1} parent=11 // pred_check_branch
          %532 = sbr.rel (%p530) target = $region48
        $region47: #{tpu_custom_call.1} parent=11 // pred_region
          %534 = vsyncadd [#allocation17], 0
          %s535 = sshll.u32 %s9, 4
          %s536 = int_to_ptr.hbm [resolvable:$true] %s535
          %s537 = sshll.u32 [#allocation18], 4
          %s538 = int_to_ptr.vmem [resolvable:$true] %s537
          %543 = dma.hbm_to_vmem [thread:$0]  %s536, 1024, %s538, [#allocation17], 512, 512, 32
        $region48: #{tpu_custom_call.1} parent=11 // pred_fallthru
          _
        // Predicated region
        $region49: #{tpu_custom_call.1} parent=11 // pred_check
          %p544 = pneg %p272
        $region50: #{tpu_custom_call.1} parent=11 // pred_check_branch
          %546 = sbr.rel (%p544) target = $region52
        $region51: #{tpu_custom_call.1} parent=11 // pred_region
          _
        $region52: #{tpu_custom_call.1} parent=11 // pred_fallthru
          _
        // Predicated region
        $region53: #{tpu_custom_call.1} parent=11 // pred_check
          %p547 = pneg %p293
        $region54: #{tpu_custom_call.1} parent=11 // pred_check_branch
          %549 = sbr.rel (%p547) target = $region56
        $region55: #{tpu_custom_call.1} parent=11 // pred_region
          %551 = vsyncadd [#allocation20], 0
          %s552 = sshll.u32 %s11, 4
          %s553 = int_to_ptr.hbm [resolvable:$true] %s552
          %s554 = sshll.u32 [#allocation19], 4
          %s555 = int_to_ptr.vmem [resolvable:$true] %s554
          %560 = dma.hbm_to_vmem [thread:$0]  %s553, 1536, %s555, [#allocation20], 512, 512, 32
        $region56: #{tpu_custom_call.1} parent=11 // pred_fallthru
          _
        // Predicated region
        $region57: #{tpu_custom_call.1} parent=11 // pred_check
          %p561 = pneg %p314
        $region58: #{tpu_custom_call.1} parent=11 // pred_check_branch
          %563 = sbr.rel (%p561) target = $region60
        $region59: #{tpu_custom_call.1} parent=11 // pred_region
          %565 = vsyncadd [#allocation20], 0
          %s567 = sshll.u32 %s12, 4
          %s568 = int_to_ptr.hbm [resolvable:$true] %s567
          %s569 = sshll.u32 [#allocation21], 4
          %s570 = int_to_ptr.vmem [resolvable:$true] %s569
          %572 = dma.hbm_to_vmem [thread:$0]  %s568, 64, %s570, [#allocation20]
        $region60: #{tpu_custom_call.1} parent=11 // pred_fallthru
          _
        // Predicated region
        $region61: #{tpu_custom_call.1} parent=11 // pred_check
          %p573 = pneg %p335
        $region62: #{tpu_custom_call.1} parent=11 // pred_check_branch
          %575 = sbr.rel (%p573) target = $region64
        $region63: #{tpu_custom_call.1} parent=11 // pred_region
          %577 = vsyncadd [#allocation23], 0
          %s578 = sshll.u32 %s13, 4
          %s579 = int_to_ptr.hbm [resolvable:$true] %s578
          %s580 = sshll.u32 [#allocation22], 4
          %s581 = int_to_ptr.vmem [resolvable:$true] %s580
          %586 = dma.hbm_to_vmem [thread:$0]  %s579, 1536, %s581, [#allocation23], 512, 512, 32
        $region64: #{tpu_custom_call.1} parent=11 // pred_fallthru
          _
        // Predicated region
        $region65: #{tpu_custom_call.1} parent=11 // pred_check
          %p587 = pneg %p356
        $region66: #{tpu_custom_call.1} parent=11 // pred_check_branch
          %589 = sbr.rel (%p587) target = $region68
        $region67: #{tpu_custom_call.1} parent=11 // pred_region
          _
        $region68: #{tpu_custom_call.1} parent=11 // pred_fallthru
          _
        // Predicated region
        $region69: #{tpu_custom_call.1} parent=11 // pred_check
          %p590 = pneg %p377
        $region70: #{tpu_custom_call.1} parent=11 // pred_check_branch
          %592 = sbr.rel (%p590) target = $region72
        $region71: #{tpu_custom_call.1} parent=11 // pred_region
          %594 = vsyncadd [#allocation23], 0
          %s595 = sshll.u32 %s15, 4
          %s596 = int_to_ptr.hbm [resolvable:$true] %s595
          %s597 = sshll.u32 [#allocation24], 4
          %s598 = int_to_ptr.vmem [resolvable:$true] %s597
          %603 = dma.hbm_to_vmem [thread:$0]  %s596, 32768, %s598, [#allocation23], 512, 512, 32
        $region72: #{tpu_custom_call.1} parent=11 // pred_fallthru
          _
        // Predicated region
        $region73: #{tpu_custom_call.1} parent=11 // pred_check
          %p604 = pneg %p398
        $region74: #{tpu_custom_call.1} parent=11 // pred_check_branch
          %606 = sbr.rel (%p604) target = $region76
        $region75: #{tpu_custom_call.1} parent=11 // pred_region
          %608 = vsyncadd [#allocation26], 0
          %s610 = sshll.u32 %s16, 4
          %s611 = int_to_ptr.hbm [resolvable:$true] %s610
          %s612 = sshll.u32 [#allocation25], 4
          %s613 = int_to_ptr.vmem [resolvable:$true] %s612
          %615 = dma.hbm_to_vmem [thread:$0]  %s611, 64, %s613, [#allocation26]
        $region76: #{tpu_custom_call.1} parent=11 // pred_fallthru
          _
      $region12: #{tpu_custom_call.1} parent=5 // pred_fallthru
        _
      %p616 = scmp.lt.s32.totalorder %s36, 2
      // Predicated region
      $region77: #{tpu_custom_call.1} parent=5 // pred_check
        %p617 = pneg %p616
      $region78: #{tpu_custom_call.1} parent=5 // pred_check_branch
        %619 = sbr.rel (%p617) target = $region80
      $region79: #{tpu_custom_call.1} parent=5 // pred_region
        // Predicated region
        $region81: #{tpu_custom_call.1} parent=79 // pred_check
          %p620 = pneg %p56
        $region82: #{tpu_custom_call.1} parent=79 // pred_check_branch
          %622 = sbr.rel (%p620) target = $region84
        $region83: #{tpu_custom_call.1} parent=79 // pred_region
          %s623 = sand.u32 %s46, 1
          %s624 = scalar_lea.sflag [#allocation5], %s623
          %s625 = sand.u32 %s46, 1
          %s626 = smul.addr %s625, 64
          %s627 = scalar_lea.vmem [#allocation4], %s626
          %629 = vsyncadd %s624, 0
          %s630 = smul.addr %s36, 8
          %s631 = smul.addr %s630, 8
          %s632 = scalar_lea.hbm %s0, %s631
          %s633 = sshll.u32 %s632, 4
          %s634 = int_to_ptr.hbm [resolvable:$true] %s633
          %s635 = sshll.u32 %s627, 4
          %s636 = int_to_ptr.vmem [resolvable:$true] %s635
          %641 = dma.hbm_to_vmem [thread:$0]  %s634, 1024, %s636, %s624, 512, 512, 32
        $region84: #{tpu_custom_call.1} parent=79 // pred_fallthru
          _
      $region80: #{tpu_custom_call.1} parent=5 // pred_fallthru
        _
      %p642 = scmp.le.s32.totalorder 1, %s36
      %p643 = scmp.lt.s32.totalorder %s36, 3
      %p644 = pnand %p642, %p643
      %p645 = pneg %p644
      // Predicated region
      $region85: #{tpu_custom_call.1} parent=5 // pred_check
        _
      $region86: #{tpu_custom_call.1} parent=5 // pred_check_branch
        %647 = sbr.rel (%p644) target = $region88
      $region87: #{tpu_custom_call.1} parent=5 // pred_region
        %s648 = ssub.s32 %s36, 1
        %s649 = sand.u32 %s49, 1
        %s650 = scalar_lea.sflag [#allocation5], %s649
        %s651 = sand.u32 %s49, 1
        %s652 = smul.addr %s651, 64
        %s653 = scalar_lea.vmem [#allocation4], %s652
        // Predicated region
        $region89: #{tpu_custom_call.1} parent=87 // pred_check
          %p654 = pneg %p62
        $region90: #{tpu_custom_call.1} parent=87 // pred_check_branch
          %656 = sbr.rel (%p654) target = $region92
        $region91: #{tpu_custom_call.1} parent=87 // pred_region
          %658 = dma.done %s650, 1024
        $region92: #{tpu_custom_call.1} parent=87 // pred_fallthru
          _
        // Predicated region
        $region93: #{tpu_custom_call.1} parent=87 // pred_check
          %p659 = pneg %p83
        $region94: #{tpu_custom_call.1} parent=87 // pred_check_branch
          %661 = sbr.rel (%p659) target = $region96
        $region95: #{tpu_custom_call.1} parent=87 // pred_region
          %663 = dma.done [#allocation8], 2048
        $region96: #{tpu_custom_call.1} parent=87 // pred_fallthru
          _
        // Predicated region
        $region97: #{tpu_custom_call.1} parent=87 // pred_check
          %p664 = pneg %p104
        $region98: #{tpu_custom_call.1} parent=87 // pred_check_branch
          %666 = sbr.rel (%p664) target = $region100
        $region99: #{tpu_custom_call.1} parent=87 // pred_region
          %668 = dma.done [#allocation8], 64
        $region100: #{tpu_custom_call.1} parent=87 // pred_fallthru
          _
        // Predicated region
        $region101: #{tpu_custom_call.1} parent=87 // pred_check
          %p669 = pneg %p125
        $region102: #{tpu_custom_call.1} parent=87 // pred_check_branch
          %671 = sbr.rel (%p669) target = $region104
        $region103: #{tpu_custom_call.1} parent=87 // pred_region
          %673 = dma.done [#allocation11], 512
        $region104: #{tpu_custom_call.1} parent=87 // pred_fallthru
          _
        // Predicated region
        $region105: #{tpu_custom_call.1} parent=87 // pred_check
          %p674 = pneg %p146
        $region106: #{tpu_custom_call.1} parent=87 // pred_check_branch
          %676 = sbr.rel (%p674) target = $region108
        $region107: #{tpu_custom_call.1} parent=87 // pred_region
          %678 = dma.done [#allocation11], 64
        $region108: #{tpu_custom_call.1} parent=87 // pred_fallthru
          _
        // Predicated region
        $region109: #{tpu_custom_call.1} parent=87 // pred_check
          %p679 = pneg %p167
        $region110: #{tpu_custom_call.1} parent=87 // pred_check_branch
          %681 = sbr.rel (%p679) target = $region112
        $region111: #{tpu_custom_call.1} parent=87 // pred_region
          %683 = dma.done [#allocation14], 512
        $region112: #{tpu_custom_call.1} parent=87 // pred_fallthru
          _
        // Predicated region
        $region113: #{tpu_custom_call.1} parent=87 // pred_check
          %p684 = pneg %p209
        $region114: #{tpu_custom_call.1} parent=87 // pred_check_branch
          %686 = sbr.rel (%p684) target = $region116
        $region115: #{tpu_custom_call.1} parent=87 // pred_region
          %688 = dma.done [#allocation14], 1024
        $region116: #{tpu_custom_call.1} parent=87 // pred_fallthru
          _
        // Predicated region
        $region117: #{tpu_custom_call.1} parent=87 // pred_check
          %p689 = pneg %p230
        $region118: #{tpu_custom_call.1} parent=87 // pred_check_branch
          %691 = sbr.rel (%p689) target = $region120
        $region119: #{tpu_custom_call.1} parent=87 // pred_region
          %693 = dma.done [#allocation17], 64
        $region120: #{tpu_custom_call.1} parent=87 // pred_fallthru
          _
        // Predicated region
        $region121: #{tpu_custom_call.1} parent=87 // pred_check
          %p694 = pneg %p251
        $region122: #{tpu_custom_call.1} parent=87 // pred_check_branch
          %696 = sbr.rel (%p694) target = $region124
        $region123: #{tpu_custom_call.1} parent=87 // pred_region
          %698 = dma.done [#allocation17], 1024
        $region124: #{tpu_custom_call.1} parent=87 // pred_fallthru
          _
        // Predicated region
        $region125: #{tpu_custom_call.1} parent=87 // pred_check
          %p699 = pneg %p293
        $region126: #{tpu_custom_call.1} parent=87 // pred_check_branch
          %701 = sbr.rel (%p699) target = $region128
        $region127: #{tpu_custom_call.1} parent=87 // pred_region
          %703 = dma.done [#allocation20], 1536
        $region128: #{tpu_custom_call.1} parent=87 // pred_fallthru
          _
        // Predicated region
        $region129: #{tpu_custom_call.1} parent=87 // pred_check
          %p704 = pneg %p314
        $region130: #{tpu_custom_call.1} parent=87 // pred_check_branch
          %706 = sbr.rel (%p704) target = $region132
        $region131: #{tpu_custom_call.1} parent=87 // pred_region
          %708 = dma.done [#allocation20], 64
        $region132: #{tpu_custom_call.1} parent=87 // pred_fallthru
          _
        // Predicated region
        $region133: #{tpu_custom_call.1} parent=87 // pred_check
          %p709 = pneg %p335
        $region134: #{tpu_custom_call.1} parent=87 // pred_check_branch
          %711 = sbr.rel (%p709) target = $region136
        $region135: #{tpu_custom_call.1} parent=87 // pred_region
          %713 = dma.done [#allocation23], 1536
        $region136: #{tpu_custom_call.1} parent=87 // pred_fallthru
          _
        // Predicated region
        $region137: #{tpu_custom_call.1} parent=87 // pred_check
          %p714 = pneg %p377
        $region138: #{tpu_custom_call.1} parent=87 // pred_check_branch
          %716 = sbr.rel (%p714) target = $region140
        $region139: #{tpu_custom_call.1} parent=87 // pred_region
          %718 = dma.done [#allocation23], 32768
        $region140: #{tpu_custom_call.1} parent=87 // pred_fallthru
          _
        // Predicated region
        $region141: #{tpu_custom_call.1} parent=87 // pred_check
          %p719 = pneg %p398
        $region142: #{tpu_custom_call.1} parent=87 // pred_check_branch
          %721 = sbr.rel (%p719) target = $region144
        $region143: #{tpu_custom_call.1} parent=87 // pred_region
          %723 = dma.done [#allocation26], 64
        $region144: #{tpu_custom_call.1} parent=87 // pred_fallthru
          _
        %s724 = sand.u32 %s49, 1
        %s725 = scalar_lea.sflag [#allocation5], %s724
        %s726 = sand.u32 %s49, 1
        %s727 = smul.addr %s726, 64
        %s728 = scalar_lea.vmem [#allocation4], %s727
        %p729 = pneg %p62
        %p730 = pneg %p59
        %p731 = pneg %p83
        %p732 = pneg %p80
        %p733 = pneg %p104
        %p734 = pneg %p101
        %p735 = pneg %p125
        %p736 = pneg %p122
        %p737 = pneg %p146
        %p738 = pneg %p143
        %p739 = pneg %p167
        %p740 = pneg %p164
        %p741 = pneg %p188
        %p742 = pneg %p185
        %p743 = pneg %p209
        %p744 = pneg %p206
        %p745 = pneg %p230
        %p746 = pneg %p227
        %p747 = pneg %p251
        %p748 = pneg %p248
        %p749 = pneg %p272
        %p750 = pneg %p269
        %p751 = pneg %p293
        %p752 = pneg %p290
        %p753 = pneg %p314
        %p754 = pneg %p311
        %p755 = pneg %p335
        %p756 = pneg %p332
        %p757 = pneg %p356
        %p758 = pneg %p353
        %p759 = pneg %p377
        %p760 = pneg %p374
        %p761 = pneg %p398
        %p762 = pneg %p395
        %p763 = pneg %p424
        %p764 = pneg %p421
        %s765 = sand.u32 %s411, 1
        %s766 = scalar_lea.sflag [#allocation6], %s765
        %s767 = sand.u32 %s411, 1
        %s768 = smul.addr %s767, 64
        %s769 = scalar_lea.vmem [#allocation27], %s768
        %770 = vst [vmem:[#allocation2] sm:$0xff] 0.0
        %771 = vst [vmem:[#allocation2 + $0x8] sm:$0xff] 0.0
        %772 = vst [vmem:[#allocation2 + $0x10] sm:$0xff] 0.0
        %773 = vst [vmem:[#allocation2 + $0x50] sm:$0xff] 0.0
        %774 = vst [vmem:[#allocation2 + $0x58] sm:$0xff] 0.0
        %775 = vst [vmem:[#allocation2 + $0x60] sm:$0xff] 0.0
        %776 = vst [vmem:[#allocation2 + $0xa0] sm:$0xff] 0.0
        %777 = vst [vmem:[#allocation2 + $0xa8] sm:$0xff] 0.0
        %778 = vst [vmem:[#allocation2 + $0xb0] sm:$0xff] 0.0
        %779 = vst [vmem:[#allocation2 + $0xf0] sm:$0xff] 0.0
        %780 = vst [vmem:[#allocation2 + $0xf8] sm:$0xff] 0.0
        %781 = vst [vmem:[#allocation2 + $0x100] sm:$0xff] 0.0
        %782 = vst [vmem:[#allocation2 + $0x38] sm:$0xff] 0.0
        %783 = vst [vmem:[#allocation2 + $0x40] sm:$0xff] 0.0
        %784 = vst [vmem:[#allocation2 + $0x48] sm:$0xff] 0.0
        %785 = vst [vmem:[#allocation2 + $0x88] sm:$0xff] 0.0
        %786 = vst [vmem:[#allocation2 + $0x90] sm:$0xff] 0.0
        %787 = vst [vmem:[#allocation2 + $0x98] sm:$0xff] 0.0
        %788 = vst [vmem:[#allocation2 + $0xd8] sm:$0xff] 0.0
        %789 = vst [vmem:[#allocation2 + $0xe0] sm:$0xff] 0.0
        %790 = vst [vmem:[#allocation2 + $0xe8] sm:$0xff] 0.0
        %791 = vst [vmem:[#allocation2 + $0x128] sm:$0xff] 0.0
        %792 = vst [vmem:[#allocation2 + $0x130] sm:$0xff] 0.0
        %793 = vst [vmem:[#allocation2 + $0x138] sm:$0xff] 0.0
        %794 = vst [vmem:[#allocation2 + $0x18] sm:$0xff] 0.0
        %795 = vst [vmem:[#allocation2 + $0x20] sm:$0xff] 0.0
        %796 = vst [vmem:[#allocation2 + $0x28] sm:$0xff] 0.0
        %797 = vst [vmem:[#allocation2 + $0x30] sm:$0xff] 0.0
        %798 = vst [vmem:[#allocation2 + $0x108] sm:$0xff] 0.0
        %799 = vst [vmem:[#allocation2 + $0x110] sm:$0xff] 0.0
        %800 = vst [vmem:[#allocation2 + $0x118] sm:$0xff] 0.0
        %801 = vst [vmem:[#allocation2 + $0x120] sm:$0xff] 0.0
        %802 = vst [vmem:[#allocation3] sm:$0xff] 0.0
        %803 = vst [vmem:[#allocation3 + $0x8] sm:$0xff] 0.0
        %804 = vst [vmem:[#allocation3 + $0x10] sm:$0xff] 0.0
        %805 = vst [vmem:[#allocation3 + $0x18] sm:$0xff] 0.0
        %806 = vst [vmem:[#allocation3 + $0x20] sm:$0xff] 0.0
        %807 = vst [vmem:[#allocation3 + $0x28] sm:$0xff] 0.0
        %808 = vst [vmem:[#allocation3 + $0x30] sm:$0xff] 0.0
        %809 = vst [vmem:[#allocation3 + $0x38] sm:$0xff] 0.0
        %810 = vst [vmem:[#allocation3 + $0x80] sm:$0xff] 0.0
        %811 = vst [vmem:[#allocation3 + $0x88] sm:$0xff] 0.0
        %812 = vst [vmem:[#allocation3 + $0x90] sm:$0xff] 0.0
        %813 = vst [vmem:[#allocation3 + $0x98] sm:$0xff] 0.0
        %814 = vst [vmem:[#allocation3 + $0xa0] sm:$0xff] 0.0
        %815 = vst [vmem:[#allocation3 + $0xa8] sm:$0xff] 0.0
        %816 = vst [vmem:[#allocation3 + $0xb0] sm:$0xff] 0.0
        %817 = vst [vmem:[#allocation3 + $0xb8] sm:$0xff] 0.0
        %v818 = vld [vmem:[%s653] sm:$0xff]
        %v819 = vld [vmem:[%s653 + $0x8] sm:$0xff]
        %v820 = vld [vmem:[%s653 + $0x10] sm:$0xff]
        %v821 = vld [vmem:[%s653 + $0x18] sm:$0xff]
        %v822 = vld [vmem:[%s653 + $0x20] sm:$0xff]
        %v823 = vld [vmem:[%s653 + $0x28] sm:$0xff]
        %v824 = vld [vmem:[%s653 + $0x30] sm:$0xff]
        %v825 = vld [vmem:[%s653 + $0x38] sm:$0xff]
        %826 = vst [vmem:[#allocation2 + $0x68] sm:$0xff] %v818
        %827 = vst [vmem:[#allocation2 + $0x70] sm:$0xff] %v819
        %828 = vst [vmem:[#allocation2 + $0x78] sm:$0xff] %v820
        %829 = vst [vmem:[#allocation2 + $0x80] sm:$0xff] %v821
        %830 = vst [vmem:[#allocation2 + $0xb8] sm:$0xff] %v822
        %831 = vst [vmem:[#allocation2 + $0xc0] sm:$0xff] %v823
        %832 = vst [vmem:[#allocation2 + $0xc8] sm:$0xff] %v824
        %833 = vst [vmem:[#allocation2 + $0xd0] sm:$0xff] %v825
        %v834 = vld [vmem:[#allocation2 + $0x10] sm:$0xc0]
        %v835 = vld [vmem:[#allocation2 + $0x18] sm:$0xc0]
        %v836 = vld [vmem:[#allocation2 + $0x20] sm:$0xc0]
        %v837 = vld [vmem:[#allocation2 + $0x28] sm:$0xc0]
        %v838 = vld [vmem:[#allocation2 + $0x30] sm:$0xc0]
        %v839 = vld [vmem:[#allocation2 + $0x60] sm:$0xff]
        %v840 = vld [vmem:[#allocation2 + $0x68] sm:$0xff]
        %v841 = vld [vmem:[#allocation2 + $0x70] sm:$0xff]
        %v842 = vld [vmem:[#allocation2 + $0x78] sm:$0xff]
        %v843 = vld [vmem:[#allocation2 + $0x80] sm:$0xff]
        %v844 = vld [vmem:[#allocation2 + $0xb0] sm:$0x3f]
        %v845 = vld [vmem:[#allocation2 + $0xb8] sm:$0x3f]
        %v846 = vld [vmem:[#allocation2 + $0xc0] sm:$0x3f]
        %v847 = vld [vmem:[#allocation2 + $0xc8] sm:$0x3f]
        %v848 = vld [vmem:[#allocation2 + $0xd0] sm:$0x3f]
        %v849 = vld [vmem:[#allocation7] ss:$8 sm:$0xf]
        %v851 = vperm.slane %v849, 0
        %v852 = vperm.slane %v849, 1
        %v853 = vperm.slane %v849, 2
        %v854 = vperm.slane %v849, 3
        %855 = vrot.lane.b32.xlu0 %v851, 64
        %v856 = vpop.permute.xlu0 %855
        %857 = vrot.lane.b32.xlu0 %v852, 64
        %v858 = vpop.permute.xlu0 %857
        %859 = vrot.lane.b32.xlu0 %v853, 64
        %v860 = vpop.permute.xlu0 %859
        %861 = vrot.lane.b32.xlu0 %v854, 64
        %v862 = vpop.permute.xlu0 %861
        %vm863 = vcmask 523264
        %v864 = vsel %vm863, %v856, %v858
        %v865 = vsel %vm863, %v858, %v860
        %v866 = vsel %vm863, %v860, %v862
        %v872 = vmul.f32 %v834, %v856
        %v873 = vmul.f32 %v835, %v864
        %v874 = vmul.f32 %v836, %v865
        %v875 = vmul.f32 %v837, %v866
        %v876 = vmul.f32 %v838, %v862
        %v877 = vmul.f32 %v839, %v856
        %v878 = vmul.f32 %v840, %v864
        %v879 = vmul.f32 %v841, %v865
        %v880 = vmul.f32 %v842, %v866
        %v881 = vmul.f32 %v843, %v862
        %v882 = vmul.f32 %v844, %v856
        %v883 = vmul.f32 %v845, %v864
        %v884 = vmul.f32 %v846, %v865
        %v885 = vmul.f32 %v847, %v866
        %v886 = vmul.f32 %v848, %v862
        %v887 = vadd.f32 %v872, 0.0
        %v888 = vadd.f32 %v873, 0.0
        %v889 = vadd.f32 %v874, 0.0
        %v890 = vadd.f32 %v875, 0.0
        %v891 = vadd.f32 %v876, 0.0
        %v892 = vadd.f32 %v877, 0.0
        %v893 = vadd.f32 %v878, 0.0
        %v894 = vadd.f32 %v879, 0.0
        %v895 = vadd.f32 %v880, 0.0
        %v896 = vadd.f32 %v881, 0.0
        %v897 = vadd.f32 %v882, 0.0
        %v898 = vadd.f32 %v883, 0.0
        %v899 = vadd.f32 %v884, 0.0
        %v900 = vadd.f32 %v885, 0.0
        %v901 = vadd.f32 %v886, 0.0
        %s902 = scalar_lea.vmem [#allocation7], 1
        %v903 = vld [vmem:[%s902] ss:$8 sm:$0xf]
        %v905 = vperm.slane %v903, 0
        %v906 = vperm.slane %v903, 1
        %v907 = vperm.slane %v903, 2
        %v908 = vperm.slane %v903, 3
        %909 = vrot.lane.b32.xlu0 %v905, 96
        %v910 = vpop.permute.xlu0 %909
        %911 = vrot.lane.b32.xlu0 %v906, 96
        %v912 = vpop.permute.xlu0 %911
        %913 = vrot.lane.b32.xlu0 %v907, 96
        %v914 = vpop.permute.xlu0 %913
        %915 = vrot.lane.b32.xlu0 %v908, 96
        %v916 = vpop.permute.xlu0 %915
        %vm917 = vcmask 785408
        %v918 = vsel %vm917, %v910, %v912
        %v919 = vsel %vm917, %v912, %v914
        %v920 = vsel %vm917, %v914, %v916
        %v926 = vmul.f32 %v834, %v910
        %v927 = vmul.f32 %v835, %v918
        %v928 = vmul.f32 %v836, %v919
        %v929 = vmul.f32 %v837, %v920
        %v930 = vmul.f32 %v838, %v916
        %v931 = vmul.f32 %v839, %v910
        %v932 = vmul.f32 %v840, %v918
        %v933 = vmul.f32 %v841, %v919
        %v934 = vmul.f32 %v842, %v920
        %v935 = vmul.f32 %v843, %v916
        %v936 = vmul.f32 %v844, %v910
        %v937 = vmul.f32 %v845, %v918
        %v938 = vmul.f32 %v846, %v919
        %v939 = vmul.f32 %v847, %v920
        %v940 = vmul.f32 %v848, %v916
        %956 = vrot.lane.b32.xlu0 %v926, 96
        %v957 = vpop.permute.xlu0 %956
        %958 = vrot.lane.b32.xlu0 %v927, 96
        %v959 = vpop.permute.xlu0 %958
        %960 = vrot.lane.b32.xlu0 %v928, 96
        %v961 = vpop.permute.xlu0 %960
        %962 = vrot.lane.b32.xlu0 %v929, 96
        %v963 = vpop.permute.xlu0 %962
        %964 = vrot.lane.b32.xlu0 %v930, 96
        %v965 = vpop.permute.xlu0 %964
        %966 = vrot.lane.b32.xlu0 %v931, 96
        %v967 = vpop.permute.xlu0 %966
        %968 = vrot.lane.b32.xlu0 %v932, 96
        %v969 = vpop.permute.xlu0 %968
        %970 = vrot.lane.b32.xlu0 %v933, 96
        %v971 = vpop.permute.xlu0 %970
        %972 = vrot.lane.b32.xlu0 %v934, 96
        %v973 = vpop.permute.xlu0 %972
        %974 = vrot.lane.b32.xlu0 %v935, 96
        %v975 = vpop.permute.xlu0 %974
        %976 = vrot.lane.b32.xlu0 %v936, 96
        %v977 = vpop.permute.xlu0 %976
        %978 = vrot.lane.b32.xlu0 %v937, 96
        %v979 = vpop.permute.xlu0 %978
        %980 = vrot.lane.b32.xlu0 %v938, 96
        %v981 = vpop.permute.xlu0 %980
        %982 = vrot.lane.b32.xlu0 %v939, 96
        %v983 = vpop.permute.xlu0 %982
        %984 = vrot.lane.b32.xlu0 %v940, 96
        %v985 = vpop.permute.xlu0 %984
        %v986 = vsel %vm917, %v957, %v959
        %v987 = vsel %vm917, %v959, %v961
        %v988 = vsel %vm917, %v961, %v963
        %v989 = vsel %vm917, %v963, %v965
        %v990 = vsel %vm917, %v967, %v969
        %v991 = vsel %vm917, %v969, %v971
        %v992 = vsel %vm917, %v971, %v973
        %v993 = vsel %vm917, %v973, %v975
        %v994 = vsel %vm917, %v977, %v979
        %v995 = vsel %vm917, %v979, %v981
        %v996 = vsel %vm917, %v981, %v983
        %v997 = vsel %vm917, %v983, %v985
        %v1013 = vadd.f32 %v887, %v986
        %v1014 = vadd.f32 %v888, %v987
        %v1015 = vadd.f32 %v889, %v988
        %v1016 = vadd.f32 %v890, %v989
        %v1017 = vadd.f32 %v891, %v965
        %v1018 = vadd.f32 %v892, %v990
        %v1019 = vadd.f32 %v893, %v991
        %v1020 = vadd.f32 %v894, %v992
        %v1021 = vadd.f32 %v895, %v993
        %v1022 = vadd.f32 %v896, %v975
        %v1023 = vadd.f32 %v897, %v994
        %v1024 = vadd.f32 %v898, %v995
        %v1025 = vadd.f32 %v899, %v996
        %v1026 = vadd.f32 %v900, %v997
        %v1027 = vadd.f32 %v901, %v985
        %s1028 = scalar_lea.vmem [#allocation7], 2
        %v1029 = vld [vmem:[%s1028] ss:$8 sm:$0xf]
        %v1031 = vperm.slane %v1029, 0
        %v1032 = vperm.slane %v1029, 1
        %v1033 = vperm.slane %v1029, 2
        %v1034 = vperm.slane %v1029, 3
        %v1039 = vmul.f32 %v835, %v1031
        %v1040 = vmul.f32 %v836, %v1032
        %v1041 = vmul.f32 %v837, %v1033
        %v1042 = vmul.f32 %v838, %v1034
        %v1043 = vmul.f32 %v840, %v1031
        %v1044 = vmul.f32 %v841, %v1032
        %v1045 = vmul.f32 %v842, %v1033
        %v1046 = vmul.f32 %v843, %v1034
        %v1047 = vmul.f32 %v845, %v1031
        %v1048 = vmul.f32 %v846, %v1032
        %v1049 = vmul.f32 %v847, %v1033
        %v1050 = vmul.f32 %v848, %v1034
        %1063 = vrot.lane.b32.xlu0 %v1039, 64
        %v1064 = vpop.permute.xlu0 %1063
        %1065 = vrot.lane.b32.xlu0 %v1040, 64
        %v1066 = vpop.permute.xlu0 %1065
        %1067 = vrot.lane.b32.xlu0 %v1041, 64
        %v1068 = vpop.permute.xlu0 %1067
        %1069 = vrot.lane.b32.xlu0 %v1042, 64
        %v1070 = vpop.permute.xlu0 %1069
        %1071 = vrot.lane.b32.xlu0 %v1043, 64
        %v1072 = vpop.permute.xlu0 %1071
        %1073 = vrot.lane.b32.xlu0 %v1044, 64
        %v1074 = vpop.permute.xlu0 %1073
        %1075 = vrot.lane.b32.xlu0 %v1045, 64
        %v1076 = vpop.permute.xlu0 %1075
        %1077 = vrot.lane.b32.xlu0 %v1046, 64
        %v1078 = vpop.permute.xlu0 %1077
        %1079 = vrot.lane.b32.xlu0 %v1047, 64
        %v1080 = vpop.permute.xlu0 %1079
        %1081 = vrot.lane.b32.xlu0 %v1048, 64
        %v1082 = vpop.permute.xlu0 %1081
        %1083 = vrot.lane.b32.xlu0 %v1049, 64
        %v1084 = vpop.permute.xlu0 %1083
        %1085 = vrot.lane.b32.xlu0 %v1050, 64
        %v1086 = vpop.permute.xlu0 %1085
        %v1087 = vsel %vm863, %v1064, %v1066
        %v1088 = vsel %vm863, %v1066, %v1068
        %v1089 = vsel %vm863, %v1068, %v1070
        %v1090 = vsel %vm863, %v1072, %v1074
        %v1091 = vsel %vm863, %v1074, %v1076
        %v1092 = vsel %vm863, %v1076, %v1078
        %v1093 = vsel %vm863, %v1080, %v1082
        %v1094 = vsel %vm863, %v1082, %v1084
        %v1095 = vsel %vm863, %v1084, %v1086
        %v1111 = vadd.f32 %v1013, %v1064
        %v1112 = vadd.f32 %v1014, %v1087
        %v1113 = vadd.f32 %v1015, %v1088
        %v1114 = vadd.f32 %v1016, %v1089
        %v1115 = vadd.f32 %v1017, %v1070
        %v1116 = vadd.f32 %v1018, %v1072
        %v1117 = vadd.f32 %v1019, %v1090
        %v1118 = vadd.f32 %v1020, %v1091
        %v1119 = vadd.f32 %v1021, %v1092
        %v1120 = vadd.f32 %v1022, %v1078
        %v1121 = vadd.f32 %v1023, %v1080
        %v1122 = vadd.f32 %v1024, %v1093
        %v1123 = vadd.f32 %v1025, %v1094
        %v1124 = vadd.f32 %v1026, %v1095
        %v1125 = vadd.f32 %v1027, %v1086
        %v1126 = vld [vmem:[#allocation2 + $0x38] sm:$0xc0]
        %v1127 = vld [vmem:[#allocation2 + $0x88] sm:$0xff]
        %v1128 = vld [vmem:[#allocation2 + $0xd8] sm:$0x3f]
        %s1129 = scalar_lea.vmem [#allocation7], 3
        %v1130 = vld [vmem:[%s1129] ss:$8 sm:$0xf]
        %v1132 = vperm.slane %v1130, 0
        %v1133 = vperm.slane %v1130, 1
        %v1134 = vperm.slane %v1130, 2
        %v1135 = vperm.slane %v1130, 3
        %1136 = vrot.lane.b32.xlu0 %v1132, 32
        %v1137 = vpop.permute.xlu0 %1136
        %1138 = vrot.lane.b32.xlu0 %v1133, 32
        %v1139 = vpop.permute.xlu0 %1138
        %1140 = vrot.lane.b32.xlu0 %v1134, 32
        %v1141 = vpop.permute.xlu0 %1140
        %1142 = vrot.lane.b32.xlu0 %v1135, 32
        %v1143 = vpop.permute.xlu0 %1142
        %vm1144 = vcmask 261120
        %v1145 = vsel %vm1144, %v1137, %v1139
        %v1146 = vsel %vm1144, %v1139, %v1141
        %v1147 = vsel %vm1144, %v1141, %v1143
        %v1153 = vmul.f32 %v835, %v1137
        %v1154 = vmul.f32 %v836, %v1145
        %v1155 = vmul.f32 %v837, %v1146
        %v1156 = vmul.f32 %v838, %v1147
        %v1157 = vmul.f32 %v1126, %v1143
        %v1158 = vmul.f32 %v840, %v1137
        %v1159 = vmul.f32 %v841, %v1145
        %v1160 = vmul.f32 %v842, %v1146
        %v1161 = vmul.f32 %v843, %v1147
        %v1162 = vmul.f32 %v1127, %v1143
        %v1163 = vmul.f32 %v845, %v1137
        %v1164 = vmul.f32 %v846, %v1145
        %v1165 = vmul.f32 %v847, %v1146
        %v1166 = vmul.f32 %v848, %v1147
        %v1167 = vmul.f32 %v1128, %v1143
        %1183 = vrot.lane.b32.xlu0 %v1153, 32
        %v1184 = vpop.permute.xlu0 %1183
        %1185 = vrot.lane.b32.xlu0 %v1154, 32
        %v1186 = vpop.permute.xlu0 %1185
        %1187 = vrot.lane.b32.xlu0 %v1155, 32
        %v1188 = vpop.permute.xlu0 %1187
        %1189 = vrot.lane.b32.xlu0 %v1156, 32
        %v1190 = vpop.permute.xlu0 %1189
        %1191 = vrot.lane.b32.xlu0 %v1157, 32
        %v1192 = vpop.permute.xlu0 %1191
        %1193 = vrot.lane.b32.xlu0 %v1158, 32
        %v1194 = vpop.permute.xlu0 %1193
        %1195 = vrot.lane.b32.xlu0 %v1159, 32
        %v1196 = vpop.permute.xlu0 %1195
        %1197 = vrot.lane.b32.xlu0 %v1160, 32
        %v1198 = vpop.permute.xlu0 %1197
        %1199 = vrot.lane.b32.xlu0 %v1161, 32
        %v1200 = vpop.permute.xlu0 %1199
        %1201 = vrot.lane.b32.xlu0 %v1162, 32
        %v1202 = vpop.permute.xlu0 %1201
        %1203 = vrot.lane.b32.xlu0 %v1163, 32
        %v1204 = vpop.permute.xlu0 %1203
        %1205 = vrot.lane.b32.xlu0 %v1164, 32
        %v1206 = vpop.permute.xlu0 %1205
        %1207 = vrot.lane.b32.xlu0 %v1165, 32
        %v1208 = vpop.permute.xlu0 %1207
        %1209 = vrot.lane.b32.xlu0 %v1166, 32
        %v1210 = vpop.permute.xlu0 %1209
        %1211 = vrot.lane.b32.xlu0 %v1167, 32
        %v1212 = vpop.permute.xlu0 %1211
        %v1213 = vsel %vm1144, %v1184, %v1186
        %v1214 = vsel %vm1144, %v1186, %v1188
        %v1215 = vsel %vm1144, %v1188, %v1190
        %v1216 = vsel %vm1144, %v1190, %v1192
        %v1217 = vsel %vm1144, %v1194, %v1196
        %v1218 = vsel %vm1144, %v1196, %v1198
        %v1219 = vsel %vm1144, %v1198, %v1200
        %v1220 = vsel %vm1144, %v1200, %v1202
        %v1221 = vsel %vm1144, %v1204, %v1206
        %v1222 = vsel %vm1144, %v1206, %v1208
        %v1223 = vsel %vm1144, %v1208, %v1210
        %v1224 = vsel %vm1144, %v1210, %v1212
        %v1240 = vadd.f32 %v1111, %v1184
        %v1241 = vadd.f32 %v1112, %v1213
        %v1242 = vadd.f32 %v1113, %v1214
        %v1243 = vadd.f32 %v1114, %v1215
        %v1244 = vadd.f32 %v1115, %v1216
        %v1245 = vadd.f32 %v1116, %v1194
        %v1246 = vadd.f32 %v1117, %v1217
        %v1247 = vadd.f32 %v1118, %v1218
        %v1248 = vadd.f32 %v1119, %v1219
        %v1249 = vadd.f32 %v1120, %v1220
        %v1250 = vadd.f32 %v1121, %v1204
        %v1251 = vadd.f32 %v1122, %v1221
        %v1252 = vadd.f32 %v1123, %v1222
        %v1253 = vadd.f32 %v1124, %v1223
        %v1254 = vadd.f32 %v1125, %v1224
        %s1255 = scalar_lea.vmem [#allocation7], 4
        %v1256 = vld [vmem:[%s1255] ss:$8 sm:$0xf]
        %v1258 = vperm.slane %v1256, 0
        %v1259 = vperm.slane %v1256, 1
        %v1260 = vperm.slane %v1256, 2
        %v1261 = vperm.slane %v1256, 3
        %1262 = vrot.lane.b32.xlu0 %v1258, 64
        %v1263 = vpop.permute.xlu0 %1262
        %1264 = vrot.lane.b32.xlu0 %v1259, 64
        %v1265 = vpop.permute.xlu0 %1264
        %1266 = vrot.lane.b32.xlu0 %v1260, 64
        %v1267 = vpop.permute.xlu0 %1266
        %1268 = vrot.lane.b32.xlu0 %v1261, 64
        %v1269 = vpop.permute.xlu0 %1268
        %v1270 = vsel %vm863, %v1263, %v1265
        %v1271 = vsel %vm863, %v1265, %v1267
        %v1272 = vsel %vm863, %v1267, %v1269
        %v1278 = vmul.f32 %v835, %v1263
        %v1279 = vmul.f32 %v836, %v1270
        %v1280 = vmul.f32 %v837, %v1271
        %v1281 = vmul.f32 %v838, %v1272
        %v1282 = vmul.f32 %v1126, %v1269
        %v1283 = vmul.f32 %v840, %v1263
        %v1284 = vmul.f32 %v841, %v1270
        %v1285 = vmul.f32 %v842, %v1271
        %v1286 = vmul.f32 %v843, %v1272
        %v1287 = vmul.f32 %v1127, %v1269
        %v1288 = vmul.f32 %v845, %v1263
        %v1289 = vmul.f32 %v846, %v1270
        %v1290 = vmul.f32 %v847, %v1271
        %v1291 = vmul.f32 %v848, %v1272
        %v1292 = vmul.f32 %v1128, %v1269
        %v1293 = vadd.f32 %v1240, %v1278
        %v1294 = vadd.f32 %v1241, %v1279
        %v1295 = vadd.f32 %v1242, %v1280
        %v1296 = vadd.f32 %v1243, %v1281
        %v1297 = vadd.f32 %v1244, %v1282
        %v1298 = vadd.f32 %v1245, %v1283
        %v1299 = vadd.f32 %v1246, %v1284
        %v1300 = vadd.f32 %v1247, %v1285
        %v1301 = vadd.f32 %v1248, %v1286
        %v1302 = vadd.f32 %v1249, %v1287
        %v1303 = vadd.f32 %v1250, %v1288
        %v1304 = vadd.f32 %v1251, %v1289
        %v1305 = vadd.f32 %v1252, %v1290
        %v1306 = vadd.f32 %v1253, %v1291
        %v1307 = vadd.f32 %v1254, %v1292
        %v1308 = vld [vmem:[#allocation2 + $0x10] sm:$0x80]
        %v1309 = vld [vmem:[#allocation2 + $0x18] sm:$0x80]
        %v1310 = vld [vmem:[#allocation2 + $0x20] sm:$0x80]
        %v1311 = vld [vmem:[#allocation2 + $0x28] sm:$0x80]
        %v1312 = vld [vmem:[#allocation2 + $0x30] sm:$0x80]
        %v1313 = vld [vmem:[#allocation2 + $0xb0] sm:$0x7f]
        %v1314 = vld [vmem:[#allocation2 + $0xb8] sm:$0x7f]
        %v1315 = vld [vmem:[#allocation2 + $0xc0] sm:$0x7f]
        %v1316 = vld [vmem:[#allocation2 + $0xc8] sm:$0x7f]
        %v1317 = vld [vmem:[#allocation2 + $0xd0] sm:$0x7f]
        %s1318 = scalar_lea.vmem [#allocation7], 5
        %v1319 = vld [vmem:[%s1318] ss:$8 sm:$0xf]
        %v1321 = vperm.slane %v1319, 0
        %v1322 = vperm.slane %v1319, 1
        %v1323 = vperm.slane %v1319, 2
        %v1324 = vperm.slane %v1319, 3
        %1325 = vrot.lane.b32.xlu0 %v1321, 64
        %v1326 = vpop.permute.xlu0 %1325
        %1327 = vrot.lane.b32.xlu0 %v1322, 64
        %v1328 = vpop.permute.xlu0 %1327
        %1329 = vrot.lane.b32.xlu0 %v1323, 64
        %v1330 = vpop.permute.xlu0 %1329
        %1331 = vrot.lane.b32.xlu0 %v1324, 64
        %v1332 = vpop.permute.xlu0 %1331
        %v1333 = vsel %vm863, %v1326, %v1328
        %v1334 = vsel %vm863, %v1328, %v1330
        %v1335 = vsel %vm863, %v1330, %v1332
        %v1341 = vmul.f32 %v1308, %v1326
        %v1342 = vmul.f32 %v1309, %v1333
        %v1343 = vmul.f32 %v1310, %v1334
        %v1344 = vmul.f32 %v1311, %v1335
        %v1345 = vmul.f32 %v1312, %v1332
        %v1346 = vmul.f32 %v839, %v1326
        %v1347 = vmul.f32 %v840, %v1333
        %v1348 = vmul.f32 %v841, %v1334
        %v1349 = vmul.f32 %v842, %v1335
        %v1350 = vmul.f32 %v843, %v1332
        %v1351 = vmul.f32 %v1313, %v1326
        %v1352 = vmul.f32 %v1314, %v1333
        %v1353 = vmul.f32 %v1315, %v1334
        %v1354 = vmul.f32 %v1316, %v1335
        %v1355 = vmul.f32 %v1317, %v1332
        %vm1371 = vcmask 1046528
        %v1372 = vrot.slane %v1341, 1
        %v1373 = vrot.slane %v1346, 1
        %v1374 = vsel %vm1371, %v1372, %v1373
        %v1375 = vrot.slane %v1342, 1
        %v1376 = vrot.slane %v1347, 1
        %v1377 = vsel %vm1371, %v1375, %v1376
        %v1378 = vrot.slane %v1343, 1
        %v1379 = vrot.slane %v1348, 1
        %v1380 = vsel %vm1371, %v1378, %v1379
        %v1381 = vrot.slane %v1344, 1
        %v1382 = vrot.slane %v1349, 1
        %v1383 = vsel %vm1371, %v1381, %v1382
        %v1384 = vrot.slane %v1345, 1
        %v1385 = vrot.slane %v1350, 1
        %v1386 = vsel %vm1371, %v1384, %v1385
        %v1387 = vrot.slane %v1351, 1
        %v1388 = vsel %vm1371, %v1373, %v1387
        %v1389 = vrot.slane %v1352, 1
        %v1390 = vsel %vm1371, %v1376, %v1389
        %v1391 = vrot.slane %v1353, 1
        %v1392 = vsel %vm1371, %v1379, %v1391
        %v1393 = vrot.slane %v1354, 1
        %v1394 = vsel %vm1371, %v1382, %v1393
        %v1395 = vrot.slane %v1355, 1
        %v1396 = vsel %vm1371, %v1385, %v1395
        %v1412 = vadd.f32 %v1293, %v1374
        %v1413 = vadd.f32 %v1294, %v1377
        %v1414 = vadd.f32 %v1295, %v1380
        %v1415 = vadd.f32 %v1296, %v1383
        %v1416 = vadd.f32 %v1297, %v1386
        %v1417 = vadd.f32 %v1298, %v1388
        %v1418 = vadd.f32 %v1299, %v1390
        %v1419 = vadd.f32 %v1300, %v1392
        %v1420 = vadd.f32 %v1301, %v1394
        %v1421 = vadd.f32 %v1302, %v1396
        %v1422 = vadd.f32 %v1303, %v1387
        %v1423 = vadd.f32 %v1304, %v1389
        %v1424 = vadd.f32 %v1305, %v1391
        %v1425 = vadd.f32 %v1306, %v1393
        %v1426 = vadd.f32 %v1307, %v1395
        %s1427 = scalar_lea.vmem [#allocation7], 6
        %v1428 = vld [vmem:[%s1427] ss:$8 sm:$0xf]
        %v1430 = vperm.slane %v1428, 0
        %v1431 = vperm.slane %v1428, 1
        %v1432 = vperm.slane %v1428, 2
        %v1433 = vperm.slane %v1428, 3
        %1434 = vrot.lane.b32.xlu0 %v1430, 96
        %v1435 = vpop.permute.xlu0 %1434
        %1436 = vrot.lane.b32.xlu0 %v1431, 96
        %v1437 = vpop.permute.xlu0 %1436
        %1438 = vrot.lane.b32.xlu0 %v1432, 96
        %v1439 = vpop.permute.xlu0 %1438
        %1440 = vrot.lane.b32.xlu0 %v1433, 96
        %v1441 = vpop.permute.xlu0 %1440
        %v1442 = vsel %vm917, %v1435, %v1437
        %v1443 = vsel %vm917, %v1437, %v1439
        %v1444 = vsel %vm917, %v1439, %v1441
        %v1450 = vmul.f32 %v1308, %v1435
        %v1451 = vmul.f32 %v1309, %v1442
        %v1452 = vmul.f32 %v1310, %v1443
        %v1453 = vmul.f32 %v1311, %v1444
        %v1454 = vmul.f32 %v1312, %v1441
        %v1455 = vmul.f32 %v839, %v1435
        %v1456 = vmul.f32 %v840, %v1442
        %v1457 = vmul.f32 %v841, %v1443
        %v1458 = vmul.f32 %v842, %v1444
        %v1459 = vmul.f32 %v843, %v1441
        %v1460 = vmul.f32 %v1313, %v1435
        %v1461 = vmul.f32 %v1314, %v1442
        %v1462 = vmul.f32 %v1315, %v1443
        %v1463 = vmul.f32 %v1316, %v1444
        %v1464 = vmul.f32 %v1317, %v1441
        %v1480 = vrot.slane %v1450, 1
        %v1481 = vrot.slane %v1455, 1
        %v1482 = vsel %vm1371, %v1480, %v1481
        %v1483 = vrot.slane %v1451, 1
        %v1484 = vrot.slane %v1456, 1
        %v1485 = vsel %vm1371, %v1483, %v1484
        %v1486 = vrot.slane %v1452, 1
        %v1487 = vrot.slane %v1457, 1
        %v1488 = vsel %vm1371, %v1486, %v1487
        %v1489 = vrot.slane %v1453, 1
        %v1490 = vrot.slane %v1458, 1
        %v1491 = vsel %vm1371, %v1489, %v1490
        %v1492 = vrot.slane %v1454, 1
        %v1493 = vrot.slane %v1459, 1
        %v1494 = vsel %vm1371, %v1492, %v1493
        %v1495 = vrot.slane %v1460, 1
        %v1496 = vsel %vm1371, %v1481, %v1495
        %v1497 = vrot.slane %v1461, 1
        %v1498 = vsel %vm1371, %v1484, %v1497
        %v1499 = vrot.slane %v1462, 1
        %v1500 = vsel %vm1371, %v1487, %v1499
        %v1501 = vrot.slane %v1463, 1
        %v1502 = vsel %vm1371, %v1490, %v1501
        %v1503 = vrot.slane %v1464, 1
        %v1504 = vsel %vm1371, %v1493, %v1503
        %1505 = vrot.lane.b32.xlu0 %v1482, 96
        %v1506 = vpop.permute.xlu0 %1505
        %1507 = vrot.lane.b32.xlu0 %v1485, 96
        %v1508 = vpop.permute.xlu0 %1507
        %1509 = vrot.lane.b32.xlu0 %v1488, 96
        %v1510 = vpop.permute.xlu0 %1509
        %1511 = vrot.lane.b32.xlu0 %v1491, 96
        %v1512 = vpop.permute.xlu0 %1511
        %1513 = vrot.lane.b32.xlu0 %v1494, 96
        %v1514 = vpop.permute.xlu0 %1513
        %1515 = vrot.lane.b32.xlu0 %v1496, 96
        %v1516 = vpop.permute.xlu0 %1515
        %1517 = vrot.lane.b32.xlu0 %v1498, 96
        %v1518 = vpop.permute.xlu0 %1517
        %1519 = vrot.lane.b32.xlu0 %v1500, 96
        %v1520 = vpop.permute.xlu0 %1519
        %1521 = vrot.lane.b32.xlu0 %v1502, 96
        %v1522 = vpop.permute.xlu0 %1521
        %1523 = vrot.lane.b32.xlu0 %v1504, 96
        %v1524 = vpop.permute.xlu0 %1523
        %1525 = vrot.lane.b32.xlu0 %v1495, 96
        %v1526 = vpop.permute.xlu0 %1525
        %1527 = vrot.lane.b32.xlu0 %v1497, 96
        %v1528 = vpop.permute.xlu0 %1527
        %1529 = vrot.lane.b32.xlu0 %v1499, 96
        %v1530 = vpop.permute.xlu0 %1529
        %1531 = vrot.lane.b32.xlu0 %v1501, 96
        %v1532 = vpop.permute.xlu0 %1531
        %1533 = vrot.lane.b32.xlu0 %v1503, 96
        %v1534 = vpop.permute.xlu0 %1533
        %v1535 = vsel %vm917, %v1506, %v1508
        %v1536 = vsel %vm917, %v1508, %v1510
        %v1537 = vsel %vm917, %v1510, %v1512
        %v1538 = vsel %vm917, %v1512, %v1514
        %v1539 = vsel %vm917, %v1516, %v1518
        %v1540 = vsel %vm917, %v1518, %v1520
        %v1541 = vsel %vm917, %v1520, %v1522
        %v1542 = vsel %vm917, %v1522, %v1524
        %v1543 = vsel %vm917, %v1526, %v1528
        %v1544 = vsel %vm917, %v1528, %v1530
        %v1545 = vsel %vm917, %v1530, %v1532
        %v1546 = vsel %vm917, %v1532, %v1534
        %v1562 = vadd.f32 %v1412, %v1535
        %v1563 = vadd.f32 %v1413, %v1536
        %v1564 = vadd.f32 %v1414, %v1537
        %v1565 = vadd.f32 %v1415, %v1538
        %v1566 = vadd.f32 %v1416, %v1514
        %v1567 = vadd.f32 %v1417, %v1539
        %v1568 = vadd.f32 %v1418, %v1540
        %v1569 = vadd.f32 %v1419, %v1541
        %v1570 = vadd.f32 %v1420, %v1542
        %v1571 = vadd.f32 %v1421, %v1524
        %v1572 = vadd.f32 %v1422, %v1543
        %v1573 = vadd.f32 %v1423, %v1544
        %v1574 = vadd.f32 %v1424, %v1545
        %v1575 = vadd.f32 %v1425, %v1546
        %v1576 = vadd.f32 %v1426, %v1534
        %s1577 = scalar_lea.vmem [#allocation7], 7
        %v1578 = vld [vmem:[%s1577] ss:$8 sm:$0xf]
        %v1580 = vperm.slane %v1578, 0
        %v1581 = vperm.slane %v1578, 1
        %v1582 = vperm.slane %v1578, 2
        %v1583 = vperm.slane %v1578, 3
        %v1588 = vmul.f32 %v1309, %v1580
        %v1589 = vmul.f32 %v1310, %v1581
        %v1590 = vmul.f32 %v1311, %v1582
        %v1591 = vmul.f32 %v1312, %v1583
        %v1592 = vmul.f32 %v840, %v1580
        %v1593 = vmul.f32 %v841, %v1581
        %v1594 = vmul.f32 %v842, %v1582
        %v1595 = vmul.f32 %v843, %v1583
        %v1596 = vmul.f32 %v1314, %v1580
        %v1597 = vmul.f32 %v1315, %v1581
        %v1598 = vmul.f32 %v1316, %v1582
        %v1599 = vmul.f32 %v1317, %v1583
        %v1612 = vrot.slane %v1588, 1
        %v1613 = vrot.slane %v1592, 1
        %v1614 = vsel %vm1371, %v1612, %v1613
        %v1615 = vrot.slane %v1589, 1
        %v1616 = vrot.slane %v1593, 1
        %v1617 = vsel %vm1371, %v1615, %v1616
        %v1618 = vrot.slane %v1590, 1
        %v1619 = vrot.slane %v1594, 1
        %v1620 = vsel %vm1371, %v1618, %v1619
        %v1621 = vrot.slane %v1591, 1
        %v1622 = vrot.slane %v1595, 1
        %v1623 = vsel %vm1371, %v1621, %v1622
        %v1624 = vrot.slane %v1596, 1
        %v1625 = vsel %vm1371, %v1613, %v1624
        %v1626 = vrot.slane %v1597, 1
        %v1627 = vsel %vm1371, %v1616, %v1626
        %v1628 = vrot.slane %v1598, 1
        %v1629 = vsel %vm1371, %v1619, %v1628
        %v1630 = vrot.slane %v1599, 1
        %v1631 = vsel %vm1371, %v1622, %v1630
        %1632 = vrot.lane.b32.xlu0 %v1614, 64
        %v1633 = vpop.permute.xlu0 %1632
        %1634 = vrot.lane.b32.xlu0 %v1617, 64
        %v1635 = vpop.permute.xlu0 %1634
        %1636 = vrot.lane.b32.xlu0 %v1620, 64
        %v1637 = vpop.permute.xlu0 %1636
        %1638 = vrot.lane.b32.xlu0 %v1623, 64
        %v1639 = vpop.permute.xlu0 %1638
        %1640 = vrot.lane.b32.xlu0 %v1625, 64
        %v1641 = vpop.permute.xlu0 %1640
        %1642 = vrot.lane.b32.xlu0 %v1627, 64
        %v1643 = vpop.permute.xlu0 %1642
        %1644 = vrot.lane.b32.xlu0 %v1629, 64
        %v1645 = vpop.permute.xlu0 %1644
        %1646 = vrot.lane.b32.xlu0 %v1631, 64
        %v1647 = vpop.permute.xlu0 %1646
        %1648 = vrot.lane.b32.xlu0 %v1624, 64
        %v1649 = vpop.permute.xlu0 %1648
        %1650 = vrot.lane.b32.xlu0 %v1626, 64
        %v1651 = vpop.permute.xlu0 %1650
        %1652 = vrot.lane.b32.xlu0 %v1628, 64
        %v1653 = vpop.permute.xlu0 %1652
        %1654 = vrot.lane.b32.xlu0 %v1630, 64
        %v1655 = vpop.permute.xlu0 %1654
        %v1656 = vsel %vm863, %v1633, %v1635
        %v1657 = vsel %vm863, %v1635, %v1637
        %v1658 = vsel %vm863, %v1637, %v1639
        %v1659 = vsel %vm863, %v1641, %v1643
        %v1660 = vsel %vm863, %v1643, %v1645
        %v1661 = vsel %vm863, %v1645, %v1647
        %v1662 = vsel %vm863, %v1649, %v1651
        %v1663 = vsel %vm863, %v1651, %v1653
        %v1664 = vsel %vm863, %v1653, %v1655
        %v1680 = vadd.f32 %v1562, %v1633
        %v1681 = vadd.f32 %v1563, %v1656
        %v1682 = vadd.f32 %v1564, %v1657
        %v1683 = vadd.f32 %v1565, %v1658
        %v1684 = vadd.f32 %v1566, %v1639
        %v1685 = vadd.f32 %v1567, %v1641
        %v1686 = vadd.f32 %v1568, %v1659
        %v1687 = vadd.f32 %v1569, %v1660
        %v1688 = vadd.f32 %v1570, %v1661
        %v1689 = vadd.f32 %v1571, %v1647
        %v1690 = vadd.f32 %v1572, %v1649
        %v1691 = vadd.f32 %v1573, %v1662
        %v1692 = vadd.f32 %v1574, %v1663
        %v1693 = vadd.f32 %v1575, %v1664
        %v1694 = vadd.f32 %v1576, %v1655
        %v1695 = vld [vmem:[#allocation2 + $0x38] sm:$0x80]
        %v1696 = vld [vmem:[#allocation2 + $0xd8] sm:$0x7f]
        %s1697 = scalar_lea.vmem [#allocation7], 32
        %v1698 = vld [vmem:[%s1697] ss:$8 sm:$0xf]
        %v1700 = vperm.slane %v1698, 0
        %v1701 = vperm.slane %v1698, 1
        %v1702 = vperm.slane %v1698, 2
        %v1703 = vperm.slane %v1698, 3
        %1704 = vrot.lane.b32.xlu0 %v1700, 32
        %v1705 = vpop.permute.xlu0 %1704
        %1706 = vrot.lane.b32.xlu0 %v1701, 32
        %v1707 = vpop.permute.xlu0 %1706
        %1708 = vrot.lane.b32.xlu0 %v1702, 32
        %v1709 = vpop.permute.xlu0 %1708
        %1710 = vrot.lane.b32.xlu0 %v1703, 32
        %v1711 = vpop.permute.xlu0 %1710
        %v1712 = vsel %vm1144, %v1705, %v1707
        %v1713 = vsel %vm1144, %v1707, %v1709
        %v1714 = vsel %vm1144, %v1709, %v1711
        %v1720 = vmul.f32 %v1309, %v1705
        %v1721 = vmul.f32 %v1310, %v1712
        %v1722 = vmul.f32 %v1311, %v1713
        %v1723 = vmul.f32 %v1312, %v1714
        %v1724 = vmul.f32 %v1695, %v1711
        %v1725 = vmul.f32 %v840, %v1705
        %v1726 = vmul.f32 %v841, %v1712
        %v1727 = vmul.f32 %v842, %v1713
        %v1728 = vmul.f32 %v843, %v1714
        %v1729 = vmul.f32 %v1127, %v1711
        %v1730 = vmul.f32 %v1314, %v1705
        %v1731 = vmul.f32 %v1315, %v1712
        %v1732 = vmul.f32 %v1316, %v1713
        %v1733 = vmul.f32 %v1317, %v1714
        %v1734 = vmul.f32 %v1696, %v1711
        %v1750 = vrot.slane %v1720, 1
        %v1751 = vrot.slane %v1725, 1
        %v1752 = vsel %vm1371, %v1750, %v1751
        %v1753 = vrot.slane %v1721, 1
        %v1754 = vrot.slane %v1726, 1
        %v1755 = vsel %vm1371, %v1753, %v1754
        %v1756 = vrot.slane %v1722, 1
        %v1757 = vrot.slane %v1727, 1
        %v1758 = vsel %vm1371, %v1756, %v1757
        %v1759 = vrot.slane %v1723, 1
        %v1760 = vrot.slane %v1728, 1
        %v1761 = vsel %vm1371, %v1759, %v1760
        %v1762 = vrot.slane %v1724, 1
        %v1763 = vrot.slane %v1729, 1
        %v1764 = vsel %vm1371, %v1762, %v1763
        %v1765 = vrot.slane %v1730, 1
        %v1766 = vsel %vm1371, %v1751, %v1765
        %v1767 = vrot.slane %v1731, 1
        %v1768 = vsel %vm1371, %v1754, %v1767
        %v1769 = vrot.slane %v1732, 1
        %v1770 = vsel %vm1371, %v1757, %v1769
        %v1771 = vrot.slane %v1733, 1
        %v1772 = vsel %vm1371, %v1760, %v1771
        %v1773 = vrot.slane %v1734, 1
        %v1774 = vsel %vm1371, %v1763, %v1773
        %1775 = vrot.lane.b32.xlu0 %v1752, 32
        %v1776 = vpop.permute.xlu0 %1775
        %1777 = vrot.lane.b32.xlu0 %v1755, 32
        %v1778 = vpop.permute.xlu0 %1777
        %1779 = vrot.lane.b32.xlu0 %v1758, 32
        %v1780 = vpop.permute.xlu0 %1779
        %1781 = vrot.lane.b32.xlu0 %v1761, 32
        %v1782 = vpop.permute.xlu0 %1781
        %1783 = vrot.lane.b32.xlu0 %v1764, 32
        %v1784 = vpop.permute.xlu0 %1783
        %1785 = vrot.lane.b32.xlu0 %v1766, 32
        %v1786 = vpop.permute.xlu0 %1785
        %1787 = vrot.lane.b32.xlu0 %v1768, 32
        %v1788 = vpop.permute.xlu0 %1787
        %1789 = vrot.lane.b32.xlu0 %v1770, 32
        %v1790 = vpop.permute.xlu0 %1789
        %1791 = vrot.lane.b32.xlu0 %v1772, 32
        %v1792 = vpop.permute.xlu0 %1791
        %1793 = vrot.lane.b32.xlu0 %v1774, 32
        %v1794 = vpop.permute.xlu0 %1793
        %1795 = vrot.lane.b32.xlu0 %v1765, 32
        %v1796 = vpop.permute.xlu0 %1795
        %1797 = vrot.lane.b32.xlu0 %v1767, 32
        %v1798 = vpop.permute.xlu0 %1797
        %1799 = vrot.lane.b32.xlu0 %v1769, 32
        %v1800 = vpop.permute.xlu0 %1799
        %1801 = vrot.lane.b32.xlu0 %v1771, 32
        %v1802 = vpop.permute.xlu0 %1801
        %1803 = vrot.lane.b32.xlu0 %v1773, 32
        %v1804 = vpop.permute.xlu0 %1803
        %v1805 = vsel %vm1144, %v1776, %v1778
        %v1806 = vsel %vm1144, %v1778, %v1780
        %v1807 = vsel %vm1144, %v1780, %v1782
        %v1808 = vsel %vm1144, %v1782, %v1784
        %v1809 = vsel %vm1144, %v1786, %v1788
        %v1810 = vsel %vm1144, %v1788, %v1790
        %v1811 = vsel %vm1144, %v1790, %v1792
        %v1812 = vsel %vm1144, %v1792, %v1794
        %v1813 = vsel %vm1144, %v1796, %v1798
        %v1814 = vsel %vm1144, %v1798, %v1800
        %v1815 = vsel %vm1144, %v1800, %v1802
        %v1816 = vsel %vm1144, %v1802, %v1804
        %v1832 = vadd.f32 %v1680, %v1776
        %v1833 = vadd.f32 %v1681, %v1805
        %v1834 = vadd.f32 %v1682, %v1806
        %v1835 = vadd.f32 %v1683, %v1807
        %v1836 = vadd.f32 %v1684, %v1808
        %v1837 = vadd.f32 %v1685, %v1786
        %v1838 = vadd.f32 %v1686, %v1809
        %v1839 = vadd.f32 %v1687, %v1810
        %v1840 = vadd.f32 %v1688, %v1811
        %v1841 = vadd.f32 %v1689, %v1812
        %v1842 = vadd.f32 %v1690, %v1796
        %v1843 = vadd.f32 %v1691, %v1813
        %v1844 = vadd.f32 %v1692, %v1814
        %v1845 = vadd.f32 %v1693, %v1815
        %v1846 = vadd.f32 %v1694, %v1816
        %s1847 = scalar_lea.vmem [#allocation7], 33
        %v1848 = vld [vmem:[%s1847] ss:$8 sm:$0xf]
        %v1850 = vperm.slane %v1848, 0
        %v1851 = vperm.slane %v1848, 1
        %v1852 = vperm.slane %v1848, 2
        %v1853 = vperm.slane %v1848, 3
        %1854 = vrot.lane.b32.xlu0 %v1850, 64
        %v1855 = vpop.permute.xlu0 %1854
        %1856 = vrot.lane.b32.xlu0 %v1851, 64
        %v1857 = vpop.permute.xlu0 %1856
        %1858 = vrot.lane.b32.xlu0 %v1852, 64
        %v1859 = vpop.permute.xlu0 %1858
        %1860 = vrot.lane.b32.xlu0 %v1853, 64
        %v1861 = vpop.permute.xlu0 %1860
        %v1862 = vsel %vm863, %v1855, %v1857
        %v1863 = vsel %vm863, %v1857, %v1859
        %v1864 = vsel %vm863, %v1859, %v1861
        %v1870 = vmul.f32 %v1309, %v1855
        %v1871 = vmul.f32 %v1310, %v1862
        %v1872 = vmul.f32 %v1311, %v1863
        %v1873 = vmul.f32 %v1312, %v1864
        %v1874 = vmul.f32 %v1695, %v1861
        %v1875 = vmul.f32 %v840, %v1855
        %v1876 = vmul.f32 %v841, %v1862
        %v1877 = vmul.f32 %v842, %v1863
        %v1878 = vmul.f32 %v843, %v1864
        %v1879 = vmul.f32 %v1127, %v1861
        %v1880 = vmul.f32 %v1314, %v1855
        %v1881 = vmul.f32 %v1315, %v1862
        %v1882 = vmul.f32 %v1316, %v1863
        %v1883 = vmul.f32 %v1317, %v1864
        %v1884 = vmul.f32 %v1696, %v1861
        %v1900 = vrot.slane %v1870, 1
        %v1901 = vrot.slane %v1875, 1
        %v1902 = vsel %vm1371, %v1900, %v1901
        %v1903 = vrot.slane %v1871, 1
        %v1904 = vrot.slane %v1876, 1
        %v1905 = vsel %vm1371, %v1903, %v1904
        %v1906 = vrot.slane %v1872, 1
        %v1907 = vrot.slane %v1877, 1
        %v1908 = vsel %vm1371, %v1906, %v1907
        %v1909 = vrot.slane %v1873, 1
        %v1910 = vrot.slane %v1878, 1
        %v1911 = vsel %vm1371, %v1909, %v1910
        %v1912 = vrot.slane %v1874, 1
        %v1913 = vrot.slane %v1879, 1
        %v1914 = vsel %vm1371, %v1912, %v1913
        %v1915 = vrot.slane %v1880, 1
        %v1916 = vsel %vm1371, %v1901, %v1915
        %v1917 = vrot.slane %v1881, 1
        %v1918 = vsel %vm1371, %v1904, %v1917
        %v1919 = vrot.slane %v1882, 1
        %v1920 = vsel %vm1371, %v1907, %v1919
        %v1921 = vrot.slane %v1883, 1
        %v1922 = vsel %vm1371, %v1910, %v1921
        %v1923 = vrot.slane %v1884, 1
        %v1924 = vsel %vm1371, %v1913, %v1923
        %v1940 = vadd.f32 %v1832, %v1902
        %v1941 = vadd.f32 %v1833, %v1905
        %v1942 = vadd.f32 %v1834, %v1908
        %v1943 = vadd.f32 %v1835, %v1911
        %v1944 = vadd.f32 %v1836, %v1914
        %v1945 = vadd.f32 %v1837, %v1916
        %v1946 = vadd.f32 %v1838, %v1918
        %v1947 = vadd.f32 %v1839, %v1920
        %v1948 = vadd.f32 %v1840, %v1922
        %v1949 = vadd.f32 %v1841, %v1924
        %v1950 = vadd.f32 %v1842, %v1915
        %v1951 = vadd.f32 %v1843, %v1917
        %v1952 = vadd.f32 %v1844, %v1919
        %v1953 = vadd.f32 %v1845, %v1921
        %v1954 = vadd.f32 %v1846, %v1923
        %v1955 = vld [vmem:[#allocation2 + $0xb0] sm:$0xff]
        %v1956 = vld [vmem:[#allocation2 + $0xb8] sm:$0xff]
        %v1957 = vld [vmem:[#allocation2 + $0xc0] sm:$0xff]
        %v1958 = vld [vmem:[#allocation2 + $0xc8] sm:$0xff]
        %v1959 = vld [vmem:[#allocation2 + $0xd0] sm:$0xff]
        %s1960 = scalar_lea.vmem [#allocation7], 34
        %v1961 = vld [vmem:[%s1960] ss:$8 sm:$0xf]
        %v1963 = vperm.slane %v1961, 0
        %v1964 = vperm.slane %v1961, 1
        %v1965 = vperm.slane %v1961, 2
        %v1966 = vperm.slane %v1961, 3
        %1967 = vrot.lane.b32.xlu0 %v1963, 64
        %v1968 = vpop.permute.xlu0 %1967
        %1969 = vrot.lane.b32.xlu0 %v1964, 64
        %v1970 = vpop.permute.xlu0 %1969
        %1971 = vrot.lane.b32.xlu0 %v1965, 64
        %v1972 = vpop.permute.xlu0 %1971
        %1973 = vrot.lane.b32.xlu0 %v1966, 64
        %v1974 = vpop.permute.xlu0 %1973
        %v1975 = vsel %vm863, %v1968, %v1970
        %v1976 = vsel %vm863, %v1970, %v1972
        %v1977 = vsel %vm863, %v1972, %v1974
        %v1983 = vmul.f32 %v839, %v1968
        %v1984 = vmul.f32 %v840, %v1975
        %v1985 = vmul.f32 %v841, %v1976
        %v1986 = vmul.f32 %v842, %v1977
        %v1987 = vmul.f32 %v843, %v1974
        %v1988 = vmul.f32 %v1955, %v1968
        %v1989 = vmul.f32 %v1956, %v1975
        %v1990 = vmul.f32 %v1957, %v1976
        %v1991 = vmul.f32 %v1958, %v1977
        %v1992 = vmul.f32 %v1959, %v1974
        %vm2003 = vcmask 1045504
        %v2004 = vrot.slane %v1983, 2
        %v2005 = vrot.slane %v1984, 2
        %v2006 = vrot.slane %v1985, 2
        %v2007 = vrot.slane %v1986, 2
        %v2008 = vrot.slane %v1987, 2
        %v2009 = vrot.slane %v1988, 2
        %v2010 = vsel %vm2003, %v2004, %v2009
        %v2011 = vrot.slane %v1989, 2
        %v2012 = vsel %vm2003, %v2005, %v2011
        %v2013 = vrot.slane %v1990, 2
        %v2014 = vsel %vm2003, %v2006, %v2013
        %v2015 = vrot.slane %v1991, 2
        %v2016 = vsel %vm2003, %v2007, %v2015
        %v2017 = vrot.slane %v1992, 2
        %v2018 = vsel %vm2003, %v2008, %v2017
        %v2034 = vadd.f32 %v1940, %v2004
        %v2035 = vadd.f32 %v1941, %v2005
        %v2036 = vadd.f32 %v1942, %v2006
        %v2037 = vadd.f32 %v1943, %v2007
        %v2038 = vadd.f32 %v1944, %v2008
        %v2039 = vadd.f32 %v1945, %v2010
        %v2040 = vadd.f32 %v1946, %v2012
        %v2041 = vadd.f32 %v1947, %v2014
        %v2042 = vadd.f32 %v1948, %v2016
        %v2043 = vadd.f32 %v1949, %v2018
        %v2044 = vadd.f32 %v1950, %v2009
        %v2045 = vadd.f32 %v1951, %v2011
        %v2046 = vadd.f32 %v1952, %v2013
        %v2047 = vadd.f32 %v1953, %v2015
        %v2048 = vadd.f32 %v1954, %v2017
        %s2049 = scalar_lea.vmem [#allocation7], 35
        %v2050 = vld [vmem:[%s2049] ss:$8 sm:$0xf]
        %v2052 = vperm.slane %v2050, 0
        %v2053 = vperm.slane %v2050, 1
        %v2054 = vperm.slane %v2050, 2
        %v2055 = vperm.slane %v2050, 3
        %2056 = vrot.lane.b32.xlu0 %v2052, 96
        %v2057 = vpop.permute.xlu0 %2056
        %2058 = vrot.lane.b32.xlu0 %v2053, 96
        %v2059 = vpop.permute.xlu0 %2058
        %2060 = vrot.lane.b32.xlu0 %v2054, 96
        %v2061 = vpop.permute.xlu0 %2060
        %2062 = vrot.lane.b32.xlu0 %v2055, 96
        %v2063 = vpop.permute.xlu0 %2062
        %v2064 = vsel %vm917, %v2057, %v2059
        %v2065 = vsel %vm917, %v2059, %v2061
        %v2066 = vsel %vm917, %v2061, %v2063
        %v2072 = vmul.f32 %v839, %v2057
        %v2073 = vmul.f32 %v840, %v2064
        %v2074 = vmul.f32 %v841, %v2065
        %v2075 = vmul.f32 %v842, %v2066
        %v2076 = vmul.f32 %v843, %v2063
        %v2077 = vmul.f32 %v1955, %v2057
        %v2078 = vmul.f32 %v1956, %v2064
        %v2079 = vmul.f32 %v1957, %v2065
        %v2080 = vmul.f32 %v1958, %v2066
        %v2081 = vmul.f32 %v1959, %v2063
        %v2092 = vrot.slane %v2072, 2
        %v2093 = vrot.slane %v2073, 2
        %v2094 = vrot.slane %v2074, 2
        %v2095 = vrot.slane %v2075, 2
        %v2096 = vrot.slane %v2076, 2
        %v2097 = vrot.slane %v2077, 2
        %v2098 = vsel %vm2003, %v2092, %v2097
        %v2099 = vrot.slane %v2078, 2
        %v2100 = vsel %vm2003, %v2093, %v2099
        %v2101 = vrot.slane %v2079, 2
        %v2102 = vsel %vm2003, %v2094, %v2101
        %v2103 = vrot.slane %v2080, 2
        %v2104 = vsel %vm2003, %v2095, %v2103
        %v2105 = vrot.slane %v2081, 2
        %v2106 = vsel %vm2003, %v2096, %v2105
        %2107 = vrot.lane.b32.xlu0 %v2092, 96
        %v2108 = vpop.permute.xlu0 %2107
        %2109 = vrot.lane.b32.xlu0 %v2093, 96
        %v2110 = vpop.permute.xlu0 %2109
        %2111 = vrot.lane.b32.xlu0 %v2094, 96
        %v2112 = vpop.permute.xlu0 %2111
        %2113 = vrot.lane.b32.xlu0 %v2095, 96
        %v2114 = vpop.permute.xlu0 %2113
        %2115 = vrot.lane.b32.xlu0 %v2096, 96
        %v2116 = vpop.permute.xlu0 %2115
        %2117 = vrot.lane.b32.xlu0 %v2098, 96
        %v2118 = vpop.permute.xlu0 %2117
        %2119 = vrot.lane.b32.xlu0 %v2100, 96
        %v2120 = vpop.permute.xlu0 %2119
        %2121 = vrot.lane.b32.xlu0 %v2102, 96
        %v2122 = vpop.permute.xlu0 %2121
        %2123 = vrot.lane.b32.xlu0 %v2104, 96
        %v2124 = vpop.permute.xlu0 %2123
        %2125 = vrot.lane.b32.xlu0 %v2106, 96
        %v2126 = vpop.permute.xlu0 %2125
        %2127 = vrot.lane.b32.xlu0 %v2097, 96
        %v2128 = vpop.permute.xlu0 %2127
        %2129 = vrot.lane.b32.xlu0 %v2099, 96
        %v2130 = vpop.permute.xlu0 %2129
        %2131 = vrot.lane.b32.xlu0 %v2101, 96
        %v2132 = vpop.permute.xlu0 %2131
        %2133 = vrot.lane.b32.xlu0 %v2103, 96
        %v2134 = vpop.permute.xlu0 %2133
        %2135 = vrot.lane.b32.xlu0 %v2105, 96
        %v2136 = vpop.permute.xlu0 %2135
        %v2137 = vsel %vm917, %v2108, %v2110
        %v2138 = vsel %vm917, %v2110, %v2112
        %v2139 = vsel %vm917, %v2112, %v2114
        %v2140 = vsel %vm917, %v2114, %v2116
        %v2141 = vsel %vm917, %v2118, %v2120
        %v2142 = vsel %vm917, %v2120, %v2122
        %v2143 = vsel %vm917, %v2122, %v2124
        %v2144 = vsel %vm917, %v2124, %v2126
        %v2145 = vsel %vm917, %v2128, %v2130
        %v2146 = vsel %vm917, %v2130, %v2132
        %v2147 = vsel %vm917, %v2132, %v2134
        %v2148 = vsel %vm917, %v2134, %v2136
        %v2164 = vadd.f32 %v2034, %v2137
        %v2165 = vadd.f32 %v2035, %v2138
        %v2166 = vadd.f32 %v2036, %v2139
        %v2167 = vadd.f32 %v2037, %v2140
        %v2168 = vadd.f32 %v2038, %v2116
        %v2169 = vadd.f32 %v2039, %v2141
        %v2170 = vadd.f32 %v2040, %v2142
        %v2171 = vadd.f32 %v2041, %v2143
        %v2172 = vadd.f32 %v2042, %v2144
        %v2173 = vadd.f32 %v2043, %v2126
        %v2174 = vadd.f32 %v2044, %v2145
        %v2175 = vadd.f32 %v2045, %v2146
        %v2176 = vadd.f32 %v2046, %v2147
        %v2177 = vadd.f32 %v2047, %v2148
        %v2178 = vadd.f32 %v2048, %v2136
        %s2179 = scalar_lea.vmem [#allocation7], 36
        %v2180 = vld [vmem:[%s2179] ss:$8 sm:$0xf]
        %v2182 = vperm.slane %v2180, 0
        %v2183 = vperm.slane %v2180, 1
        %v2184 = vperm.slane %v2180, 2
        %v2185 = vperm.slane %v2180, 3
        %v2190 = vmul.f32 %v840, %v2182
        %v2191 = vmul.f32 %v841, %v2183
        %v2192 = vmul.f32 %v842, %v2184
        %v2193 = vmul.f32 %v843, %v2185
        %v2194 = vmul.f32 %v1956, %v2182
        %v2195 = vmul.f32 %v1957, %v2183
        %v2196 = vmul.f32 %v1958, %v2184
        %v2197 = vmul.f32 %v1959, %v2185
        %v2206 = vrot.slane %v2190, 2
        %v2207 = vrot.slane %v2191, 2
        %v2208 = vrot.slane %v2192, 2
        %v2209 = vrot.slane %v2193, 2
        %v2210 = vrot.slane %v2194, 2
        %v2211 = vsel %vm2003, %v2206, %v2210
        %v2212 = vrot.slane %v2195, 2
        %v2213 = vsel %vm2003, %v2207, %v2212
        %v2214 = vrot.slane %v2196, 2
        %v2215 = vsel %vm2003, %v2208, %v2214
        %v2216 = vrot.slane %v2197, 2
        %v2217 = vsel %vm2003, %v2209, %v2216
        %2218 = vrot.lane.b32.xlu0 %v2206, 64
        %v2219 = vpop.permute.xlu0 %2218
        %2220 = vrot.lane.b32.xlu0 %v2207, 64
        %v2221 = vpop.permute.xlu0 %2220
        %2222 = vrot.lane.b32.xlu0 %v2208, 64
        %v2223 = vpop.permute.xlu0 %2222
        %2224 = vrot.lane.b32.xlu0 %v2209, 64
        %v2225 = vpop.permute.xlu0 %2224
        %2226 = vrot.lane.b32.xlu0 %v2211, 64
        %v2227 = vpop.permute.xlu0 %2226
        %2228 = vrot.lane.b32.xlu0 %v2213, 64
        %v2229 = vpop.permute.xlu0 %2228
        %2230 = vrot.lane.b32.xlu0 %v2215, 64
        %v2231 = vpop.permute.xlu0 %2230
        %2232 = vrot.lane.b32.xlu0 %v2217, 64
        %v2233 = vpop.permute.xlu0 %2232
        %2234 = vrot.lane.b32.xlu0 %v2210, 64
        %v2235 = vpop.permute.xlu0 %2234
        %2236 = vrot.lane.b32.xlu0 %v2212, 64
        %v2237 = vpop.permute.xlu0 %2236
        %2238 = vrot.lane.b32.xlu0 %v2214, 64
        %v2239 = vpop.permute.xlu0 %2238
        %2240 = vrot.lane.b32.xlu0 %v2216, 64
        %v2241 = vpop.permute.xlu0 %2240
        %v2242 = vsel %vm863, %v2219, %v2221
        %v2243 = vsel %vm863, %v2221, %v2223
        %v2244 = vsel %vm863, %v2223, %v2225
        %v2245 = vsel %vm863, %v2227, %v2229
        %v2246 = vsel %vm863, %v2229, %v2231
        %v2247 = vsel %vm863, %v2231, %v2233
        %v2248 = vsel %vm863, %v2235, %v2237
        %v2249 = vsel %vm863, %v2237, %v2239
        %v2250 = vsel %vm863, %v2239, %v2241
        %v2266 = vadd.f32 %v2164, %v2219
        %v2267 = vadd.f32 %v2165, %v2242
        %v2268 = vadd.f32 %v2166, %v2243
        %v2269 = vadd.f32 %v2167, %v2244
        %v2270 = vadd.f32 %v2168, %v2225
        %v2271 = vadd.f32 %v2169, %v2227
        %v2272 = vadd.f32 %v2170, %v2245
        %v2273 = vadd.f32 %v2171, %v2246
        %v2274 = vadd.f32 %v2172, %v2247
        %v2275 = vadd.f32 %v2173, %v2233
        %v2276 = vadd.f32 %v2174, %v2235
        %v2277 = vadd.f32 %v2175, %v2248
        %v2278 = vadd.f32 %v2176, %v2249
        %v2279 = vadd.f32 %v2177, %v2250
        %v2280 = vadd.f32 %v2178, %v2241
        %v2281 = vld [vmem:[#allocation2 + $0xd8] sm:$0xff]
        %s2282 = scalar_lea.vmem [#allocation7], 37
        %v2283 = vld [vmem:[%s2282] ss:$8 sm:$0xf]
        %v2285 = vperm.slane %v2283, 0
        %v2286 = vperm.slane %v2283, 1
        %v2287 = vperm.slane %v2283, 2
        %v2288 = vperm.slane %v2283, 3
        %2289 = vrot.lane.b32.xlu0 %v2285, 32
        %v2290 = vpop.permute.xlu0 %2289
        %2291 = vrot.lane.b32.xlu0 %v2286, 32
        %v2292 = vpop.permute.xlu0 %2291
        %2293 = vrot.lane.b32.xlu0 %v2287, 32
        %v2294 = vpop.permute.xlu0 %2293
        %2295 = vrot.lane.b32.xlu0 %v2288, 32
        %v2296 = vpop.permute.xlu0 %2295
        %v2297 = vsel %vm1144, %v2290, %v2292
        %v2298 = vsel %vm1144, %v2292, %v2294
        %v2299 = vsel %vm1144, %v2294, %v2296
        %v2305 = vmul.f32 %v840, %v2290
        %v2306 = vmul.f32 %v841, %v2297
        %v2307 = vmul.f32 %v842, %v2298
        %v2308 = vmul.f32 %v843, %v2299
        %v2309 = vmul.f32 %v1127, %v2296
        %v2310 = vmul.f32 %v1956, %v2290
        %v2311 = vmul.f32 %v1957, %v2297
        %v2312 = vmul.f32 %v1958, %v2298
        %v2313 = vmul.f32 %v1959, %v2299
        %v2314 = vmul.f32 %v2281, %v2296
        %v2325 = vrot.slane %v2305, 2
        %v2326 = vrot.slane %v2306, 2
        %v2327 = vrot.slane %v2307, 2
        %v2328 = vrot.slane %v2308, 2
        %v2329 = vrot.slane %v2309, 2
        %v2330 = vrot.slane %v2310, 2
        %v2331 = vsel %vm2003, %v2325, %v2330
        %v2332 = vrot.slane %v2311, 2
        %v2333 = vsel %vm2003, %v2326, %v2332
        %v2334 = vrot.slane %v2312, 2
        %v2335 = vsel %vm2003, %v2327, %v2334
        %v2336 = vrot.slane %v2313, 2
        %v2337 = vsel %vm2003, %v2328, %v2336
        %v2338 = vrot.slane %v2314, 2
        %v2339 = vsel %vm2003, %v2329, %v2338
        %2340 = vrot.lane.b32.xlu0 %v2325, 32
        %v2341 = vpop.permute.xlu0 %2340
        %2342 = vrot.lane.b32.xlu0 %v2326, 32
        %v2343 = vpop.permute.xlu0 %2342
        %2344 = vrot.lane.b32.xlu0 %v2327, 32
        %v2345 = vpop.permute.xlu0 %2344
        %2346 = vrot.lane.b32.xlu0 %v2328, 32
        %v2347 = vpop.permute.xlu0 %2346
        %2348 = vrot.lane.b32.xlu0 %v2329, 32
        %v2349 = vpop.permute.xlu0 %2348
        %2350 = vrot.lane.b32.xlu0 %v2331, 32
        %v2351 = vpop.permute.xlu0 %2350
        %2352 = vrot.lane.b32.xlu0 %v2333, 32
        %v2353 = vpop.permute.xlu0 %2352
        %2354 = vrot.lane.b32.xlu0 %v2335, 32
        %v2355 = vpop.permute.xlu0 %2354
        %2356 = vrot.lane.b32.xlu0 %v2337, 32
        %v2357 = vpop.permute.xlu0 %2356
        %2358 = vrot.lane.b32.xlu0 %v2339, 32
        %v2359 = vpop.permute.xlu0 %2358
        %2360 = vrot.lane.b32.xlu0 %v2330, 32
        %v2361 = vpop.permute.xlu0 %2360
        %2362 = vrot.lane.b32.xlu0 %v2332, 32
        %v2363 = vpop.permute.xlu0 %2362
        %2364 = vrot.lane.b32.xlu0 %v2334, 32
        %v2365 = vpop.permute.xlu0 %2364
        %2366 = vrot.lane.b32.xlu0 %v2336, 32
        %v2367 = vpop.permute.xlu0 %2366
        %2368 = vrot.lane.b32.xlu0 %v2338, 32
        %v2369 = vpop.permute.xlu0 %2368
        %v2370 = vsel %vm1144, %v2341, %v2343
        %v2371 = vsel %vm1144, %v2343, %v2345
        %v2372 = vsel %vm1144, %v2345, %v2347
        %v2373 = vsel %vm1144, %v2347, %v2349
        %v2374 = vsel %vm1144, %v2351, %v2353
        %v2375 = vsel %vm1144, %v2353, %v2355
        %v2376 = vsel %vm1144, %v2355, %v2357
        %v2377 = vsel %vm1144, %v2357, %v2359
        %v2378 = vsel %vm1144, %v2361, %v2363
        %v2379 = vsel %vm1144, %v2363, %v2365
        %v2380 = vsel %vm1144, %v2365, %v2367
        %v2381 = vsel %vm1144, %v2367, %v2369
        %v2397 = vadd.f32 %v2266, %v2341
        %v2398 = vadd.f32 %v2267, %v2370
        %v2399 = vadd.f32 %v2268, %v2371
        %v2400 = vadd.f32 %v2269, %v2372
        %v2401 = vadd.f32 %v2270, %v2373
        %v2402 = vadd.f32 %v2271, %v2351
        %v2403 = vadd.f32 %v2272, %v2374
        %v2404 = vadd.f32 %v2273, %v2375
        %v2405 = vadd.f32 %v2274, %v2376
        %v2406 = vadd.f32 %v2275, %v2377
        %v2407 = vadd.f32 %v2276, %v2361
        %v2408 = vadd.f32 %v2277, %v2378
        %v2409 = vadd.f32 %v2278, %v2379
        %v2410 = vadd.f32 %v2279, %v2380
        %v2411 = vadd.f32 %v2280, %v2381
        %s2412 = scalar_lea.vmem [#allocation7], 38
        %v2413 = vld [vmem:[%s2412] ss:$8 sm:$0xf]
        %v2415 = vperm.slane %v2413, 0
        %v2416 = vperm.slane %v2413, 1
        %v2417 = vperm.slane %v2413, 2
        %v2418 = vperm.slane %v2413, 3
        %2419 = vrot.lane.b32.xlu0 %v2415, 64
        %v2420 = vpop.permute.xlu0 %2419
        %2421 = vrot.lane.b32.xlu0 %v2416, 64
        %v2422 = vpop.permute.xlu0 %2421
        %2423 = vrot.lane.b32.xlu0 %v2417, 64
        %v2424 = vpop.permute.xlu0 %2423
        %2425 = vrot.lane.b32.xlu0 %v2418, 64
        %v2426 = vpop.permute.xlu0 %2425
        %v2427 = vsel %vm863, %v2420, %v2422
        %v2428 = vsel %vm863, %v2422, %v2424
        %v2429 = vsel %vm863, %v2424, %v2426
        %v2435 = vmul.f32 %v840, %v2420
        %v2436 = vmul.f32 %v841, %v2427
        %v2437 = vmul.f32 %v842, %v2428
        %v2438 = vmul.f32 %v843, %v2429
        %v2439 = vmul.f32 %v1127, %v2426
        %v2440 = vmul.f32 %v1956, %v2420
        %v2441 = vmul.f32 %v1957, %v2427
        %v2442 = vmul.f32 %v1958, %v2428
        %v2443 = vmul.f32 %v1959, %v2429
        %v2444 = vmul.f32 %v2281, %v2426
        %v2455 = vrot.slane %v2435, 2
        %v2456 = vrot.slane %v2436, 2
        %v2457 = vrot.slane %v2437, 2
        %v2458 = vrot.slane %v2438, 2
        %v2459 = vrot.slane %v2439, 2
        %v2460 = vrot.slane %v2440, 2
        %v2461 = vsel %vm2003, %v2455, %v2460
        %v2462 = vrot.slane %v2441, 2
        %v2463 = vsel %vm2003, %v2456, %v2462
        %v2464 = vrot.slane %v2442, 2
        %v2465 = vsel %vm2003, %v2457, %v2464
        %v2466 = vrot.slane %v2443, 2
        %v2467 = vsel %vm2003, %v2458, %v2466
        %v2468 = vrot.slane %v2444, 2
        %v2469 = vsel %vm2003, %v2459, %v2468
        %v2485 = vadd.f32 %v2397, %v2455
        %v2486 = vadd.f32 %v2398, %v2456
        %v2487 = vadd.f32 %v2399, %v2457
        %v2488 = vadd.f32 %v2400, %v2458
        %v2489 = vadd.f32 %v2401, %v2459
        %v2490 = vadd.f32 %v2402, %v2461
        %v2491 = vadd.f32 %v2403, %v2463
        %v2492 = vadd.f32 %v2404, %v2465
        %v2493 = vadd.f32 %v2405, %v2467
        %v2494 = vadd.f32 %v2406, %v2469
        %v2495 = vadd.f32 %v2407, %v2460
        %v2496 = vadd.f32 %v2408, %v2462
        %v2497 = vadd.f32 %v2409, %v2464
        %v2498 = vadd.f32 %v2410, %v2466
        %v2499 = vadd.f32 %v2411, %v2468
        %v2500 = vld [vmem:[#allocation2 + $0x60] sm:$0xfe]
        %v2501 = vld [vmem:[#allocation2 + $0x68] sm:$0xfe]
        %v2502 = vld [vmem:[#allocation2 + $0x70] sm:$0xfe]
        %v2503 = vld [vmem:[#allocation2 + $0x78] sm:$0xfe]
        %v2504 = vld [vmem:[#allocation2 + $0x80] sm:$0xfe]
        %v2505 = vld [vmem:[#allocation2 + $0x100] sm:$0x1]
        %v2506 = vld [vmem:[#allocation2 + $0x108] sm:$0x1]
        %v2507 = vld [vmem:[#allocation2 + $0x110] sm:$0x1]
        %v2508 = vld [vmem:[#allocation2 + $0x118] sm:$0x1]
        %v2509 = vld [vmem:[#allocation2 + $0x120] sm:$0x1]
        %s2510 = scalar_lea.vmem [#allocation7], 39
        %v2511 = vld [vmem:[%s2510] ss:$8 sm:$0xf]
        %v2513 = vperm.slane %v2511, 0
        %v2514 = vperm.slane %v2511, 1
        %v2515 = vperm.slane %v2511, 2
        %v2516 = vperm.slane %v2511, 3
        %2517 = vrot.lane.b32.xlu0 %v2513, 64
        %v2518 = vpop.permute.xlu0 %2517
        %2519 = vrot.lane.b32.xlu0 %v2514, 64
        %v2520 = vpop.permute.xlu0 %2519
        %2521 = vrot.lane.b32.xlu0 %v2515, 64
        %v2522 = vpop.permute.xlu0 %2521
        %2523 = vrot.lane.b32.xlu0 %v2516, 64
        %v2524 = vpop.permute.xlu0 %2523
        %v2525 = vsel %vm863, %v2518, %v2520
        %v2526 = vsel %vm863, %v2520, %v2522
        %v2527 = vsel %vm863, %v2522, %v2524
        %v2533 = vmul.f32 %v2500, %v2518
        %v2534 = vmul.f32 %v2501, %v2525
        %v2535 = vmul.f32 %v2502, %v2526
        %v2536 = vmul.f32 %v2503, %v2527
        %v2537 = vmul.f32 %v2504, %v2524
        %v2538 = vmul.f32 %v1955, %v2518
        %v2539 = vmul.f32 %v1956, %v2525
        %v2540 = vmul.f32 %v1957, %v2526
        %v2541 = vmul.f32 %v1958, %v2527
        %v2542 = vmul.f32 %v1959, %v2524
        %v2543 = vmul.f32 %v2505, %v2518
        %v2544 = vmul.f32 %v2506, %v2525
        %v2545 = vmul.f32 %v2507, %v2526
        %v2546 = vmul.f32 %v2508, %v2527
        %v2547 = vmul.f32 %v2509, %v2524
        %vm2563 = vcmask 1044480
        %v2564 = vrot.slane %v2533, 3
        %v2565 = vrot.slane %v2534, 3
        %v2566 = vrot.slane %v2535, 3
        %v2567 = vrot.slane %v2536, 3
        %v2568 = vrot.slane %v2537, 3
        %v2569 = vrot.slane %v2538, 3
        %v2570 = vsel %vm2563, %v2564, %v2569
        %v2571 = vrot.slane %v2539, 3
        %v2572 = vsel %vm2563, %v2565, %v2571
        %v2573 = vrot.slane %v2540, 3
        %v2574 = vsel %vm2563, %v2566, %v2573
        %v2575 = vrot.slane %v2541, 3
        %v2576 = vsel %vm2563, %v2567, %v2575
        %v2577 = vrot.slane %v2542, 3
        %v2578 = vsel %vm2563, %v2568, %v2577
        %v2579 = vrot.slane %v2543, 3
        %v2580 = vsel %vm2563, %v2569, %v2579
        %v2581 = vrot.slane %v2544, 3
        %v2582 = vsel %vm2563, %v2571, %v2581
        %v2583 = vrot.slane %v2545, 3
        %v2584 = vsel %vm2563, %v2573, %v2583
        %v2585 = vrot.slane %v2546, 3
        %v2586 = vsel %vm2563, %v2575, %v2585
        %v2587 = vrot.slane %v2547, 3
        %v2588 = vsel %vm2563, %v2577, %v2587
        %v2604 = vadd.f32 %v2485, %v2564
        %v2605 = vadd.f32 %v2486, %v2565
        %v2606 = vadd.f32 %v2487, %v2566
        %v2607 = vadd.f32 %v2488, %v2567
        %v2608 = vadd.f32 %v2489, %v2568
        %v2609 = vadd.f32 %v2490, %v2570
        %v2610 = vadd.f32 %v2491, %v2572
        %v2611 = vadd.f32 %v2492, %v2574
        %v2612 = vadd.f32 %v2493, %v2576
        %v2613 = vadd.f32 %v2494, %v2578
        %v2614 = vadd.f32 %v2495, %v2580
        %v2615 = vadd.f32 %v2496, %v2582
        %v2616 = vadd.f32 %v2497, %v2584
        %v2617 = vadd.f32 %v2498, %v2586
        %v2618 = vadd.f32 %v2499, %v2588
        %s2619 = scalar_lea.vmem [#allocation7], 64
        %v2620 = vld [vmem:[%s2619] ss:$8 sm:$0xf]
        %v2622 = vperm.slane %v2620, 0
        %v2623 = vperm.slane %v2620, 1
        %v2624 = vperm.slane %v2620, 2
        %v2625 = vperm.slane %v2620, 3
        %2626 = vrot.lane.b32.xlu0 %v2622, 96
        %v2627 = vpop.permute.xlu0 %2626
        %2628 = vrot.lane.b32.xlu0 %v2623, 96
        %v2629 = vpop.permute.xlu0 %2628
        %2630 = vrot.lane.b32.xlu0 %v2624, 96
        %v2631 = vpop.permute.xlu0 %2630
        %2632 = vrot.lane.b32.xlu0 %v2625, 96
        %v2633 = vpop.permute.xlu0 %2632
        %v2634 = vsel %vm917, %v2627, %v2629
        %v2635 = vsel %vm917, %v2629, %v2631
        %v2636 = vsel %vm917, %v2631, %v2633
        %v2642 = vmul.f32 %v2500, %v2627
        %v2643 = vmul.f32 %v2501, %v2634
        %v2644 = vmul.f32 %v2502, %v2635
        %v2645 = vmul.f32 %v2503, %v2636
        %v2646 = vmul.f32 %v2504, %v2633
        %v2647 = vmul.f32 %v1955, %v2627
        %v2648 = vmul.f32 %v1956, %v2634
        %v2649 = vmul.f32 %v1957, %v2635
        %v2650 = vmul.f32 %v1958, %v2636
        %v2651 = vmul.f32 %v1959, %v2633
        %v2652 = vmul.f32 %v2505, %v2627
        %v2653 = vmul.f32 %v2506, %v2634
        %v2654 = vmul.f32 %v2507, %v2635
        %v2655 = vmul.f32 %v2508, %v2636
        %v2656 = vmul.f32 %v2509, %v2633
        %v2672 = vrot.slane %v2642, 3
        %v2673 = vrot.slane %v2643, 3
        %v2674 = vrot.slane %v2644, 3
        %v2675 = vrot.slane %v2645, 3
        %v2676 = vrot.slane %v2646, 3
        %v2677 = vrot.slane %v2647, 3
        %v2678 = vsel %vm2563, %v2672, %v2677
        %v2679 = vrot.slane %v2648, 3
        %v2680 = vsel %vm2563, %v2673, %v2679
        %v2681 = vrot.slane %v2649, 3
        %v2682 = vsel %vm2563, %v2674, %v2681
        %v2683 = vrot.slane %v2650, 3
        %v2684 = vsel %vm2563, %v2675, %v2683
        %v2685 = vrot.slane %v2651, 3
        %v2686 = vsel %vm2563, %v2676, %v2685
        %v2687 = vrot.slane %v2652, 3
        %v2688 = vsel %vm2563, %v2677, %v2687
        %v2689 = vrot.slane %v2653, 3
        %v2690 = vsel %vm2563, %v2679, %v2689
        %v2691 = vrot.slane %v2654, 3
        %v2692 = vsel %vm2563, %v2681, %v2691
        %v2693 = vrot.slane %v2655, 3
        %v2694 = vsel %vm2563, %v2683, %v2693
        %v2695 = vrot.slane %v2656, 3
        %v2696 = vsel %vm2563, %v2685, %v2695
        %2697 = vrot.lane.b32.xlu0 %v2672, 96
        %v2698 = vpop.permute.xlu0 %2697
        %2699 = vrot.lane.b32.xlu0 %v2673, 96
        %v2700 = vpop.permute.xlu0 %2699
        %2701 = vrot.lane.b32.xlu0 %v2674, 96
        %v2702 = vpop.permute.xlu0 %2701
        %2703 = vrot.lane.b32.xlu0 %v2675, 96
        %v2704 = vpop.permute.xlu0 %2703
        %2705 = vrot.lane.b32.xlu0 %v2676, 96
        %v2706 = vpop.permute.xlu0 %2705
        %2707 = vrot.lane.b32.xlu0 %v2678, 96
        %v2708 = vpop.permute.xlu0 %2707
        %2709 = vrot.lane.b32.xlu0 %v2680, 96
        %v2710 = vpop.permute.xlu0 %2709
        %2711 = vrot.lane.b32.xlu0 %v2682, 96
        %v2712 = vpop.permute.xlu0 %2711
        %2713 = vrot.lane.b32.xlu0 %v2684, 96
        %v2714 = vpop.permute.xlu0 %2713
        %2715 = vrot.lane.b32.xlu0 %v2686, 96
        %v2716 = vpop.permute.xlu0 %2715
        %2717 = vrot.lane.b32.xlu0 %v2688, 96
        %v2718 = vpop.permute.xlu0 %2717
        %2719 = vrot.lane.b32.xlu0 %v2690, 96
        %v2720 = vpop.permute.xlu0 %2719
        %2721 = vrot.lane.b32.xlu0 %v2692, 96
        %v2722 = vpop.permute.xlu0 %2721
        %2723 = vrot.lane.b32.xlu0 %v2694, 96
        %v2724 = vpop.permute.xlu0 %2723
        %2725 = vrot.lane.b32.xlu0 %v2696, 96
        %v2726 = vpop.permute.xlu0 %2725
        %v2727 = vsel %vm917, %v2698, %v2700
        %v2728 = vsel %vm917, %v2700, %v2702
        %v2729 = vsel %vm917, %v2702, %v2704
        %v2730 = vsel %vm917, %v2704, %v2706
        %v2731 = vsel %vm917, %v2708, %v2710
        %v2732 = vsel %vm917, %v2710, %v2712
        %v2733 = vsel %vm917, %v2712, %v2714
        %v2734 = vsel %vm917, %v2714, %v2716
        %v2735 = vsel %vm917, %v2718, %v2720
        %v2736 = vsel %vm917, %v2720, %v2722
        %v2737 = vsel %vm917, %v2722, %v2724
        %v2738 = vsel %vm917, %v2724, %v2726
        %v2754 = vadd.f32 %v2604, %v2727
        %v2755 = vadd.f32 %v2605, %v2728
        %v2756 = vadd.f32 %v2606, %v2729
        %v2757 = vadd.f32 %v2607, %v2730
        %v2758 = vadd.f32 %v2608, %v2706
        %v2759 = vadd.f32 %v2609, %v2731
        %v2760 = vadd.f32 %v2610, %v2732
        %v2761 = vadd.f32 %v2611, %v2733
        %v2762 = vadd.f32 %v2612, %v2734
        %v2763 = vadd.f32 %v2613, %v2716
        %v2764 = vadd.f32 %v2614, %v2735
        %v2765 = vadd.f32 %v2615, %v2736
        %v2766 = vadd.f32 %v2616, %v2737
        %v2767 = vadd.f32 %v2617, %v2738
        %v2768 = vadd.f32 %v2618, %v2726
        %s2769 = scalar_lea.vmem [#allocation7], 65
        %v2770 = vld [vmem:[%s2769] ss:$8 sm:$0xf]
        %v2772 = vperm.slane %v2770, 0
        %v2773 = vperm.slane %v2770, 1
        %v2774 = vperm.slane %v2770, 2
        %v2775 = vperm.slane %v2770, 3
        %v2780 = vmul.f32 %v2501, %v2772
        %v2781 = vmul.f32 %v2502, %v2773
        %v2782 = vmul.f32 %v2503, %v2774
        %v2783 = vmul.f32 %v2504, %v2775
        %v2784 = vmul.f32 %v1956, %v2772
        %v2785 = vmul.f32 %v1957, %v2773
        %v2786 = vmul.f32 %v1958, %v2774
        %v2787 = vmul.f32 %v1959, %v2775
        %v2788 = vmul.f32 %v2506, %v2772
        %v2789 = vmul.f32 %v2507, %v2773
        %v2790 = vmul.f32 %v2508, %v2774
        %v2791 = vmul.f32 %v2509, %v2775
        %v2804 = vrot.slane %v2780, 3
        %v2805 = vrot.slane %v2781, 3
        %v2806 = vrot.slane %v2782, 3
        %v2807 = vrot.slane %v2783, 3
        %v2808 = vrot.slane %v2784, 3
        %v2809 = vsel %vm2563, %v2804, %v2808
        %v2810 = vrot.slane %v2785, 3
        %v2811 = vsel %vm2563, %v2805, %v2810
        %v2812 = vrot.slane %v2786, 3
        %v2813 = vsel %vm2563, %v2806, %v2812
        %v2814 = vrot.slane %v2787, 3
        %v2815 = vsel %vm2563, %v2807, %v2814
        %v2816 = vrot.slane %v2788, 3
        %v2817 = vsel %vm2563, %v2808, %v2816
        %v2818 = vrot.slane %v2789, 3
        %v2819 = vsel %vm2563, %v2810, %v2818
        %v2820 = vrot.slane %v2790, 3
        %v2821 = vsel %vm2563, %v2812, %v2820
        %v2822 = vrot.slane %v2791, 3
        %v2823 = vsel %vm2563, %v2814, %v2822
        %2824 = vrot.lane.b32.xlu0 %v2804, 64
        %v2825 = vpop.permute.xlu0 %2824
        %2826 = vrot.lane.b32.xlu0 %v2805, 64
        %v2827 = vpop.permute.xlu0 %2826
        %2828 = vrot.lane.b32.xlu0 %v2806, 64
        %v2829 = vpop.permute.xlu0 %2828
        %2830 = vrot.lane.b32.xlu0 %v2807, 64
        %v2831 = vpop.permute.xlu0 %2830
        %2832 = vrot.lane.b32.xlu0 %v2809, 64
        %v2833 = vpop.permute.xlu0 %2832
        %2834 = vrot.lane.b32.xlu0 %v2811, 64
        %v2835 = vpop.permute.xlu0 %2834
        %2836 = vrot.lane.b32.xlu0 %v2813, 64
        %v2837 = vpop.permute.xlu0 %2836
        %2838 = vrot.lane.b32.xlu0 %v2815, 64
        %v2839 = vpop.permute.xlu0 %2838
        %2840 = vrot.lane.b32.xlu0 %v2817, 64
        %v2841 = vpop.permute.xlu0 %2840
        %2842 = vrot.lane.b32.xlu0 %v2819, 64
        %v2843 = vpop.permute.xlu0 %2842
        %2844 = vrot.lane.b32.xlu0 %v2821, 64
        %v2845 = vpop.permute.xlu0 %2844
        %2846 = vrot.lane.b32.xlu0 %v2823, 64
        %v2847 = vpop.permute.xlu0 %2846
        %v2848 = vsel %vm863, %v2825, %v2827
        %v2849 = vsel %vm863, %v2827, %v2829
        %v2850 = vsel %vm863, %v2829, %v2831
        %v2851 = vsel %vm863, %v2833, %v2835
        %v2852 = vsel %vm863, %v2835, %v2837
        %v2853 = vsel %vm863, %v2837, %v2839
        %v2854 = vsel %vm863, %v2841, %v2843
        %v2855 = vsel %vm863, %v2843, %v2845
        %v2856 = vsel %vm863, %v2845, %v2847
        %v2872 = vadd.f32 %v2754, %v2825
        %v2873 = vadd.f32 %v2755, %v2848
        %v2874 = vadd.f32 %v2756, %v2849
        %v2875 = vadd.f32 %v2757, %v2850
        %v2876 = vadd.f32 %v2758, %v2831
        %v2877 = vadd.f32 %v2759, %v2833
        %v2878 = vadd.f32 %v2760, %v2851
        %v2879 = vadd.f32 %v2761, %v2852
        %v2880 = vadd.f32 %v2762, %v2853
        %v2881 = vadd.f32 %v2763, %v2839
        %v2882 = vadd.f32 %v2764, %v2841
        %v2883 = vadd.f32 %v2765, %v2854
        %v2884 = vadd.f32 %v2766, %v2855
        %v2885 = vadd.f32 %v2767, %v2856
        %v2886 = vadd.f32 %v2768, %v2847
        %v2887 = vld [vmem:[#allocation2 + $0x88] sm:$0xfe]
        %v2888 = vld [vmem:[#allocation2 + $0x128] sm:$0x1]
        %s2889 = scalar_lea.vmem [#allocation7], 66
        %v2890 = vld [vmem:[%s2889] ss:$8 sm:$0xf]
        %v2892 = vperm.slane %v2890, 0
        %v2893 = vperm.slane %v2890, 1
        %v2894 = vperm.slane %v2890, 2
        %v2895 = vperm.slane %v2890, 3
        %2896 = vrot.lane.b32.xlu0 %v2892, 32
        %v2897 = vpop.permute.xlu0 %2896
        %2898 = vrot.lane.b32.xlu0 %v2893, 32
        %v2899 = vpop.permute.xlu0 %2898
        %2900 = vrot.lane.b32.xlu0 %v2894, 32
        %v2901 = vpop.permute.xlu0 %2900
        %2902 = vrot.lane.b32.xlu0 %v2895, 32
        %v2903 = vpop.permute.xlu0 %2902
        %v2904 = vsel %vm1144, %v2897, %v2899
        %v2905 = vsel %vm1144, %v2899, %v2901
        %v2906 = vsel %vm1144, %v2901, %v2903
        %v2912 = vmul.f32 %v2501, %v2897
        %v2913 = vmul.f32 %v2502, %v2904
        %v2914 = vmul.f32 %v2503, %v2905
        %v2915 = vmul.f32 %v2504, %v2906
        %v2916 = vmul.f32 %v2887, %v2903
        %v2917 = vmul.f32 %v1956, %v2897
        %v2918 = vmul.f32 %v1957, %v2904
        %v2919 = vmul.f32 %v1958, %v2905
        %v2920 = vmul.f32 %v1959, %v2906
        %v2921 = vmul.f32 %v2281, %v2903
        %v2922 = vmul.f32 %v2506, %v2897
        %v2923 = vmul.f32 %v2507, %v2904
        %v2924 = vmul.f32 %v2508, %v2905
        %v2925 = vmul.f32 %v2509, %v2906
        %v2926 = vmul.f32 %v2888, %v2903
        %v2942 = vrot.slane %v2912, 3
        %v2943 = vrot.slane %v2913, 3
        %v2944 = vrot.slane %v2914, 3
        %v2945 = vrot.slane %v2915, 3
        %v2946 = vrot.slane %v2916, 3
        %v2947 = vrot.slane %v2917, 3
        %v2948 = vsel %vm2563, %v2942, %v2947
        %v2949 = vrot.slane %v2918, 3
        %v2950 = vsel %vm2563, %v2943, %v2949
        %v2951 = vrot.slane %v2919, 3
        %v2952 = vsel %vm2563, %v2944, %v2951
        %v2953 = vrot.slane %v2920, 3
        %v2954 = vsel %vm2563, %v2945, %v2953
        %v2955 = vrot.slane %v2921, 3
        %v2956 = vsel %vm2563, %v2946, %v2955
        %v2957 = vrot.slane %v2922, 3
        %v2958 = vsel %vm2563, %v2947, %v2957
        %v2959 = vrot.slane %v2923, 3
        %v2960 = vsel %vm2563, %v2949, %v2959
        %v2961 = vrot.slane %v2924, 3
        %v2962 = vsel %vm2563, %v2951, %v2961
        %v2963 = vrot.slane %v2925, 3
        %v2964 = vsel %vm2563, %v2953, %v2963
        %v2965 = vrot.slane %v2926, 3
        %v2966 = vsel %vm2563, %v2955, %v2965
        %2967 = vrot.lane.b32.xlu0 %v2942, 32
        %v2968 = vpop.permute.xlu0 %2967
        %2969 = vrot.lane.b32.xlu0 %v2943, 32
        %v2970 = vpop.permute.xlu0 %2969
        %2971 = vrot.lane.b32.xlu0 %v2944, 32
        %v2972 = vpop.permute.xlu0 %2971
        %2973 = vrot.lane.b32.xlu0 %v2945, 32
        %v2974 = vpop.permute.xlu0 %2973
        %2975 = vrot.lane.b32.xlu0 %v2946, 32
        %v2976 = vpop.permute.xlu0 %2975
        %2977 = vrot.lane.b32.xlu0 %v2948, 32
        %v2978 = vpop.permute.xlu0 %2977
        %2979 = vrot.lane.b32.xlu0 %v2950, 32
        %v2980 = vpop.permute.xlu0 %2979
        %2981 = vrot.lane.b32.xlu0 %v2952, 32
        %v2982 = vpop.permute.xlu0 %2981
        %2983 = vrot.lane.b32.xlu0 %v2954, 32
        %v2984 = vpop.permute.xlu0 %2983
        %2985 = vrot.lane.b32.xlu0 %v2956, 32
        %v2986 = vpop.permute.xlu0 %2985
        %2987 = vrot.lane.b32.xlu0 %v2958, 32
        %v2988 = vpop.permute.xlu0 %2987
        %2989 = vrot.lane.b32.xlu0 %v2960, 32
        %v2990 = vpop.permute.xlu0 %2989
        %2991 = vrot.lane.b32.xlu0 %v2962, 32
        %v2992 = vpop.permute.xlu0 %2991
        %2993 = vrot.lane.b32.xlu0 %v2964, 32
        %v2994 = vpop.permute.xlu0 %2993
        %2995 = vrot.lane.b32.xlu0 %v2966, 32
        %v2996 = vpop.permute.xlu0 %2995
        %v2997 = vsel %vm1144, %v2968, %v2970
        %v2998 = vsel %vm1144, %v2970, %v2972
        %v2999 = vsel %vm1144, %v2972, %v2974
        %v3000 = vsel %vm1144, %v2974, %v2976
        %v3001 = vsel %vm1144, %v2978, %v2980
        %v3002 = vsel %vm1144, %v2980, %v2982
        %v3003 = vsel %vm1144, %v2982, %v2984
        %v3004 = vsel %vm1144, %v2984, %v2986
        %v3005 = vsel %vm1144, %v2988, %v2990
        %v3006 = vsel %vm1144, %v2990, %v2992
        %v3007 = vsel %vm1144, %v2992, %v2994
        %v3008 = vsel %vm1144, %v2994, %v2996
        %v3024 = vadd.f32 %v2872, %v2968
        %v3025 = vadd.f32 %v2873, %v2997
        %v3026 = vadd.f32 %v2874, %v2998
        %v3027 = vadd.f32 %v2875, %v2999
        %v3028 = vadd.f32 %v2876, %v3000
        %v3029 = vadd.f32 %v2877, %v2978
        %v3030 = vadd.f32 %v2878, %v3001
        %v3031 = vadd.f32 %v2879, %v3002
        %v3032 = vadd.f32 %v2880, %v3003
        %v3033 = vadd.f32 %v2881, %v3004
        %v3034 = vadd.f32 %v2882, %v2988
        %v3035 = vadd.f32 %v2883, %v3005
        %v3036 = vadd.f32 %v2884, %v3006
        %v3037 = vadd.f32 %v2885, %v3007
        %v3038 = vadd.f32 %v2886, %v3008
        %s3039 = scalar_lea.vmem [#allocation7], 67
        %v3040 = vld [vmem:[%s3039] ss:$8 sm:$0xf]
        %v3042 = vperm.slane %v3040, 0
        %v3043 = vperm.slane %v3040, 1
        %v3044 = vperm.slane %v3040, 2
        %v3045 = vperm.slane %v3040, 3
        %3046 = vrot.lane.b32.xlu0 %v3042, 64
        %v3047 = vpop.permute.xlu0 %3046
        %3048 = vrot.lane.b32.xlu0 %v3043, 64
        %v3049 = vpop.permute.xlu0 %3048
        %3050 = vrot.lane.b32.xlu0 %v3044, 64
        %v3051 = vpop.permute.xlu0 %3050
        %3052 = vrot.lane.b32.xlu0 %v3045, 64
        %v3053 = vpop.permute.xlu0 %3052
        %v3054 = vsel %vm863, %v3047, %v3049
        %v3055 = vsel %vm863, %v3049, %v3051
        %v3056 = vsel %vm863, %v3051, %v3053
        %v3062 = vmul.f32 %v2501, %v3047
        %v3063 = vmul.f32 %v2502, %v3054
        %v3064 = vmul.f32 %v2503, %v3055
        %v3065 = vmul.f32 %v2504, %v3056
        %v3066 = vmul.f32 %v2887, %v3053
        %v3067 = vmul.f32 %v1956, %v3047
        %v3068 = vmul.f32 %v1957, %v3054
        %v3069 = vmul.f32 %v1958, %v3055
        %v3070 = vmul.f32 %v1959, %v3056
        %v3071 = vmul.f32 %v2281, %v3053
        %v3072 = vmul.f32 %v2506, %v3047
        %v3073 = vmul.f32 %v2507, %v3054
        %v3074 = vmul.f32 %v2508, %v3055
        %v3075 = vmul.f32 %v2509, %v3056
        %v3076 = vmul.f32 %v2888, %v3053
        %v3092 = vrot.slane %v3062, 3
        %v3093 = vrot.slane %v3063, 3
        %v3094 = vrot.slane %v3064, 3
        %v3095 = vrot.slane %v3065, 3
        %v3096 = vrot.slane %v3066, 3
        %v3097 = vrot.slane %v3067, 3
        %v3098 = vsel %vm2563, %v3092, %v3097
        %v3099 = vrot.slane %v3068, 3
        %v3100 = vsel %vm2563, %v3093, %v3099
        %v3101 = vrot.slane %v3069, 3
        %v3102 = vsel %vm2563, %v3094, %v3101
        %v3103 = vrot.slane %v3070, 3
        %v3104 = vsel %vm2563, %v3095, %v3103
        %v3105 = vrot.slane %v3071, 3
        %v3106 = vsel %vm2563, %v3096, %v3105
        %v3107 = vrot.slane %v3072, 3
        %v3108 = vsel %vm2563, %v3097, %v3107
        %v3109 = vrot.slane %v3073, 3
        %v3110 = vsel %vm2563, %v3099, %v3109
        %v3111 = vrot.slane %v3074, 3
        %v3112 = vsel %vm2563, %v3101, %v3111
        %v3113 = vrot.slane %v3075, 3
        %v3114 = vsel %vm2563, %v3103, %v3113
        %v3115 = vrot.slane %v3076, 3
        %v3116 = vsel %vm2563, %v3105, %v3115
        %v3132 = vadd.f32 %v3024, %v3092
        %v3133 = vadd.f32 %v3025, %v3093
        %v3134 = vadd.f32 %v3026, %v3094
        %v3135 = vadd.f32 %v3027, %v3095
        %v3136 = vadd.f32 %v3028, %v3096
        %v3137 = vadd.f32 %v3029, %v3098
        %v3138 = vadd.f32 %v3030, %v3100
        %v3139 = vadd.f32 %v3031, %v3102
        %v3140 = vadd.f32 %v3032, %v3104
        %v3141 = vadd.f32 %v3033, %v3106
        %v3142 = vadd.f32 %v3034, %v3108
        %v3143 = vadd.f32 %v3035, %v3110
        %v3144 = vadd.f32 %v3036, %v3112
        %v3145 = vadd.f32 %v3037, %v3114
        %v3146 = vadd.f32 %v3038, %v3116
        %v3147 = vld [vmem:[#allocation2 + $0x60] sm:$0xfc]
        %v3148 = vld [vmem:[#allocation2 + $0x68] sm:$0xfc]
        %v3149 = vld [vmem:[#allocation2 + $0x70] sm:$0xfc]
        %v3150 = vld [vmem:[#allocation2 + $0x78] sm:$0xfc]
        %v3151 = vld [vmem:[#allocation2 + $0x80] sm:$0xfc]
        %v3152 = vld [vmem:[#allocation2 + $0x100] sm:$0x3]
        %v3153 = vld [vmem:[#allocation2 + $0x108] sm:$0x3]
        %v3154 = vld [vmem:[#allocation2 + $0x110] sm:$0x3]
        %v3155 = vld [vmem:[#allocation2 + $0x118] sm:$0x3]
        %v3156 = vld [vmem:[#allocation2 + $0x120] sm:$0x3]
        %s3157 = scalar_lea.vmem [#allocation7], 68
        %v3158 = vld [vmem:[%s3157] ss:$8 sm:$0xf]
        %v3160 = vperm.slane %v3158, 0
        %v3161 = vperm.slane %v3158, 1
        %v3162 = vperm.slane %v3158, 2
        %v3163 = vperm.slane %v3158, 3
        %3164 = vrot.lane.b32.xlu0 %v3160, 64
        %v3165 = vpop.permute.xlu0 %3164
        %3166 = vrot.lane.b32.xlu0 %v3161, 64
        %v3167 = vpop.permute.xlu0 %3166
        %3168 = vrot.lane.b32.xlu0 %v3162, 64
        %v3169 = vpop.permute.xlu0 %3168
        %3170 = vrot.lane.b32.xlu0 %v3163, 64
        %v3171 = vpop.permute.xlu0 %3170
        %v3172 = vsel %vm863, %v3165, %v3167
        %v3173 = vsel %vm863, %v3167, %v3169
        %v3174 = vsel %vm863, %v3169, %v3171
        %v3180 = vmul.f32 %v3147, %v3165
        %v3181 = vmul.f32 %v3148, %v3172
        %v3182 = vmul.f32 %v3149, %v3173
        %v3183 = vmul.f32 %v3150, %v3174
        %v3184 = vmul.f32 %v3151, %v3171
        %v3185 = vmul.f32 %v1955, %v3165
        %v3186 = vmul.f32 %v1956, %v3172
        %v3187 = vmul.f32 %v1957, %v3173
        %v3188 = vmul.f32 %v1958, %v3174
        %v3189 = vmul.f32 %v1959, %v3171
        %v3190 = vmul.f32 %v3152, %v3165
        %v3191 = vmul.f32 %v3153, %v3172
        %v3192 = vmul.f32 %v3154, %v3173
        %v3193 = vmul.f32 %v3155, %v3174
        %v3194 = vmul.f32 %v3156, %v3171
        %vm3210 = vcmask 1043456
        %v3211 = vrot.slane %v3180, 4
        %v3212 = vrot.slane %v3181, 4
        %v3213 = vrot.slane %v3182, 4
        %v3214 = vrot.slane %v3183, 4
        %v3215 = vrot.slane %v3184, 4
        %v3216 = vrot.slane %v3185, 4
        %v3217 = vsel %vm3210, %v3211, %v3216
        %v3218 = vrot.slane %v3186, 4
        %v3219 = vsel %vm3210, %v3212, %v3218
        %v3220 = vrot.slane %v3187, 4
        %v3221 = vsel %vm3210, %v3213, %v3220
        %v3222 = vrot.slane %v3188, 4
        %v3223 = vsel %vm3210, %v3214, %v3222
        %v3224 = vrot.slane %v3189, 4
        %v3225 = vsel %vm3210, %v3215, %v3224
        %v3226 = vrot.slane %v3190, 4
        %v3227 = vsel %vm3210, %v3216, %v3226
        %v3228 = vrot.slane %v3191, 4
        %v3229 = vsel %vm3210, %v3218, %v3228
        %v3230 = vrot.slane %v3192, 4
        %v3231 = vsel %vm3210, %v3220, %v3230
        %v3232 = vrot.slane %v3193, 4
        %v3233 = vsel %vm3210, %v3222, %v3232
        %v3234 = vrot.slane %v3194, 4
        %v3235 = vsel %vm3210, %v3224, %v3234
        %v3251 = vadd.f32 %v3132, %v3211
        %v3252 = vadd.f32 %v3133, %v3212
        %v3253 = vadd.f32 %v3134, %v3213
        %v3254 = vadd.f32 %v3135, %v3214
        %v3255 = vadd.f32 %v3136, %v3215
        %v3256 = vadd.f32 %v3137, %v3217
        %v3257 = vadd.f32 %v3138, %v3219
        %v3258 = vadd.f32 %v3139, %v3221
        %v3259 = vadd.f32 %v3140, %v3223
        %v3260 = vadd.f32 %v3141, %v3225
        %v3261 = vadd.f32 %v3142, %v3227
        %v3262 = vadd.f32 %v3143, %v3229
        %v3263 = vadd.f32 %v3144, %v3231
        %v3264 = vadd.f32 %v3145, %v3233
        %v3265 = vadd.f32 %v3146, %v3235
        %s3266 = scalar_lea.vmem [#allocation7], 69
        %v3267 = vld [vmem:[%s3266] ss:$8 sm:$0xf]
        %v3269 = vperm.slane %v3267, 0
        %v3270 = vperm.slane %v3267, 1
        %v3271 = vperm.slane %v3267, 2
        %v3272 = vperm.slane %v3267, 3
        %3273 = vrot.lane.b32.xlu0 %v3269, 96
        %v3274 = vpop.permute.xlu0 %3273
        %3275 = vrot.lane.b32.xlu0 %v3270, 96
        %v3276 = vpop.permute.xlu0 %3275
        %3277 = vrot.lane.b32.xlu0 %v3271, 96
        %v3278 = vpop.permute.xlu0 %3277
        %3279 = vrot.lane.b32.xlu0 %v3272, 96
        %v3280 = vpop.permute.xlu0 %3279
        %v3281 = vsel %vm917, %v3274, %v3276
        %v3282 = vsel %vm917, %v3276, %v3278
        %v3283 = vsel %vm917, %v3278, %v3280
        %v3289 = vmul.f32 %v3147, %v3274
        %v3290 = vmul.f32 %v3148, %v3281
        %v3291 = vmul.f32 %v3149, %v3282
        %v3292 = vmul.f32 %v3150, %v3283
        %v3293 = vmul.f32 %v3151, %v3280
        %v3294 = vmul.f32 %v1955, %v3274
        %v3295 = vmul.f32 %v1956, %v3281
        %v3296 = vmul.f32 %v1957, %v3282
        %v3297 = vmul.f32 %v1958, %v3283
        %v3298 = vmul.f32 %v1959, %v3280
        %v3299 = vmul.f32 %v3152, %v3274
        %v3300 = vmul.f32 %v3153, %v3281
        %v3301 = vmul.f32 %v3154, %v3282
        %v3302 = vmul.f32 %v3155, %v3283
        %v3303 = vmul.f32 %v3156, %v3280
        %v3319 = vrot.slane %v3289, 4
        %v3320 = vrot.slane %v3290, 4
        %v3321 = vrot.slane %v3291, 4
        %v3322 = vrot.slane %v3292, 4
        %v3323 = vrot.slane %v3293, 4
        %v3324 = vrot.slane %v3294, 4
        %v3325 = vsel %vm3210, %v3319, %v3324
        %v3326 = vrot.slane %v3295, 4
        %v3327 = vsel %vm3210, %v3320, %v3326
        %v3328 = vrot.slane %v3296, 4
        %v3329 = vsel %vm3210, %v3321, %v3328
        %v3330 = vrot.slane %v3297, 4
        %v3331 = vsel %vm3210, %v3322, %v3330
        %v3332 = vrot.slane %v3298, 4
        %v3333 = vsel %vm3210, %v3323, %v3332
        %v3334 = vrot.slane %v3299, 4
        %v3335 = vsel %vm3210, %v3324, %v3334
        %v3336 = vrot.slane %v3300, 4
        %v3337 = vsel %vm3210, %v3326, %v3336
        %v3338 = vrot.slane %v3301, 4
        %v3339 = vsel %vm3210, %v3328, %v3338
        %v3340 = vrot.slane %v3302, 4
        %v3341 = vsel %vm3210, %v3330, %v3340
        %v3342 = vrot.slane %v3303, 4
        %v3343 = vsel %vm3210, %v3332, %v3342
        %3344 = vrot.lane.b32.xlu0 %v3319, 96
        %v3345 = vpop.permute.xlu0 %3344
        %3346 = vrot.lane.b32.xlu0 %v3320, 96
        %v3347 = vpop.permute.xlu0 %3346
        %3348 = vrot.lane.b32.xlu0 %v3321, 96
        %v3349 = vpop.permute.xlu0 %3348
        %3350 = vrot.lane.b32.xlu0 %v3322, 96
        %v3351 = vpop.permute.xlu0 %3350
        %3352 = vrot.lane.b32.xlu0 %v3323, 96
        %v3353 = vpop.permute.xlu0 %3352
        %3354 = vrot.lane.b32.xlu0 %v3325, 96
        %v3355 = vpop.permute.xlu0 %3354
        %3356 = vrot.lane.b32.xlu0 %v3327, 96
        %v3357 = vpop.permute.xlu0 %3356
        %3358 = vrot.lane.b32.xlu0 %v3329, 96
        %v3359 = vpop.permute.xlu0 %3358
        %3360 = vrot.lane.b32.xlu0 %v3331, 96
        %v3361 = vpop.permute.xlu0 %3360
        %3362 = vrot.lane.b32.xlu0 %v3333, 96
        %v3363 = vpop.permute.xlu0 %3362
        %3364 = vrot.lane.b32.xlu0 %v3335, 96
        %v3365 = vpop.permute.xlu0 %3364
        %3366 = vrot.lane.b32.xlu0 %v3337, 96
        %v3367 = vpop.permute.xlu0 %3366
        %3368 = vrot.lane.b32.xlu0 %v3339, 96
        %v3369 = vpop.permute.xlu0 %3368
        %3370 = vrot.lane.b32.xlu0 %v3341, 96
        %v3371 = vpop.permute.xlu0 %3370
        %3372 = vrot.lane.b32.xlu0 %v3343, 96
        %v3373 = vpop.permute.xlu0 %3372
        %v3374 = vsel %vm917, %v3345, %v3347
        %v3375 = vsel %vm917, %v3347, %v3349
        %v3376 = vsel %vm917, %v3349, %v3351
        %v3377 = vsel %vm917, %v3351, %v3353
        %v3378 = vsel %vm917, %v3355, %v3357
        %v3379 = vsel %vm917, %v3357, %v3359
        %v3380 = vsel %vm917, %v3359, %v3361
        %v3381 = vsel %vm917, %v3361, %v3363
        %v3382 = vsel %vm917, %v3365, %v3367
        %v3383 = vsel %vm917, %v3367, %v3369
        %v3384 = vsel %vm917, %v3369, %v3371
        %v3385 = vsel %vm917, %v3371, %v3373
        %v3401 = vadd.f32 %v3251, %v3374
        %v3402 = vadd.f32 %v3252, %v3375
        %v3403 = vadd.f32 %v3253, %v3376
        %v3404 = vadd.f32 %v3254, %v3377
        %v3405 = vadd.f32 %v3255, %v3353
        %v3406 = vadd.f32 %v3256, %v3378
        %v3407 = vadd.f32 %v3257, %v3379
        %v3408 = vadd.f32 %v3258, %v3380
        %v3409 = vadd.f32 %v3259, %v3381
        %v3410 = vadd.f32 %v3260, %v3363
        %v3411 = vadd.f32 %v3261, %v3382
        %v3412 = vadd.f32 %v3262, %v3383
        %v3413 = vadd.f32 %v3263, %v3384
        %v3414 = vadd.f32 %v3264, %v3385
        %v3415 = vadd.f32 %v3265, %v3373
        %s3416 = scalar_lea.vmem [#allocation7], 70
        %v3417 = vld [vmem:[%s3416] ss:$8 sm:$0xf]
        %v3419 = vperm.slane %v3417, 0
        %v3420 = vperm.slane %v3417, 1
        %v3421 = vperm.slane %v3417, 2
        %v3422 = vperm.slane %v3417, 3
        %v3427 = vmul.f32 %v3148, %v3419
        %v3428 = vmul.f32 %v3149, %v3420
        %v3429 = vmul.f32 %v3150, %v3421
        %v3430 = vmul.f32 %v3151, %v3422
        %v3431 = vmul.f32 %v1956, %v3419
        %v3432 = vmul.f32 %v1957, %v3420
        %v3433 = vmul.f32 %v1958, %v3421
        %v3434 = vmul.f32 %v1959, %v3422
        %v3435 = vmul.f32 %v3153, %v3419
        %v3436 = vmul.f32 %v3154, %v3420
        %v3437 = vmul.f32 %v3155, %v3421
        %v3438 = vmul.f32 %v3156, %v3422
        %v3451 = vrot.slane %v3427, 4
        %v3452 = vrot.slane %v3428, 4
        %v3453 = vrot.slane %v3429, 4
        %v3454 = vrot.slane %v3430, 4
        %v3455 = vrot.slane %v3431, 4
        %v3456 = vsel %vm3210, %v3451, %v3455
        %v3457 = vrot.slane %v3432, 4
        %v3458 = vsel %vm3210, %v3452, %v3457
        %v3459 = vrot.slane %v3433, 4
        %v3460 = vsel %vm3210, %v3453, %v3459
        %v3461 = vrot.slane %v3434, 4
        %v3462 = vsel %vm3210, %v3454, %v3461
        %v3463 = vrot.slane %v3435, 4
        %v3464 = vsel %vm3210, %v3455, %v3463
        %v3465 = vrot.slane %v3436, 4
        %v3466 = vsel %vm3210, %v3457, %v3465
        %v3467 = vrot.slane %v3437, 4
        %v3468 = vsel %vm3210, %v3459, %v3467
        %v3469 = vrot.slane %v3438, 4
        %v3470 = vsel %vm3210, %v3461, %v3469
        %3471 = vrot.lane.b32.xlu0 %v3451, 64
        %v3472 = vpop.permute.xlu0 %3471
        %3473 = vrot.lane.b32.xlu0 %v3452, 64
        %v3474 = vpop.permute.xlu0 %3473
        %3475 = vrot.lane.b32.xlu0 %v3453, 64
        %v3476 = vpop.permute.xlu0 %3475
        %3477 = vrot.lane.b32.xlu0 %v3454, 64
        %v3478 = vpop.permute.xlu0 %3477
        %3479 = vrot.lane.b32.xlu0 %v3456, 64
        %v3480 = vpop.permute.xlu0 %3479
        %3481 = vrot.lane.b32.xlu0 %v3458, 64
        %v3482 = vpop.permute.xlu0 %3481
        %3483 = vrot.lane.b32.xlu0 %v3460, 64
        %v3484 = vpop.permute.xlu0 %3483
        %3485 = vrot.lane.b32.xlu0 %v3462, 64
        %v3486 = vpop.permute.xlu0 %3485
        %3487 = vrot.lane.b32.xlu0 %v3464, 64
        %v3488 = vpop.permute.xlu0 %3487
        %3489 = vrot.lane.b32.xlu0 %v3466, 64
        %v3490 = vpop.permute.xlu0 %3489
        %3491 = vrot.lane.b32.xlu0 %v3468, 64
        %v3492 = vpop.permute.xlu0 %3491
        %3493 = vrot.lane.b32.xlu0 %v3470, 64
        %v3494 = vpop.permute.xlu0 %3493
        %v3495 = vsel %vm863, %v3472, %v3474
        %v3496 = vsel %vm863, %v3474, %v3476
        %v3497 = vsel %vm863, %v3476, %v3478
        %v3498 = vsel %vm863, %v3480, %v3482
        %v3499 = vsel %vm863, %v3482, %v3484
        %v3500 = vsel %vm863, %v3484, %v3486
        %v3501 = vsel %vm863, %v3488, %v3490
        %v3502 = vsel %vm863, %v3490, %v3492
        %v3503 = vsel %vm863, %v3492, %v3494
        %v3519 = vadd.f32 %v3401, %v3472
        %v3520 = vadd.f32 %v3402, %v3495
        %v3521 = vadd.f32 %v3403, %v3496
        %v3522 = vadd.f32 %v3404, %v3497
        %v3523 = vadd.f32 %v3405, %v3478
        %v3524 = vadd.f32 %v3406, %v3480
        %v3525 = vadd.f32 %v3407, %v3498
        %v3526 = vadd.f32 %v3408, %v3499
        %v3527 = vadd.f32 %v3409, %v3500
        %v3528 = vadd.f32 %v3410, %v3486
        %v3529 = vadd.f32 %v3411, %v3488
        %v3530 = vadd.f32 %v3412, %v3501
        %v3531 = vadd.f32 %v3413, %v3502
        %v3532 = vadd.f32 %v3414, %v3503
        %v3533 = vadd.f32 %v3415, %v3494
        %v3534 = vld [vmem:[#allocation2 + $0x88] sm:$0xfc]
        %v3535 = vld [vmem:[#allocation2 + $0x128] sm:$0x3]
        %s3536 = scalar_lea.vmem [#allocation7], 71
        %v3537 = vld [vmem:[%s3536] ss:$8 sm:$0xf]
        %v3539 = vperm.slane %v3537, 0
        %v3540 = vperm.slane %v3537, 1
        %v3541 = vperm.slane %v3537, 2
        %v3542 = vperm.slane %v3537, 3
        %3543 = vrot.lane.b32.xlu0 %v3539, 32
        %v3544 = vpop.permute.xlu0 %3543
        %3545 = vrot.lane.b32.xlu0 %v3540, 32
        %v3546 = vpop.permute.xlu0 %3545
        %3547 = vrot.lane.b32.xlu0 %v3541, 32
        %v3548 = vpop.permute.xlu0 %3547
        %3549 = vrot.lane.b32.xlu0 %v3542, 32
        %v3550 = vpop.permute.xlu0 %3549
        %v3551 = vsel %vm1144, %v3544, %v3546
        %v3552 = vsel %vm1144, %v3546, %v3548
        %v3553 = vsel %vm1144, %v3548, %v3550
        %v3559 = vmul.f32 %v3148, %v3544
        %v3560 = vmul.f32 %v3149, %v3551
        %v3561 = vmul.f32 %v3150, %v3552
        %v3562 = vmul.f32 %v3151, %v3553
        %v3563 = vmul.f32 %v3534, %v3550
        %v3564 = vmul.f32 %v1956, %v3544
        %v3565 = vmul.f32 %v1957, %v3551
        %v3566 = vmul.f32 %v1958, %v3552
        %v3567 = vmul.f32 %v1959, %v3553
        %v3568 = vmul.f32 %v2281, %v3550
        %v3569 = vmul.f32 %v3153, %v3544
        %v3570 = vmul.f32 %v3154, %v3551
        %v3571 = vmul.f32 %v3155, %v3552
        %v3572 = vmul.f32 %v3156, %v3553
        %v3573 = vmul.f32 %v3535, %v3550
        %v3589 = vrot.slane %v3559, 4
        %v3590 = vrot.slane %v3560, 4
        %v3591 = vrot.slane %v3561, 4
        %v3592 = vrot.slane %v3562, 4
        %v3593 = vrot.slane %v3563, 4
        %v3594 = vrot.slane %v3564, 4
        %v3595 = vsel %vm3210, %v3589, %v3594
        %v3596 = vrot.slane %v3565, 4
        %v3597 = vsel %vm3210, %v3590, %v3596
        %v3598 = vrot.slane %v3566, 4
        %v3599 = vsel %vm3210, %v3591, %v3598
        %v3600 = vrot.slane %v3567, 4
        %v3601 = vsel %vm3210, %v3592, %v3600
        %v3602 = vrot.slane %v3568, 4
        %v3603 = vsel %vm3210, %v3593, %v3602
        %v3604 = vrot.slane %v3569, 4
        %v3605 = vsel %vm3210, %v3594, %v3604
        %v3606 = vrot.slane %v3570, 4
        %v3607 = vsel %vm3210, %v3596, %v3606
        %v3608 = vrot.slane %v3571, 4
        %v3609 = vsel %vm3210, %v3598, %v3608
        %v3610 = vrot.slane %v3572, 4
        %v3611 = vsel %vm3210, %v3600, %v3610
        %v3612 = vrot.slane %v3573, 4
        %v3613 = vsel %vm3210, %v3602, %v3612
        %3614 = vrot.lane.b32.xlu0 %v3589, 32
        %v3615 = vpop.permute.xlu0 %3614
        %3616 = vrot.lane.b32.xlu0 %v3590, 32
        %v3617 = vpop.permute.xlu0 %3616
        %3618 = vrot.lane.b32.xlu0 %v3591, 32
        %v3619 = vpop.permute.xlu0 %3618
        %3620 = vrot.lane.b32.xlu0 %v3592, 32
        %v3621 = vpop.permute.xlu0 %3620
        %3622 = vrot.lane.b32.xlu0 %v3593, 32
        %v3623 = vpop.permute.xlu0 %3622
        %3624 = vrot.lane.b32.xlu0 %v3595, 32
        %v3625 = vpop.permute.xlu0 %3624
        %3626 = vrot.lane.b32.xlu0 %v3597, 32
        %v3627 = vpop.permute.xlu0 %3626
        %3628 = vrot.lane.b32.xlu0 %v3599, 32
        %v3629 = vpop.permute.xlu0 %3628
        %3630 = vrot.lane.b32.xlu0 %v3601, 32
        %v3631 = vpop.permute.xlu0 %3630
        %3632 = vrot.lane.b32.xlu0 %v3603, 32
        %v3633 = vpop.permute.xlu0 %3632
        %3634 = vrot.lane.b32.xlu0 %v3605, 32
        %v3635 = vpop.permute.xlu0 %3634
        %3636 = vrot.lane.b32.xlu0 %v3607, 32
        %v3637 = vpop.permute.xlu0 %3636
        %3638 = vrot.lane.b32.xlu0 %v3609, 32
        %v3639 = vpop.permute.xlu0 %3638
        %3640 = vrot.lane.b32.xlu0 %v3611, 32
        %v3641 = vpop.permute.xlu0 %3640
        %3642 = vrot.lane.b32.xlu0 %v3613, 32
        %v3643 = vpop.permute.xlu0 %3642
        %v3644 = vsel %vm1144, %v3615, %v3617
        %v3645 = vsel %vm1144, %v3617, %v3619
        %v3646 = vsel %vm1144, %v3619, %v3621
        %v3647 = vsel %vm1144, %v3621, %v3623
        %v3648 = vsel %vm1144, %v3625, %v3627
        %v3649 = vsel %vm1144, %v3627, %v3629
        %v3650 = vsel %vm1144, %v3629, %v3631
        %v3651 = vsel %vm1144, %v3631, %v3633
        %v3652 = vsel %vm1144, %v3635, %v3637
        %v3653 = vsel %vm1144, %v3637, %v3639
        %v3654 = vsel %vm1144, %v3639, %v3641
        %v3655 = vsel %vm1144, %v3641, %v3643
        %v3671 = vadd.f32 %v3519, %v3615
        %v3672 = vadd.f32 %v3520, %v3644
        %v3673 = vadd.f32 %v3521, %v3645
        %v3674 = vadd.f32 %v3522, %v3646
        %v3675 = vadd.f32 %v3523, %v3647
        %v3676 = vadd.f32 %v3524, %v3625
        %v3677 = vadd.f32 %v3525, %v3648
        %v3678 = vadd.f32 %v3526, %v3649
        %v3679 = vadd.f32 %v3527, %v3650
        %v3680 = vadd.f32 %v3528, %v3651
        %v3681 = vadd.f32 %v3529, %v3635
        %v3682 = vadd.f32 %v3530, %v3652
        %v3683 = vadd.f32 %v3531, %v3653
        %v3684 = vadd.f32 %v3532, %v3654
        %v3685 = vadd.f32 %v3533, %v3655
        %s3686 = scalar_lea.vmem [#allocation7], 96
        %v3687 = vld [vmem:[%s3686] ss:$8 sm:$0xf]
        %v3689 = vperm.slane %v3687, 0
        %v3690 = vperm.slane %v3687, 1
        %v3691 = vperm.slane %v3687, 2
        %v3692 = vperm.slane %v3687, 3
        %3693 = vrot.lane.b32.xlu0 %v3689, 64
        %v3694 = vpop.permute.xlu0 %3693
        %3695 = vrot.lane.b32.xlu0 %v3690, 64
        %v3696 = vpop.permute.xlu0 %3695
        %3697 = vrot.lane.b32.xlu0 %v3691, 64
        %v3698 = vpop.permute.xlu0 %3697
        %3699 = vrot.lane.b32.xlu0 %v3692, 64
        %v3700 = vpop.permute.xlu0 %3699
        %v3701 = vsel %vm863, %v3694, %v3696
        %v3702 = vsel %vm863, %v3696, %v3698
        %v3703 = vsel %vm863, %v3698, %v3700
        %v3709 = vmul.f32 %v3148, %v3694
        %v3710 = vmul.f32 %v3149, %v3701
        %v3711 = vmul.f32 %v3150, %v3702
        %v3712 = vmul.f32 %v3151, %v3703
        %v3713 = vmul.f32 %v3534, %v3700
        %v3714 = vmul.f32 %v1956, %v3694
        %v3715 = vmul.f32 %v1957, %v3701
        %v3716 = vmul.f32 %v1958, %v3702
        %v3717 = vmul.f32 %v1959, %v3703
        %v3718 = vmul.f32 %v2281, %v3700
        %v3719 = vmul.f32 %v3153, %v3694
        %v3720 = vmul.f32 %v3154, %v3701
        %v3721 = vmul.f32 %v3155, %v3702
        %v3722 = vmul.f32 %v3156, %v3703
        %v3723 = vmul.f32 %v3535, %v3700
        %v3739 = vrot.slane %v3709, 4
        %v3740 = vrot.slane %v3710, 4
        %v3741 = vrot.slane %v3711, 4
        %v3742 = vrot.slane %v3712, 4
        %v3743 = vrot.slane %v3713, 4
        %v3744 = vrot.slane %v3714, 4
        %v3745 = vsel %vm3210, %v3739, %v3744
        %v3746 = vrot.slane %v3715, 4
        %v3747 = vsel %vm3210, %v3740, %v3746
        %v3748 = vrot.slane %v3716, 4
        %v3749 = vsel %vm3210, %v3741, %v3748
        %v3750 = vrot.slane %v3717, 4
        %v3751 = vsel %vm3210, %v3742, %v3750
        %v3752 = vrot.slane %v3718, 4
        %v3753 = vsel %vm3210, %v3743, %v3752
        %v3754 = vrot.slane %v3719, 4
        %v3755 = vsel %vm3210, %v3744, %v3754
        %v3756 = vrot.slane %v3720, 4
        %v3757 = vsel %vm3210, %v3746, %v3756
        %v3758 = vrot.slane %v3721, 4
        %v3759 = vsel %vm3210, %v3748, %v3758
        %v3760 = vrot.slane %v3722, 4
        %v3761 = vsel %vm3210, %v3750, %v3760
        %v3762 = vrot.slane %v3723, 4
        %v3763 = vsel %vm3210, %v3752, %v3762
        %v3779 = vadd.f32 %v3671, %v3739
        %v3780 = vadd.f32 %v3672, %v3740
        %v3781 = vadd.f32 %v3673, %v3741
        %v3782 = vadd.f32 %v3674, %v3742
        %v3783 = vadd.f32 %v3675, %v3743
        %v3784 = vadd.f32 %v3676, %v3745
        %v3785 = vadd.f32 %v3677, %v3747
        %v3786 = vadd.f32 %v3678, %v3749
        %v3787 = vadd.f32 %v3679, %v3751
        %v3788 = vadd.f32 %v3680, %v3753
        %v3789 = vadd.f32 %v3681, %v3755
        %v3790 = vadd.f32 %v3682, %v3757
        %v3791 = vadd.f32 %v3683, %v3759
        %v3792 = vadd.f32 %v3684, %v3761
        %v3793 = vadd.f32 %v3685, %v3763
        %v3794 = vld [vmem:[#allocation9] sm:$0xf]
        %v3796 = vperm.slane %v3794, 0
        %v3797 = vperm.slane %v3794, 1
        %v3798 = vperm.slane %v3794, 2
        %v3799 = vperm.slane %v3794, 3
        %3800 = vrot.lane.b32.xlu0 %v3796, 64
        %v3801 = vpop.permute.xlu0 %3800
        %3802 = vrot.lane.b32.xlu0 %v3797, 64
        %v3803 = vpop.permute.xlu0 %3802
        %3804 = vrot.lane.b32.xlu0 %v3798, 64
        %v3805 = vpop.permute.xlu0 %3804
        %3806 = vrot.lane.b32.xlu0 %v3799, 64
        %v3807 = vpop.permute.xlu0 %3806
        %v3808 = vsel %vm863, %v3801, %v3803
        %v3809 = vsel %vm863, %v3803, %v3805
        %v3810 = vsel %vm863, %v3805, %v3807
        %v3816 = vadd.f32 %v3779, %v3801
        %v3817 = vadd.f32 %v3780, %v3808
        %v3818 = vadd.f32 %v3781, %v3809
        %v3819 = vadd.f32 %v3782, %v3810
        %v3820 = vadd.f32 %v3783, %v3807
        %v3821 = vadd.f32 %v3784, %v3801
        %v3822 = vadd.f32 %v3785, %v3808
        %v3823 = vadd.f32 %v3786, %v3809
        %v3824 = vadd.f32 %v3787, %v3810
        %v3825 = vadd.f32 %v3788, %v3807
        %v3826 = vadd.f32 %v3789, %v3801
        %v3827 = vadd.f32 %v3790, %v3808
        %v3828 = vadd.f32 %v3791, %v3809
        %v3829 = vadd.f32 %v3792, %v3810
        %v3830 = vadd.f32 %v3793, %v3807
        %vm3846 = vcmask 1041408
        %v3847 = vrot.slane %v3816, 6
        %v3848 = vrot.slane %v3821, 6
        %v3849 = vsel %vm3846, %v3847, %v3848
        %v3850 = vrot.slane %v3817, 6
        %v3851 = vrot.slane %v3822, 6
        %v3852 = vsel %vm3846, %v3850, %v3851
        %v3853 = vrot.slane %v3818, 6
        %v3854 = vrot.slane %v3823, 6
        %v3855 = vsel %vm3846, %v3853, %v3854
        %v3856 = vrot.slane %v3819, 6
        %v3857 = vrot.slane %v3824, 6
        %v3858 = vsel %vm3846, %v3856, %v3857
        %v3859 = vrot.slane %v3820, 6
        %v3860 = vrot.slane %v3825, 6
        %v3861 = vsel %vm3846, %v3859, %v3860
        %v3862 = vrot.slane %v3826, 6
        %v3863 = vsel %vm3846, %v3848, %v3862
        %v3864 = vrot.slane %v3827, 6
        %v3865 = vsel %vm3846, %v3851, %v3864
        %v3866 = vrot.slane %v3828, 6
        %v3867 = vsel %vm3846, %v3854, %v3866
        %v3868 = vrot.slane %v3829, 6
        %v3869 = vsel %vm3846, %v3857, %v3868
        %v3870 = vrot.slane %v3830, 6
        %v3871 = vsel %vm3846, %v3860, %v3870
        %3872 = vrot.lane.b32.xlu0 %v3849, 64
        %v3873 = vpop.permute.xlu0 %3872
        %3874 = vrot.lane.b32.xlu0 %v3852, 64
        %v3875 = vpop.permute.xlu0 %3874
        %3876 = vrot.lane.b32.xlu0 %v3855, 64
        %v3877 = vpop.permute.xlu0 %3876
        %3878 = vrot.lane.b32.xlu0 %v3858, 64
        %v3879 = vpop.permute.xlu0 %3878
        %3880 = vrot.lane.b32.xlu0 %v3861, 64
        %v3881 = vpop.permute.xlu0 %3880
        %3882 = vrot.lane.b32.xlu0 %v3863, 64
        %v3883 = vpop.permute.xlu0 %3882
        %3884 = vrot.lane.b32.xlu0 %v3865, 64
        %v3885 = vpop.permute.xlu0 %3884
        %3886 = vrot.lane.b32.xlu0 %v3867, 64
        %v3887 = vpop.permute.xlu0 %3886
        %3888 = vrot.lane.b32.xlu0 %v3869, 64
        %v3889 = vpop.permute.xlu0 %3888
        %3890 = vrot.lane.b32.xlu0 %v3871, 64
        %v3891 = vpop.permute.xlu0 %3890
        %v3892 = vsel %vm863, %v3873, %v3875
        %v3893 = vsel %vm863, %v3875, %v3877
        %v3894 = vsel %vm863, %v3877, %v3879
        %v3895 = vsel %vm863, %v3879, %v3881
        %v3896 = vsel %vm863, %v3883, %v3885
        %v3897 = vsel %vm863, %v3885, %v3887
        %v3898 = vsel %vm863, %v3887, %v3889
        %v3899 = vsel %vm863, %v3889, %v3891
        %3908 = vst [vmem:[#allocation2 + $0x68] sm:$0xff] %v3892
        %3909 = vst [vmem:[#allocation2 + $0x70] sm:$0xff] %v3893
        %3910 = vst [vmem:[#allocation2 + $0x78] sm:$0xff] %v3894
        %3911 = vst [vmem:[#allocation2 + $0x80] sm:$0xff] %v3895
        %3912 = vst [vmem:[#allocation2 + $0xb8] sm:$0xff] %v3896
        %3913 = vst [vmem:[#allocation2 + $0xc0] sm:$0xff] %v3897
        %3914 = vst [vmem:[#allocation2 + $0xc8] sm:$0xff] %v3898
        %3915 = vst [vmem:[#allocation2 + $0xd0] sm:$0xff] %v3899
        %v3916 = vld [vmem:[#allocation2 + $0x60] sm:$0xff]
        %v3917 = vld [vmem:[#allocation2 + $0x68] sm:$0xff]
        %v3918 = vld [vmem:[#allocation2 + $0x70] sm:$0xff]
        %v3919 = vld [vmem:[#allocation2 + $0x78] sm:$0xff]
        %v3920 = vld [vmem:[#allocation2 + $0x80] sm:$0xff]
        %v3921 = vld [vmem:[#allocation2 + $0xb0] sm:$0xff]
        %v3922 = vld [vmem:[#allocation2 + $0xb8] sm:$0xff]
        %v3923 = vld [vmem:[#allocation2 + $0xc0] sm:$0xff]
        %v3924 = vld [vmem:[#allocation2 + $0xc8] sm:$0xff]
        %v3925 = vld [vmem:[#allocation2 + $0xd0] sm:$0xff]
        %v3926 = vld [vmem:[#allocation10] ss:$8 sm:$0xf]
        %v3928 = vperm.slane %v3926, 0
        %v3929 = vperm.slane %v3926, 1
        %v3930 = vperm.slane %v3926, 2
        %v3931 = vperm.slane %v3926, 3
        %3932 = vrot.lane.b32.xlu0 %v3928, 32
        %v3933 = vpop.permute.xlu0 %3932
        %3934 = vrot.lane.b32.xlu0 %v3929, 32
        %v3935 = vpop.permute.xlu0 %3934
        %3936 = vrot.lane.b32.xlu0 %v3930, 32
        %v3937 = vpop.permute.xlu0 %3936
        %3938 = vrot.lane.b32.xlu0 %v3931, 32
        %v3939 = vpop.permute.xlu0 %3938
        %v3940 = vsel %vm1144, %v3933, %v3935
        %v3941 = vsel %vm1144, %v3935, %v3937
        %v3942 = vsel %vm1144, %v3937, %v3939
        %v3948 = vmul.f32 %v3916, %v3933
        %v3949 = vmul.f32 %v3917, %v3940
        %v3950 = vmul.f32 %v3918, %v3941
        %v3951 = vmul.f32 %v3919, %v3942
        %v3952 = vmul.f32 %v3920, %v3939
        %v3953 = vmul.f32 %v3921, %v3933
        %v3954 = vmul.f32 %v3922, %v3940
        %v3955 = vmul.f32 %v3923, %v3941
        %v3956 = vmul.f32 %v3924, %v3942
        %v3957 = vmul.f32 %v3925, %v3939
        %v3958 = vadd.f32 %v3948, 0.0
        %v3959 = vadd.f32 %v3949, 0.0
        %v3960 = vadd.f32 %v3950, 0.0
        %v3961 = vadd.f32 %v3951, 0.0
        %v3962 = vadd.f32 %v3952, 0.0
        %v3963 = vadd.f32 %v3953, 0.0
        %v3964 = vadd.f32 %v3954, 0.0
        %v3965 = vadd.f32 %v3955, 0.0
        %v3966 = vadd.f32 %v3956, 0.0
        %v3967 = vadd.f32 %v3957, 0.0
        %s3968 = scalar_lea.vmem [#allocation10], 1
        %v3969 = vld [vmem:[%s3968] ss:$8 sm:$0xf]
        %v3971 = vperm.slane %v3969, 0
        %v3972 = vperm.slane %v3969, 1
        %v3973 = vperm.slane %v3969, 2
        %v3974 = vperm.slane %v3969, 3
        %3975 = vrot.lane.b32.xlu0 %v3971, 64
        %v3976 = vpop.permute.xlu0 %3975
        %3977 = vrot.lane.b32.xlu0 %v3972, 64
        %v3978 = vpop.permute.xlu0 %3977
        %3979 = vrot.lane.b32.xlu0 %v3973, 64
        %v3980 = vpop.permute.xlu0 %3979
        %3981 = vrot.lane.b32.xlu0 %v3974, 64
        %v3982 = vpop.permute.xlu0 %3981
        %v3983 = vsel %vm863, %v3976, %v3978
        %v3984 = vsel %vm863, %v3978, %v3980
        %v3985 = vsel %vm863, %v3980, %v3982
        %v3991 = vmul.f32 %v3916, %v3976
        %v3992 = vmul.f32 %v3917, %v3983
        %v3993 = vmul.f32 %v3918, %v3984
        %v3994 = vmul.f32 %v3919, %v3985
        %v3995 = vmul.f32 %v3920, %v3982
        %v3996 = vmul.f32 %v3921, %v3976
        %v3997 = vmul.f32 %v3922, %v3983
        %v3998 = vmul.f32 %v3923, %v3984
        %v3999 = vmul.f32 %v3924, %v3985
        %v4000 = vmul.f32 %v3925, %v3982
        %4011 = vrot.lane.b32.xlu0 %v3991, 96
        %v4012 = vpop.permute.xlu0 %4011
        %4013 = vrot.lane.b32.xlu0 %v3992, 96
        %v4014 = vpop.permute.xlu0 %4013
        %4015 = vrot.lane.b32.xlu0 %v3993, 96
        %v4016 = vpop.permute.xlu0 %4015
        %4017 = vrot.lane.b32.xlu0 %v3994, 96
        %v4018 = vpop.permute.xlu0 %4017
        %4019 = vrot.lane.b32.xlu0 %v3995, 96
        %v4020 = vpop.permute.xlu0 %4019
        %4021 = vrot.lane.b32.xlu0 %v3996, 96
        %v4022 = vpop.permute.xlu0 %4021
        %4023 = vrot.lane.b32.xlu0 %v3997, 96
        %v4024 = vpop.permute.xlu0 %4023
        %4025 = vrot.lane.b32.xlu0 %v3998, 96
        %v4026 = vpop.permute.xlu0 %4025
        %4027 = vrot.lane.b32.xlu0 %v3999, 96
        %v4028 = vpop.permute.xlu0 %4027
        %4029 = vrot.lane.b32.xlu0 %v4000, 96
        %v4030 = vpop.permute.xlu0 %4029
        %v4031 = vsel %vm917, %v4012, %v4014
        %v4032 = vsel %vm917, %v4014, %v4016
        %v4033 = vsel %vm917, %v4016, %v4018
        %v4034 = vsel %vm917, %v4018, %v4020
        %v4035 = vsel %vm917, %v4022, %v4024
        %v4036 = vsel %vm917, %v4024, %v4026
        %v4037 = vsel %vm917, %v4026, %v4028
        %v4038 = vsel %vm917, %v4028, %v4030
        %v4049 = vadd.f32 %v3958, %v4031
        %v4050 = vadd.f32 %v3959, %v4032
        %v4051 = vadd.f32 %v3960, %v4033
        %v4052 = vadd.f32 %v3961, %v4034
        %v4053 = vadd.f32 %v3962, %v4020
        %v4054 = vadd.f32 %v3963, %v4035
        %v4055 = vadd.f32 %v3964, %v4036
        %v4056 = vadd.f32 %v3965, %v4037
        %v4057 = vadd.f32 %v3966, %v4038
        %v4058 = vadd.f32 %v3967, %v4030
        %s4059 = scalar_lea.vmem [#allocation10], 2
        %v4060 = vld [vmem:[%s4059] ss:$8 sm:$0xf]
        %v4062 = vperm.slane %v4060, 0
        %v4063 = vperm.slane %v4060, 1
        %v4064 = vperm.slane %v4060, 2
        %v4065 = vperm.slane %v4060, 3
        %4066 = vrot.lane.b32.xlu0 %v4062, 96
        %v4067 = vpop.permute.xlu0 %4066
        %4068 = vrot.lane.b32.xlu0 %v4063, 96
        %v4069 = vpop.permute.xlu0 %4068
        %4070 = vrot.lane.b32.xlu0 %v4064, 96
        %v4071 = vpop.permute.xlu0 %4070
        %4072 = vrot.lane.b32.xlu0 %v4065, 96
        %v4073 = vpop.permute.xlu0 %4072
        %v4074 = vsel %vm917, %v4067, %v4069
        %v4075 = vsel %vm917, %v4069, %v4071
        %v4076 = vsel %vm917, %v4071, %v4073
        %v4082 = vmul.f32 %v3916, %v4067
        %v4083 = vmul.f32 %v3917, %v4074
        %v4084 = vmul.f32 %v3918, %v4075
        %v4085 = vmul.f32 %v3919, %v4076
        %v4086 = vmul.f32 %v3920, %v4073
        %v4087 = vmul.f32 %v3921, %v4067
        %v4088 = vmul.f32 %v3922, %v4074
        %v4089 = vmul.f32 %v3923, %v4075
        %v4090 = vmul.f32 %v3924, %v4076
        %v4091 = vmul.f32 %v3925, %v4073
        %4102 = vrot.lane.b32.xlu0 %v4082, 64
        %v4103 = vpop.permute.xlu0 %4102
        %4104 = vrot.lane.b32.xlu0 %v4083, 64
        %v4105 = vpop.permute.xlu0 %4104
        %4106 = vrot.lane.b32.xlu0 %v4084, 64
        %v4107 = vpop.permute.xlu0 %4106
        %4108 = vrot.lane.b32.xlu0 %v4085, 64
        %v4109 = vpop.permute.xlu0 %4108
        %4110 = vrot.lane.b32.xlu0 %v4086, 64
        %v4111 = vpop.permute.xlu0 %4110
        %4112 = vrot.lane.b32.xlu0 %v4087, 64
        %v4113 = vpop.permute.xlu0 %4112
        %4114 = vrot.lane.b32.xlu0 %v4088, 64
        %v4115 = vpop.permute.xlu0 %4114
        %4116 = vrot.lane.b32.xlu0 %v4089, 64
        %v4117 = vpop.permute.xlu0 %4116
        %4118 = vrot.lane.b32.xlu0 %v4090, 64
        %v4119 = vpop.permute.xlu0 %4118
        %4120 = vrot.lane.b32.xlu0 %v4091, 64
        %v4121 = vpop.permute.xlu0 %4120
        %v4122 = vsel %vm863, %v4103, %v4105
        %v4123 = vsel %vm863, %v4105, %v4107
        %v4124 = vsel %vm863, %v4107, %v4109
        %v4125 = vsel %vm863, %v4109, %v4111
        %v4126 = vsel %vm863, %v4113, %v4115
        %v4127 = vsel %vm863, %v4115, %v4117
        %v4128 = vsel %vm863, %v4117, %v4119
        %v4129 = vsel %vm863, %v4119, %v4121
        %v4140 = vadd.f32 %v4049, %v4122
        %v4141 = vadd.f32 %v4050, %v4123
        %v4142 = vadd.f32 %v4051, %v4124
        %v4143 = vadd.f32 %v4052, %v4125
        %v4144 = vadd.f32 %v4053, %v4111
        %v4145 = vadd.f32 %v4054, %v4126
        %v4146 = vadd.f32 %v4055, %v4127
        %v4147 = vadd.f32 %v4056, %v4128
        %v4148 = vadd.f32 %v4057, %v4129
        %v4149 = vadd.f32 %v4058, %v4121
        %s4150 = scalar_lea.vmem [#allocation10], 3
        %v4151 = vld [vmem:[%s4150] ss:$8 sm:$0xf]
        %v4153 = vperm.slane %v4151, 0
        %v4154 = vperm.slane %v4151, 1
        %v4155 = vperm.slane %v4151, 2
        %v4156 = vperm.slane %v4151, 3
        %v4161 = vmul.f32 %v3917, %v4153
        %v4162 = vmul.f32 %v3918, %v4154
        %v4163 = vmul.f32 %v3919, %v4155
        %v4164 = vmul.f32 %v3920, %v4156
        %v4165 = vmul.f32 %v3922, %v4153
        %v4166 = vmul.f32 %v3923, %v4154
        %v4167 = vmul.f32 %v3924, %v4155
        %v4168 = vmul.f32 %v3925, %v4156
        %4177 = vrot.lane.b32.xlu0 %v4161, 32
        %v4178 = vpop.permute.xlu0 %4177
        %4179 = vrot.lane.b32.xlu0 %v4162, 32
        %v4180 = vpop.permute.xlu0 %4179
        %4181 = vrot.lane.b32.xlu0 %v4163, 32
        %v4182 = vpop.permute.xlu0 %4181
        %4183 = vrot.lane.b32.xlu0 %v4164, 32
        %v4184 = vpop.permute.xlu0 %4183
        %4185 = vrot.lane.b32.xlu0 %v4165, 32
        %v4186 = vpop.permute.xlu0 %4185
        %4187 = vrot.lane.b32.xlu0 %v4166, 32
        %v4188 = vpop.permute.xlu0 %4187
        %4189 = vrot.lane.b32.xlu0 %v4167, 32
        %v4190 = vpop.permute.xlu0 %4189
        %4191 = vrot.lane.b32.xlu0 %v4168, 32
        %v4192 = vpop.permute.xlu0 %4191
        %v4193 = vsel %vm1144, %v4178, %v4180
        %v4194 = vsel %vm1144, %v4180, %v4182
        %v4195 = vsel %vm1144, %v4182, %v4184
        %v4196 = vsel %vm1144, %v4186, %v4188
        %v4197 = vsel %vm1144, %v4188, %v4190
        %v4198 = vsel %vm1144, %v4190, %v4192
        %v4209 = vadd.f32 %v4140, %v4178
        %v4210 = vadd.f32 %v4141, %v4193
        %v4211 = vadd.f32 %v4142, %v4194
        %v4212 = vadd.f32 %v4143, %v4195
        %v4213 = vadd.f32 %v4144, %v4184
        %v4214 = vadd.f32 %v4145, %v4186
        %v4215 = vadd.f32 %v4146, %v4196
        %v4216 = vadd.f32 %v4147, %v4197
        %v4217 = vadd.f32 %v4148, %v4198
        %v4218 = vadd.f32 %v4149, %v4192
        %v4219 = vld [vmem:[#allocation2 + $0x88] sm:$0xff]
        %v4220 = vld [vmem:[#allocation2 + $0xd8] sm:$0xff]
        %s4221 = scalar_lea.vmem [#allocation10], 4
        %v4222 = vld [vmem:[%s4221] ss:$8 sm:$0xf]
        %v4224 = vperm.slane %v4222, 0
        %v4225 = vperm.slane %v4222, 1
        %v4226 = vperm.slane %v4222, 2
        %v4227 = vperm.slane %v4222, 3
        %4228 = vrot.lane.b32.xlu0 %v4224, 32
        %v4229 = vpop.permute.xlu0 %4228
        %4230 = vrot.lane.b32.xlu0 %v4225, 32
        %v4231 = vpop.permute.xlu0 %4230
        %4232 = vrot.lane.b32.xlu0 %v4226, 32
        %v4233 = vpop.permute.xlu0 %4232
        %4234 = vrot.lane.b32.xlu0 %v4227, 32
        %v4235 = vpop.permute.xlu0 %4234
        %v4236 = vsel %vm1144, %v4229, %v4231
        %v4237 = vsel %vm1144, %v4231, %v4233
        %v4238 = vsel %vm1144, %v4233, %v4235
        %v4244 = vmul.f32 %v3917, %v4229
        %v4245 = vmul.f32 %v3918, %v4236
        %v4246 = vmul.f32 %v3919, %v4237
        %v4247 = vmul.f32 %v3920, %v4238
        %v4248 = vmul.f32 %v4219, %v4235
        %v4249 = vmul.f32 %v3922, %v4229
        %v4250 = vmul.f32 %v3923, %v4236
        %v4251 = vmul.f32 %v3924, %v4237
        %v4252 = vmul.f32 %v3925, %v4238
        %v4253 = vmul.f32 %v4220, %v4235
        %v4254 = vadd.f32 %v4209, %v4244
        %v4255 = vadd.f32 %v4210, %v4245
        %v4256 = vadd.f32 %v4211, %v4246
        %v4257 = vadd.f32 %v4212, %v4247
        %v4258 = vadd.f32 %v4213, %v4248
        %v4259 = vadd.f32 %v4214, %v4249
        %v4260 = vadd.f32 %v4215, %v4250
        %v4261 = vadd.f32 %v4216, %v4251
        %v4262 = vadd.f32 %v4217, %v4252
        %v4263 = vadd.f32 %v4218, %v4253
        %s4264 = scalar_lea.vmem [#allocation10], 5
        %v4265 = vld [vmem:[%s4264] ss:$8 sm:$0xf]
        %v4267 = vperm.slane %v4265, 0
        %v4268 = vperm.slane %v4265, 1
        %v4269 = vperm.slane %v4265, 2
        %v4270 = vperm.slane %v4265, 3
        %4271 = vrot.lane.b32.xlu0 %v4267, 64
        %v4272 = vpop.permute.xlu0 %4271
        %4273 = vrot.lane.b32.xlu0 %v4268, 64
        %v4274 = vpop.permute.xlu0 %4273
        %4275 = vrot.lane.b32.xlu0 %v4269, 64
        %v4276 = vpop.permute.xlu0 %4275
        %4277 = vrot.lane.b32.xlu0 %v4270, 64
        %v4278 = vpop.permute.xlu0 %4277
        %v4279 = vsel %vm863, %v4272, %v4274
        %v4280 = vsel %vm863, %v4274, %v4276
        %v4281 = vsel %vm863, %v4276, %v4278
        %v4287 = vmul.f32 %v3917, %v4272
        %v4288 = vmul.f32 %v3918, %v4279
        %v4289 = vmul.f32 %v3919, %v4280
        %v4290 = vmul.f32 %v3920, %v4281
        %v4291 = vmul.f32 %v4219, %v4278
        %v4292 = vmul.f32 %v3922, %v4272
        %v4293 = vmul.f32 %v3923, %v4279
        %v4294 = vmul.f32 %v3924, %v4280
        %v4295 = vmul.f32 %v3925, %v4281
        %v4296 = vmul.f32 %v4220, %v4278
        %4307 = vrot.lane.b32.xlu0 %v4287, 96
        %v4308 = vpop.permute.xlu0 %4307
        %4309 = vrot.lane.b32.xlu0 %v4288, 96
        %v4310 = vpop.permute.xlu0 %4309
        %4311 = vrot.lane.b32.xlu0 %v4289, 96
        %v4312 = vpop.permute.xlu0 %4311
        %4313 = vrot.lane.b32.xlu0 %v4290, 96
        %v4314 = vpop.permute.xlu0 %4313
        %4315 = vrot.lane.b32.xlu0 %v4291, 96
        %v4316 = vpop.permute.xlu0 %4315
        %4317 = vrot.lane.b32.xlu0 %v4292, 96
        %v4318 = vpop.permute.xlu0 %4317
        %4319 = vrot.lane.b32.xlu0 %v4293, 96
        %v4320 = vpop.permute.xlu0 %4319
        %4321 = vrot.lane.b32.xlu0 %v4294, 96
        %v4322 = vpop.permute.xlu0 %4321
        %4323 = vrot.lane.b32.xlu0 %v4295, 96
        %v4324 = vpop.permute.xlu0 %4323
        %4325 = vrot.lane.b32.xlu0 %v4296, 96
        %v4326 = vpop.permute.xlu0 %4325
        %v4327 = vsel %vm917, %v4308, %v4310
        %v4328 = vsel %vm917, %v4310, %v4312
        %v4329 = vsel %vm917, %v4312, %v4314
        %v4330 = vsel %vm917, %v4314, %v4316
        %v4331 = vsel %vm917, %v4318, %v4320
        %v4332 = vsel %vm917, %v4320, %v4322
        %v4333 = vsel %vm917, %v4322, %v4324
        %v4334 = vsel %vm917, %v4324, %v4326
        %v4345 = vadd.f32 %v4254, %v4327
        %v4346 = vadd.f32 %v4255, %v4328
        %v4347 = vadd.f32 %v4256, %v4329
        %v4348 = vadd.f32 %v4257, %v4330
        %v4349 = vadd.f32 %v4258, %v4316
        %v4350 = vadd.f32 %v4259, %v4331
        %v4351 = vadd.f32 %v4260, %v4332
        %v4352 = vadd.f32 %v4261, %v4333
        %v4353 = vadd.f32 %v4262, %v4334
        %v4354 = vadd.f32 %v4263, %v4326
        %s4355 = scalar_lea.vmem [#allocation10], 6
        %v4356 = vld [vmem:[%s4355] ss:$8 sm:$0xf]
        %v4358 = vperm.slane %v4356, 0
        %v4359 = vperm.slane %v4356, 1
        %v4360 = vperm.slane %v4356, 2
        %v4361 = vperm.slane %v4356, 3
        %4362 = vrot.lane.b32.xlu0 %v4358, 96
        %v4363 = vpop.permute.xlu0 %4362
        %4364 = vrot.lane.b32.xlu0 %v4359, 96
        %v4365 = vpop.permute.xlu0 %4364
        %4366 = vrot.lane.b32.xlu0 %v4360, 96
        %v4367 = vpop.permute.xlu0 %4366
        %4368 = vrot.lane.b32.xlu0 %v4361, 96
        %v4369 = vpop.permute.xlu0 %4368
        %v4370 = vsel %vm917, %v4363, %v4365
        %v4371 = vsel %vm917, %v4365, %v4367
        %v4372 = vsel %vm917, %v4367, %v4369
        %v4378 = vmul.f32 %v3917, %v4363
        %v4379 = vmul.f32 %v3918, %v4370
        %v4380 = vmul.f32 %v3919, %v4371
        %v4381 = vmul.f32 %v3920, %v4372
        %v4382 = vmul.f32 %v4219, %v4369
        %v4383 = vmul.f32 %v3922, %v4363
        %v4384 = vmul.f32 %v3923, %v4370
        %v4385 = vmul.f32 %v3924, %v4371
        %v4386 = vmul.f32 %v3925, %v4372
        %v4387 = vmul.f32 %v4220, %v4369
        %4398 = vrot.lane.b32.xlu0 %v4378, 64
        %v4399 = vpop.permute.xlu0 %4398
        %4400 = vrot.lane.b32.xlu0 %v4379, 64
        %v4401 = vpop.permute.xlu0 %4400
        %4402 = vrot.lane.b32.xlu0 %v4380, 64
        %v4403 = vpop.permute.xlu0 %4402
        %4404 = vrot.lane.b32.xlu0 %v4381, 64
        %v4405 = vpop.permute.xlu0 %4404
        %4406 = vrot.lane.b32.xlu0 %v4382, 64
        %v4407 = vpop.permute.xlu0 %4406
        %4408 = vrot.lane.b32.xlu0 %v4383, 64
        %v4409 = vpop.permute.xlu0 %4408
        %4410 = vrot.lane.b32.xlu0 %v4384, 64
        %v4411 = vpop.permute.xlu0 %4410
        %4412 = vrot.lane.b32.xlu0 %v4385, 64
        %v4413 = vpop.permute.xlu0 %4412
        %4414 = vrot.lane.b32.xlu0 %v4386, 64
        %v4415 = vpop.permute.xlu0 %4414
        %4416 = vrot.lane.b32.xlu0 %v4387, 64
        %v4417 = vpop.permute.xlu0 %4416
        %v4418 = vsel %vm863, %v4399, %v4401
        %v4419 = vsel %vm863, %v4401, %v4403
        %v4420 = vsel %vm863, %v4403, %v4405
        %v4421 = vsel %vm863, %v4405, %v4407
        %v4422 = vsel %vm863, %v4409, %v4411
        %v4423 = vsel %vm863, %v4411, %v4413
        %v4424 = vsel %vm863, %v4413, %v4415
        %v4425 = vsel %vm863, %v4415, %v4417
        %v4436 = vadd.f32 %v4345, %v4418
        %v4437 = vadd.f32 %v4346, %v4419
        %v4438 = vadd.f32 %v4347, %v4420
        %v4439 = vadd.f32 %v4348, %v4421
        %v4440 = vadd.f32 %v4349, %v4407
        %v4441 = vadd.f32 %v4350, %v4422
        %v4442 = vadd.f32 %v4351, %v4423
        %v4443 = vadd.f32 %v4352, %v4424
        %v4444 = vadd.f32 %v4353, %v4425
        %v4445 = vadd.f32 %v4354, %v4417
        %v4446 = vld [vmem:[#allocation12] sm:$0xf]
        %v4448 = vperm.slane %v4446, 0
        %v4449 = vperm.slane %v4446, 1
        %v4450 = vperm.slane %v4446, 2
        %v4451 = vperm.slane %v4446, 3
        %4452 = vrot.lane.b32.xlu0 %v4448, 32
        %v4453 = vpop.permute.xlu0 %4452
        %4454 = vrot.lane.b32.xlu0 %v4449, 32
        %v4455 = vpop.permute.xlu0 %4454
        %4456 = vrot.lane.b32.xlu0 %v4450, 32
        %v4457 = vpop.permute.xlu0 %4456
        %4458 = vrot.lane.b32.xlu0 %v4451, 32
        %v4459 = vpop.permute.xlu0 %4458
        %v4460 = vsel %vm1144, %v4453, %v4455
        %v4461 = vsel %vm1144, %v4455, %v4457
        %v4462 = vsel %vm1144, %v4457, %v4459
        %v4468 = vadd.f32 %v4436, %v4453
        %v4469 = vadd.f32 %v4437, %v4460
        %v4470 = vadd.f32 %v4438, %v4461
        %v4471 = vadd.f32 %v4439, %v4462
        %v4472 = vadd.f32 %v4440, %v4459
        %v4473 = vadd.f32 %v4441, %v4453
        %v4474 = vadd.f32 %v4442, %v4460
        %v4475 = vadd.f32 %v4443, %v4461
        %v4476 = vadd.f32 %v4444, %v4462
        %v4477 = vadd.f32 %v4445, %v4459
        %4488 = vrot.lane.b32.xlu0 %v4468, 96
        %v4489 = vpop.permute.xlu0 %4488
        %4490 = vrot.lane.b32.xlu0 %v4469, 96
        %v4491 = vpop.permute.xlu0 %4490
        %4492 = vrot.lane.b32.xlu0 %v4470, 96
        %v4493 = vpop.permute.xlu0 %4492
        %4494 = vrot.lane.b32.xlu0 %v4471, 96
        %v4495 = vpop.permute.xlu0 %4494
        %4496 = vrot.lane.b32.xlu0 %v4472, 96
        %v4497 = vpop.permute.xlu0 %4496
        %4498 = vrot.lane.b32.xlu0 %v4473, 96
        %v4499 = vpop.permute.xlu0 %4498
        %4500 = vrot.lane.b32.xlu0 %v4474, 96
        %v4501 = vpop.permute.xlu0 %4500
        %4502 = vrot.lane.b32.xlu0 %v4475, 96
        %v4503 = vpop.permute.xlu0 %4502
        %4504 = vrot.lane.b32.xlu0 %v4476, 96
        %v4505 = vpop.permute.xlu0 %4504
        %4506 = vrot.lane.b32.xlu0 %v4477, 96
        %v4507 = vpop.permute.xlu0 %4506
        %v4508 = vsel %vm917, %v4489, %v4491
        %v4509 = vsel %vm917, %v4491, %v4493
        %v4510 = vsel %vm917, %v4493, %v4495
        %v4511 = vsel %vm917, %v4495, %v4497
        %v4512 = vsel %vm917, %v4499, %v4501
        %v4513 = vsel %vm917, %v4501, %v4503
        %v4514 = vsel %vm917, %v4503, %v4505
        %v4515 = vsel %vm917, %v4505, %v4507
        %4524 = vst [vmem:[#allocation3 + $0x40] sm:$0xff] %v4508
        %4525 = vst [vmem:[#allocation3 + $0x48] sm:$0xff] %v4509
        %4526 = vst [vmem:[#allocation3 + $0x50] sm:$0xff] %v4510
        %4527 = vst [vmem:[#allocation3 + $0x58] sm:$0xff] %v4511
        %4528 = vst [vmem:[#allocation3 + $0x60] sm:$0xff] %v4512
        %4529 = vst [vmem:[#allocation3 + $0x68] sm:$0xff] %v4513
        %4530 = vst [vmem:[#allocation3 + $0x70] sm:$0xff] %v4514
        %4531 = vst [vmem:[#allocation3 + $0x78] sm:$0xff] %v4515
        %v4532 = vld [vmem:[#allocation3 + $0x20] sm:$0xe0]
        %v4533 = vld [vmem:[#allocation3 + $0x28] sm:$0xe0]
        %v4534 = vld [vmem:[#allocation3 + $0x30] sm:$0xe0]
        %v4535 = vld [vmem:[#allocation3 + $0x38] sm:$0xe0]
        %v4536 = vld [vmem:[#allocation3 + $0x40] sm:$0xff]
        %v4537 = vld [vmem:[#allocation3 + $0x48] sm:$0xff]
        %v4538 = vld [vmem:[#allocation3 + $0x50] sm:$0xff]
        %v4539 = vld [vmem:[#allocation3 + $0x58] sm:$0xff]
        %v4540 = vld [vmem:[#allocation3 + $0x60] sm:$0x1f]
        %v4541 = vld [vmem:[#allocation3 + $0x68] sm:$0x1f]
        %v4542 = vld [vmem:[#allocation3 + $0x70] sm:$0x1f]
        %v4543 = vld [vmem:[#allocation3 + $0x78] sm:$0x1f]
        %v4544 = vld [vmem:[#allocation13] ss:$8 sm:$0xf]
        %v4546 = vperm.slane %v4544, 0
        %v4547 = vperm.slane %v4544, 1
        %v4548 = vperm.slane %v4544, 2
        %v4549 = vperm.slane %v4544, 3
        %v4554 = vmul.f32 %v4532, %v4546
        %v4555 = vmul.f32 %v4533, %v4547
        %v4556 = vmul.f32 %v4534, %v4548
        %v4557 = vmul.f32 %v4535, %v4549
        %v4558 = vmul.f32 %v4536, %v4546
        %v4559 = vmul.f32 %v4537, %v4547
        %v4560 = vmul.f32 %v4538, %v4548
        %v4561 = vmul.f32 %v4539, %v4549
        %v4562 = vmul.f32 %v4540, %v4546
        %v4563 = vmul.f32 %v4541, %v4547
        %v4564 = vmul.f32 %v4542, %v4548
        %v4565 = vmul.f32 %v4543, %v4549
        %v4566 = vadd.f32 %v4554, 0.0
        %v4567 = vadd.f32 %v4555, 0.0
        %v4568 = vadd.f32 %v4556, 0.0
        %v4569 = vadd.f32 %v4557, 0.0
        %v4570 = vadd.f32 %v4558, 0.0
        %v4571 = vadd.f32 %v4559, 0.0
        %v4572 = vadd.f32 %v4560, 0.0
        %v4573 = vadd.f32 %v4561, 0.0
        %v4574 = vadd.f32 %v4562, 0.0
        %v4575 = vadd.f32 %v4563, 0.0
        %v4576 = vadd.f32 %v4564, 0.0
        %v4577 = vadd.f32 %v4565, 0.0
        %v4578 = vld [vmem:[#allocation3 + $0x20] sm:$0xc0]
        %v4579 = vld [vmem:[#allocation3 + $0x28] sm:$0xc0]
        %v4580 = vld [vmem:[#allocation3 + $0x30] sm:$0xc0]
        %v4581 = vld [vmem:[#allocation3 + $0x38] sm:$0xc0]
        %v4582 = vld [vmem:[#allocation3 + $0x60] sm:$0x3f]
        %v4583 = vld [vmem:[#allocation3 + $0x68] sm:$0x3f]
        %v4584 = vld [vmem:[#allocation3 + $0x70] sm:$0x3f]
        %v4585 = vld [vmem:[#allocation3 + $0x78] sm:$0x3f]
        %s4586 = scalar_lea.vmem [#allocation13], 1
        %v4587 = vld [vmem:[%s4586] ss:$8 sm:$0xf]
        %v4589 = vperm.slane %v4587, 0
        %v4590 = vperm.slane %v4587, 1
        %v4591 = vperm.slane %v4587, 2
        %v4592 = vperm.slane %v4587, 3
        %v4597 = vmul.f32 %v4578, %v4589
        %v4598 = vmul.f32 %v4579, %v4590
        %v4599 = vmul.f32 %v4580, %v4591
        %v4600 = vmul.f32 %v4581, %v4592
        %v4601 = vmul.f32 %v4536, %v4589
        %v4602 = vmul.f32 %v4537, %v4590
        %v4603 = vmul.f32 %v4538, %v4591
        %v4604 = vmul.f32 %v4539, %v4592
        %v4605 = vmul.f32 %v4582, %v4589
        %v4606 = vmul.f32 %v4583, %v4590
        %v4607 = vmul.f32 %v4584, %v4591
        %v4608 = vmul.f32 %v4585, %v4592
        %v4621 = vrot.slane %v4597, 1
        %v4622 = vrot.slane %v4601, 1
        %v4623 = vsel %vm1371, %v4621, %v4622
        %v4624 = vrot.slane %v4598, 1
        %v4625 = vrot.slane %v4602, 1
        %v4626 = vsel %vm1371, %v4624, %v4625
        %v4627 = vrot.slane %v4599, 1
        %v4628 = vrot.slane %v4603, 1
        %v4629 = vsel %vm1371, %v4627, %v4628
        %v4630 = vrot.slane %v4600, 1
        %v4631 = vrot.slane %v4604, 1
        %v4632 = vsel %vm1371, %v4630, %v4631
        %v4633 = vrot.slane %v4605, 1
        %v4634 = vsel %vm1371, %v4622, %v4633
        %v4635 = vrot.slane %v4606, 1
        %v4636 = vsel %vm1371, %v4625, %v4635
        %v4637 = vrot.slane %v4607, 1
        %v4638 = vsel %vm1371, %v4628, %v4637
        %v4639 = vrot.slane %v4608, 1
        %v4640 = vsel %vm1371, %v4631, %v4639
        %v4653 = vadd.f32 %v4566, %v4623
        %v4654 = vadd.f32 %v4567, %v4626
        %v4655 = vadd.f32 %v4568, %v4629
        %v4656 = vadd.f32 %v4569, %v4632
        %v4657 = vadd.f32 %v4570, %v4634
        %v4658 = vadd.f32 %v4571, %v4636
        %v4659 = vadd.f32 %v4572, %v4638
        %v4660 = vadd.f32 %v4573, %v4640
        %v4661 = vadd.f32 %v4574, %v4633
        %v4662 = vadd.f32 %v4575, %v4635
        %v4663 = vadd.f32 %v4576, %v4637
        %v4664 = vadd.f32 %v4577, %v4639
        %v4665 = vld [vmem:[#allocation3 + $0x20] sm:$0x80]
        %v4666 = vld [vmem:[#allocation3 + $0x28] sm:$0x80]
        %v4667 = vld [vmem:[#allocation3 + $0x30] sm:$0x80]
        %v4668 = vld [vmem:[#allocation3 + $0x38] sm:$0x80]
        %v4669 = vld [vmem:[#allocation3 + $0x60] sm:$0x7f]
        %v4670 = vld [vmem:[#allocation3 + $0x68] sm:$0x7f]
        %v4671 = vld [vmem:[#allocation3 + $0x70] sm:$0x7f]
        %v4672 = vld [vmem:[#allocation3 + $0x78] sm:$0x7f]
        %s4673 = scalar_lea.vmem [#allocation13], 2
        %v4674 = vld [vmem:[%s4673] ss:$8 sm:$0xf]
        %v4676 = vperm.slane %v4674, 0
        %v4677 = vperm.slane %v4674, 1
        %v4678 = vperm.slane %v4674, 2
        %v4679 = vperm.slane %v4674, 3
        %v4684 = vmul.f32 %v4665, %v4676
        %v4685 = vmul.f32 %v4666, %v4677
        %v4686 = vmul.f32 %v4667, %v4678
        %v4687 = vmul.f32 %v4668, %v4679
        %v4688 = vmul.f32 %v4536, %v4676
        %v4689 = vmul.f32 %v4537, %v4677
        %v4690 = vmul.f32 %v4538, %v4678
        %v4691 = vmul.f32 %v4539, %v4679
        %v4692 = vmul.f32 %v4669, %v4676
        %v4693 = vmul.f32 %v4670, %v4677
        %v4694 = vmul.f32 %v4671, %v4678
        %v4695 = vmul.f32 %v4672, %v4679
        %v4708 = vrot.slane %v4684, 2
        %v4709 = vrot.slane %v4688, 2
        %v4710 = vsel %vm2003, %v4708, %v4709
        %v4711 = vrot.slane %v4685, 2
        %v4712 = vrot.slane %v4689, 2
        %v4713 = vsel %vm2003, %v4711, %v4712
        %v4714 = vrot.slane %v4686, 2
        %v4715 = vrot.slane %v4690, 2
        %v4716 = vsel %vm2003, %v4714, %v4715
        %v4717 = vrot.slane %v4687, 2
        %v4718 = vrot.slane %v4691, 2
        %v4719 = vsel %vm2003, %v4717, %v4718
        %v4720 = vrot.slane %v4692, 2
        %v4721 = vsel %vm2003, %v4709, %v4720
        %v4722 = vrot.slane %v4693, 2
        %v4723 = vsel %vm2003, %v4712, %v4722
        %v4724 = vrot.slane %v4694, 2
        %v4725 = vsel %vm2003, %v4715, %v4724
        %v4726 = vrot.slane %v4695, 2
        %v4727 = vsel %vm2003, %v4718, %v4726
        %v4740 = vadd.f32 %v4653, %v4710
        %v4741 = vadd.f32 %v4654, %v4713
        %v4742 = vadd.f32 %v4655, %v4716
        %v4743 = vadd.f32 %v4656, %v4719
        %v4744 = vadd.f32 %v4657, %v4721
        %v4745 = vadd.f32 %v4658, %v4723
        %v4746 = vadd.f32 %v4659, %v4725
        %v4747 = vadd.f32 %v4660, %v4727
        %v4748 = vadd.f32 %v4661, %v4720
        %v4749 = vadd.f32 %v4662, %v4722
        %v4750 = vadd.f32 %v4663, %v4724
        %v4751 = vadd.f32 %v4664, %v4726
        %v4752 = vld [vmem:[#allocation3 + $0x60] sm:$0xff]
        %v4753 = vld [vmem:[#allocation3 + $0x68] sm:$0xff]
        %v4754 = vld [vmem:[#allocation3 + $0x70] sm:$0xff]
        %v4755 = vld [vmem:[#allocation3 + $0x78] sm:$0xff]
        %s4756 = scalar_lea.vmem [#allocation13], 3
        %v4757 = vld [vmem:[%s4756] ss:$8 sm:$0xf]
        %v4759 = vperm.slane %v4757, 0
        %v4760 = vperm.slane %v4757, 1
        %v4761 = vperm.slane %v4757, 2
        %v4762 = vperm.slane %v4757, 3
        %v4767 = vmul.f32 %v4536, %v4759
        %v4768 = vmul.f32 %v4537, %v4760
        %v4769 = vmul.f32 %v4538, %v4761
        %v4770 = vmul.f32 %v4539, %v4762
        %v4771 = vmul.f32 %v4752, %v4759
        %v4772 = vmul.f32 %v4753, %v4760
        %v4773 = vmul.f32 %v4754, %v4761
        %v4774 = vmul.f32 %v4755, %v4762
        %v4783 = vrot.slane %v4767, 3
        %v4784 = vrot.slane %v4768, 3
        %v4785 = vrot.slane %v4769, 3
        %v4786 = vrot.slane %v4770, 3
        %v4787 = vrot.slane %v4771, 3
        %v4788 = vsel %vm2563, %v4783, %v4787
        %v4789 = vrot.slane %v4772, 3
        %v4790 = vsel %vm2563, %v4784, %v4789
        %v4791 = vrot.slane %v4773, 3
        %v4792 = vsel %vm2563, %v4785, %v4791
        %v4793 = vrot.slane %v4774, 3
        %v4794 = vsel %vm2563, %v4786, %v4793
        %v4807 = vadd.f32 %v4740, %v4783
        %v4808 = vadd.f32 %v4741, %v4784
        %v4809 = vadd.f32 %v4742, %v4785
        %v4810 = vadd.f32 %v4743, %v4786
        %v4811 = vadd.f32 %v4744, %v4788
        %v4812 = vadd.f32 %v4745, %v4790
        %v4813 = vadd.f32 %v4746, %v4792
        %v4814 = vadd.f32 %v4747, %v4794
        %v4815 = vadd.f32 %v4748, %v4787
        %v4816 = vadd.f32 %v4749, %v4789
        %v4817 = vadd.f32 %v4750, %v4791
        %v4818 = vadd.f32 %v4751, %v4793
        %v4819 = vld [vmem:[#allocation3 + $0x40] sm:$0xfe]
        %v4820 = vld [vmem:[#allocation3 + $0x48] sm:$0xfe]
        %v4821 = vld [vmem:[#allocation3 + $0x50] sm:$0xfe]
        %v4822 = vld [vmem:[#allocation3 + $0x58] sm:$0xfe]
        %v4823 = vld [vmem:[#allocation3 + $0x80] sm:$0x1]
        %v4824 = vld [vmem:[#allocation3 + $0x88] sm:$0x1]
        %v4825 = vld [vmem:[#allocation3 + $0x90] sm:$0x1]
        %v4826 = vld [vmem:[#allocation3 + $0x98] sm:$0x1]
        %s4827 = scalar_lea.vmem [#allocation13], 4
        %v4828 = vld [vmem:[%s4827] ss:$8 sm:$0xf]
        %v4830 = vperm.slane %v4828, 0
        %v4831 = vperm.slane %v4828, 1
        %v4832 = vperm.slane %v4828, 2
        %v4833 = vperm.slane %v4828, 3
        %v4838 = vmul.f32 %v4819, %v4830
        %v4839 = vmul.f32 %v4820, %v4831
        %v4840 = vmul.f32 %v4821, %v4832
        %v4841 = vmul.f32 %v4822, %v4833
        %v4842 = vmul.f32 %v4752, %v4830
        %v4843 = vmul.f32 %v4753, %v4831
        %v4844 = vmul.f32 %v4754, %v4832
        %v4845 = vmul.f32 %v4755, %v4833
        %v4846 = vmul.f32 %v4823, %v4830
        %v4847 = vmul.f32 %v4824, %v4831
        %v4848 = vmul.f32 %v4825, %v4832
        %v4849 = vmul.f32 %v4826, %v4833
        %v4862 = vrot.slane %v4838, 4
        %v4863 = vrot.slane %v4839, 4
        %v4864 = vrot.slane %v4840, 4
        %v4865 = vrot.slane %v4841, 4
        %v4866 = vrot.slane %v4842, 4
        %v4867 = vsel %vm3210, %v4862, %v4866
        %v4868 = vrot.slane %v4843, 4
        %v4869 = vsel %vm3210, %v4863, %v4868
        %v4870 = vrot.slane %v4844, 4
        %v4871 = vsel %vm3210, %v4864, %v4870
        %v4872 = vrot.slane %v4845, 4
        %v4873 = vsel %vm3210, %v4865, %v4872
        %v4874 = vrot.slane %v4846, 4
        %v4875 = vsel %vm3210, %v4866, %v4874
        %v4876 = vrot.slane %v4847, 4
        %v4877 = vsel %vm3210, %v4868, %v4876
        %v4878 = vrot.slane %v4848, 4
        %v4879 = vsel %vm3210, %v4870, %v4878
        %v4880 = vrot.slane %v4849, 4
        %v4881 = vsel %vm3210, %v4872, %v4880
        %v4894 = vadd.f32 %v4807, %v4862
        %v4895 = vadd.f32 %v4808, %v4863
        %v4896 = vadd.f32 %v4809, %v4864
        %v4897 = vadd.f32 %v4810, %v4865
        %v4898 = vadd.f32 %v4811, %v4867
        %v4899 = vadd.f32 %v4812, %v4869
        %v4900 = vadd.f32 %v4813, %v4871
        %v4901 = vadd.f32 %v4814, %v4873
        %v4902 = vadd.f32 %v4815, %v4875
        %v4903 = vadd.f32 %v4816, %v4877
        %v4904 = vadd.f32 %v4817, %v4879
        %v4905 = vadd.f32 %v4818, %v4881
        %v4906 = vld [vmem:[#allocation3 + $0x40] sm:$0xfc]
        %v4907 = vld [vmem:[#allocation3 + $0x48] sm:$0xfc]
        %v4908 = vld [vmem:[#allocation3 + $0x50] sm:$0xfc]
        %v4909 = vld [vmem:[#allocation3 + $0x58] sm:$0xfc]
        %v4910 = vld [vmem:[#allocation3 + $0x80] sm:$0x3]
        %v4911 = vld [vmem:[#allocation3 + $0x88] sm:$0x3]
        %v4912 = vld [vmem:[#allocation3 + $0x90] sm:$0x3]
        %v4913 = vld [vmem:[#allocation3 + $0x98] sm:$0x3]
        %s4914 = scalar_lea.vmem [#allocation13], 5
        %v4915 = vld [vmem:[%s4914] ss:$8 sm:$0xf]
        %v4917 = vperm.slane %v4915, 0
        %v4918 = vperm.slane %v4915, 1
        %v4919 = vperm.slane %v4915, 2
        %v4920 = vperm.slane %v4915, 3
        %v4925 = vmul.f32 %v4906, %v4917
        %v4926 = vmul.f32 %v4907, %v4918
        %v4927 = vmul.f32 %v4908, %v4919
        %v4928 = vmul.f32 %v4909, %v4920
        %v4929 = vmul.f32 %v4752, %v4917
        %v4930 = vmul.f32 %v4753, %v4918
        %v4931 = vmul.f32 %v4754, %v4919
        %v4932 = vmul.f32 %v4755, %v4920
        %v4933 = vmul.f32 %v4910, %v4917
        %v4934 = vmul.f32 %v4911, %v4918
        %v4935 = vmul.f32 %v4912, %v4919
        %v4936 = vmul.f32 %v4913, %v4920
        %vm4949 = vcmask 1042432
        %v4950 = vrot.slane %v4925, 5
        %v4951 = vrot.slane %v4926, 5
        %v4952 = vrot.slane %v4927, 5
        %v4953 = vrot.slane %v4928, 5
        %v4954 = vrot.slane %v4929, 5
        %v4955 = vsel %vm4949, %v4950, %v4954
        %v4956 = vrot.slane %v4930, 5
        %v4957 = vsel %vm4949, %v4951, %v4956
        %v4958 = vrot.slane %v4931, 5
        %v4959 = vsel %vm4949, %v4952, %v4958
        %v4960 = vrot.slane %v4932, 5
        %v4961 = vsel %vm4949, %v4953, %v4960
        %v4962 = vrot.slane %v4933, 5
        %v4963 = vsel %vm4949, %v4954, %v4962
        %v4964 = vrot.slane %v4934, 5
        %v4965 = vsel %vm4949, %v4956, %v4964
        %v4966 = vrot.slane %v4935, 5
        %v4967 = vsel %vm4949, %v4958, %v4966
        %v4968 = vrot.slane %v4936, 5
        %v4969 = vsel %vm4949, %v4960, %v4968
        %v4982 = vadd.f32 %v4894, %v4950
        %v4983 = vadd.f32 %v4895, %v4951
        %v4984 = vadd.f32 %v4896, %v4952
        %v4985 = vadd.f32 %v4897, %v4953
        %v4986 = vadd.f32 %v4898, %v4955
        %v4987 = vadd.f32 %v4899, %v4957
        %v4988 = vadd.f32 %v4900, %v4959
        %v4989 = vadd.f32 %v4901, %v4961
        %v4990 = vadd.f32 %v4902, %v4963
        %v4991 = vadd.f32 %v4903, %v4965
        %v4992 = vadd.f32 %v4904, %v4967
        %v4993 = vadd.f32 %v4905, %v4969
        %v4994 = vld [vmem:[#allocation3 + $0x40] sm:$0xf8]
        %v4995 = vld [vmem:[#allocation3 + $0x48] sm:$0xf8]
        %v4996 = vld [vmem:[#allocation3 + $0x50] sm:$0xf8]
        %v4997 = vld [vmem:[#allocation3 + $0x58] sm:$0xf8]
        %v4998 = vld [vmem:[#allocation3 + $0x80] sm:$0x7]
        %v4999 = vld [vmem:[#allocation3 + $0x88] sm:$0x7]
        %v5000 = vld [vmem:[#allocation3 + $0x90] sm:$0x7]
        %v5001 = vld [vmem:[#allocation3 + $0x98] sm:$0x7]
        %s5002 = scalar_lea.vmem [#allocation13], 6
        %v5003 = vld [vmem:[%s5002] ss:$8 sm:$0xf]
        %v5005 = vperm.slane %v5003, 0
        %v5006 = vperm.slane %v5003, 1
        %v5007 = vperm.slane %v5003, 2
        %v5008 = vperm.slane %v5003, 3
        %v5013 = vmul.f32 %v4994, %v5005
        %v5014 = vmul.f32 %v4995, %v5006
        %v5015 = vmul.f32 %v4996, %v5007
        %v5016 = vmul.f32 %v4997, %v5008
        %v5017 = vmul.f32 %v4752, %v5005
        %v5018 = vmul.f32 %v4753, %v5006
        %v5019 = vmul.f32 %v4754, %v5007
        %v5020 = vmul.f32 %v4755, %v5008
        %v5021 = vmul.f32 %v4998, %v5005
        %v5022 = vmul.f32 %v4999, %v5006
        %v5023 = vmul.f32 %v5000, %v5007
        %v5024 = vmul.f32 %v5001, %v5008
        %v5037 = vrot.slane %v5013, 6
        %v5038 = vrot.slane %v5014, 6
        %v5039 = vrot.slane %v5015, 6
        %v5040 = vrot.slane %v5016, 6
        %v5041 = vrot.slane %v5017, 6
        %v5042 = vsel %vm3846, %v5037, %v5041
        %v5043 = vrot.slane %v5018, 6
        %v5044 = vsel %vm3846, %v5038, %v5043
        %v5045 = vrot.slane %v5019, 6
        %v5046 = vsel %vm3846, %v5039, %v5045
        %v5047 = vrot.slane %v5020, 6
        %v5048 = vsel %vm3846, %v5040, %v5047
        %v5049 = vrot.slane %v5021, 6
        %v5050 = vsel %vm3846, %v5041, %v5049
        %v5051 = vrot.slane %v5022, 6
        %v5052 = vsel %vm3846, %v5043, %v5051
        %v5053 = vrot.slane %v5023, 6
        %v5054 = vsel %vm3846, %v5045, %v5053
        %v5055 = vrot.slane %v5024, 6
        %v5056 = vsel %vm3846, %v5047, %v5055
        %v5069 = vadd.f32 %v4982, %v5037
        %v5070 = vadd.f32 %v4983, %v5038
        %v5071 = vadd.f32 %v4984, %v5039
        %v5072 = vadd.f32 %v4985, %v5040
        %v5073 = vadd.f32 %v4986, %v5042
        %v5074 = vadd.f32 %v4987, %v5044
        %v5075 = vadd.f32 %v4988, %v5046
        %v5076 = vadd.f32 %v4989, %v5048
        %v5077 = vadd.f32 %v4990, %v5050
        %v5078 = vadd.f32 %v4991, %v5052
        %v5079 = vadd.f32 %v4992, %v5054
        %v5080 = vadd.f32 %v4993, %v5056
        %v5081 = vld [vmem:[%s6] sm:$0xf]
        %v5083 = vperm.slane %v5081, 0
        %v5084 = vperm.slane %v5081, 1
        %v5085 = vperm.slane %v5081, 2
        %v5086 = vperm.slane %v5081, 3
        %v5091 = vadd.f32 %v5069, %v5083
        %v5092 = vadd.f32 %v5070, %v5084
        %v5093 = vadd.f32 %v5071, %v5085
        %v5094 = vadd.f32 %v5072, %v5086
        %v5095 = vadd.f32 %v5073, %v5083
        %v5096 = vadd.f32 %v5074, %v5084
        %v5097 = vadd.f32 %v5075, %v5085
        %v5098 = vadd.f32 %v5076, %v5086
        %v5099 = vadd.f32 %v5077, %v5083
        %v5100 = vadd.f32 %v5078, %v5084
        %v5101 = vadd.f32 %v5079, %v5085
        %v5102 = vadd.f32 %v5080, %v5086
        %vm5115 = vcmask 1040384
        %v5116 = vrot.slane %v5091, 7
        %v5117 = vrot.slane %v5092, 7
        %v5118 = vrot.slane %v5093, 7
        %v5119 = vrot.slane %v5094, 7
        %v5120 = vrot.slane %v5095, 7
        %v5121 = vsel %vm5115, %v5116, %v5120
        %v5122 = vrot.slane %v5096, 7
        %v5123 = vsel %vm5115, %v5117, %v5122
        %v5124 = vrot.slane %v5097, 7
        %v5125 = vsel %vm5115, %v5118, %v5124
        %v5126 = vrot.slane %v5098, 7
        %v5127 = vsel %vm5115, %v5119, %v5126
        %v5128 = vrot.slane %v5099, 7
        %v5129 = vsel %vm5115, %v5120, %v5128
        %v5130 = vrot.slane %v5100, 7
        %v5131 = vsel %vm5115, %v5122, %v5130
        %v5132 = vrot.slane %v5101, 7
        %v5133 = vsel %vm5115, %v5124, %v5132
        %v5134 = vrot.slane %v5102, 7
        %v5135 = vsel %vm5115, %v5126, %v5134
        %5136 = vrot.lane.b32.xlu0 %v5116, 64
        %v5137 = vpop.permute.xlu0 %5136
        %5138 = vrot.lane.b32.xlu0 %v5117, 64
        %v5139 = vpop.permute.xlu0 %5138
        %5140 = vrot.lane.b32.xlu0 %v5118, 64
        %v5141 = vpop.permute.xlu0 %5140
        %5142 = vrot.lane.b32.xlu0 %v5119, 64
        %v5143 = vpop.permute.xlu0 %5142
        %5144 = vrot.lane.b32.xlu0 %v5121, 64
        %v5145 = vpop.permute.xlu0 %5144
        %5146 = vrot.lane.b32.xlu0 %v5123, 64
        %v5147 = vpop.permute.xlu0 %5146
        %5148 = vrot.lane.b32.xlu0 %v5125, 64
        %v5149 = vpop.permute.xlu0 %5148
        %5150 = vrot.lane.b32.xlu0 %v5127, 64
        %v5151 = vpop.permute.xlu0 %5150
        %5152 = vrot.lane.b32.xlu0 %v5129, 64
        %v5153 = vpop.permute.xlu0 %5152
        %5154 = vrot.lane.b32.xlu0 %v5131, 64
        %v5155 = vpop.permute.xlu0 %5154
        %5156 = vrot.lane.b32.xlu0 %v5133, 64
        %v5157 = vpop.permute.xlu0 %5156
        %5158 = vrot.lane.b32.xlu0 %v5135, 64
        %v5159 = vpop.permute.xlu0 %5158
        %v5160 = vsel %vm863, %v5137, %v5139
        %v5161 = vsel %vm863, %v5139, %v5141
        %v5162 = vsel %vm863, %v5141, %v5143
        %v5163 = vsel %vm863, %v5145, %v5147
        %v5164 = vsel %vm863, %v5147, %v5149
        %v5165 = vsel %vm863, %v5149, %v5151
        %v5166 = vsel %vm863, %v5153, %v5155
        %v5167 = vsel %vm863, %v5155, %v5157
        %v5168 = vsel %vm863, %v5157, %v5159
        %v5184 = vadd.f32 %v3816, %v5137
        %v5185 = vadd.f32 %v3817, %v5160
        %v5186 = vadd.f32 %v3818, %v5161
        %v5187 = vadd.f32 %v3819, %v5162
        %v5188 = vadd.f32 %v3820, %v5143
        %v5189 = vadd.f32 %v3821, %v5145
        %v5190 = vadd.f32 %v3822, %v5163
        %v5191 = vadd.f32 %v3823, %v5164
        %v5192 = vadd.f32 %v3824, %v5165
        %v5193 = vadd.f32 %v3825, %v5151
        %v5194 = vadd.f32 %v3826, %v5153
        %v5195 = vadd.f32 %v3827, %v5166
        %v5196 = vadd.f32 %v3828, %v5167
        %v5197 = vadd.f32 %v3829, %v5168
        %v5198 = vadd.f32 %v3830, %v5159
        %v5199 = vld [vmem:[#allocation2 + $0x58] sm:$0xff]
        %v5200 = vld [vmem:[#allocation2 + $0x60] sm:$0xff]
        %v5201 = vld [vmem:[#allocation2 + $0x68] sm:$0xff]
        %v5202 = vld [vmem:[#allocation2 + $0x70] sm:$0xff]
        %v5203 = vld [vmem:[#allocation2 + $0x78] sm:$0xff]
        %v5204 = vld [vmem:[#allocation2 + $0xa8] sm:$0xff]
        %v5205 = vld [vmem:[#allocation2 + $0xb0] sm:$0xff]
        %v5206 = vld [vmem:[#allocation2 + $0xb8] sm:$0xff]
        %v5207 = vld [vmem:[#allocation2 + $0xc0] sm:$0xff]
        %v5208 = vld [vmem:[#allocation2 + $0xc8] sm:$0xff]
        %v5209 = vld [vmem:[#allocation15] ss:$8 sm:$0xf]
        %v5211 = vperm.slane %v5209, 0
        %v5212 = vperm.slane %v5209, 1
        %v5213 = vperm.slane %v5209, 2
        %v5214 = vperm.slane %v5209, 3
        %5215 = vrot.lane.b32.xlu0 %v5211, 96
        %v5216 = vpop.permute.xlu0 %5215
        %5217 = vrot.lane.b32.xlu0 %v5212, 96
        %v5218 = vpop.permute.xlu0 %5217
        %5219 = vrot.lane.b32.xlu0 %v5213, 96
        %v5220 = vpop.permute.xlu0 %5219
        %5221 = vrot.lane.b32.xlu0 %v5214, 96
        %v5222 = vpop.permute.xlu0 %5221
        %v5223 = vsel %vm917, %v5216, %v5218
        %v5224 = vsel %vm917, %v5218, %v5220
        %v5225 = vsel %vm917, %v5220, %v5222
        %v5231 = vmul.f32 %v5199, %v5216
        %v5232 = vmul.f32 %v5200, %v5223
        %v5233 = vmul.f32 %v5201, %v5224
        %v5234 = vmul.f32 %v5202, %v5225
        %v5235 = vmul.f32 %v5203, %v5222
        %v5236 = vmul.f32 %v5204, %v5216
        %v5237 = vmul.f32 %v5205, %v5223
        %v5238 = vmul.f32 %v5206, %v5224
        %v5239 = vmul.f32 %v5207, %v5225
        %v5240 = vmul.f32 %v5208, %v5222
        %v5241 = vadd.f32 %v5231, 0.0
        %v5242 = vadd.f32 %v5232, 0.0
        %v5243 = vadd.f32 %v5233, 0.0
        %v5244 = vadd.f32 %v5234, 0.0
        %v5245 = vadd.f32 %v5235, 0.0
        %v5246 = vadd.f32 %v5236, 0.0
        %v5247 = vadd.f32 %v5237, 0.0
        %v5248 = vadd.f32 %v5238, 0.0
        %v5249 = vadd.f32 %v5239, 0.0
        %v5250 = vadd.f32 %v5240, 0.0
        %s5251 = scalar_lea.vmem [#allocation15], 1
        %v5252 = vld [vmem:[%s5251] ss:$8 sm:$0xf]
        %v5254 = vperm.slane %v5252, 0
        %v5255 = vperm.slane %v5252, 1
        %v5256 = vperm.slane %v5252, 2
        %v5257 = vperm.slane %v5252, 3
        %v5262 = vmul.f32 %v5200, %v5254
        %v5263 = vmul.f32 %v5201, %v5255
        %v5264 = vmul.f32 %v5202, %v5256
        %v5265 = vmul.f32 %v5203, %v5257
        %v5266 = vmul.f32 %v5205, %v5254
        %v5267 = vmul.f32 %v5206, %v5255
        %v5268 = vmul.f32 %v5207, %v5256
        %v5269 = vmul.f32 %v5208, %v5257
        %5278 = vrot.lane.b32.xlu0 %v5262, 96
        %v5279 = vpop.permute.xlu0 %5278
        %5280 = vrot.lane.b32.xlu0 %v5263, 96
        %v5281 = vpop.permute.xlu0 %5280
        %5282 = vrot.lane.b32.xlu0 %v5264, 96
        %v5283 = vpop.permute.xlu0 %5282
        %5284 = vrot.lane.b32.xlu0 %v5265, 96
        %v5285 = vpop.permute.xlu0 %5284
        %5286 = vrot.lane.b32.xlu0 %v5266, 96
        %v5287 = vpop.permute.xlu0 %5286
        %5288 = vrot.lane.b32.xlu0 %v5267, 96
        %v5289 = vpop.permute.xlu0 %5288
        %5290 = vrot.lane.b32.xlu0 %v5268, 96
        %v5291 = vpop.permute.xlu0 %5290
        %5292 = vrot.lane.b32.xlu0 %v5269, 96
        %v5293 = vpop.permute.xlu0 %5292
        %v5294 = vsel %vm917, %v5279, %v5281
        %v5295 = vsel %vm917, %v5281, %v5283
        %v5296 = vsel %vm917, %v5283, %v5285
        %v5297 = vsel %vm917, %v5287, %v5289
        %v5298 = vsel %vm917, %v5289, %v5291
        %v5299 = vsel %vm917, %v5291, %v5293
        %v5310 = vadd.f32 %v5241, %v5279
        %v5311 = vadd.f32 %v5242, %v5294
        %v5312 = vadd.f32 %v5243, %v5295
        %v5313 = vadd.f32 %v5244, %v5296
        %v5314 = vadd.f32 %v5245, %v5285
        %v5315 = vadd.f32 %v5246, %v5287
        %v5316 = vadd.f32 %v5247, %v5297
        %v5317 = vadd.f32 %v5248, %v5298
        %v5318 = vadd.f32 %v5249, %v5299
        %v5319 = vadd.f32 %v5250, %v5293
        %v5320 = vld [vmem:[#allocation2 + $0x80] sm:$0xff]
        %v5321 = vld [vmem:[#allocation2 + $0xd0] sm:$0xff]
        %s5322 = scalar_lea.vmem [#allocation15], 2
        %v5323 = vld [vmem:[%s5322] ss:$8 sm:$0xf]
        %v5325 = vperm.slane %v5323, 0
        %v5326 = vperm.slane %v5323, 1
        %v5327 = vperm.slane %v5323, 2
        %v5328 = vperm.slane %v5323, 3
        %5329 = vrot.lane.b32.xlu0 %v5325, 32
        %v5330 = vpop.permute.xlu0 %5329
        %5331 = vrot.lane.b32.xlu0 %v5326, 32
        %v5332 = vpop.permute.xlu0 %5331
        %5333 = vrot.lane.b32.xlu0 %v5327, 32
        %v5334 = vpop.permute.xlu0 %5333
        %5335 = vrot.lane.b32.xlu0 %v5328, 32
        %v5336 = vpop.permute.xlu0 %5335
        %v5337 = vsel %vm1144, %v5330, %v5332
        %v5338 = vsel %vm1144, %v5332, %v5334
        %v5339 = vsel %vm1144, %v5334, %v5336
        %v5345 = vmul.f32 %v5200, %v5330
        %v5346 = vmul.f32 %v5201, %v5337
        %v5347 = vmul.f32 %v5202, %v5338
        %v5348 = vmul.f32 %v5203, %v5339
        %v5349 = vmul.f32 %v5320, %v5336
        %v5350 = vmul.f32 %v5205, %v5330
        %v5351 = vmul.f32 %v5206, %v5337
        %v5352 = vmul.f32 %v5207, %v5338
        %v5353 = vmul.f32 %v5208, %v5339
        %v5354 = vmul.f32 %v5321, %v5336
        %5365 = vrot.lane.b32.xlu0 %v5345, 64
        %v5366 = vpop.permute.xlu0 %5365
        %5367 = vrot.lane.b32.xlu0 %v5346, 64
        %v5368 = vpop.permute.xlu0 %5367
        %5369 = vrot.lane.b32.xlu0 %v5347, 64
        %v5370 = vpop.permute.xlu0 %5369
        %5371 = vrot.lane.b32.xlu0 %v5348, 64
        %v5372 = vpop.permute.xlu0 %5371
        %5373 = vrot.lane.b32.xlu0 %v5349, 64
        %v5374 = vpop.permute.xlu0 %5373
        %5375 = vrot.lane.b32.xlu0 %v5350, 64
        %v5376 = vpop.permute.xlu0 %5375
        %5377 = vrot.lane.b32.xlu0 %v5351, 64
        %v5378 = vpop.permute.xlu0 %5377
        %5379 = vrot.lane.b32.xlu0 %v5352, 64
        %v5380 = vpop.permute.xlu0 %5379
        %5381 = vrot.lane.b32.xlu0 %v5353, 64
        %v5382 = vpop.permute.xlu0 %5381
        %5383 = vrot.lane.b32.xlu0 %v5354, 64
        %v5384 = vpop.permute.xlu0 %5383
        %v5385 = vsel %vm863, %v5366, %v5368
        %v5386 = vsel %vm863, %v5368, %v5370
        %v5387 = vsel %vm863, %v5370, %v5372
        %v5388 = vsel %vm863, %v5372, %v5374
        %v5389 = vsel %vm863, %v5376, %v5378
        %v5390 = vsel %vm863, %v5378, %v5380
        %v5391 = vsel %vm863, %v5380, %v5382
        %v5392 = vsel %vm863, %v5382, %v5384
        %v5403 = vadd.f32 %v5310, %v5366
        %v5404 = vadd.f32 %v5311, %v5385
        %v5405 = vadd.f32 %v5312, %v5386
        %v5406 = vadd.f32 %v5313, %v5387
        %v5407 = vadd.f32 %v5314, %v5388
        %v5408 = vadd.f32 %v5315, %v5376
        %v5409 = vadd.f32 %v5316, %v5389
        %v5410 = vadd.f32 %v5317, %v5390
        %v5411 = vadd.f32 %v5318, %v5391
        %v5412 = vadd.f32 %v5319, %v5392
        %s5413 = scalar_lea.vmem [#allocation15], 3
        %v5414 = vld [vmem:[%s5413] ss:$8 sm:$0xf]
        %v5416 = vperm.slane %v5414, 0
        %v5417 = vperm.slane %v5414, 1
        %v5418 = vperm.slane %v5414, 2
        %v5419 = vperm.slane %v5414, 3
        %5420 = vrot.lane.b32.xlu0 %v5416, 64
        %v5421 = vpop.permute.xlu0 %5420
        %5422 = vrot.lane.b32.xlu0 %v5417, 64
        %v5423 = vpop.permute.xlu0 %5422
        %5424 = vrot.lane.b32.xlu0 %v5418, 64
        %v5425 = vpop.permute.xlu0 %5424
        %5426 = vrot.lane.b32.xlu0 %v5419, 64
        %v5427 = vpop.permute.xlu0 %5426
        %v5428 = vsel %vm863, %v5421, %v5423
        %v5429 = vsel %vm863, %v5423, %v5425
        %v5430 = vsel %vm863, %v5425, %v5427
        %v5436 = vmul.f32 %v5200, %v5421
        %v5437 = vmul.f32 %v5201, %v5428
        %v5438 = vmul.f32 %v5202, %v5429
        %v5439 = vmul.f32 %v5203, %v5430
        %v5440 = vmul.f32 %v5320, %v5427
        %v5441 = vmul.f32 %v5205, %v5421
        %v5442 = vmul.f32 %v5206, %v5428
        %v5443 = vmul.f32 %v5207, %v5429
        %v5444 = vmul.f32 %v5208, %v5430
        %v5445 = vmul.f32 %v5321, %v5427
        %5456 = vrot.lane.b32.xlu0 %v5436, 32
        %v5457 = vpop.permute.xlu0 %5456
        %5458 = vrot.lane.b32.xlu0 %v5437, 32
        %v5459 = vpop.permute.xlu0 %5458
        %5460 = vrot.lane.b32.xlu0 %v5438, 32
        %v5461 = vpop.permute.xlu0 %5460
        %5462 = vrot.lane.b32.xlu0 %v5439, 32
        %v5463 = vpop.permute.xlu0 %5462
        %5464 = vrot.lane.b32.xlu0 %v5440, 32
        %v5465 = vpop.permute.xlu0 %5464
        %5466 = vrot.lane.b32.xlu0 %v5441, 32
        %v5467 = vpop.permute.xlu0 %5466
        %5468 = vrot.lane.b32.xlu0 %v5442, 32
        %v5469 = vpop.permute.xlu0 %5468
        %5470 = vrot.lane.b32.xlu0 %v5443, 32
        %v5471 = vpop.permute.xlu0 %5470
        %5472 = vrot.lane.b32.xlu0 %v5444, 32
        %v5473 = vpop.permute.xlu0 %5472
        %5474 = vrot.lane.b32.xlu0 %v5445, 32
        %v5475 = vpop.permute.xlu0 %5474
        %v5476 = vsel %vm1144, %v5457, %v5459
        %v5477 = vsel %vm1144, %v5459, %v5461
        %v5478 = vsel %vm1144, %v5461, %v5463
        %v5479 = vsel %vm1144, %v5463, %v5465
        %v5480 = vsel %vm1144, %v5467, %v5469
        %v5481 = vsel %vm1144, %v5469, %v5471
        %v5482 = vsel %vm1144, %v5471, %v5473
        %v5483 = vsel %vm1144, %v5473, %v5475
        %v5494 = vadd.f32 %v5403, %v5457
        %v5495 = vadd.f32 %v5404, %v5476
        %v5496 = vadd.f32 %v5405, %v5477
        %v5497 = vadd.f32 %v5406, %v5478
        %v5498 = vadd.f32 %v5407, %v5479
        %v5499 = vadd.f32 %v5408, %v5467
        %v5500 = vadd.f32 %v5409, %v5480
        %v5501 = vadd.f32 %v5410, %v5481
        %v5502 = vadd.f32 %v5411, %v5482
        %v5503 = vadd.f32 %v5412, %v5483
        %s5504 = scalar_lea.vmem [#allocation15], 4
        %v5505 = vld [vmem:[%s5504] ss:$8 sm:$0xf]
        %v5507 = vperm.slane %v5505, 0
        %v5508 = vperm.slane %v5505, 1
        %v5509 = vperm.slane %v5505, 2
        %v5510 = vperm.slane %v5505, 3
        %5511 = vrot.lane.b32.xlu0 %v5507, 96
        %v5512 = vpop.permute.xlu0 %5511
        %5513 = vrot.lane.b32.xlu0 %v5508, 96
        %v5514 = vpop.permute.xlu0 %5513
        %5515 = vrot.lane.b32.xlu0 %v5509, 96
        %v5516 = vpop.permute.xlu0 %5515
        %5517 = vrot.lane.b32.xlu0 %v5510, 96
        %v5518 = vpop.permute.xlu0 %5517
        %v5519 = vsel %vm917, %v5512, %v5514
        %v5520 = vsel %vm917, %v5514, %v5516
        %v5521 = vsel %vm917, %v5516, %v5518
        %v5527 = vmul.f32 %v5200, %v5512
        %v5528 = vmul.f32 %v5201, %v5519
        %v5529 = vmul.f32 %v5202, %v5520
        %v5530 = vmul.f32 %v5203, %v5521
        %v5531 = vmul.f32 %v5320, %v5518
        %v5532 = vmul.f32 %v5205, %v5512
        %v5533 = vmul.f32 %v5206, %v5519
        %v5534 = vmul.f32 %v5207, %v5520
        %v5535 = vmul.f32 %v5208, %v5521
        %v5536 = vmul.f32 %v5321, %v5518
        %v5537 = vadd.f32 %v5494, %v5527
        %v5538 = vadd.f32 %v5495, %v5528
        %v5539 = vadd.f32 %v5496, %v5529
        %v5540 = vadd.f32 %v5497, %v5530
        %v5541 = vadd.f32 %v5498, %v5531
        %v5542 = vadd.f32 %v5499, %v5532
        %v5543 = vadd.f32 %v5500, %v5533
        %v5544 = vadd.f32 %v5501, %v5534
        %v5545 = vadd.f32 %v5502, %v5535
        %v5546 = vadd.f32 %v5503, %v5536
        %s5547 = scalar_lea.vmem [#allocation15], 5
        %v5548 = vld [vmem:[%s5547] ss:$8 sm:$0xf]
        %v5550 = vperm.slane %v5548, 0
        %v5551 = vperm.slane %v5548, 1
        %v5552 = vperm.slane %v5548, 2
        %v5553 = vperm.slane %v5548, 3
        %v5558 = vmul.f32 %v5201, %v5550
        %v5559 = vmul.f32 %v5202, %v5551
        %v5560 = vmul.f32 %v5203, %v5552
        %v5561 = vmul.f32 %v5320, %v5553
        %v5562 = vmul.f32 %v5206, %v5550
        %v5563 = vmul.f32 %v5207, %v5551
        %v5564 = vmul.f32 %v5208, %v5552
        %v5565 = vmul.f32 %v5321, %v5553
        %5574 = vrot.lane.b32.xlu0 %v5558, 96
        %v5575 = vpop.permute.xlu0 %5574
        %5576 = vrot.lane.b32.xlu0 %v5559, 96
        %v5577 = vpop.permute.xlu0 %5576
        %5578 = vrot.lane.b32.xlu0 %v5560, 96
        %v5579 = vpop.permute.xlu0 %5578
        %5580 = vrot.lane.b32.xlu0 %v5561, 96
        %v5581 = vpop.permute.xlu0 %5580
        %5582 = vrot.lane.b32.xlu0 %v5562, 96
        %v5583 = vpop.permute.xlu0 %5582
        %5584 = vrot.lane.b32.xlu0 %v5563, 96
        %v5585 = vpop.permute.xlu0 %5584
        %5586 = vrot.lane.b32.xlu0 %v5564, 96
        %v5587 = vpop.permute.xlu0 %5586
        %5588 = vrot.lane.b32.xlu0 %v5565, 96
        %v5589 = vpop.permute.xlu0 %5588
        %v5590 = vsel %vm917, %v5575, %v5577
        %v5591 = vsel %vm917, %v5577, %v5579
        %v5592 = vsel %vm917, %v5579, %v5581
        %v5593 = vsel %vm917, %v5583, %v5585
        %v5594 = vsel %vm917, %v5585, %v5587
        %v5595 = vsel %vm917, %v5587, %v5589
        %v5606 = vadd.f32 %v5537, %v5575
        %v5607 = vadd.f32 %v5538, %v5590
        %v5608 = vadd.f32 %v5539, %v5591
        %v5609 = vadd.f32 %v5540, %v5592
        %v5610 = vadd.f32 %v5541, %v5581
        %v5611 = vadd.f32 %v5542, %v5583
        %v5612 = vadd.f32 %v5543, %v5593
        %v5613 = vadd.f32 %v5544, %v5594
        %v5614 = vadd.f32 %v5545, %v5595
        %v5615 = vadd.f32 %v5546, %v5589
        %v5616 = vld [vmem:[#allocation2 + $0x88] sm:$0xff]
        %v5617 = vld [vmem:[#allocation2 + $0xd8] sm:$0xff]
        %s5618 = scalar_lea.vmem [#allocation15], 6
        %v5619 = vld [vmem:[%s5618] ss:$8 sm:$0xf]
        %v5621 = vperm.slane %v5619, 0
        %v5622 = vperm.slane %v5619, 1
        %v5623 = vperm.slane %v5619, 2
        %v5624 = vperm.slane %v5619, 3
        %5625 = vrot.lane.b32.xlu0 %v5621, 32
        %v5626 = vpop.permute.xlu0 %5625
        %5627 = vrot.lane.b32.xlu0 %v5622, 32
        %v5628 = vpop.permute.xlu0 %5627
        %5629 = vrot.lane.b32.xlu0 %v5623, 32
        %v5630 = vpop.permute.xlu0 %5629
        %5631 = vrot.lane.b32.xlu0 %v5624, 32
        %v5632 = vpop.permute.xlu0 %5631
        %v5633 = vsel %vm1144, %v5626, %v5628
        %v5634 = vsel %vm1144, %v5628, %v5630
        %v5635 = vsel %vm1144, %v5630, %v5632
        %v5641 = vmul.f32 %v5201, %v5626
        %v5642 = vmul.f32 %v5202, %v5633
        %v5643 = vmul.f32 %v5203, %v5634
        %v5644 = vmul.f32 %v5320, %v5635
        %v5645 = vmul.f32 %v5616, %v5632
        %v5646 = vmul.f32 %v5206, %v5626
        %v5647 = vmul.f32 %v5207, %v5633
        %v5648 = vmul.f32 %v5208, %v5634
        %v5649 = vmul.f32 %v5321, %v5635
        %v5650 = vmul.f32 %v5617, %v5632
        %5661 = vrot.lane.b32.xlu0 %v5641, 64
        %v5662 = vpop.permute.xlu0 %5661
        %5663 = vrot.lane.b32.xlu0 %v5642, 64
        %v5664 = vpop.permute.xlu0 %5663
        %5665 = vrot.lane.b32.xlu0 %v5643, 64
        %v5666 = vpop.permute.xlu0 %5665
        %5667 = vrot.lane.b32.xlu0 %v5644, 64
        %v5668 = vpop.permute.xlu0 %5667
        %5669 = vrot.lane.b32.xlu0 %v5645, 64
        %v5670 = vpop.permute.xlu0 %5669
        %5671 = vrot.lane.b32.xlu0 %v5646, 64
        %v5672 = vpop.permute.xlu0 %5671
        %5673 = vrot.lane.b32.xlu0 %v5647, 64
        %v5674 = vpop.permute.xlu0 %5673
        %5675 = vrot.lane.b32.xlu0 %v5648, 64
        %v5676 = vpop.permute.xlu0 %5675
        %5677 = vrot.lane.b32.xlu0 %v5649, 64
        %v5678 = vpop.permute.xlu0 %5677
        %5679 = vrot.lane.b32.xlu0 %v5650, 64
        %v5680 = vpop.permute.xlu0 %5679
        %v5681 = vsel %vm863, %v5662, %v5664
        %v5682 = vsel %vm863, %v5664, %v5666
        %v5683 = vsel %vm863, %v5666, %v5668
        %v5684 = vsel %vm863, %v5668, %v5670
        %v5685 = vsel %vm863, %v5672, %v5674
        %v5686 = vsel %vm863, %v5674, %v5676
        %v5687 = vsel %vm863, %v5676, %v5678
        %v5688 = vsel %vm863, %v5678, %v5680
        %v5699 = vadd.f32 %v5606, %v5662
        %v5700 = vadd.f32 %v5607, %v5681
        %v5701 = vadd.f32 %v5608, %v5682
        %v5702 = vadd.f32 %v5609, %v5683
        %v5703 = vadd.f32 %v5610, %v5684
        %v5704 = vadd.f32 %v5611, %v5672
        %v5705 = vadd.f32 %v5612, %v5685
        %v5706 = vadd.f32 %v5613, %v5686
        %v5707 = vadd.f32 %v5614, %v5687
        %v5708 = vadd.f32 %v5615, %v5688
        %s5709 = scalar_lea.vmem [#allocation15], 7
        %v5710 = vld [vmem:[%s5709] ss:$8 sm:$0xf]
        %v5712 = vperm.slane %v5710, 0
        %v5713 = vperm.slane %v5710, 1
        %v5714 = vperm.slane %v5710, 2
        %v5715 = vperm.slane %v5710, 3
        %5716 = vrot.lane.b32.xlu0 %v5712, 64
        %v5717 = vpop.permute.xlu0 %5716
        %5718 = vrot.lane.b32.xlu0 %v5713, 64
        %v5719 = vpop.permute.xlu0 %5718
        %5720 = vrot.lane.b32.xlu0 %v5714, 64
        %v5721 = vpop.permute.xlu0 %5720
        %5722 = vrot.lane.b32.xlu0 %v5715, 64
        %v5723 = vpop.permute.xlu0 %5722
        %v5724 = vsel %vm863, %v5717, %v5719
        %v5725 = vsel %vm863, %v5719, %v5721
        %v5726 = vsel %vm863, %v5721, %v5723
        %v5732 = vmul.f32 %v5201, %v5717
        %v5733 = vmul.f32 %v5202, %v5724
        %v5734 = vmul.f32 %v5203, %v5725
        %v5735 = vmul.f32 %v5320, %v5726
        %v5736 = vmul.f32 %v5616, %v5723
        %v5737 = vmul.f32 %v5206, %v5717
        %v5738 = vmul.f32 %v5207, %v5724
        %v5739 = vmul.f32 %v5208, %v5725
        %v5740 = vmul.f32 %v5321, %v5726
        %v5741 = vmul.f32 %v5617, %v5723
        %5752 = vrot.lane.b32.xlu0 %v5732, 32
        %v5753 = vpop.permute.xlu0 %5752
        %5754 = vrot.lane.b32.xlu0 %v5733, 32
        %v5755 = vpop.permute.xlu0 %5754
        %5756 = vrot.lane.b32.xlu0 %v5734, 32
        %v5757 = vpop.permute.xlu0 %5756
        %5758 = vrot.lane.b32.xlu0 %v5735, 32
        %v5759 = vpop.permute.xlu0 %5758
        %5760 = vrot.lane.b32.xlu0 %v5736, 32
        %v5761 = vpop.permute.xlu0 %5760
        %5762 = vrot.lane.b32.xlu0 %v5737, 32
        %v5763 = vpop.permute.xlu0 %5762
        %5764 = vrot.lane.b32.xlu0 %v5738, 32
        %v5765 = vpop.permute.xlu0 %5764
        %5766 = vrot.lane.b32.xlu0 %v5739, 32
        %v5767 = vpop.permute.xlu0 %5766
        %5768 = vrot.lane.b32.xlu0 %v5740, 32
        %v5769 = vpop.permute.xlu0 %5768
        %5770 = vrot.lane.b32.xlu0 %v5741, 32
        %v5771 = vpop.permute.xlu0 %5770
        %v5772 = vsel %vm1144, %v5753, %v5755
        %v5773 = vsel %vm1144, %v5755, %v5757
        %v5774 = vsel %vm1144, %v5757, %v5759
        %v5775 = vsel %vm1144, %v5759, %v5761
        %v5776 = vsel %vm1144, %v5763, %v5765
        %v5777 = vsel %vm1144, %v5765, %v5767
        %v5778 = vsel %vm1144, %v5767, %v5769
        %v5779 = vsel %vm1144, %v5769, %v5771
        %v5790 = vadd.f32 %v5699, %v5753
        %v5791 = vadd.f32 %v5700, %v5772
        %v5792 = vadd.f32 %v5701, %v5773
        %v5793 = vadd.f32 %v5702, %v5774
        %v5794 = vadd.f32 %v5703, %v5775
        %v5795 = vadd.f32 %v5704, %v5763
        %v5796 = vadd.f32 %v5705, %v5776
        %v5797 = vadd.f32 %v5706, %v5777
        %v5798 = vadd.f32 %v5707, %v5778
        %v5799 = vadd.f32 %v5708, %v5779
        %s5800 = scalar_lea.vmem [#allocation15], 32
        %v5801 = vld [vmem:[%s5800] ss:$8 sm:$0xf]
        %v5803 = vperm.slane %v5801, 0
        %v5804 = vperm.slane %v5801, 1
        %v5805 = vperm.slane %v5801, 2
        %v5806 = vperm.slane %v5801, 3
        %5807 = vrot.lane.b32.xlu0 %v5803, 96
        %v5808 = vpop.permute.xlu0 %5807
        %5809 = vrot.lane.b32.xlu0 %v5804, 96
        %v5810 = vpop.permute.xlu0 %5809
        %5811 = vrot.lane.b32.xlu0 %v5805, 96
        %v5812 = vpop.permute.xlu0 %5811
        %5813 = vrot.lane.b32.xlu0 %v5806, 96
        %v5814 = vpop.permute.xlu0 %5813
        %v5815 = vsel %vm917, %v5808, %v5810
        %v5816 = vsel %vm917, %v5810, %v5812
        %v5817 = vsel %vm917, %v5812, %v5814
        %v5823 = vmul.f32 %v5201, %v5808
        %v5824 = vmul.f32 %v5202, %v5815
        %v5825 = vmul.f32 %v5203, %v5816
        %v5826 = vmul.f32 %v5320, %v5817
        %v5827 = vmul.f32 %v5616, %v5814
        %v5828 = vmul.f32 %v5206, %v5808
        %v5829 = vmul.f32 %v5207, %v5815
        %v5830 = vmul.f32 %v5208, %v5816
        %v5831 = vmul.f32 %v5321, %v5817
        %v5832 = vmul.f32 %v5617, %v5814
        %v5833 = vadd.f32 %v5790, %v5823
        %v5834 = vadd.f32 %v5791, %v5824
        %v5835 = vadd.f32 %v5792, %v5825
        %v5836 = vadd.f32 %v5793, %v5826
        %v5837 = vadd.f32 %v5794, %v5827
        %v5838 = vadd.f32 %v5795, %v5828
        %v5839 = vadd.f32 %v5796, %v5829
        %v5840 = vadd.f32 %v5797, %v5830
        %v5841 = vadd.f32 %v5798, %v5831
        %v5842 = vadd.f32 %v5799, %v5832
        %s5843 = scalar_lea.vmem [#allocation15], 33
        %v5844 = vld [vmem:[%s5843] ss:$8 sm:$0xf]
        %v5846 = vperm.slane %v5844, 0
        %v5847 = vperm.slane %v5844, 1
        %v5848 = vperm.slane %v5844, 2
        %v5849 = vperm.slane %v5844, 3
        %v5854 = vmul.f32 %v5202, %v5846
        %v5855 = vmul.f32 %v5203, %v5847
        %v5856 = vmul.f32 %v5320, %v5848
        %v5857 = vmul.f32 %v5616, %v5849
        %v5858 = vmul.f32 %v5207, %v5846
        %v5859 = vmul.f32 %v5208, %v5847
        %v5860 = vmul.f32 %v5321, %v5848
        %v5861 = vmul.f32 %v5617, %v5849
        %5870 = vrot.lane.b32.xlu0 %v5854, 96
        %v5871 = vpop.permute.xlu0 %5870
        %5872 = vrot.lane.b32.xlu0 %v5855, 96
        %v5873 = vpop.permute.xlu0 %5872
        %5874 = vrot.lane.b32.xlu0 %v5856, 96
        %v5875 = vpop.permute.xlu0 %5874
        %5876 = vrot.lane.b32.xlu0 %v5857, 96
        %v5877 = vpop.permute.xlu0 %5876
        %5878 = vrot.lane.b32.xlu0 %v5858, 96
        %v5879 = vpop.permute.xlu0 %5878
        %5880 = vrot.lane.b32.xlu0 %v5859, 96
        %v5881 = vpop.permute.xlu0 %5880
        %5882 = vrot.lane.b32.xlu0 %v5860, 96
        %v5883 = vpop.permute.xlu0 %5882
        %5884 = vrot.lane.b32.xlu0 %v5861, 96
        %v5885 = vpop.permute.xlu0 %5884
        %v5886 = vsel %vm917, %v5871, %v5873
        %v5887 = vsel %vm917, %v5873, %v5875
        %v5888 = vsel %vm917, %v5875, %v5877
        %v5889 = vsel %vm917, %v5879, %v5881
        %v5890 = vsel %vm917, %v5881, %v5883
        %v5891 = vsel %vm917, %v5883, %v5885
        %v5902 = vadd.f32 %v5833, %v5871
        %v5903 = vadd.f32 %v5834, %v5886
        %v5904 = vadd.f32 %v5835, %v5887
        %v5905 = vadd.f32 %v5836, %v5888
        %v5906 = vadd.f32 %v5837, %v5877
        %v5907 = vadd.f32 %v5838, %v5879
        %v5908 = vadd.f32 %v5839, %v5889
        %v5909 = vadd.f32 %v5840, %v5890
        %v5910 = vadd.f32 %v5841, %v5891
        %v5911 = vadd.f32 %v5842, %v5885
        %v5912 = vld [vmem:[#allocation2 + $0x90] sm:$0xff]
        %v5913 = vld [vmem:[#allocation2 + $0xe0] sm:$0xff]
        %s5914 = scalar_lea.vmem [#allocation15], 34
        %v5915 = vld [vmem:[%s5914] ss:$8 sm:$0xf]
        %v5917 = vperm.slane %v5915, 0
        %v5918 = vperm.slane %v5915, 1
        %v5919 = vperm.slane %v5915, 2
        %v5920 = vperm.slane %v5915, 3
        %5921 = vrot.lane.b32.xlu0 %v5917, 32
        %v5922 = vpop.permute.xlu0 %5921
        %5923 = vrot.lane.b32.xlu0 %v5918, 32
        %v5924 = vpop.permute.xlu0 %5923
        %5925 = vrot.lane.b32.xlu0 %v5919, 32
        %v5926 = vpop.permute.xlu0 %5925
        %5927 = vrot.lane.b32.xlu0 %v5920, 32
        %v5928 = vpop.permute.xlu0 %5927
        %v5929 = vsel %vm1144, %v5922, %v5924
        %v5930 = vsel %vm1144, %v5924, %v5926
        %v5931 = vsel %vm1144, %v5926, %v5928
        %v5937 = vmul.f32 %v5202, %v5922
        %v5938 = vmul.f32 %v5203, %v5929
        %v5939 = vmul.f32 %v5320, %v5930
        %v5940 = vmul.f32 %v5616, %v5931
        %v5941 = vmul.f32 %v5912, %v5928
        %v5942 = vmul.f32 %v5207, %v5922
        %v5943 = vmul.f32 %v5208, %v5929
        %v5944 = vmul.f32 %v5321, %v5930
        %v5945 = vmul.f32 %v5617, %v5931
        %v5946 = vmul.f32 %v5913, %v5928
        %5957 = vrot.lane.b32.xlu0 %v5937, 64
        %v5958 = vpop.permute.xlu0 %5957
        %5959 = vrot.lane.b32.xlu0 %v5938, 64
        %v5960 = vpop.permute.xlu0 %5959
        %5961 = vrot.lane.b32.xlu0 %v5939, 64
        %v5962 = vpop.permute.xlu0 %5961
        %5963 = vrot.lane.b32.xlu0 %v5940, 64
        %v5964 = vpop.permute.xlu0 %5963
        %5965 = vrot.lane.b32.xlu0 %v5941, 64
        %v5966 = vpop.permute.xlu0 %5965
        %5967 = vrot.lane.b32.xlu0 %v5942, 64
        %v5968 = vpop.permute.xlu0 %5967
        %5969 = vrot.lane.b32.xlu0 %v5943, 64
        %v5970 = vpop.permute.xlu0 %5969
        %5971 = vrot.lane.b32.xlu0 %v5944, 64
        %v5972 = vpop.permute.xlu0 %5971
        %5973 = vrot.lane.b32.xlu0 %v5945, 64
        %v5974 = vpop.permute.xlu0 %5973
        %5975 = vrot.lane.b32.xlu0 %v5946, 64
        %v5976 = vpop.permute.xlu0 %5975
        %v5977 = vsel %vm863, %v5958, %v5960
        %v5978 = vsel %vm863, %v5960, %v5962
        %v5979 = vsel %vm863, %v5962, %v5964
        %v5980 = vsel %vm863, %v5964, %v5966
        %v5981 = vsel %vm863, %v5968, %v5970
        %v5982 = vsel %vm863, %v5970, %v5972
        %v5983 = vsel %vm863, %v5972, %v5974
        %v5984 = vsel %vm863, %v5974, %v5976
        %v5995 = vadd.f32 %v5902, %v5958
        %v5996 = vadd.f32 %v5903, %v5977
        %v5997 = vadd.f32 %v5904, %v5978
        %v5998 = vadd.f32 %v5905, %v5979
        %v5999 = vadd.f32 %v5906, %v5980
        %v6000 = vadd.f32 %v5907, %v5968
        %v6001 = vadd.f32 %v5908, %v5981
        %v6002 = vadd.f32 %v5909, %v5982
        %v6003 = vadd.f32 %v5910, %v5983
        %v6004 = vadd.f32 %v5911, %v5984
        %v6005 = vld [vmem:[#allocation16] sm:$0xf]
        %v6007 = vperm.slane %v6005, 0
        %v6008 = vperm.slane %v6005, 1
        %v6009 = vperm.slane %v6005, 2
        %v6010 = vperm.slane %v6005, 3
        %6011 = vrot.lane.b32.xlu0 %v6007, 96
        %v6012 = vpop.permute.xlu0 %6011
        %6013 = vrot.lane.b32.xlu0 %v6008, 96
        %v6014 = vpop.permute.xlu0 %6013
        %6015 = vrot.lane.b32.xlu0 %v6009, 96
        %v6016 = vpop.permute.xlu0 %6015
        %6017 = vrot.lane.b32.xlu0 %v6010, 96
        %v6018 = vpop.permute.xlu0 %6017
        %v6019 = vsel %vm917, %v6012, %v6014
        %v6020 = vsel %vm917, %v6014, %v6016
        %v6021 = vsel %vm917, %v6016, %v6018
        %v6027 = vadd.f32 %v5995, %v6012
        %v6028 = vadd.f32 %v5996, %v6019
        %v6029 = vadd.f32 %v5997, %v6020
        %v6030 = vadd.f32 %v5998, %v6021
        %v6031 = vadd.f32 %v5999, %v6018
        %v6032 = vadd.f32 %v6000, %v6012
        %v6033 = vadd.f32 %v6001, %v6019
        %v6034 = vadd.f32 %v6002, %v6020
        %v6035 = vadd.f32 %v6003, %v6021
        %v6036 = vadd.f32 %v6004, %v6018
        %6047 = vrot.lane.b32.xlu0 %v6027, 32
        %v6048 = vpop.permute.xlu0 %6047
        %6049 = vrot.lane.b32.xlu0 %v6028, 32
        %v6050 = vpop.permute.xlu0 %6049
        %6051 = vrot.lane.b32.xlu0 %v6029, 32
        %v6052 = vpop.permute.xlu0 %6051
        %6053 = vrot.lane.b32.xlu0 %v6030, 32
        %v6054 = vpop.permute.xlu0 %6053
        %6055 = vrot.lane.b32.xlu0 %v6031, 32
        %v6056 = vpop.permute.xlu0 %6055
        %6057 = vrot.lane.b32.xlu0 %v6032, 32
        %v6058 = vpop.permute.xlu0 %6057
        %6059 = vrot.lane.b32.xlu0 %v6033, 32
        %v6060 = vpop.permute.xlu0 %6059
        %6061 = vrot.lane.b32.xlu0 %v6034, 32
        %v6062 = vpop.permute.xlu0 %6061
        %6063 = vrot.lane.b32.xlu0 %v6035, 32
        %v6064 = vpop.permute.xlu0 %6063
        %6065 = vrot.lane.b32.xlu0 %v6036, 32
        %v6066 = vpop.permute.xlu0 %6065
        %v6067 = vsel %vm1144, %v6048, %v6050
        %v6068 = vsel %vm1144, %v6050, %v6052
        %v6069 = vsel %vm1144, %v6052, %v6054
        %v6070 = vsel %vm1144, %v6054, %v6056
        %v6071 = vsel %vm1144, %v6058, %v6060
        %v6072 = vsel %vm1144, %v6060, %v6062
        %v6073 = vsel %vm1144, %v6062, %v6064
        %v6074 = vsel %vm1144, %v6064, %v6066
        %6083 = vst [vmem:[#allocation3 + $0x40] sm:$0xff] %v6067
        %6084 = vst [vmem:[#allocation3 + $0x48] sm:$0xff] %v6068
        %6085 = vst [vmem:[#allocation3 + $0x50] sm:$0xff] %v6069
        %6086 = vst [vmem:[#allocation3 + $0x58] sm:$0xff] %v6070
        %6087 = vst [vmem:[#allocation3 + $0x60] sm:$0xff] %v6071
        %6088 = vst [vmem:[#allocation3 + $0x68] sm:$0xff] %v6072
        %6089 = vst [vmem:[#allocation3 + $0x70] sm:$0xff] %v6073
        %6090 = vst [vmem:[#allocation3 + $0x78] sm:$0xff] %v6074
        %v6091 = vld [vmem:[#allocation3 + $0x20] sm:$0xf8]
        %v6092 = vld [vmem:[#allocation3 + $0x28] sm:$0xf8]
        %v6093 = vld [vmem:[#allocation3 + $0x30] sm:$0xf8]
        %v6094 = vld [vmem:[#allocation3 + $0x38] sm:$0xf8]
        %v6095 = vld [vmem:[#allocation3 + $0x40] sm:$0xff]
        %v6096 = vld [vmem:[#allocation3 + $0x48] sm:$0xff]
        %v6097 = vld [vmem:[#allocation3 + $0x50] sm:$0xff]
        %v6098 = vld [vmem:[#allocation3 + $0x58] sm:$0xff]
        %v6099 = vld [vmem:[#allocation3 + $0x60] sm:$0x7]
        %v6100 = vld [vmem:[#allocation3 + $0x68] sm:$0x7]
        %v6101 = vld [vmem:[#allocation3 + $0x70] sm:$0x7]
        %v6102 = vld [vmem:[#allocation3 + $0x78] sm:$0x7]
        %v6103 = vld [vmem:[#allocation18] ss:$8 sm:$0xf]
        %v6105 = vperm.slane %v6103, 0
        %v6106 = vperm.slane %v6103, 1
        %v6107 = vperm.slane %v6103, 2
        %v6108 = vperm.slane %v6103, 3
        %v6113 = vmul.f32 %v6091, %v6105
        %v6114 = vmul.f32 %v6092, %v6106
        %v6115 = vmul.f32 %v6093, %v6107
        %v6116 = vmul.f32 %v6094, %v6108
        %v6117 = vmul.f32 %v6095, %v6105
        %v6118 = vmul.f32 %v6096, %v6106
        %v6119 = vmul.f32 %v6097, %v6107
        %v6120 = vmul.f32 %v6098, %v6108
        %v6121 = vmul.f32 %v6099, %v6105
        %v6122 = vmul.f32 %v6100, %v6106
        %v6123 = vmul.f32 %v6101, %v6107
        %v6124 = vmul.f32 %v6102, %v6108
        %v6125 = vadd.f32 %v6113, 0.0
        %v6126 = vadd.f32 %v6114, 0.0
        %v6127 = vadd.f32 %v6115, 0.0
        %v6128 = vadd.f32 %v6116, 0.0
        %v6129 = vadd.f32 %v6117, 0.0
        %v6130 = vadd.f32 %v6118, 0.0
        %v6131 = vadd.f32 %v6119, 0.0
        %v6132 = vadd.f32 %v6120, 0.0
        %v6133 = vadd.f32 %v6121, 0.0
        %v6134 = vadd.f32 %v6122, 0.0
        %v6135 = vadd.f32 %v6123, 0.0
        %v6136 = vadd.f32 %v6124, 0.0
        %v6137 = vld [vmem:[#allocation3 + $0x20] sm:$0xf0]
        %v6138 = vld [vmem:[#allocation3 + $0x28] sm:$0xf0]
        %v6139 = vld [vmem:[#allocation3 + $0x30] sm:$0xf0]
        %v6140 = vld [vmem:[#allocation3 + $0x38] sm:$0xf0]
        %v6141 = vld [vmem:[#allocation3 + $0x60] sm:$0xf]
        %v6142 = vld [vmem:[#allocation3 + $0x68] sm:$0xf]
        %v6143 = vld [vmem:[#allocation3 + $0x70] sm:$0xf]
        %v6144 = vld [vmem:[#allocation3 + $0x78] sm:$0xf]
        %s6145 = scalar_lea.vmem [#allocation18], 1
        %v6146 = vld [vmem:[%s6145] ss:$8 sm:$0xf]
        %v6148 = vperm.slane %v6146, 0
        %v6149 = vperm.slane %v6146, 1
        %v6150 = vperm.slane %v6146, 2
        %v6151 = vperm.slane %v6146, 3
        %v6156 = vmul.f32 %v6137, %v6148
        %v6157 = vmul.f32 %v6138, %v6149
        %v6158 = vmul.f32 %v6139, %v6150
        %v6159 = vmul.f32 %v6140, %v6151
        %v6160 = vmul.f32 %v6095, %v6148
        %v6161 = vmul.f32 %v6096, %v6149
        %v6162 = vmul.f32 %v6097, %v6150
        %v6163 = vmul.f32 %v6098, %v6151
        %v6164 = vmul.f32 %v6141, %v6148
        %v6165 = vmul.f32 %v6142, %v6149
        %v6166 = vmul.f32 %v6143, %v6150
        %v6167 = vmul.f32 %v6144, %v6151
        %v6180 = vrot.slane %v6156, 1
        %v6181 = vrot.slane %v6160, 1
        %v6182 = vsel %vm1371, %v6180, %v6181
        %v6183 = vrot.slane %v6157, 1
        %v6184 = vrot.slane %v6161, 1
        %v6185 = vsel %vm1371, %v6183, %v6184
        %v6186 = vrot.slane %v6158, 1
        %v6187 = vrot.slane %v6162, 1
        %v6188 = vsel %vm1371, %v6186, %v6187
        %v6189 = vrot.slane %v6159, 1
        %v6190 = vrot.slane %v6163, 1
        %v6191 = vsel %vm1371, %v6189, %v6190
        %v6192 = vrot.slane %v6164, 1
        %v6193 = vsel %vm1371, %v6181, %v6192
        %v6194 = vrot.slane %v6165, 1
        %v6195 = vsel %vm1371, %v6184, %v6194
        %v6196 = vrot.slane %v6166, 1
        %v6197 = vsel %vm1371, %v6187, %v6196
        %v6198 = vrot.slane %v6167, 1
        %v6199 = vsel %vm1371, %v6190, %v6198
        %v6212 = vadd.f32 %v6125, %v6182
        %v6213 = vadd.f32 %v6126, %v6185
        %v6214 = vadd.f32 %v6127, %v6188
        %v6215 = vadd.f32 %v6128, %v6191
        %v6216 = vadd.f32 %v6129, %v6193
        %v6217 = vadd.f32 %v6130, %v6195
        %v6218 = vadd.f32 %v6131, %v6197
        %v6219 = vadd.f32 %v6132, %v6199
        %v6220 = vadd.f32 %v6133, %v6192
        %v6221 = vadd.f32 %v6134, %v6194
        %v6222 = vadd.f32 %v6135, %v6196
        %v6223 = vadd.f32 %v6136, %v6198
        %v6224 = vld [vmem:[#allocation3 + $0x20] sm:$0xe0]
        %v6225 = vld [vmem:[#allocation3 + $0x28] sm:$0xe0]
        %v6226 = vld [vmem:[#allocation3 + $0x30] sm:$0xe0]
        %v6227 = vld [vmem:[#allocation3 + $0x38] sm:$0xe0]
        %v6228 = vld [vmem:[#allocation3 + $0x60] sm:$0x1f]
        %v6229 = vld [vmem:[#allocation3 + $0x68] sm:$0x1f]
        %v6230 = vld [vmem:[#allocation3 + $0x70] sm:$0x1f]
        %v6231 = vld [vmem:[#allocation3 + $0x78] sm:$0x1f]
        %s6232 = scalar_lea.vmem [#allocation18], 2
        %v6233 = vld [vmem:[%s6232] ss:$8 sm:$0xf]
        %v6235 = vperm.slane %v6233, 0
        %v6236 = vperm.slane %v6233, 1
        %v6237 = vperm.slane %v6233, 2
        %v6238 = vperm.slane %v6233, 3
        %v6243 = vmul.f32 %v6224, %v6235
        %v6244 = vmul.f32 %v6225, %v6236
        %v6245 = vmul.f32 %v6226, %v6237
        %v6246 = vmul.f32 %v6227, %v6238
        %v6247 = vmul.f32 %v6095, %v6235
        %v6248 = vmul.f32 %v6096, %v6236
        %v6249 = vmul.f32 %v6097, %v6237
        %v6250 = vmul.f32 %v6098, %v6238
        %v6251 = vmul.f32 %v6228, %v6235
        %v6252 = vmul.f32 %v6229, %v6236
        %v6253 = vmul.f32 %v6230, %v6237
        %v6254 = vmul.f32 %v6231, %v6238
        %v6267 = vrot.slane %v6243, 2
        %v6268 = vrot.slane %v6247, 2
        %v6269 = vsel %vm2003, %v6267, %v6268
        %v6270 = vrot.slane %v6244, 2
        %v6271 = vrot.slane %v6248, 2
        %v6272 = vsel %vm2003, %v6270, %v6271
        %v6273 = vrot.slane %v6245, 2
        %v6274 = vrot.slane %v6249, 2
        %v6275 = vsel %vm2003, %v6273, %v6274
        %v6276 = vrot.slane %v6246, 2
        %v6277 = vrot.slane %v6250, 2
        %v6278 = vsel %vm2003, %v6276, %v6277
        %v6279 = vrot.slane %v6251, 2
        %v6280 = vsel %vm2003, %v6268, %v6279
        %v6281 = vrot.slane %v6252, 2
        %v6282 = vsel %vm2003, %v6271, %v6281
        %v6283 = vrot.slane %v6253, 2
        %v6284 = vsel %vm2003, %v6274, %v6283
        %v6285 = vrot.slane %v6254, 2
        %v6286 = vsel %vm2003, %v6277, %v6285
        %v6299 = vadd.f32 %v6212, %v6269
        %v6300 = vadd.f32 %v6213, %v6272
        %v6301 = vadd.f32 %v6214, %v6275
        %v6302 = vadd.f32 %v6215, %v6278
        %v6303 = vadd.f32 %v6216, %v6280
        %v6304 = vadd.f32 %v6217, %v6282
        %v6305 = vadd.f32 %v6218, %v6284
        %v6306 = vadd.f32 %v6219, %v6286
        %v6307 = vadd.f32 %v6220, %v6279
        %v6308 = vadd.f32 %v6221, %v6281
        %v6309 = vadd.f32 %v6222, %v6283
        %v6310 = vadd.f32 %v6223, %v6285
        %v6311 = vld [vmem:[#allocation3 + $0x20] sm:$0xc0]
        %v6312 = vld [vmem:[#allocation3 + $0x28] sm:$0xc0]
        %v6313 = vld [vmem:[#allocation3 + $0x30] sm:$0xc0]
        %v6314 = vld [vmem:[#allocation3 + $0x38] sm:$0xc0]
        %v6315 = vld [vmem:[#allocation3 + $0x60] sm:$0x3f]
        %v6316 = vld [vmem:[#allocation3 + $0x68] sm:$0x3f]
        %v6317 = vld [vmem:[#allocation3 + $0x70] sm:$0x3f]
        %v6318 = vld [vmem:[#allocation3 + $0x78] sm:$0x3f]
        %s6319 = scalar_lea.vmem [#allocation18], 3
        %v6320 = vld [vmem:[%s6319] ss:$8 sm:$0xf]
        %v6322 = vperm.slane %v6320, 0
        %v6323 = vperm.slane %v6320, 1
        %v6324 = vperm.slane %v6320, 2
        %v6325 = vperm.slane %v6320, 3
        %v6330 = vmul.f32 %v6311, %v6322
        %v6331 = vmul.f32 %v6312, %v6323
        %v6332 = vmul.f32 %v6313, %v6324
        %v6333 = vmul.f32 %v6314, %v6325
        %v6334 = vmul.f32 %v6095, %v6322
        %v6335 = vmul.f32 %v6096, %v6323
        %v6336 = vmul.f32 %v6097, %v6324
        %v6337 = vmul.f32 %v6098, %v6325
        %v6338 = vmul.f32 %v6315, %v6322
        %v6339 = vmul.f32 %v6316, %v6323
        %v6340 = vmul.f32 %v6317, %v6324
        %v6341 = vmul.f32 %v6318, %v6325
        %v6354 = vrot.slane %v6330, 3
        %v6355 = vrot.slane %v6334, 3
        %v6356 = vsel %vm2563, %v6354, %v6355
        %v6357 = vrot.slane %v6331, 3
        %v6358 = vrot.slane %v6335, 3
        %v6359 = vsel %vm2563, %v6357, %v6358
        %v6360 = vrot.slane %v6332, 3
        %v6361 = vrot.slane %v6336, 3
        %v6362 = vsel %vm2563, %v6360, %v6361
        %v6363 = vrot.slane %v6333, 3
        %v6364 = vrot.slane %v6337, 3
        %v6365 = vsel %vm2563, %v6363, %v6364
        %v6366 = vrot.slane %v6338, 3
        %v6367 = vsel %vm2563, %v6355, %v6366
        %v6368 = vrot.slane %v6339, 3
        %v6369 = vsel %vm2563, %v6358, %v6368
        %v6370 = vrot.slane %v6340, 3
        %v6371 = vsel %vm2563, %v6361, %v6370
        %v6372 = vrot.slane %v6341, 3
        %v6373 = vsel %vm2563, %v6364, %v6372
        %v6386 = vadd.f32 %v6299, %v6356
        %v6387 = vadd.f32 %v6300, %v6359
        %v6388 = vadd.f32 %v6301, %v6362
        %v6389 = vadd.f32 %v6302, %v6365
        %v6390 = vadd.f32 %v6303, %v6367
        %v6391 = vadd.f32 %v6304, %v6369
        %v6392 = vadd.f32 %v6305, %v6371
        %v6393 = vadd.f32 %v6306, %v6373
        %v6394 = vadd.f32 %v6307, %v6366
        %v6395 = vadd.f32 %v6308, %v6368
        %v6396 = vadd.f32 %v6309, %v6370
        %v6397 = vadd.f32 %v6310, %v6372
        %v6398 = vld [vmem:[#allocation3 + $0x20] sm:$0x80]
        %v6399 = vld [vmem:[#allocation3 + $0x28] sm:$0x80]
        %v6400 = vld [vmem:[#allocation3 + $0x30] sm:$0x80]
        %v6401 = vld [vmem:[#allocation3 + $0x38] sm:$0x80]
        %v6402 = vld [vmem:[#allocation3 + $0x60] sm:$0x7f]
        %v6403 = vld [vmem:[#allocation3 + $0x68] sm:$0x7f]
        %v6404 = vld [vmem:[#allocation3 + $0x70] sm:$0x7f]
        %v6405 = vld [vmem:[#allocation3 + $0x78] sm:$0x7f]
        %s6406 = scalar_lea.vmem [#allocation18], 4
        %v6407 = vld [vmem:[%s6406] ss:$8 sm:$0xf]
        %v6409 = vperm.slane %v6407, 0
        %v6410 = vperm.slane %v6407, 1
        %v6411 = vperm.slane %v6407, 2
        %v6412 = vperm.slane %v6407, 3
        %v6417 = vmul.f32 %v6398, %v6409
        %v6418 = vmul.f32 %v6399, %v6410
        %v6419 = vmul.f32 %v6400, %v6411
        %v6420 = vmul.f32 %v6401, %v6412
        %v6421 = vmul.f32 %v6095, %v6409
        %v6422 = vmul.f32 %v6096, %v6410
        %v6423 = vmul.f32 %v6097, %v6411
        %v6424 = vmul.f32 %v6098, %v6412
        %v6425 = vmul.f32 %v6402, %v6409
        %v6426 = vmul.f32 %v6403, %v6410
        %v6427 = vmul.f32 %v6404, %v6411
        %v6428 = vmul.f32 %v6405, %v6412
        %v6441 = vrot.slane %v6417, 4
        %v6442 = vrot.slane %v6421, 4
        %v6443 = vsel %vm3210, %v6441, %v6442
        %v6444 = vrot.slane %v6418, 4
        %v6445 = vrot.slane %v6422, 4
        %v6446 = vsel %vm3210, %v6444, %v6445
        %v6447 = vrot.slane %v6419, 4
        %v6448 = vrot.slane %v6423, 4
        %v6449 = vsel %vm3210, %v6447, %v6448
        %v6450 = vrot.slane %v6420, 4
        %v6451 = vrot.slane %v6424, 4
        %v6452 = vsel %vm3210, %v6450, %v6451
        %v6453 = vrot.slane %v6425, 4
        %v6454 = vsel %vm3210, %v6442, %v6453
        %v6455 = vrot.slane %v6426, 4
        %v6456 = vsel %vm3210, %v6445, %v6455
        %v6457 = vrot.slane %v6427, 4
        %v6458 = vsel %vm3210, %v6448, %v6457
        %v6459 = vrot.slane %v6428, 4
        %v6460 = vsel %vm3210, %v6451, %v6459
        %v6473 = vadd.f32 %v6386, %v6443
        %v6474 = vadd.f32 %v6387, %v6446
        %v6475 = vadd.f32 %v6388, %v6449
        %v6476 = vadd.f32 %v6389, %v6452
        %v6477 = vadd.f32 %v6390, %v6454
        %v6478 = vadd.f32 %v6391, %v6456
        %v6479 = vadd.f32 %v6392, %v6458
        %v6480 = vadd.f32 %v6393, %v6460
        %v6481 = vadd.f32 %v6394, %v6453
        %v6482 = vadd.f32 %v6395, %v6455
        %v6483 = vadd.f32 %v6396, %v6457
        %v6484 = vadd.f32 %v6397, %v6459
        %v6485 = vld [vmem:[#allocation3 + $0x60] sm:$0xff]
        %v6486 = vld [vmem:[#allocation3 + $0x68] sm:$0xff]
        %v6487 = vld [vmem:[#allocation3 + $0x70] sm:$0xff]
        %v6488 = vld [vmem:[#allocation3 + $0x78] sm:$0xff]
        %s6489 = scalar_lea.vmem [#allocation18], 5
        %v6490 = vld [vmem:[%s6489] ss:$8 sm:$0xf]
        %v6492 = vperm.slane %v6490, 0
        %v6493 = vperm.slane %v6490, 1
        %v6494 = vperm.slane %v6490, 2
        %v6495 = vperm.slane %v6490, 3
        %v6500 = vmul.f32 %v6095, %v6492
        %v6501 = vmul.f32 %v6096, %v6493
        %v6502 = vmul.f32 %v6097, %v6494
        %v6503 = vmul.f32 %v6098, %v6495
        %v6504 = vmul.f32 %v6485, %v6492
        %v6505 = vmul.f32 %v6486, %v6493
        %v6506 = vmul.f32 %v6487, %v6494
        %v6507 = vmul.f32 %v6488, %v6495
        %v6516 = vrot.slane %v6500, 5
        %v6517 = vrot.slane %v6501, 5
        %v6518 = vrot.slane %v6502, 5
        %v6519 = vrot.slane %v6503, 5
        %v6520 = vrot.slane %v6504, 5
        %v6521 = vsel %vm4949, %v6516, %v6520
        %v6522 = vrot.slane %v6505, 5
        %v6523 = vsel %vm4949, %v6517, %v6522
        %v6524 = vrot.slane %v6506, 5
        %v6525 = vsel %vm4949, %v6518, %v6524
        %v6526 = vrot.slane %v6507, 5
        %v6527 = vsel %vm4949, %v6519, %v6526
        %v6540 = vadd.f32 %v6473, %v6516
        %v6541 = vadd.f32 %v6474, %v6517
        %v6542 = vadd.f32 %v6475, %v6518
        %v6543 = vadd.f32 %v6476, %v6519
        %v6544 = vadd.f32 %v6477, %v6521
        %v6545 = vadd.f32 %v6478, %v6523
        %v6546 = vadd.f32 %v6479, %v6525
        %v6547 = vadd.f32 %v6480, %v6527
        %v6548 = vadd.f32 %v6481, %v6520
        %v6549 = vadd.f32 %v6482, %v6522
        %v6550 = vadd.f32 %v6483, %v6524
        %v6551 = vadd.f32 %v6484, %v6526
        %v6552 = vld [vmem:[#allocation3 + $0x40] sm:$0xfe]
        %v6553 = vld [vmem:[#allocation3 + $0x48] sm:$0xfe]
        %v6554 = vld [vmem:[#allocation3 + $0x50] sm:$0xfe]
        %v6555 = vld [vmem:[#allocation3 + $0x58] sm:$0xfe]
        %v6556 = vld [vmem:[#allocation3 + $0x80] sm:$0x1]
        %v6557 = vld [vmem:[#allocation3 + $0x88] sm:$0x1]
        %v6558 = vld [vmem:[#allocation3 + $0x90] sm:$0x1]
        %v6559 = vld [vmem:[#allocation3 + $0x98] sm:$0x1]
        %s6560 = scalar_lea.vmem [#allocation18], 6
        %v6561 = vld [vmem:[%s6560] ss:$8 sm:$0xf]
        %v6563 = vperm.slane %v6561, 0
        %v6564 = vperm.slane %v6561, 1
        %v6565 = vperm.slane %v6561, 2
        %v6566 = vperm.slane %v6561, 3
        %v6571 = vmul.f32 %v6552, %v6563
        %v6572 = vmul.f32 %v6553, %v6564
        %v6573 = vmul.f32 %v6554, %v6565
        %v6574 = vmul.f32 %v6555, %v6566
        %v6575 = vmul.f32 %v6485, %v6563
        %v6576 = vmul.f32 %v6486, %v6564
        %v6577 = vmul.f32 %v6487, %v6565
        %v6578 = vmul.f32 %v6488, %v6566
        %v6579 = vmul.f32 %v6556, %v6563
        %v6580 = vmul.f32 %v6557, %v6564
        %v6581 = vmul.f32 %v6558, %v6565
        %v6582 = vmul.f32 %v6559, %v6566
        %v6595 = vrot.slane %v6571, 6
        %v6596 = vrot.slane %v6572, 6
        %v6597 = vrot.slane %v6573, 6
        %v6598 = vrot.slane %v6574, 6
        %v6599 = vrot.slane %v6575, 6
        %v6600 = vsel %vm3846, %v6595, %v6599
        %v6601 = vrot.slane %v6576, 6
        %v6602 = vsel %vm3846, %v6596, %v6601
        %v6603 = vrot.slane %v6577, 6
        %v6604 = vsel %vm3846, %v6597, %v6603
        %v6605 = vrot.slane %v6578, 6
        %v6606 = vsel %vm3846, %v6598, %v6605
        %v6607 = vrot.slane %v6579, 6
        %v6608 = vsel %vm3846, %v6599, %v6607
        %v6609 = vrot.slane %v6580, 6
        %v6610 = vsel %vm3846, %v6601, %v6609
        %v6611 = vrot.slane %v6581, 6
        %v6612 = vsel %vm3846, %v6603, %v6611
        %v6613 = vrot.slane %v6582, 6
        %v6614 = vsel %vm3846, %v6605, %v6613
        %v6627 = vadd.f32 %v6540, %v6595
        %v6628 = vadd.f32 %v6541, %v6596
        %v6629 = vadd.f32 %v6542, %v6597
        %v6630 = vadd.f32 %v6543, %v6598
        %v6631 = vadd.f32 %v6544, %v6600
        %v6632 = vadd.f32 %v6545, %v6602
        %v6633 = vadd.f32 %v6546, %v6604
        %v6634 = vadd.f32 %v6547, %v6606
        %v6635 = vadd.f32 %v6548, %v6608
        %v6636 = vadd.f32 %v6549, %v6610
        %v6637 = vadd.f32 %v6550, %v6612
        %v6638 = vadd.f32 %v6551, %v6614
        %v6639 = vld [vmem:[#allocation3 + $0x40] sm:$0xfc]
        %v6640 = vld [vmem:[#allocation3 + $0x48] sm:$0xfc]
        %v6641 = vld [vmem:[#allocation3 + $0x50] sm:$0xfc]
        %v6642 = vld [vmem:[#allocation3 + $0x58] sm:$0xfc]
        %v6643 = vld [vmem:[#allocation3 + $0x80] sm:$0x3]
        %v6644 = vld [vmem:[#allocation3 + $0x88] sm:$0x3]
        %v6645 = vld [vmem:[#allocation3 + $0x90] sm:$0x3]
        %v6646 = vld [vmem:[#allocation3 + $0x98] sm:$0x3]
        %s6647 = scalar_lea.vmem [#allocation18], 7
        %v6648 = vld [vmem:[%s6647] ss:$8 sm:$0xf]
        %v6650 = vperm.slane %v6648, 0
        %v6651 = vperm.slane %v6648, 1
        %v6652 = vperm.slane %v6648, 2
        %v6653 = vperm.slane %v6648, 3
        %v6658 = vmul.f32 %v6639, %v6650
        %v6659 = vmul.f32 %v6640, %v6651
        %v6660 = vmul.f32 %v6641, %v6652
        %v6661 = vmul.f32 %v6642, %v6653
        %v6662 = vmul.f32 %v6485, %v6650
        %v6663 = vmul.f32 %v6486, %v6651
        %v6664 = vmul.f32 %v6487, %v6652
        %v6665 = vmul.f32 %v6488, %v6653
        %v6666 = vmul.f32 %v6643, %v6650
        %v6667 = vmul.f32 %v6644, %v6651
        %v6668 = vmul.f32 %v6645, %v6652
        %v6669 = vmul.f32 %v6646, %v6653
        %v6682 = vrot.slane %v6658, 7
        %v6683 = vrot.slane %v6659, 7
        %v6684 = vrot.slane %v6660, 7
        %v6685 = vrot.slane %v6661, 7
        %v6686 = vrot.slane %v6662, 7
        %v6687 = vsel %vm5115, %v6682, %v6686
        %v6688 = vrot.slane %v6663, 7
        %v6689 = vsel %vm5115, %v6683, %v6688
        %v6690 = vrot.slane %v6664, 7
        %v6691 = vsel %vm5115, %v6684, %v6690
        %v6692 = vrot.slane %v6665, 7
        %v6693 = vsel %vm5115, %v6685, %v6692
        %v6694 = vrot.slane %v6666, 7
        %v6695 = vsel %vm5115, %v6686, %v6694
        %v6696 = vrot.slane %v6667, 7
        %v6697 = vsel %vm5115, %v6688, %v6696
        %v6698 = vrot.slane %v6668, 7
        %v6699 = vsel %vm5115, %v6690, %v6698
        %v6700 = vrot.slane %v6669, 7
        %v6701 = vsel %vm5115, %v6692, %v6700
        %v6714 = vadd.f32 %v6627, %v6682
        %v6715 = vadd.f32 %v6628, %v6683
        %v6716 = vadd.f32 %v6629, %v6684
        %v6717 = vadd.f32 %v6630, %v6685
        %v6718 = vadd.f32 %v6631, %v6687
        %v6719 = vadd.f32 %v6632, %v6689
        %v6720 = vadd.f32 %v6633, %v6691
        %v6721 = vadd.f32 %v6634, %v6693
        %v6722 = vadd.f32 %v6635, %v6695
        %v6723 = vadd.f32 %v6636, %v6697
        %v6724 = vadd.f32 %v6637, %v6699
        %v6725 = vadd.f32 %v6638, %v6701
        %v6726 = vld [vmem:[#allocation3 + $0x40] sm:$0xf8]
        %v6727 = vld [vmem:[#allocation3 + $0x48] sm:$0xf8]
        %v6728 = vld [vmem:[#allocation3 + $0x50] sm:$0xf8]
        %v6729 = vld [vmem:[#allocation3 + $0x58] sm:$0xf8]
        %v6730 = vld [vmem:[#allocation3 + $0x80] sm:$0x7]
        %v6731 = vld [vmem:[#allocation3 + $0x88] sm:$0x7]
        %v6732 = vld [vmem:[#allocation3 + $0x90] sm:$0x7]
        %v6733 = vld [vmem:[#allocation3 + $0x98] sm:$0x7]
        %s6734 = scalar_lea.vmem [#allocation18], 32
        %v6735 = vld [vmem:[%s6734] ss:$8 sm:$0xf]
        %v6737 = vperm.slane %v6735, 0
        %v6738 = vperm.slane %v6735, 1
        %v6739 = vperm.slane %v6735, 2
        %v6740 = vperm.slane %v6735, 3
        %v6745 = vmul.f32 %v6726, %v6737
        %v6746 = vmul.f32 %v6727, %v6738
        %v6747 = vmul.f32 %v6728, %v6739
        %v6748 = vmul.f32 %v6729, %v6740
        %v6749 = vmul.f32 %v6485, %v6737
        %v6750 = vmul.f32 %v6486, %v6738
        %v6751 = vmul.f32 %v6487, %v6739
        %v6752 = vmul.f32 %v6488, %v6740
        %v6753 = vmul.f32 %v6730, %v6737
        %v6754 = vmul.f32 %v6731, %v6738
        %v6755 = vmul.f32 %v6732, %v6739
        %v6756 = vmul.f32 %v6733, %v6740
        %v6757 = vadd.f32 %v6714, %v6745
        %v6758 = vadd.f32 %v6715, %v6746
        %v6759 = vadd.f32 %v6716, %v6747
        %v6760 = vadd.f32 %v6717, %v6748
        %v6761 = vadd.f32 %v6718, %v6749
        %v6762 = vadd.f32 %v6719, %v6750
        %v6763 = vadd.f32 %v6720, %v6751
        %v6764 = vadd.f32 %v6721, %v6752
        %v6765 = vadd.f32 %v6722, %v6753
        %v6766 = vadd.f32 %v6723, %v6754
        %v6767 = vadd.f32 %v6724, %v6755
        %v6768 = vadd.f32 %v6725, %v6756
        %v6769 = vld [vmem:[#allocation3 + $0x40] sm:$0xf0]
        %v6770 = vld [vmem:[#allocation3 + $0x48] sm:$0xf0]
        %v6771 = vld [vmem:[#allocation3 + $0x50] sm:$0xf0]
        %v6772 = vld [vmem:[#allocation3 + $0x58] sm:$0xf0]
        %v6773 = vld [vmem:[#allocation3 + $0x80] sm:$0xf]
        %v6774 = vld [vmem:[#allocation3 + $0x88] sm:$0xf]
        %v6775 = vld [vmem:[#allocation3 + $0x90] sm:$0xf]
        %v6776 = vld [vmem:[#allocation3 + $0x98] sm:$0xf]
        %s6777 = scalar_lea.vmem [#allocation18], 33
        %v6778 = vld [vmem:[%s6777] ss:$8 sm:$0xf]
        %v6780 = vperm.slane %v6778, 0
        %v6781 = vperm.slane %v6778, 1
        %v6782 = vperm.slane %v6778, 2
        %v6783 = vperm.slane %v6778, 3
        %v6788 = vmul.f32 %v6769, %v6780
        %v6789 = vmul.f32 %v6770, %v6781
        %v6790 = vmul.f32 %v6771, %v6782
        %v6791 = vmul.f32 %v6772, %v6783
        %v6792 = vmul.f32 %v6485, %v6780
        %v6793 = vmul.f32 %v6486, %v6781
        %v6794 = vmul.f32 %v6487, %v6782
        %v6795 = vmul.f32 %v6488, %v6783
        %v6796 = vmul.f32 %v6773, %v6780
        %v6797 = vmul.f32 %v6774, %v6781
        %v6798 = vmul.f32 %v6775, %v6782
        %v6799 = vmul.f32 %v6776, %v6783
        %v6812 = vrot.slane %v6788, 1
        %v6813 = vrot.slane %v6792, 1
        %v6814 = vsel %vm1371, %v6812, %v6813
        %v6815 = vrot.slane %v6789, 1
        %v6816 = vrot.slane %v6793, 1
        %v6817 = vsel %vm1371, %v6815, %v6816
        %v6818 = vrot.slane %v6790, 1
        %v6819 = vrot.slane %v6794, 1
        %v6820 = vsel %vm1371, %v6818, %v6819
        %v6821 = vrot.slane %v6791, 1
        %v6822 = vrot.slane %v6795, 1
        %v6823 = vsel %vm1371, %v6821, %v6822
        %v6824 = vrot.slane %v6796, 1
        %v6825 = vsel %vm1371, %v6813, %v6824
        %v6826 = vrot.slane %v6797, 1
        %v6827 = vsel %vm1371, %v6816, %v6826
        %v6828 = vrot.slane %v6798, 1
        %v6829 = vsel %vm1371, %v6819, %v6828
        %v6830 = vrot.slane %v6799, 1
        %v6831 = vsel %vm1371, %v6822, %v6830
        %v6844 = vadd.f32 %v6757, %v6814
        %v6845 = vadd.f32 %v6758, %v6817
        %v6846 = vadd.f32 %v6759, %v6820
        %v6847 = vadd.f32 %v6760, %v6823
        %v6848 = vadd.f32 %v6761, %v6825
        %v6849 = vadd.f32 %v6762, %v6827
        %v6850 = vadd.f32 %v6763, %v6829
        %v6851 = vadd.f32 %v6764, %v6831
        %v6852 = vadd.f32 %v6765, %v6824
        %v6853 = vadd.f32 %v6766, %v6826
        %v6854 = vadd.f32 %v6767, %v6828
        %v6855 = vadd.f32 %v6768, %v6830
        %v6856 = vld [vmem:[#allocation3 + $0x40] sm:$0xe0]
        %v6857 = vld [vmem:[#allocation3 + $0x48] sm:$0xe0]
        %v6858 = vld [vmem:[#allocation3 + $0x50] sm:$0xe0]
        %v6859 = vld [vmem:[#allocation3 + $0x58] sm:$0xe0]
        %v6860 = vld [vmem:[#allocation3 + $0x80] sm:$0x1f]
        %v6861 = vld [vmem:[#allocation3 + $0x88] sm:$0x1f]
        %v6862 = vld [vmem:[#allocation3 + $0x90] sm:$0x1f]
        %v6863 = vld [vmem:[#allocation3 + $0x98] sm:$0x1f]
        %s6864 = scalar_lea.vmem [#allocation18], 34
        %v6865 = vld [vmem:[%s6864] ss:$8 sm:$0xf]
        %v6867 = vperm.slane %v6865, 0
        %v6868 = vperm.slane %v6865, 1
        %v6869 = vperm.slane %v6865, 2
        %v6870 = vperm.slane %v6865, 3
        %v6875 = vmul.f32 %v6856, %v6867
        %v6876 = vmul.f32 %v6857, %v6868
        %v6877 = vmul.f32 %v6858, %v6869
        %v6878 = vmul.f32 %v6859, %v6870
        %v6879 = vmul.f32 %v6485, %v6867
        %v6880 = vmul.f32 %v6486, %v6868
        %v6881 = vmul.f32 %v6487, %v6869
        %v6882 = vmul.f32 %v6488, %v6870
        %v6883 = vmul.f32 %v6860, %v6867
        %v6884 = vmul.f32 %v6861, %v6868
        %v6885 = vmul.f32 %v6862, %v6869
        %v6886 = vmul.f32 %v6863, %v6870
        %v6899 = vrot.slane %v6875, 2
        %v6900 = vrot.slane %v6879, 2
        %v6901 = vsel %vm2003, %v6899, %v6900
        %v6902 = vrot.slane %v6876, 2
        %v6903 = vrot.slane %v6880, 2
        %v6904 = vsel %vm2003, %v6902, %v6903
        %v6905 = vrot.slane %v6877, 2
        %v6906 = vrot.slane %v6881, 2
        %v6907 = vsel %vm2003, %v6905, %v6906
        %v6908 = vrot.slane %v6878, 2
        %v6909 = vrot.slane %v6882, 2
        %v6910 = vsel %vm2003, %v6908, %v6909
        %v6911 = vrot.slane %v6883, 2
        %v6912 = vsel %vm2003, %v6900, %v6911
        %v6913 = vrot.slane %v6884, 2
        %v6914 = vsel %vm2003, %v6903, %v6913
        %v6915 = vrot.slane %v6885, 2
        %v6916 = vsel %vm2003, %v6906, %v6915
        %v6917 = vrot.slane %v6886, 2
        %v6918 = vsel %vm2003, %v6909, %v6917
        %v6931 = vadd.f32 %v6844, %v6901
        %v6932 = vadd.f32 %v6845, %v6904
        %v6933 = vadd.f32 %v6846, %v6907
        %v6934 = vadd.f32 %v6847, %v6910
        %v6935 = vadd.f32 %v6848, %v6912
        %v6936 = vadd.f32 %v6849, %v6914
        %v6937 = vadd.f32 %v6850, %v6916
        %v6938 = vadd.f32 %v6851, %v6918
        %v6939 = vadd.f32 %v6852, %v6911
        %v6940 = vadd.f32 %v6853, %v6913
        %v6941 = vadd.f32 %v6854, %v6915
        %v6942 = vadd.f32 %v6855, %v6917
        %v6943 = vld [vmem:[%s10] sm:$0xf]
        %v6945 = vperm.slane %v6943, 0
        %v6946 = vperm.slane %v6943, 1
        %v6947 = vperm.slane %v6943, 2
        %v6948 = vperm.slane %v6943, 3
        %v6953 = vadd.f32 %v6931, %v6945
        %v6954 = vadd.f32 %v6932, %v6946
        %v6955 = vadd.f32 %v6933, %v6947
        %v6956 = vadd.f32 %v6934, %v6948
        %v6957 = vadd.f32 %v6935, %v6945
        %v6958 = vadd.f32 %v6936, %v6946
        %v6959 = vadd.f32 %v6937, %v6947
        %v6960 = vadd.f32 %v6938, %v6948
        %v6961 = vadd.f32 %v6939, %v6945
        %v6962 = vadd.f32 %v6940, %v6946
        %v6963 = vadd.f32 %v6941, %v6947
        %v6964 = vadd.f32 %v6942, %v6948
        %v6977 = vrot.slane %v6953, 5
        %v6978 = vrot.slane %v6954, 5
        %v6979 = vrot.slane %v6955, 5
        %v6980 = vrot.slane %v6956, 5
        %v6981 = vrot.slane %v6957, 5
        %v6982 = vsel %vm4949, %v6977, %v6981
        %v6983 = vrot.slane %v6958, 5
        %v6984 = vsel %vm4949, %v6978, %v6983
        %v6985 = vrot.slane %v6959, 5
        %v6986 = vsel %vm4949, %v6979, %v6985
        %v6987 = vrot.slane %v6960, 5
        %v6988 = vsel %vm4949, %v6980, %v6987
        %v6989 = vrot.slane %v6961, 5
        %v6990 = vsel %vm4949, %v6981, %v6989
        %v6991 = vrot.slane %v6962, 5
        %v6992 = vsel %vm4949, %v6983, %v6991
        %v6993 = vrot.slane %v6963, 5
        %v6994 = vsel %vm4949, %v6985, %v6993
        %v6995 = vrot.slane %v6964, 5
        %v6996 = vsel %vm4949, %v6987, %v6995
        %6997 = vrot.lane.b32.xlu0 %v6977, 64
        %v6998 = vpop.permute.xlu0 %6997
        %6999 = vrot.lane.b32.xlu0 %v6978, 64
        %v7000 = vpop.permute.xlu0 %6999
        %7001 = vrot.lane.b32.xlu0 %v6979, 64
        %v7002 = vpop.permute.xlu0 %7001
        %7003 = vrot.lane.b32.xlu0 %v6980, 64
        %v7004 = vpop.permute.xlu0 %7003
        %7005 = vrot.lane.b32.xlu0 %v6982, 64
        %v7006 = vpop.permute.xlu0 %7005
        %7007 = vrot.lane.b32.xlu0 %v6984, 64
        %v7008 = vpop.permute.xlu0 %7007
        %7009 = vrot.lane.b32.xlu0 %v6986, 64
        %v7010 = vpop.permute.xlu0 %7009
        %7011 = vrot.lane.b32.xlu0 %v6988, 64
        %v7012 = vpop.permute.xlu0 %7011
        %7013 = vrot.lane.b32.xlu0 %v6990, 64
        %v7014 = vpop.permute.xlu0 %7013
        %7015 = vrot.lane.b32.xlu0 %v6992, 64
        %v7016 = vpop.permute.xlu0 %7015
        %7017 = vrot.lane.b32.xlu0 %v6994, 64
        %v7018 = vpop.permute.xlu0 %7017
        %7019 = vrot.lane.b32.xlu0 %v6996, 64
        %v7020 = vpop.permute.xlu0 %7019
        %v7021 = vsel %vm863, %v6998, %v7000
        %v7022 = vsel %vm863, %v7000, %v7002
        %v7023 = vsel %vm863, %v7002, %v7004
        %v7024 = vsel %vm863, %v7006, %v7008
        %v7025 = vsel %vm863, %v7008, %v7010
        %v7026 = vsel %vm863, %v7010, %v7012
        %v7027 = vsel %vm863, %v7014, %v7016
        %v7028 = vsel %vm863, %v7016, %v7018
        %v7029 = vsel %vm863, %v7018, %v7020
        %v7045 = vadd.f32 %v5184, %v6998
        %v7046 = vadd.f32 %v5185, %v7021
        %v7047 = vadd.f32 %v5186, %v7022
        %v7048 = vadd.f32 %v5187, %v7023
        %v7049 = vadd.f32 %v5188, %v7004
        %v7050 = vadd.f32 %v5189, %v7006
        %v7051 = vadd.f32 %v5190, %v7024
        %v7052 = vadd.f32 %v5191, %v7025
        %v7053 = vadd.f32 %v5192, %v7026
        %v7054 = vadd.f32 %v5193, %v7012
        %v7055 = vadd.f32 %v5194, %v7014
        %v7056 = vadd.f32 %v5195, %v7027
        %v7057 = vadd.f32 %v5196, %v7028
        %v7058 = vadd.f32 %v5197, %v7029
        %v7059 = vadd.f32 %v5198, %v7020
        %v7060 = vld [vmem:[#allocation2 + $0x50] sm:$0xff]
        %v7061 = vld [vmem:[#allocation2 + $0x58] sm:$0xff]
        %v7062 = vld [vmem:[#allocation2 + $0x60] sm:$0xff]
        %v7063 = vld [vmem:[#allocation2 + $0x68] sm:$0xff]
        %v7064 = vld [vmem:[#allocation2 + $0x70] sm:$0xff]
        %v7065 = vld [vmem:[#allocation2 + $0xa0] sm:$0xff]
        %v7066 = vld [vmem:[#allocation2 + $0xa8] sm:$0xff]
        %v7067 = vld [vmem:[#allocation2 + $0xb0] sm:$0xff]
        %v7068 = vld [vmem:[#allocation2 + $0xb8] sm:$0xff]
        %v7069 = vld [vmem:[#allocation2 + $0xc0] sm:$0xff]
        %v7070 = vld [vmem:[#allocation19] ss:$8 sm:$0xf]
        %v7072 = vperm.slane %v7070, 0
        %v7073 = vperm.slane %v7070, 1
        %v7074 = vperm.slane %v7070, 2
        %v7075 = vperm.slane %v7070, 3
        %7076 = vrot.lane.b32.xlu0 %v7072, 64
        %v7077 = vpop.permute.xlu0 %7076
        %7078 = vrot.lane.b32.xlu0 %v7073, 64
        %v7079 = vpop.permute.xlu0 %7078
        %7080 = vrot.lane.b32.xlu0 %v7074, 64
        %v7081 = vpop.permute.xlu0 %7080
        %7082 = vrot.lane.b32.xlu0 %v7075, 64
        %v7083 = vpop.permute.xlu0 %7082
        %v7084 = vsel %vm863, %v7077, %v7079
        %v7085 = vsel %vm863, %v7079, %v7081
        %v7086 = vsel %vm863, %v7081, %v7083
        %v7092 = vmul.f32 %v7060, %v7077
        %v7093 = vmul.f32 %v7061, %v7084
        %v7094 = vmul.f32 %v7062, %v7085
        %v7095 = vmul.f32 %v7063, %v7086
        %v7096 = vmul.f32 %v7064, %v7083
        %v7097 = vmul.f32 %v7065, %v7077
        %v7098 = vmul.f32 %v7066, %v7084
        %v7099 = vmul.f32 %v7067, %v7085
        %v7100 = vmul.f32 %v7068, %v7086
        %v7101 = vmul.f32 %v7069, %v7083
        %v7102 = vadd.f32 %v7092, 0.0
        %v7103 = vadd.f32 %v7093, 0.0
        %v7104 = vadd.f32 %v7094, 0.0
        %v7105 = vadd.f32 %v7095, 0.0
        %v7106 = vadd.f32 %v7096, 0.0
        %v7107 = vadd.f32 %v7097, 0.0
        %v7108 = vadd.f32 %v7098, 0.0
        %v7109 = vadd.f32 %v7099, 0.0
        %v7110 = vadd.f32 %v7100, 0.0
        %v7111 = vadd.f32 %v7101, 0.0
        %s7112 = scalar_lea.vmem [#allocation19], 1
        %v7113 = vld [vmem:[%s7112] ss:$8 sm:$0xf]
        %v7115 = vperm.slane %v7113, 0
        %v7116 = vperm.slane %v7113, 1
        %v7117 = vperm.slane %v7113, 2
        %v7118 = vperm.slane %v7113, 3
        %7119 = vrot.lane.b32.xlu0 %v7115, 96
        %v7120 = vpop.permute.xlu0 %7119
        %7121 = vrot.lane.b32.xlu0 %v7116, 96
        %v7122 = vpop.permute.xlu0 %7121
        %7123 = vrot.lane.b32.xlu0 %v7117, 96
        %v7124 = vpop.permute.xlu0 %7123
        %7125 = vrot.lane.b32.xlu0 %v7118, 96
        %v7126 = vpop.permute.xlu0 %7125
        %v7127 = vsel %vm917, %v7120, %v7122
        %v7128 = vsel %vm917, %v7122, %v7124
        %v7129 = vsel %vm917, %v7124, %v7126
        %v7135 = vmul.f32 %v7060, %v7120
        %v7136 = vmul.f32 %v7061, %v7127
        %v7137 = vmul.f32 %v7062, %v7128
        %v7138 = vmul.f32 %v7063, %v7129
        %v7139 = vmul.f32 %v7064, %v7126
        %v7140 = vmul.f32 %v7065, %v7120
        %v7141 = vmul.f32 %v7066, %v7127
        %v7142 = vmul.f32 %v7067, %v7128
        %v7143 = vmul.f32 %v7068, %v7129
        %v7144 = vmul.f32 %v7069, %v7126
        %7155 = vrot.lane.b32.xlu0 %v7135, 96
        %v7156 = vpop.permute.xlu0 %7155
        %7157 = vrot.lane.b32.xlu0 %v7136, 96
        %v7158 = vpop.permute.xlu0 %7157
        %7159 = vrot.lane.b32.xlu0 %v7137, 96
        %v7160 = vpop.permute.xlu0 %7159
        %7161 = vrot.lane.b32.xlu0 %v7138, 96
        %v7162 = vpop.permute.xlu0 %7161
        %7163 = vrot.lane.b32.xlu0 %v7139, 96
        %v7164 = vpop.permute.xlu0 %7163
        %7165 = vrot.lane.b32.xlu0 %v7140, 96
        %v7166 = vpop.permute.xlu0 %7165
        %7167 = vrot.lane.b32.xlu0 %v7141, 96
        %v7168 = vpop.permute.xlu0 %7167
        %7169 = vrot.lane.b32.xlu0 %v7142, 96
        %v7170 = vpop.permute.xlu0 %7169
        %7171 = vrot.lane.b32.xlu0 %v7143, 96
        %v7172 = vpop.permute.xlu0 %7171
        %7173 = vrot.lane.b32.xlu0 %v7144, 96
        %v7174 = vpop.permute.xlu0 %7173
        %v7175 = vsel %vm917, %v7156, %v7158
        %v7176 = vsel %vm917, %v7158, %v7160
        %v7177 = vsel %vm917, %v7160, %v7162
        %v7178 = vsel %vm917, %v7162, %v7164
        %v7179 = vsel %vm917, %v7166, %v7168
        %v7180 = vsel %vm917, %v7168, %v7170
        %v7181 = vsel %vm917, %v7170, %v7172
        %v7182 = vsel %vm917, %v7172, %v7174
        %v7193 = vadd.f32 %v7102, %v7175
        %v7194 = vadd.f32 %v7103, %v7176
        %v7195 = vadd.f32 %v7104, %v7177
        %v7196 = vadd.f32 %v7105, %v7178
        %v7197 = vadd.f32 %v7106, %v7164
        %v7198 = vadd.f32 %v7107, %v7179
        %v7199 = vadd.f32 %v7108, %v7180
        %v7200 = vadd.f32 %v7109, %v7181
        %v7201 = vadd.f32 %v7110, %v7182
        %v7202 = vadd.f32 %v7111, %v7174
        %s7203 = scalar_lea.vmem [#allocation19], 2
        %v7204 = vld [vmem:[%s7203] ss:$8 sm:$0xf]
        %v7206 = vperm.slane %v7204, 0
        %v7207 = vperm.slane %v7204, 1
        %v7208 = vperm.slane %v7204, 2
        %v7209 = vperm.slane %v7204, 3
        %v7214 = vmul.f32 %v7061, %v7206
        %v7215 = vmul.f32 %v7062, %v7207
        %v7216 = vmul.f32 %v7063, %v7208
        %v7217 = vmul.f32 %v7064, %v7209
        %v7218 = vmul.f32 %v7066, %v7206
        %v7219 = vmul.f32 %v7067, %v7207
        %v7220 = vmul.f32 %v7068, %v7208
        %v7221 = vmul.f32 %v7069, %v7209
        %7230 = vrot.lane.b32.xlu0 %v7214, 64
        %v7231 = vpop.permute.xlu0 %7230
        %7232 = vrot.lane.b32.xlu0 %v7215, 64
        %v7233 = vpop.permute.xlu0 %7232
        %7234 = vrot.lane.b32.xlu0 %v7216, 64
        %v7235 = vpop.permute.xlu0 %7234
        %7236 = vrot.lane.b32.xlu0 %v7217, 64
        %v7237 = vpop.permute.xlu0 %7236
        %7238 = vrot.lane.b32.xlu0 %v7218, 64
        %v7239 = vpop.permute.xlu0 %7238
        %7240 = vrot.lane.b32.xlu0 %v7219, 64
        %v7241 = vpop.permute.xlu0 %7240
        %7242 = vrot.lane.b32.xlu0 %v7220, 64
        %v7243 = vpop.permute.xlu0 %7242
        %7244 = vrot.lane.b32.xlu0 %v7221, 64
        %v7245 = vpop.permute.xlu0 %7244
        %v7246 = vsel %vm863, %v7231, %v7233
        %v7247 = vsel %vm863, %v7233, %v7235
        %v7248 = vsel %vm863, %v7235, %v7237
        %v7249 = vsel %vm863, %v7239, %v7241
        %v7250 = vsel %vm863, %v7241, %v7243
        %v7251 = vsel %vm863, %v7243, %v7245
        %v7262 = vadd.f32 %v7193, %v7231
        %v7263 = vadd.f32 %v7194, %v7246
        %v7264 = vadd.f32 %v7195, %v7247
        %v7265 = vadd.f32 %v7196, %v7248
        %v7266 = vadd.f32 %v7197, %v7237
        %v7267 = vadd.f32 %v7198, %v7239
        %v7268 = vadd.f32 %v7199, %v7249
        %v7269 = vadd.f32 %v7200, %v7250
        %v7270 = vadd.f32 %v7201, %v7251
        %v7271 = vadd.f32 %v7202, %v7245
        %v7272 = vld [vmem:[#allocation2 + $0x78] sm:$0xff]
        %v7273 = vld [vmem:[#allocation2 + $0xc8] sm:$0xff]
        %s7274 = scalar_lea.vmem [#allocation19], 3
        %v7275 = vld [vmem:[%s7274] ss:$8 sm:$0xf]
        %v7277 = vperm.slane %v7275, 0
        %v7278 = vperm.slane %v7275, 1
        %v7279 = vperm.slane %v7275, 2
        %v7280 = vperm.slane %v7275, 3
        %7281 = vrot.lane.b32.xlu0 %v7277, 32
        %v7282 = vpop.permute.xlu0 %7281
        %7283 = vrot.lane.b32.xlu0 %v7278, 32
        %v7284 = vpop.permute.xlu0 %7283
        %7285 = vrot.lane.b32.xlu0 %v7279, 32
        %v7286 = vpop.permute.xlu0 %7285
        %7287 = vrot.lane.b32.xlu0 %v7280, 32
        %v7288 = vpop.permute.xlu0 %7287
        %v7289 = vsel %vm1144, %v7282, %v7284
        %v7290 = vsel %vm1144, %v7284, %v7286
        %v7291 = vsel %vm1144, %v7286, %v7288
        %v7297 = vmul.f32 %v7061, %v7282
        %v7298 = vmul.f32 %v7062, %v7289
        %v7299 = vmul.f32 %v7063, %v7290
        %v7300 = vmul.f32 %v7064, %v7291
        %v7301 = vmul.f32 %v7272, %v7288
        %v7302 = vmul.f32 %v7066, %v7282
        %v7303 = vmul.f32 %v7067, %v7289
        %v7304 = vmul.f32 %v7068, %v7290
        %v7305 = vmul.f32 %v7069, %v7291
        %v7306 = vmul.f32 %v7273, %v7288
        %7317 = vrot.lane.b32.xlu0 %v7297, 32
        %v7318 = vpop.permute.xlu0 %7317
        %7319 = vrot.lane.b32.xlu0 %v7298, 32
        %v7320 = vpop.permute.xlu0 %7319
        %7321 = vrot.lane.b32.xlu0 %v7299, 32
        %v7322 = vpop.permute.xlu0 %7321
        %7323 = vrot.lane.b32.xlu0 %v7300, 32
        %v7324 = vpop.permute.xlu0 %7323
        %7325 = vrot.lane.b32.xlu0 %v7301, 32
        %v7326 = vpop.permute.xlu0 %7325
        %7327 = vrot.lane.b32.xlu0 %v7302, 32
        %v7328 = vpop.permute.xlu0 %7327
        %7329 = vrot.lane.b32.xlu0 %v7303, 32
        %v7330 = vpop.permute.xlu0 %7329
        %7331 = vrot.lane.b32.xlu0 %v7304, 32
        %v7332 = vpop.permute.xlu0 %7331
        %7333 = vrot.lane.b32.xlu0 %v7305, 32
        %v7334 = vpop.permute.xlu0 %7333
        %7335 = vrot.lane.b32.xlu0 %v7306, 32
        %v7336 = vpop.permute.xlu0 %7335
        %v7337 = vsel %vm1144, %v7318, %v7320
        %v7338 = vsel %vm1144, %v7320, %v7322
        %v7339 = vsel %vm1144, %v7322, %v7324
        %v7340 = vsel %vm1144, %v7324, %v7326
        %v7341 = vsel %vm1144, %v7328, %v7330
        %v7342 = vsel %vm1144, %v7330, %v7332
        %v7343 = vsel %vm1144, %v7332, %v7334
        %v7344 = vsel %vm1144, %v7334, %v7336
        %v7355 = vadd.f32 %v7262, %v7318
        %v7356 = vadd.f32 %v7263, %v7337
        %v7357 = vadd.f32 %v7264, %v7338
        %v7358 = vadd.f32 %v7265, %v7339
        %v7359 = vadd.f32 %v7266, %v7340
        %v7360 = vadd.f32 %v7267, %v7328
        %v7361 = vadd.f32 %v7268, %v7341
        %v7362 = vadd.f32 %v7269, %v7342
        %v7363 = vadd.f32 %v7270, %v7343
        %v7364 = vadd.f32 %v7271, %v7344
        %s7365 = scalar_lea.vmem [#allocation19], 4
        %v7366 = vld [vmem:[%s7365] ss:$8 sm:$0xf]
        %v7368 = vperm.slane %v7366, 0
        %v7369 = vperm.slane %v7366, 1
        %v7370 = vperm.slane %v7366, 2
        %v7371 = vperm.slane %v7366, 3
        %7372 = vrot.lane.b32.xlu0 %v7368, 64
        %v7373 = vpop.permute.xlu0 %7372
        %7374 = vrot.lane.b32.xlu0 %v7369, 64
        %v7375 = vpop.permute.xlu0 %7374
        %7376 = vrot.lane.b32.xlu0 %v7370, 64
        %v7377 = vpop.permute.xlu0 %7376
        %7378 = vrot.lane.b32.xlu0 %v7371, 64
        %v7379 = vpop.permute.xlu0 %7378
        %v7380 = vsel %vm863, %v7373, %v7375
        %v7381 = vsel %vm863, %v7375, %v7377
        %v7382 = vsel %vm863, %v7377, %v7379
        %v7388 = vmul.f32 %v7061, %v7373
        %v7389 = vmul.f32 %v7062, %v7380
        %v7390 = vmul.f32 %v7063, %v7381
        %v7391 = vmul.f32 %v7064, %v7382
        %v7392 = vmul.f32 %v7272, %v7379
        %v7393 = vmul.f32 %v7066, %v7373
        %v7394 = vmul.f32 %v7067, %v7380
        %v7395 = vmul.f32 %v7068, %v7381
        %v7396 = vmul.f32 %v7069, %v7382
        %v7397 = vmul.f32 %v7273, %v7379
        %v7398 = vadd.f32 %v7355, %v7388
        %v7399 = vadd.f32 %v7356, %v7389
        %v7400 = vadd.f32 %v7357, %v7390
        %v7401 = vadd.f32 %v7358, %v7391
        %v7402 = vadd.f32 %v7359, %v7392
        %v7403 = vadd.f32 %v7360, %v7393
        %v7404 = vadd.f32 %v7361, %v7394
        %v7405 = vadd.f32 %v7362, %v7395
        %v7406 = vadd.f32 %v7363, %v7396
        %v7407 = vadd.f32 %v7364, %v7397
        %s7408 = scalar_lea.vmem [#allocation19], 5
        %v7409 = vld [vmem:[%s7408] ss:$8 sm:$0xf]
        %v7411 = vperm.slane %v7409, 0
        %v7412 = vperm.slane %v7409, 1
        %v7413 = vperm.slane %v7409, 2
        %v7414 = vperm.slane %v7409, 3
        %7415 = vrot.lane.b32.xlu0 %v7411, 96
        %v7416 = vpop.permute.xlu0 %7415
        %7417 = vrot.lane.b32.xlu0 %v7412, 96
        %v7418 = vpop.permute.xlu0 %7417
        %7419 = vrot.lane.b32.xlu0 %v7413, 96
        %v7420 = vpop.permute.xlu0 %7419
        %7421 = vrot.lane.b32.xlu0 %v7414, 96
        %v7422 = vpop.permute.xlu0 %7421
        %v7423 = vsel %vm917, %v7416, %v7418
        %v7424 = vsel %vm917, %v7418, %v7420
        %v7425 = vsel %vm917, %v7420, %v7422
        %v7431 = vmul.f32 %v7061, %v7416
        %v7432 = vmul.f32 %v7062, %v7423
        %v7433 = vmul.f32 %v7063, %v7424
        %v7434 = vmul.f32 %v7064, %v7425
        %v7435 = vmul.f32 %v7272, %v7422
        %v7436 = vmul.f32 %v7066, %v7416
        %v7437 = vmul.f32 %v7067, %v7423
        %v7438 = vmul.f32 %v7068, %v7424
        %v7439 = vmul.f32 %v7069, %v7425
        %v7440 = vmul.f32 %v7273, %v7422
        %7451 = vrot.lane.b32.xlu0 %v7431, 96
        %v7452 = vpop.permute.xlu0 %7451
        %7453 = vrot.lane.b32.xlu0 %v7432, 96
        %v7454 = vpop.permute.xlu0 %7453
        %7455 = vrot.lane.b32.xlu0 %v7433, 96
        %v7456 = vpop.permute.xlu0 %7455
        %7457 = vrot.lane.b32.xlu0 %v7434, 96
        %v7458 = vpop.permute.xlu0 %7457
        %7459 = vrot.lane.b32.xlu0 %v7435, 96
        %v7460 = vpop.permute.xlu0 %7459
        %7461 = vrot.lane.b32.xlu0 %v7436, 96
        %v7462 = vpop.permute.xlu0 %7461
        %7463 = vrot.lane.b32.xlu0 %v7437, 96
        %v7464 = vpop.permute.xlu0 %7463
        %7465 = vrot.lane.b32.xlu0 %v7438, 96
        %v7466 = vpop.permute.xlu0 %7465
        %7467 = vrot.lane.b32.xlu0 %v7439, 96
        %v7468 = vpop.permute.xlu0 %7467
        %7469 = vrot.lane.b32.xlu0 %v7440, 96
        %v7470 = vpop.permute.xlu0 %7469
        %v7471 = vsel %vm917, %v7452, %v7454
        %v7472 = vsel %vm917, %v7454, %v7456
        %v7473 = vsel %vm917, %v7456, %v7458
        %v7474 = vsel %vm917, %v7458, %v7460
        %v7475 = vsel %vm917, %v7462, %v7464
        %v7476 = vsel %vm917, %v7464, %v7466
        %v7477 = vsel %vm917, %v7466, %v7468
        %v7478 = vsel %vm917, %v7468, %v7470
        %v7489 = vadd.f32 %v7398, %v7471
        %v7490 = vadd.f32 %v7399, %v7472
        %v7491 = vadd.f32 %v7400, %v7473
        %v7492 = vadd.f32 %v7401, %v7474
        %v7493 = vadd.f32 %v7402, %v7460
        %v7494 = vadd.f32 %v7403, %v7475
        %v7495 = vadd.f32 %v7404, %v7476
        %v7496 = vadd.f32 %v7405, %v7477
        %v7497 = vadd.f32 %v7406, %v7478
        %v7498 = vadd.f32 %v7407, %v7470
        %s7499 = scalar_lea.vmem [#allocation19], 6
        %v7500 = vld [vmem:[%s7499] ss:$8 sm:$0xf]
        %v7502 = vperm.slane %v7500, 0
        %v7503 = vperm.slane %v7500, 1
        %v7504 = vperm.slane %v7500, 2
        %v7505 = vperm.slane %v7500, 3
        %v7510 = vmul.f32 %v7062, %v7502
        %v7511 = vmul.f32 %v7063, %v7503
        %v7512 = vmul.f32 %v7064, %v7504
        %v7513 = vmul.f32 %v7272, %v7505
        %v7514 = vmul.f32 %v7067, %v7502
        %v7515 = vmul.f32 %v7068, %v7503
        %v7516 = vmul.f32 %v7069, %v7504
        %v7517 = vmul.f32 %v7273, %v7505
        %7526 = vrot.lane.b32.xlu0 %v7510, 64
        %v7527 = vpop.permute.xlu0 %7526
        %7528 = vrot.lane.b32.xlu0 %v7511, 64
        %v7529 = vpop.permute.xlu0 %7528
        %7530 = vrot.lane.b32.xlu0 %v7512, 64
        %v7531 = vpop.permute.xlu0 %7530
        %7532 = vrot.lane.b32.xlu0 %v7513, 64
        %v7533 = vpop.permute.xlu0 %7532
        %7534 = vrot.lane.b32.xlu0 %v7514, 64
        %v7535 = vpop.permute.xlu0 %7534
        %7536 = vrot.lane.b32.xlu0 %v7515, 64
        %v7537 = vpop.permute.xlu0 %7536
        %7538 = vrot.lane.b32.xlu0 %v7516, 64
        %v7539 = vpop.permute.xlu0 %7538
        %7540 = vrot.lane.b32.xlu0 %v7517, 64
        %v7541 = vpop.permute.xlu0 %7540
        %v7542 = vsel %vm863, %v7527, %v7529
        %v7543 = vsel %vm863, %v7529, %v7531
        %v7544 = vsel %vm863, %v7531, %v7533
        %v7545 = vsel %vm863, %v7535, %v7537
        %v7546 = vsel %vm863, %v7537, %v7539
        %v7547 = vsel %vm863, %v7539, %v7541
        %v7558 = vadd.f32 %v7489, %v7527
        %v7559 = vadd.f32 %v7490, %v7542
        %v7560 = vadd.f32 %v7491, %v7543
        %v7561 = vadd.f32 %v7492, %v7544
        %v7562 = vadd.f32 %v7493, %v7533
        %v7563 = vadd.f32 %v7494, %v7535
        %v7564 = vadd.f32 %v7495, %v7545
        %v7565 = vadd.f32 %v7496, %v7546
        %v7566 = vadd.f32 %v7497, %v7547
        %v7567 = vadd.f32 %v7498, %v7541
        %v7568 = vld [vmem:[#allocation2 + $0x80] sm:$0xff]
        %v7569 = vld [vmem:[#allocation2 + $0xd0] sm:$0xff]
        %s7570 = scalar_lea.vmem [#allocation19], 7
        %v7571 = vld [vmem:[%s7570] ss:$8 sm:$0xf]
        %v7573 = vperm.slane %v7571, 0
        %v7574 = vperm.slane %v7571, 1
        %v7575 = vperm.slane %v7571, 2
        %v7576 = vperm.slane %v7571, 3
        %7577 = vrot.lane.b32.xlu0 %v7573, 32
        %v7578 = vpop.permute.xlu0 %7577
        %7579 = vrot.lane.b32.xlu0 %v7574, 32
        %v7580 = vpop.permute.xlu0 %7579
        %7581 = vrot.lane.b32.xlu0 %v7575, 32
        %v7582 = vpop.permute.xlu0 %7581
        %7583 = vrot.lane.b32.xlu0 %v7576, 32
        %v7584 = vpop.permute.xlu0 %7583
        %v7585 = vsel %vm1144, %v7578, %v7580
        %v7586 = vsel %vm1144, %v7580, %v7582
        %v7587 = vsel %vm1144, %v7582, %v7584
        %v7593 = vmul.f32 %v7062, %v7578
        %v7594 = vmul.f32 %v7063, %v7585
        %v7595 = vmul.f32 %v7064, %v7586
        %v7596 = vmul.f32 %v7272, %v7587
        %v7597 = vmul.f32 %v7568, %v7584
        %v7598 = vmul.f32 %v7067, %v7578
        %v7599 = vmul.f32 %v7068, %v7585
        %v7600 = vmul.f32 %v7069, %v7586
        %v7601 = vmul.f32 %v7273, %v7587
        %v7602 = vmul.f32 %v7569, %v7584
        %7613 = vrot.lane.b32.xlu0 %v7593, 32
        %v7614 = vpop.permute.xlu0 %7613
        %7615 = vrot.lane.b32.xlu0 %v7594, 32
        %v7616 = vpop.permute.xlu0 %7615
        %7617 = vrot.lane.b32.xlu0 %v7595, 32
        %v7618 = vpop.permute.xlu0 %7617
        %7619 = vrot.lane.b32.xlu0 %v7596, 32
        %v7620 = vpop.permute.xlu0 %7619
        %7621 = vrot.lane.b32.xlu0 %v7597, 32
        %v7622 = vpop.permute.xlu0 %7621
        %7623 = vrot.lane.b32.xlu0 %v7598, 32
        %v7624 = vpop.permute.xlu0 %7623
        %7625 = vrot.lane.b32.xlu0 %v7599, 32
        %v7626 = vpop.permute.xlu0 %7625
        %7627 = vrot.lane.b32.xlu0 %v7600, 32
        %v7628 = vpop.permute.xlu0 %7627
        %7629 = vrot.lane.b32.xlu0 %v7601, 32
        %v7630 = vpop.permute.xlu0 %7629
        %7631 = vrot.lane.b32.xlu0 %v7602, 32
        %v7632 = vpop.permute.xlu0 %7631
        %v7633 = vsel %vm1144, %v7614, %v7616
        %v7634 = vsel %vm1144, %v7616, %v7618
        %v7635 = vsel %vm1144, %v7618, %v7620
        %v7636 = vsel %vm1144, %v7620, %v7622
        %v7637 = vsel %vm1144, %v7624, %v7626
        %v7638 = vsel %vm1144, %v7626, %v7628
        %v7639 = vsel %vm1144, %v7628, %v7630
        %v7640 = vsel %vm1144, %v7630, %v7632
        %v7651 = vadd.f32 %v7558, %v7614
        %v7652 = vadd.f32 %v7559, %v7633
        %v7653 = vadd.f32 %v7560, %v7634
        %v7654 = vadd.f32 %v7561, %v7635
        %v7655 = vadd.f32 %v7562, %v7636
        %v7656 = vadd.f32 %v7563, %v7624
        %v7657 = vadd.f32 %v7564, %v7637
        %v7658 = vadd.f32 %v7565, %v7638
        %v7659 = vadd.f32 %v7566, %v7639
        %v7660 = vadd.f32 %v7567, %v7640
        %s7661 = scalar_lea.vmem [#allocation19], 32
        %v7662 = vld [vmem:[%s7661] ss:$8 sm:$0xf]
        %v7664 = vperm.slane %v7662, 0
        %v7665 = vperm.slane %v7662, 1
        %v7666 = vperm.slane %v7662, 2
        %v7667 = vperm.slane %v7662, 3
        %7668 = vrot.lane.b32.xlu0 %v7664, 64
        %v7669 = vpop.permute.xlu0 %7668
        %7670 = vrot.lane.b32.xlu0 %v7665, 64
        %v7671 = vpop.permute.xlu0 %7670
        %7672 = vrot.lane.b32.xlu0 %v7666, 64
        %v7673 = vpop.permute.xlu0 %7672
        %7674 = vrot.lane.b32.xlu0 %v7667, 64
        %v7675 = vpop.permute.xlu0 %7674
        %v7676 = vsel %vm863, %v7669, %v7671
        %v7677 = vsel %vm863, %v7671, %v7673
        %v7678 = vsel %vm863, %v7673, %v7675
        %v7684 = vmul.f32 %v7062, %v7669
        %v7685 = vmul.f32 %v7063, %v7676
        %v7686 = vmul.f32 %v7064, %v7677
        %v7687 = vmul.f32 %v7272, %v7678
        %v7688 = vmul.f32 %v7568, %v7675
        %v7689 = vmul.f32 %v7067, %v7669
        %v7690 = vmul.f32 %v7068, %v7676
        %v7691 = vmul.f32 %v7069, %v7677
        %v7692 = vmul.f32 %v7273, %v7678
        %v7693 = vmul.f32 %v7569, %v7675
        %v7694 = vadd.f32 %v7651, %v7684
        %v7695 = vadd.f32 %v7652, %v7685
        %v7696 = vadd.f32 %v7653, %v7686
        %v7697 = vadd.f32 %v7654, %v7687
        %v7698 = vadd.f32 %v7655, %v7688
        %v7699 = vadd.f32 %v7656, %v7689
        %v7700 = vadd.f32 %v7657, %v7690
        %v7701 = vadd.f32 %v7658, %v7691
        %v7702 = vadd.f32 %v7659, %v7692
        %v7703 = vadd.f32 %v7660, %v7693
        %s7704 = scalar_lea.vmem [#allocation19], 33
        %v7705 = vld [vmem:[%s7704] ss:$8 sm:$0xf]
        %v7707 = vperm.slane %v7705, 0
        %v7708 = vperm.slane %v7705, 1
        %v7709 = vperm.slane %v7705, 2
        %v7710 = vperm.slane %v7705, 3
        %7711 = vrot.lane.b32.xlu0 %v7707, 96
        %v7712 = vpop.permute.xlu0 %7711
        %7713 = vrot.lane.b32.xlu0 %v7708, 96
        %v7714 = vpop.permute.xlu0 %7713
        %7715 = vrot.lane.b32.xlu0 %v7709, 96
        %v7716 = vpop.permute.xlu0 %7715
        %7717 = vrot.lane.b32.xlu0 %v7710, 96
        %v7718 = vpop.permute.xlu0 %7717
        %v7719 = vsel %vm917, %v7712, %v7714
        %v7720 = vsel %vm917, %v7714, %v7716
        %v7721 = vsel %vm917, %v7716, %v7718
        %v7727 = vmul.f32 %v7062, %v7712
        %v7728 = vmul.f32 %v7063, %v7719
        %v7729 = vmul.f32 %v7064, %v7720
        %v7730 = vmul.f32 %v7272, %v7721
        %v7731 = vmul.f32 %v7568, %v7718
        %v7732 = vmul.f32 %v7067, %v7712
        %v7733 = vmul.f32 %v7068, %v7719
        %v7734 = vmul.f32 %v7069, %v7720
        %v7735 = vmul.f32 %v7273, %v7721
        %v7736 = vmul.f32 %v7569, %v7718
        %7747 = vrot.lane.b32.xlu0 %v7727, 96
        %v7748 = vpop.permute.xlu0 %7747
        %7749 = vrot.lane.b32.xlu0 %v7728, 96
        %v7750 = vpop.permute.xlu0 %7749
        %7751 = vrot.lane.b32.xlu0 %v7729, 96
        %v7752 = vpop.permute.xlu0 %7751
        %7753 = vrot.lane.b32.xlu0 %v7730, 96
        %v7754 = vpop.permute.xlu0 %7753
        %7755 = vrot.lane.b32.xlu0 %v7731, 96
        %v7756 = vpop.permute.xlu0 %7755
        %7757 = vrot.lane.b32.xlu0 %v7732, 96
        %v7758 = vpop.permute.xlu0 %7757
        %7759 = vrot.lane.b32.xlu0 %v7733, 96
        %v7760 = vpop.permute.xlu0 %7759
        %7761 = vrot.lane.b32.xlu0 %v7734, 96
        %v7762 = vpop.permute.xlu0 %7761
        %7763 = vrot.lane.b32.xlu0 %v7735, 96
        %v7764 = vpop.permute.xlu0 %7763
        %7765 = vrot.lane.b32.xlu0 %v7736, 96
        %v7766 = vpop.permute.xlu0 %7765
        %v7767 = vsel %vm917, %v7748, %v7750
        %v7768 = vsel %vm917, %v7750, %v7752
        %v7769 = vsel %vm917, %v7752, %v7754
        %v7770 = vsel %vm917, %v7754, %v7756
        %v7771 = vsel %vm917, %v7758, %v7760
        %v7772 = vsel %vm917, %v7760, %v7762
        %v7773 = vsel %vm917, %v7762, %v7764
        %v7774 = vsel %vm917, %v7764, %v7766
        %v7785 = vadd.f32 %v7694, %v7767
        %v7786 = vadd.f32 %v7695, %v7768
        %v7787 = vadd.f32 %v7696, %v7769
        %v7788 = vadd.f32 %v7697, %v7770
        %v7789 = vadd.f32 %v7698, %v7756
        %v7790 = vadd.f32 %v7699, %v7771
        %v7791 = vadd.f32 %v7700, %v7772
        %v7792 = vadd.f32 %v7701, %v7773
        %v7793 = vadd.f32 %v7702, %v7774
        %v7794 = vadd.f32 %v7703, %v7766
        %s7795 = scalar_lea.vmem [#allocation19], 34
        %v7796 = vld [vmem:[%s7795] ss:$8 sm:$0xf]
        %v7798 = vperm.slane %v7796, 0
        %v7799 = vperm.slane %v7796, 1
        %v7800 = vperm.slane %v7796, 2
        %v7801 = vperm.slane %v7796, 3
        %v7806 = vmul.f32 %v7063, %v7798
        %v7807 = vmul.f32 %v7064, %v7799
        %v7808 = vmul.f32 %v7272, %v7800
        %v7809 = vmul.f32 %v7568, %v7801
        %v7810 = vmul.f32 %v7068, %v7798
        %v7811 = vmul.f32 %v7069, %v7799
        %v7812 = vmul.f32 %v7273, %v7800
        %v7813 = vmul.f32 %v7569, %v7801
        %7822 = vrot.lane.b32.xlu0 %v7806, 64
        %v7823 = vpop.permute.xlu0 %7822
        %7824 = vrot.lane.b32.xlu0 %v7807, 64
        %v7825 = vpop.permute.xlu0 %7824
        %7826 = vrot.lane.b32.xlu0 %v7808, 64
        %v7827 = vpop.permute.xlu0 %7826
        %7828 = vrot.lane.b32.xlu0 %v7809, 64
        %v7829 = vpop.permute.xlu0 %7828
        %7830 = vrot.lane.b32.xlu0 %v7810, 64
        %v7831 = vpop.permute.xlu0 %7830
        %7832 = vrot.lane.b32.xlu0 %v7811, 64
        %v7833 = vpop.permute.xlu0 %7832
        %7834 = vrot.lane.b32.xlu0 %v7812, 64
        %v7835 = vpop.permute.xlu0 %7834
        %7836 = vrot.lane.b32.xlu0 %v7813, 64
        %v7837 = vpop.permute.xlu0 %7836
        %v7838 = vsel %vm863, %v7823, %v7825
        %v7839 = vsel %vm863, %v7825, %v7827
        %v7840 = vsel %vm863, %v7827, %v7829
        %v7841 = vsel %vm863, %v7831, %v7833
        %v7842 = vsel %vm863, %v7833, %v7835
        %v7843 = vsel %vm863, %v7835, %v7837
        %v7854 = vadd.f32 %v7785, %v7823
        %v7855 = vadd.f32 %v7786, %v7838
        %v7856 = vadd.f32 %v7787, %v7839
        %v7857 = vadd.f32 %v7788, %v7840
        %v7858 = vadd.f32 %v7789, %v7829
        %v7859 = vadd.f32 %v7790, %v7831
        %v7860 = vadd.f32 %v7791, %v7841
        %v7861 = vadd.f32 %v7792, %v7842
        %v7862 = vadd.f32 %v7793, %v7843
        %v7863 = vadd.f32 %v7794, %v7837
        %v7864 = vld [vmem:[#allocation2 + $0x88] sm:$0xff]
        %v7865 = vld [vmem:[#allocation2 + $0xd8] sm:$0xff]
        %s7866 = scalar_lea.vmem [#allocation19], 35
        %v7867 = vld [vmem:[%s7866] ss:$8 sm:$0xf]
        %v7869 = vperm.slane %v7867, 0
        %v7870 = vperm.slane %v7867, 1
        %v7871 = vperm.slane %v7867, 2
        %v7872 = vperm.slane %v7867, 3
        %7873 = vrot.lane.b32.xlu0 %v7869, 32
        %v7874 = vpop.permute.xlu0 %7873
        %7875 = vrot.lane.b32.xlu0 %v7870, 32
        %v7876 = vpop.permute.xlu0 %7875
        %7877 = vrot.lane.b32.xlu0 %v7871, 32
        %v7878 = vpop.permute.xlu0 %7877
        %7879 = vrot.lane.b32.xlu0 %v7872, 32
        %v7880 = vpop.permute.xlu0 %7879
        %v7881 = vsel %vm1144, %v7874, %v7876
        %v7882 = vsel %vm1144, %v7876, %v7878
        %v7883 = vsel %vm1144, %v7878, %v7880
        %v7889 = vmul.f32 %v7063, %v7874
        %v7890 = vmul.f32 %v7064, %v7881
        %v7891 = vmul.f32 %v7272, %v7882
        %v7892 = vmul.f32 %v7568, %v7883
        %v7893 = vmul.f32 %v7864, %v7880
        %v7894 = vmul.f32 %v7068, %v7874
        %v7895 = vmul.f32 %v7069, %v7881
        %v7896 = vmul.f32 %v7273, %v7882
        %v7897 = vmul.f32 %v7569, %v7883
        %v7898 = vmul.f32 %v7865, %v7880
        %7909 = vrot.lane.b32.xlu0 %v7889, 32
        %v7910 = vpop.permute.xlu0 %7909
        %7911 = vrot.lane.b32.xlu0 %v7890, 32
        %v7912 = vpop.permute.xlu0 %7911
        %7913 = vrot.lane.b32.xlu0 %v7891, 32
        %v7914 = vpop.permute.xlu0 %7913
        %7915 = vrot.lane.b32.xlu0 %v7892, 32
        %v7916 = vpop.permute.xlu0 %7915
        %7917 = vrot.lane.b32.xlu0 %v7893, 32
        %v7918 = vpop.permute.xlu0 %7917
        %7919 = vrot.lane.b32.xlu0 %v7894, 32
        %v7920 = vpop.permute.xlu0 %7919
        %7921 = vrot.lane.b32.xlu0 %v7895, 32
        %v7922 = vpop.permute.xlu0 %7921
        %7923 = vrot.lane.b32.xlu0 %v7896, 32
        %v7924 = vpop.permute.xlu0 %7923
        %7925 = vrot.lane.b32.xlu0 %v7897, 32
        %v7926 = vpop.permute.xlu0 %7925
        %7927 = vrot.lane.b32.xlu0 %v7898, 32
        %v7928 = vpop.permute.xlu0 %7927
        %v7929 = vsel %vm1144, %v7910, %v7912
        %v7930 = vsel %vm1144, %v7912, %v7914
        %v7931 = vsel %vm1144, %v7914, %v7916
        %v7932 = vsel %vm1144, %v7916, %v7918
        %v7933 = vsel %vm1144, %v7920, %v7922
        %v7934 = vsel %vm1144, %v7922, %v7924
        %v7935 = vsel %vm1144, %v7924, %v7926
        %v7936 = vsel %vm1144, %v7926, %v7928
        %v7947 = vadd.f32 %v7854, %v7910
        %v7948 = vadd.f32 %v7855, %v7929
        %v7949 = vadd.f32 %v7856, %v7930
        %v7950 = vadd.f32 %v7857, %v7931
        %v7951 = vadd.f32 %v7858, %v7932
        %v7952 = vadd.f32 %v7859, %v7920
        %v7953 = vadd.f32 %v7860, %v7933
        %v7954 = vadd.f32 %v7861, %v7934
        %v7955 = vadd.f32 %v7862, %v7935
        %v7956 = vadd.f32 %v7863, %v7936
        %s7957 = scalar_lea.vmem [#allocation19], 36
        %v7958 = vld [vmem:[%s7957] ss:$8 sm:$0xf]
        %v7960 = vperm.slane %v7958, 0
        %v7961 = vperm.slane %v7958, 1
        %v7962 = vperm.slane %v7958, 2
        %v7963 = vperm.slane %v7958, 3
        %7964 = vrot.lane.b32.xlu0 %v7960, 64
        %v7965 = vpop.permute.xlu0 %7964
        %7966 = vrot.lane.b32.xlu0 %v7961, 64
        %v7967 = vpop.permute.xlu0 %7966
        %7968 = vrot.lane.b32.xlu0 %v7962, 64
        %v7969 = vpop.permute.xlu0 %7968
        %7970 = vrot.lane.b32.xlu0 %v7963, 64
        %v7971 = vpop.permute.xlu0 %7970
        %v7972 = vsel %vm863, %v7965, %v7967
        %v7973 = vsel %vm863, %v7967, %v7969
        %v7974 = vsel %vm863, %v7969, %v7971
        %v7980 = vmul.f32 %v7063, %v7965
        %v7981 = vmul.f32 %v7064, %v7972
        %v7982 = vmul.f32 %v7272, %v7973
        %v7983 = vmul.f32 %v7568, %v7974
        %v7984 = vmul.f32 %v7864, %v7971
        %v7985 = vmul.f32 %v7068, %v7965
        %v7986 = vmul.f32 %v7069, %v7972
        %v7987 = vmul.f32 %v7273, %v7973
        %v7988 = vmul.f32 %v7569, %v7974
        %v7989 = vmul.f32 %v7865, %v7971
        %v7990 = vadd.f32 %v7947, %v7980
        %v7991 = vadd.f32 %v7948, %v7981
        %v7992 = vadd.f32 %v7949, %v7982
        %v7993 = vadd.f32 %v7950, %v7983
        %v7994 = vadd.f32 %v7951, %v7984
        %v7995 = vadd.f32 %v7952, %v7985
        %v7996 = vadd.f32 %v7953, %v7986
        %v7997 = vadd.f32 %v7954, %v7987
        %v7998 = vadd.f32 %v7955, %v7988
        %v7999 = vadd.f32 %v7956, %v7989
        %s8000 = scalar_lea.vmem [#allocation19], 37
        %v8001 = vld [vmem:[%s8000] ss:$8 sm:$0xf]
        %v8003 = vperm.slane %v8001, 0
        %v8004 = vperm.slane %v8001, 1
        %v8005 = vperm.slane %v8001, 2
        %v8006 = vperm.slane %v8001, 3
        %8007 = vrot.lane.b32.xlu0 %v8003, 96
        %v8008 = vpop.permute.xlu0 %8007
        %8009 = vrot.lane.b32.xlu0 %v8004, 96
        %v8010 = vpop.permute.xlu0 %8009
        %8011 = vrot.lane.b32.xlu0 %v8005, 96
        %v8012 = vpop.permute.xlu0 %8011
        %8013 = vrot.lane.b32.xlu0 %v8006, 96
        %v8014 = vpop.permute.xlu0 %8013
        %v8015 = vsel %vm917, %v8008, %v8010
        %v8016 = vsel %vm917, %v8010, %v8012
        %v8017 = vsel %vm917, %v8012, %v8014
        %v8023 = vmul.f32 %v7063, %v8008
        %v8024 = vmul.f32 %v7064, %v8015
        %v8025 = vmul.f32 %v7272, %v8016
        %v8026 = vmul.f32 %v7568, %v8017
        %v8027 = vmul.f32 %v7864, %v8014
        %v8028 = vmul.f32 %v7068, %v8008
        %v8029 = vmul.f32 %v7069, %v8015
        %v8030 = vmul.f32 %v7273, %v8016
        %v8031 = vmul.f32 %v7569, %v8017
        %v8032 = vmul.f32 %v7865, %v8014
        %8043 = vrot.lane.b32.xlu0 %v8023, 96
        %v8044 = vpop.permute.xlu0 %8043
        %8045 = vrot.lane.b32.xlu0 %v8024, 96
        %v8046 = vpop.permute.xlu0 %8045
        %8047 = vrot.lane.b32.xlu0 %v8025, 96
        %v8048 = vpop.permute.xlu0 %8047
        %8049 = vrot.lane.b32.xlu0 %v8026, 96
        %v8050 = vpop.permute.xlu0 %8049
        %8051 = vrot.lane.b32.xlu0 %v8027, 96
        %v8052 = vpop.permute.xlu0 %8051
        %8053 = vrot.lane.b32.xlu0 %v8028, 96
        %v8054 = vpop.permute.xlu0 %8053
        %8055 = vrot.lane.b32.xlu0 %v8029, 96
        %v8056 = vpop.permute.xlu0 %8055
        %8057 = vrot.lane.b32.xlu0 %v8030, 96
        %v8058 = vpop.permute.xlu0 %8057
        %8059 = vrot.lane.b32.xlu0 %v8031, 96
        %v8060 = vpop.permute.xlu0 %8059
        %8061 = vrot.lane.b32.xlu0 %v8032, 96
        %v8062 = vpop.permute.xlu0 %8061
        %v8063 = vsel %vm917, %v8044, %v8046
        %v8064 = vsel %vm917, %v8046, %v8048
        %v8065 = vsel %vm917, %v8048, %v8050
        %v8066 = vsel %vm917, %v8050, %v8052
        %v8067 = vsel %vm917, %v8054, %v8056
        %v8068 = vsel %vm917, %v8056, %v8058
        %v8069 = vsel %vm917, %v8058, %v8060
        %v8070 = vsel %vm917, %v8060, %v8062
        %v8081 = vadd.f32 %v7990, %v8063
        %v8082 = vadd.f32 %v7991, %v8064
        %v8083 = vadd.f32 %v7992, %v8065
        %v8084 = vadd.f32 %v7993, %v8066
        %v8085 = vadd.f32 %v7994, %v8052
        %v8086 = vadd.f32 %v7995, %v8067
        %v8087 = vadd.f32 %v7996, %v8068
        %v8088 = vadd.f32 %v7997, %v8069
        %v8089 = vadd.f32 %v7998, %v8070
        %v8090 = vadd.f32 %v7999, %v8062
        %s8091 = scalar_lea.vmem [#allocation19], 38
        %v8092 = vld [vmem:[%s8091] ss:$8 sm:$0xf]
        %v8094 = vperm.slane %v8092, 0
        %v8095 = vperm.slane %v8092, 1
        %v8096 = vperm.slane %v8092, 2
        %v8097 = vperm.slane %v8092, 3
        %v8102 = vmul.f32 %v7064, %v8094
        %v8103 = vmul.f32 %v7272, %v8095
        %v8104 = vmul.f32 %v7568, %v8096
        %v8105 = vmul.f32 %v7864, %v8097
        %v8106 = vmul.f32 %v7069, %v8094
        %v8107 = vmul.f32 %v7273, %v8095
        %v8108 = vmul.f32 %v7569, %v8096
        %v8109 = vmul.f32 %v7865, %v8097
        %8118 = vrot.lane.b32.xlu0 %v8102, 64
        %v8119 = vpop.permute.xlu0 %8118
        %8120 = vrot.lane.b32.xlu0 %v8103, 64
        %v8121 = vpop.permute.xlu0 %8120
        %8122 = vrot.lane.b32.xlu0 %v8104, 64
        %v8123 = vpop.permute.xlu0 %8122
        %8124 = vrot.lane.b32.xlu0 %v8105, 64
        %v8125 = vpop.permute.xlu0 %8124
        %8126 = vrot.lane.b32.xlu0 %v8106, 64
        %v8127 = vpop.permute.xlu0 %8126
        %8128 = vrot.lane.b32.xlu0 %v8107, 64
        %v8129 = vpop.permute.xlu0 %8128
        %8130 = vrot.lane.b32.xlu0 %v8108, 64
        %v8131 = vpop.permute.xlu0 %8130
        %8132 = vrot.lane.b32.xlu0 %v8109, 64
        %v8133 = vpop.permute.xlu0 %8132
        %v8134 = vsel %vm863, %v8119, %v8121
        %v8135 = vsel %vm863, %v8121, %v8123
        %v8136 = vsel %vm863, %v8123, %v8125
        %v8137 = vsel %vm863, %v8127, %v8129
        %v8138 = vsel %vm863, %v8129, %v8131
        %v8139 = vsel %vm863, %v8131, %v8133
        %v8150 = vadd.f32 %v8081, %v8119
        %v8151 = vadd.f32 %v8082, %v8134
        %v8152 = vadd.f32 %v8083, %v8135
        %v8153 = vadd.f32 %v8084, %v8136
        %v8154 = vadd.f32 %v8085, %v8125
        %v8155 = vadd.f32 %v8086, %v8127
        %v8156 = vadd.f32 %v8087, %v8137
        %v8157 = vadd.f32 %v8088, %v8138
        %v8158 = vadd.f32 %v8089, %v8139
        %v8159 = vadd.f32 %v8090, %v8133
        %v8160 = vld [vmem:[#allocation2 + $0x90] sm:$0xff]
        %v8161 = vld [vmem:[#allocation2 + $0xe0] sm:$0xff]
        %s8162 = scalar_lea.vmem [#allocation19], 39
        %v8163 = vld [vmem:[%s8162] ss:$8 sm:$0xf]
        %v8165 = vperm.slane %v8163, 0
        %v8166 = vperm.slane %v8163, 1
        %v8167 = vperm.slane %v8163, 2
        %v8168 = vperm.slane %v8163, 3
        %8169 = vrot.lane.b32.xlu0 %v8165, 32
        %v8170 = vpop.permute.xlu0 %8169
        %8171 = vrot.lane.b32.xlu0 %v8166, 32
        %v8172 = vpop.permute.xlu0 %8171
        %8173 = vrot.lane.b32.xlu0 %v8167, 32
        %v8174 = vpop.permute.xlu0 %8173
        %8175 = vrot.lane.b32.xlu0 %v8168, 32
        %v8176 = vpop.permute.xlu0 %8175
        %v8177 = vsel %vm1144, %v8170, %v8172
        %v8178 = vsel %vm1144, %v8172, %v8174
        %v8179 = vsel %vm1144, %v8174, %v8176
        %v8185 = vmul.f32 %v7064, %v8170
        %v8186 = vmul.f32 %v7272, %v8177
        %v8187 = vmul.f32 %v7568, %v8178
        %v8188 = vmul.f32 %v7864, %v8179
        %v8189 = vmul.f32 %v8160, %v8176
        %v8190 = vmul.f32 %v7069, %v8170
        %v8191 = vmul.f32 %v7273, %v8177
        %v8192 = vmul.f32 %v7569, %v8178
        %v8193 = vmul.f32 %v7865, %v8179
        %v8194 = vmul.f32 %v8161, %v8176
        %8205 = vrot.lane.b32.xlu0 %v8185, 32
        %v8206 = vpop.permute.xlu0 %8205
        %8207 = vrot.lane.b32.xlu0 %v8186, 32
        %v8208 = vpop.permute.xlu0 %8207
        %8209 = vrot.lane.b32.xlu0 %v8187, 32
        %v8210 = vpop.permute.xlu0 %8209
        %8211 = vrot.lane.b32.xlu0 %v8188, 32
        %v8212 = vpop.permute.xlu0 %8211
        %8213 = vrot.lane.b32.xlu0 %v8189, 32
        %v8214 = vpop.permute.xlu0 %8213
        %8215 = vrot.lane.b32.xlu0 %v8190, 32
        %v8216 = vpop.permute.xlu0 %8215
        %8217 = vrot.lane.b32.xlu0 %v8191, 32
        %v8218 = vpop.permute.xlu0 %8217
        %8219 = vrot.lane.b32.xlu0 %v8192, 32
        %v8220 = vpop.permute.xlu0 %8219
        %8221 = vrot.lane.b32.xlu0 %v8193, 32
        %v8222 = vpop.permute.xlu0 %8221
        %8223 = vrot.lane.b32.xlu0 %v8194, 32
        %v8224 = vpop.permute.xlu0 %8223
        %v8225 = vsel %vm1144, %v8206, %v8208
        %v8226 = vsel %vm1144, %v8208, %v8210
        %v8227 = vsel %vm1144, %v8210, %v8212
        %v8228 = vsel %vm1144, %v8212, %v8214
        %v8229 = vsel %vm1144, %v8216, %v8218
        %v8230 = vsel %vm1144, %v8218, %v8220
        %v8231 = vsel %vm1144, %v8220, %v8222
        %v8232 = vsel %vm1144, %v8222, %v8224
        %v8243 = vadd.f32 %v8150, %v8206
        %v8244 = vadd.f32 %v8151, %v8225
        %v8245 = vadd.f32 %v8152, %v8226
        %v8246 = vadd.f32 %v8153, %v8227
        %v8247 = vadd.f32 %v8154, %v8228
        %v8248 = vadd.f32 %v8155, %v8216
        %v8249 = vadd.f32 %v8156, %v8229
        %v8250 = vadd.f32 %v8157, %v8230
        %v8251 = vadd.f32 %v8158, %v8231
        %v8252 = vadd.f32 %v8159, %v8232
        %s8253 = scalar_lea.vmem [#allocation19], 64
        %v8254 = vld [vmem:[%s8253] ss:$8 sm:$0xf]
        %v8256 = vperm.slane %v8254, 0
        %v8257 = vperm.slane %v8254, 1
        %v8258 = vperm.slane %v8254, 2
        %v8259 = vperm.slane %v8254, 3
        %8260 = vrot.lane.b32.xlu0 %v8256, 64
        %v8261 = vpop.permute.xlu0 %8260
        %8262 = vrot.lane.b32.xlu0 %v8257, 64
        %v8263 = vpop.permute.xlu0 %8262
        %8264 = vrot.lane.b32.xlu0 %v8258, 64
        %v8265 = vpop.permute.xlu0 %8264
        %8266 = vrot.lane.b32.xlu0 %v8259, 64
        %v8267 = vpop.permute.xlu0 %8266
        %v8268 = vsel %vm863, %v8261, %v8263
        %v8269 = vsel %vm863, %v8263, %v8265
        %v8270 = vsel %vm863, %v8265, %v8267
        %v8276 = vmul.f32 %v7064, %v8261
        %v8277 = vmul.f32 %v7272, %v8268
        %v8278 = vmul.f32 %v7568, %v8269
        %v8279 = vmul.f32 %v7864, %v8270
        %v8280 = vmul.f32 %v8160, %v8267
        %v8281 = vmul.f32 %v7069, %v8261
        %v8282 = vmul.f32 %v7273, %v8268
        %v8283 = vmul.f32 %v7569, %v8269
        %v8284 = vmul.f32 %v7865, %v8270
        %v8285 = vmul.f32 %v8161, %v8267
        %v8286 = vadd.f32 %v8243, %v8276
        %v8287 = vadd.f32 %v8244, %v8277
        %v8288 = vadd.f32 %v8245, %v8278
        %v8289 = vadd.f32 %v8246, %v8279
        %v8290 = vadd.f32 %v8247, %v8280
        %v8291 = vadd.f32 %v8248, %v8281
        %v8292 = vadd.f32 %v8249, %v8282
        %v8293 = vadd.f32 %v8250, %v8283
        %v8294 = vadd.f32 %v8251, %v8284
        %v8295 = vadd.f32 %v8252, %v8285
        %s8296 = scalar_lea.vmem [#allocation19], 65
        %v8297 = vld [vmem:[%s8296] ss:$8 sm:$0xf]
        %v8299 = vperm.slane %v8297, 0
        %v8300 = vperm.slane %v8297, 1
        %v8301 = vperm.slane %v8297, 2
        %v8302 = vperm.slane %v8297, 3
        %8303 = vrot.lane.b32.xlu0 %v8299, 96
        %v8304 = vpop.permute.xlu0 %8303
        %8305 = vrot.lane.b32.xlu0 %v8300, 96
        %v8306 = vpop.permute.xlu0 %8305
        %8307 = vrot.lane.b32.xlu0 %v8301, 96
        %v8308 = vpop.permute.xlu0 %8307
        %8309 = vrot.lane.b32.xlu0 %v8302, 96
        %v8310 = vpop.permute.xlu0 %8309
        %v8311 = vsel %vm917, %v8304, %v8306
        %v8312 = vsel %vm917, %v8306, %v8308
        %v8313 = vsel %vm917, %v8308, %v8310
        %v8319 = vmul.f32 %v7064, %v8304
        %v8320 = vmul.f32 %v7272, %v8311
        %v8321 = vmul.f32 %v7568, %v8312
        %v8322 = vmul.f32 %v7864, %v8313
        %v8323 = vmul.f32 %v8160, %v8310
        %v8324 = vmul.f32 %v7069, %v8304
        %v8325 = vmul.f32 %v7273, %v8311
        %v8326 = vmul.f32 %v7569, %v8312
        %v8327 = vmul.f32 %v7865, %v8313
        %v8328 = vmul.f32 %v8161, %v8310
        %8339 = vrot.lane.b32.xlu0 %v8319, 96
        %v8340 = vpop.permute.xlu0 %8339
        %8341 = vrot.lane.b32.xlu0 %v8320, 96
        %v8342 = vpop.permute.xlu0 %8341
        %8343 = vrot.lane.b32.xlu0 %v8321, 96
        %v8344 = vpop.permute.xlu0 %8343
        %8345 = vrot.lane.b32.xlu0 %v8322, 96
        %v8346 = vpop.permute.xlu0 %8345
        %8347 = vrot.lane.b32.xlu0 %v8323, 96
        %v8348 = vpop.permute.xlu0 %8347
        %8349 = vrot.lane.b32.xlu0 %v8324, 96
        %v8350 = vpop.permute.xlu0 %8349
        %8351 = vrot.lane.b32.xlu0 %v8325, 96
        %v8352 = vpop.permute.xlu0 %8351
        %8353 = vrot.lane.b32.xlu0 %v8326, 96
        %v8354 = vpop.permute.xlu0 %8353
        %8355 = vrot.lane.b32.xlu0 %v8327, 96
        %v8356 = vpop.permute.xlu0 %8355
        %8357 = vrot.lane.b32.xlu0 %v8328, 96
        %v8358 = vpop.permute.xlu0 %8357
        %v8359 = vsel %vm917, %v8340, %v8342
        %v8360 = vsel %vm917, %v8342, %v8344
        %v8361 = vsel %vm917, %v8344, %v8346
        %v8362 = vsel %vm917, %v8346, %v8348
        %v8363 = vsel %vm917, %v8350, %v8352
        %v8364 = vsel %vm917, %v8352, %v8354
        %v8365 = vsel %vm917, %v8354, %v8356
        %v8366 = vsel %vm917, %v8356, %v8358
        %v8377 = vadd.f32 %v8286, %v8359
        %v8378 = vadd.f32 %v8287, %v8360
        %v8379 = vadd.f32 %v8288, %v8361
        %v8380 = vadd.f32 %v8289, %v8362
        %v8381 = vadd.f32 %v8290, %v8348
        %v8382 = vadd.f32 %v8291, %v8363
        %v8383 = vadd.f32 %v8292, %v8364
        %v8384 = vadd.f32 %v8293, %v8365
        %v8385 = vadd.f32 %v8294, %v8366
        %v8386 = vadd.f32 %v8295, %v8358
        %s8387 = scalar_lea.vmem [#allocation19], 66
        %v8388 = vld [vmem:[%s8387] ss:$8 sm:$0xf]
        %v8390 = vperm.slane %v8388, 0
        %v8391 = vperm.slane %v8388, 1
        %v8392 = vperm.slane %v8388, 2
        %v8393 = vperm.slane %v8388, 3
        %v8398 = vmul.f32 %v7272, %v8390
        %v8399 = vmul.f32 %v7568, %v8391
        %v8400 = vmul.f32 %v7864, %v8392
        %v8401 = vmul.f32 %v8160, %v8393
        %v8402 = vmul.f32 %v7273, %v8390
        %v8403 = vmul.f32 %v7569, %v8391
        %v8404 = vmul.f32 %v7865, %v8392
        %v8405 = vmul.f32 %v8161, %v8393
        %8414 = vrot.lane.b32.xlu0 %v8398, 64
        %v8415 = vpop.permute.xlu0 %8414
        %8416 = vrot.lane.b32.xlu0 %v8399, 64
        %v8417 = vpop.permute.xlu0 %8416
        %8418 = vrot.lane.b32.xlu0 %v8400, 64
        %v8419 = vpop.permute.xlu0 %8418
        %8420 = vrot.lane.b32.xlu0 %v8401, 64
        %v8421 = vpop.permute.xlu0 %8420
        %8422 = vrot.lane.b32.xlu0 %v8402, 64
        %v8423 = vpop.permute.xlu0 %8422
        %8424 = vrot.lane.b32.xlu0 %v8403, 64
        %v8425 = vpop.permute.xlu0 %8424
        %8426 = vrot.lane.b32.xlu0 %v8404, 64
        %v8427 = vpop.permute.xlu0 %8426
        %8428 = vrot.lane.b32.xlu0 %v8405, 64
        %v8429 = vpop.permute.xlu0 %8428
        %v8430 = vsel %vm863, %v8415, %v8417
        %v8431 = vsel %vm863, %v8417, %v8419
        %v8432 = vsel %vm863, %v8419, %v8421
        %v8433 = vsel %vm863, %v8423, %v8425
        %v8434 = vsel %vm863, %v8425, %v8427
        %v8435 = vsel %vm863, %v8427, %v8429
        %v8446 = vadd.f32 %v8377, %v8415
        %v8447 = vadd.f32 %v8378, %v8430
        %v8448 = vadd.f32 %v8379, %v8431
        %v8449 = vadd.f32 %v8380, %v8432
        %v8450 = vadd.f32 %v8381, %v8421
        %v8451 = vadd.f32 %v8382, %v8423
        %v8452 = vadd.f32 %v8383, %v8433
        %v8453 = vadd.f32 %v8384, %v8434
        %v8454 = vadd.f32 %v8385, %v8435
        %v8455 = vadd.f32 %v8386, %v8429
        %v8456 = vld [vmem:[#allocation2 + $0x98] sm:$0xff]
        %v8457 = vld [vmem:[#allocation2 + $0xe8] sm:$0xff]
        %s8458 = scalar_lea.vmem [#allocation19], 67
        %v8459 = vld [vmem:[%s8458] ss:$8 sm:$0xf]
        %v8461 = vperm.slane %v8459, 0
        %v8462 = vperm.slane %v8459, 1
        %v8463 = vperm.slane %v8459, 2
        %v8464 = vperm.slane %v8459, 3
        %8465 = vrot.lane.b32.xlu0 %v8461, 32
        %v8466 = vpop.permute.xlu0 %8465
        %8467 = vrot.lane.b32.xlu0 %v8462, 32
        %v8468 = vpop.permute.xlu0 %8467
        %8469 = vrot.lane.b32.xlu0 %v8463, 32
        %v8470 = vpop.permute.xlu0 %8469
        %8471 = vrot.lane.b32.xlu0 %v8464, 32
        %v8472 = vpop.permute.xlu0 %8471
        %v8473 = vsel %vm1144, %v8466, %v8468
        %v8474 = vsel %vm1144, %v8468, %v8470
        %v8475 = vsel %vm1144, %v8470, %v8472
        %v8481 = vmul.f32 %v7272, %v8466
        %v8482 = vmul.f32 %v7568, %v8473
        %v8483 = vmul.f32 %v7864, %v8474
        %v8484 = vmul.f32 %v8160, %v8475
        %v8485 = vmul.f32 %v8456, %v8472
        %v8486 = vmul.f32 %v7273, %v8466
        %v8487 = vmul.f32 %v7569, %v8473
        %v8488 = vmul.f32 %v7865, %v8474
        %v8489 = vmul.f32 %v8161, %v8475
        %v8490 = vmul.f32 %v8457, %v8472
        %8501 = vrot.lane.b32.xlu0 %v8481, 32
        %v8502 = vpop.permute.xlu0 %8501
        %8503 = vrot.lane.b32.xlu0 %v8482, 32
        %v8504 = vpop.permute.xlu0 %8503
        %8505 = vrot.lane.b32.xlu0 %v8483, 32
        %v8506 = vpop.permute.xlu0 %8505
        %8507 = vrot.lane.b32.xlu0 %v8484, 32
        %v8508 = vpop.permute.xlu0 %8507
        %8509 = vrot.lane.b32.xlu0 %v8485, 32
        %v8510 = vpop.permute.xlu0 %8509
        %8511 = vrot.lane.b32.xlu0 %v8486, 32
        %v8512 = vpop.permute.xlu0 %8511
        %8513 = vrot.lane.b32.xlu0 %v8487, 32
        %v8514 = vpop.permute.xlu0 %8513
        %8515 = vrot.lane.b32.xlu0 %v8488, 32
        %v8516 = vpop.permute.xlu0 %8515
        %8517 = vrot.lane.b32.xlu0 %v8489, 32
        %v8518 = vpop.permute.xlu0 %8517
        %8519 = vrot.lane.b32.xlu0 %v8490, 32
        %v8520 = vpop.permute.xlu0 %8519
        %v8521 = vsel %vm1144, %v8502, %v8504
        %v8522 = vsel %vm1144, %v8504, %v8506
        %v8523 = vsel %vm1144, %v8506, %v8508
        %v8524 = vsel %vm1144, %v8508, %v8510
        %v8525 = vsel %vm1144, %v8512, %v8514
        %v8526 = vsel %vm1144, %v8514, %v8516
        %v8527 = vsel %vm1144, %v8516, %v8518
        %v8528 = vsel %vm1144, %v8518, %v8520
        %v8539 = vadd.f32 %v8446, %v8502
        %v8540 = vadd.f32 %v8447, %v8521
        %v8541 = vadd.f32 %v8448, %v8522
        %v8542 = vadd.f32 %v8449, %v8523
        %v8543 = vadd.f32 %v8450, %v8524
        %v8544 = vadd.f32 %v8451, %v8512
        %v8545 = vadd.f32 %v8452, %v8525
        %v8546 = vadd.f32 %v8453, %v8526
        %v8547 = vadd.f32 %v8454, %v8527
        %v8548 = vadd.f32 %v8455, %v8528
        %s8549 = scalar_lea.vmem [#allocation19], 68
        %v8550 = vld [vmem:[%s8549] ss:$8 sm:$0xf]
        %v8552 = vperm.slane %v8550, 0
        %v8553 = vperm.slane %v8550, 1
        %v8554 = vperm.slane %v8550, 2
        %v8555 = vperm.slane %v8550, 3
        %8556 = vrot.lane.b32.xlu0 %v8552, 64
        %v8557 = vpop.permute.xlu0 %8556
        %8558 = vrot.lane.b32.xlu0 %v8553, 64
        %v8559 = vpop.permute.xlu0 %8558
        %8560 = vrot.lane.b32.xlu0 %v8554, 64
        %v8561 = vpop.permute.xlu0 %8560
        %8562 = vrot.lane.b32.xlu0 %v8555, 64
        %v8563 = vpop.permute.xlu0 %8562
        %v8564 = vsel %vm863, %v8557, %v8559
        %v8565 = vsel %vm863, %v8559, %v8561
        %v8566 = vsel %vm863, %v8561, %v8563
        %v8572 = vmul.f32 %v7272, %v8557
        %v8573 = vmul.f32 %v7568, %v8564
        %v8574 = vmul.f32 %v7864, %v8565
        %v8575 = vmul.f32 %v8160, %v8566
        %v8576 = vmul.f32 %v8456, %v8563
        %v8577 = vmul.f32 %v7273, %v8557
        %v8578 = vmul.f32 %v7569, %v8564
        %v8579 = vmul.f32 %v7865, %v8565
        %v8580 = vmul.f32 %v8161, %v8566
        %v8581 = vmul.f32 %v8457, %v8563
        %v8582 = vadd.f32 %v8539, %v8572
        %v8583 = vadd.f32 %v8540, %v8573
        %v8584 = vadd.f32 %v8541, %v8574
        %v8585 = vadd.f32 %v8542, %v8575
        %v8586 = vadd.f32 %v8543, %v8576
        %v8587 = vadd.f32 %v8544, %v8577
        %v8588 = vadd.f32 %v8545, %v8578
        %v8589 = vadd.f32 %v8546, %v8579
        %v8590 = vadd.f32 %v8547, %v8580
        %v8591 = vadd.f32 %v8548, %v8581
        %v8592 = vld [vmem:[#allocation21] sm:$0xf]
        %v8594 = vperm.slane %v8592, 0
        %v8595 = vperm.slane %v8592, 1
        %v8596 = vperm.slane %v8592, 2
        %v8597 = vperm.slane %v8592, 3
        %8598 = vrot.lane.b32.xlu0 %v8594, 64
        %v8599 = vpop.permute.xlu0 %8598
        %8600 = vrot.lane.b32.xlu0 %v8595, 64
        %v8601 = vpop.permute.xlu0 %8600
        %8602 = vrot.lane.b32.xlu0 %v8596, 64
        %v8603 = vpop.permute.xlu0 %8602
        %8604 = vrot.lane.b32.xlu0 %v8597, 64
        %v8605 = vpop.permute.xlu0 %8604
        %v8606 = vsel %vm863, %v8599, %v8601
        %v8607 = vsel %vm863, %v8601, %v8603
        %v8608 = vsel %vm863, %v8603, %v8605
        %v8614 = vadd.f32 %v8582, %v8599
        %v8615 = vadd.f32 %v8583, %v8606
        %v8616 = vadd.f32 %v8584, %v8607
        %v8617 = vadd.f32 %v8585, %v8608
        %v8618 = vadd.f32 %v8586, %v8605
        %v8619 = vadd.f32 %v8587, %v8599
        %v8620 = vadd.f32 %v8588, %v8606
        %v8621 = vadd.f32 %v8589, %v8607
        %v8622 = vadd.f32 %v8590, %v8608
        %v8623 = vadd.f32 %v8591, %v8605
        %8634 = vrot.lane.b32.xlu0 %v8614, 64
        %v8635 = vpop.permute.xlu0 %8634
        %8636 = vrot.lane.b32.xlu0 %v8615, 64
        %v8637 = vpop.permute.xlu0 %8636
        %8638 = vrot.lane.b32.xlu0 %v8616, 64
        %v8639 = vpop.permute.xlu0 %8638
        %8640 = vrot.lane.b32.xlu0 %v8617, 64
        %v8641 = vpop.permute.xlu0 %8640
        %8642 = vrot.lane.b32.xlu0 %v8618, 64
        %v8643 = vpop.permute.xlu0 %8642
        %8644 = vrot.lane.b32.xlu0 %v8619, 64
        %v8645 = vpop.permute.xlu0 %8644
        %8646 = vrot.lane.b32.xlu0 %v8620, 64
        %v8647 = vpop.permute.xlu0 %8646
        %8648 = vrot.lane.b32.xlu0 %v8621, 64
        %v8649 = vpop.permute.xlu0 %8648
        %8650 = vrot.lane.b32.xlu0 %v8622, 64
        %v8651 = vpop.permute.xlu0 %8650
        %8652 = vrot.lane.b32.xlu0 %v8623, 64
        %v8653 = vpop.permute.xlu0 %8652
        %v8654 = vsel %vm863, %v8635, %v8637
        %v8655 = vsel %vm863, %v8637, %v8639
        %v8656 = vsel %vm863, %v8639, %v8641
        %v8657 = vsel %vm863, %v8641, %v8643
        %v8658 = vsel %vm863, %v8645, %v8647
        %v8659 = vsel %vm863, %v8647, %v8649
        %v8660 = vsel %vm863, %v8649, %v8651
        %v8661 = vsel %vm863, %v8651, %v8653
        %8670 = vst [vmem:[#allocation3 + $0x40] sm:$0xff] %v8654
        %8671 = vst [vmem:[#allocation3 + $0x48] sm:$0xff] %v8655
        %8672 = vst [vmem:[#allocation3 + $0x50] sm:$0xff] %v8656
        %8673 = vst [vmem:[#allocation3 + $0x58] sm:$0xff] %v8657
        %8674 = vst [vmem:[#allocation3 + $0x60] sm:$0xff] %v8658
        %8675 = vst [vmem:[#allocation3 + $0x68] sm:$0xff] %v8659
        %8676 = vst [vmem:[#allocation3 + $0x70] sm:$0xff] %v8660
        %8677 = vst [vmem:[#allocation3 + $0x78] sm:$0xff] %v8661
        %v8678 = vld [vmem:[#allocation3] sm:$0xc0]
        %v8679 = vld [vmem:[#allocation3 + $0x8] sm:$0xc0]
        %v8680 = vld [vmem:[#allocation3 + $0x10] sm:$0xc0]
        %v8681 = vld [vmem:[#allocation3 + $0x18] sm:$0xc0]
        %v8682 = vld [vmem:[#allocation3 + $0x20] sm:$0xff]
        %v8683 = vld [vmem:[#allocation3 + $0x28] sm:$0xff]
        %v8684 = vld [vmem:[#allocation3 + $0x30] sm:$0xff]
        %v8685 = vld [vmem:[#allocation3 + $0x38] sm:$0xff]
        %v8686 = vld [vmem:[#allocation3 + $0x40] sm:$0x3f]
        %v8687 = vld [vmem:[#allocation3 + $0x48] sm:$0x3f]
        %v8688 = vld [vmem:[#allocation3 + $0x50] sm:$0x3f]
        %v8689 = vld [vmem:[#allocation3 + $0x58] sm:$0x3f]
        %v8690 = vld [vmem:[#allocation22] ss:$8 sm:$0xf]
        %v8692 = vperm.slane %v8690, 0
        %v8693 = vperm.slane %v8690, 1
        %v8694 = vperm.slane %v8690, 2
        %v8695 = vperm.slane %v8690, 3
        %v8700 = vmul.f32 %v8678, %v8692
        %v8701 = vmul.f32 %v8679, %v8693
        %v8702 = vmul.f32 %v8680, %v8694
        %v8703 = vmul.f32 %v8681, %v8695
        %v8704 = vmul.f32 %v8682, %v8692
        %v8705 = vmul.f32 %v8683, %v8693
        %v8706 = vmul.f32 %v8684, %v8694
        %v8707 = vmul.f32 %v8685, %v8695
        %v8708 = vmul.f32 %v8686, %v8692
        %v8709 = vmul.f32 %v8687, %v8693
        %v8710 = vmul.f32 %v8688, %v8694
        %v8711 = vmul.f32 %v8689, %v8695
        %v8712 = vadd.f32 %v8700, 0.0
        %v8713 = vadd.f32 %v8701, 0.0
        %v8714 = vadd.f32 %v8702, 0.0
        %v8715 = vadd.f32 %v8703, 0.0
        %v8716 = vadd.f32 %v8704, 0.0
        %v8717 = vadd.f32 %v8705, 0.0
        %v8718 = vadd.f32 %v8706, 0.0
        %v8719 = vadd.f32 %v8707, 0.0
        %v8720 = vadd.f32 %v8708, 0.0
        %v8721 = vadd.f32 %v8709, 0.0
        %v8722 = vadd.f32 %v8710, 0.0
        %v8723 = vadd.f32 %v8711, 0.0
        %v8724 = vld [vmem:[#allocation3] sm:$0x80]
        %v8725 = vld [vmem:[#allocation3 + $0x8] sm:$0x80]
        %v8726 = vld [vmem:[#allocation3 + $0x10] sm:$0x80]
        %v8727 = vld [vmem:[#allocation3 + $0x18] sm:$0x80]
        %v8728 = vld [vmem:[#allocation3 + $0x40] sm:$0x7f]
        %v8729 = vld [vmem:[#allocation3 + $0x48] sm:$0x7f]
        %v8730 = vld [vmem:[#allocation3 + $0x50] sm:$0x7f]
        %v8731 = vld [vmem:[#allocation3 + $0x58] sm:$0x7f]
        %s8732 = scalar_lea.vmem [#allocation22], 1
        %v8733 = vld [vmem:[%s8732] ss:$8 sm:$0xf]
        %v8735 = vperm.slane %v8733, 0
        %v8736 = vperm.slane %v8733, 1
        %v8737 = vperm.slane %v8733, 2
        %v8738 = vperm.slane %v8733, 3
        %v8743 = vmul.f32 %v8724, %v8735
        %v8744 = vmul.f32 %v8725, %v8736
        %v8745 = vmul.f32 %v8726, %v8737
        %v8746 = vmul.f32 %v8727, %v8738
        %v8747 = vmul.f32 %v8682, %v8735
        %v8748 = vmul.f32 %v8683, %v8736
        %v8749 = vmul.f32 %v8684, %v8737
        %v8750 = vmul.f32 %v8685, %v8738
        %v8751 = vmul.f32 %v8728, %v8735
        %v8752 = vmul.f32 %v8729, %v8736
        %v8753 = vmul.f32 %v8730, %v8737
        %v8754 = vmul.f32 %v8731, %v8738
        %v8767 = vrot.slane %v8743, 1
        %v8768 = vrot.slane %v8747, 1
        %v8769 = vsel %vm1371, %v8767, %v8768
        %v8770 = vrot.slane %v8744, 1
        %v8771 = vrot.slane %v8748, 1
        %v8772 = vsel %vm1371, %v8770, %v8771
        %v8773 = vrot.slane %v8745, 1
        %v8774 = vrot.slane %v8749, 1
        %v8775 = vsel %vm1371, %v8773, %v8774
        %v8776 = vrot.slane %v8746, 1
        %v8777 = vrot.slane %v8750, 1
        %v8778 = vsel %vm1371, %v8776, %v8777
        %v8779 = vrot.slane %v8751, 1
        %v8780 = vsel %vm1371, %v8768, %v8779
        %v8781 = vrot.slane %v8752, 1
        %v8782 = vsel %vm1371, %v8771, %v8781
        %v8783 = vrot.slane %v8753, 1
        %v8784 = vsel %vm1371, %v8774, %v8783
        %v8785 = vrot.slane %v8754, 1
        %v8786 = vsel %vm1371, %v8777, %v8785
        %v8799 = vadd.f32 %v8712, %v8769
        %v8800 = vadd.f32 %v8713, %v8772
        %v8801 = vadd.f32 %v8714, %v8775
        %v8802 = vadd.f32 %v8715, %v8778
        %v8803 = vadd.f32 %v8716, %v8780
        %v8804 = vadd.f32 %v8717, %v8782
        %v8805 = vadd.f32 %v8718, %v8784
        %v8806 = vadd.f32 %v8719, %v8786
        %v8807 = vadd.f32 %v8720, %v8779
        %v8808 = vadd.f32 %v8721, %v8781
        %v8809 = vadd.f32 %v8722, %v8783
        %v8810 = vadd.f32 %v8723, %v8785
        %v8811 = vld [vmem:[#allocation3 + $0x40] sm:$0xff]
        %v8812 = vld [vmem:[#allocation3 + $0x48] sm:$0xff]
        %v8813 = vld [vmem:[#allocation3 + $0x50] sm:$0xff]
        %v8814 = vld [vmem:[#allocation3 + $0x58] sm:$0xff]
        %s8815 = scalar_lea.vmem [#allocation22], 2
        %v8816 = vld [vmem:[%s8815] ss:$8 sm:$0xf]
        %v8818 = vperm.slane %v8816, 0
        %v8819 = vperm.slane %v8816, 1
        %v8820 = vperm.slane %v8816, 2
        %v8821 = vperm.slane %v8816, 3
        %v8826 = vmul.f32 %v8682, %v8818
        %v8827 = vmul.f32 %v8683, %v8819
        %v8828 = vmul.f32 %v8684, %v8820
        %v8829 = vmul.f32 %v8685, %v8821
        %v8830 = vmul.f32 %v8811, %v8818
        %v8831 = vmul.f32 %v8812, %v8819
        %v8832 = vmul.f32 %v8813, %v8820
        %v8833 = vmul.f32 %v8814, %v8821
        %v8842 = vrot.slane %v8826, 2
        %v8843 = vrot.slane %v8827, 2
        %v8844 = vrot.slane %v8828, 2
        %v8845 = vrot.slane %v8829, 2
        %v8846 = vrot.slane %v8830, 2
        %v8847 = vsel %vm2003, %v8842, %v8846
        %v8848 = vrot.slane %v8831, 2
        %v8849 = vsel %vm2003, %v8843, %v8848
        %v8850 = vrot.slane %v8832, 2
        %v8851 = vsel %vm2003, %v8844, %v8850
        %v8852 = vrot.slane %v8833, 2
        %v8853 = vsel %vm2003, %v8845, %v8852
        %v8866 = vadd.f32 %v8799, %v8842
        %v8867 = vadd.f32 %v8800, %v8843
        %v8868 = vadd.f32 %v8801, %v8844
        %v8869 = vadd.f32 %v8802, %v8845
        %v8870 = vadd.f32 %v8803, %v8847
        %v8871 = vadd.f32 %v8804, %v8849
        %v8872 = vadd.f32 %v8805, %v8851
        %v8873 = vadd.f32 %v8806, %v8853
        %v8874 = vadd.f32 %v8807, %v8846
        %v8875 = vadd.f32 %v8808, %v8848
        %v8876 = vadd.f32 %v8809, %v8850
        %v8877 = vadd.f32 %v8810, %v8852
        %v8878 = vld [vmem:[#allocation3 + $0x20] sm:$0xfe]
        %v8879 = vld [vmem:[#allocation3 + $0x28] sm:$0xfe]
        %v8880 = vld [vmem:[#allocation3 + $0x30] sm:$0xfe]
        %v8881 = vld [vmem:[#allocation3 + $0x38] sm:$0xfe]
        %v8882 = vld [vmem:[#allocation3 + $0x60] sm:$0x1]
        %v8883 = vld [vmem:[#allocation3 + $0x68] sm:$0x1]
        %v8884 = vld [vmem:[#allocation3 + $0x70] sm:$0x1]
        %v8885 = vld [vmem:[#allocation3 + $0x78] sm:$0x1]
        %s8886 = scalar_lea.vmem [#allocation22], 3
        %v8887 = vld [vmem:[%s8886] ss:$8 sm:$0xf]
        %v8889 = vperm.slane %v8887, 0
        %v8890 = vperm.slane %v8887, 1
        %v8891 = vperm.slane %v8887, 2
        %v8892 = vperm.slane %v8887, 3
        %v8897 = vmul.f32 %v8878, %v8889
        %v8898 = vmul.f32 %v8879, %v8890
        %v8899 = vmul.f32 %v8880, %v8891
        %v8900 = vmul.f32 %v8881, %v8892
        %v8901 = vmul.f32 %v8811, %v8889
        %v8902 = vmul.f32 %v8812, %v8890
        %v8903 = vmul.f32 %v8813, %v8891
        %v8904 = vmul.f32 %v8814, %v8892
        %v8905 = vmul.f32 %v8882, %v8889
        %v8906 = vmul.f32 %v8883, %v8890
        %v8907 = vmul.f32 %v8884, %v8891
        %v8908 = vmul.f32 %v8885, %v8892
        %v8921 = vrot.slane %v8897, 3
        %v8922 = vrot.slane %v8898, 3
        %v8923 = vrot.slane %v8899, 3
        %v8924 = vrot.slane %v8900, 3
        %v8925 = vrot.slane %v8901, 3
        %v8926 = vsel %vm2563, %v8921, %v8925
        %v8927 = vrot.slane %v8902, 3
        %v8928 = vsel %vm2563, %v8922, %v8927
        %v8929 = vrot.slane %v8903, 3
        %v8930 = vsel %vm2563, %v8923, %v8929
        %v8931 = vrot.slane %v8904, 3
        %v8932 = vsel %vm2563, %v8924, %v8931
        %v8933 = vrot.slane %v8905, 3
        %v8934 = vsel %vm2563, %v8925, %v8933
        %v8935 = vrot.slane %v8906, 3
        %v8936 = vsel %vm2563, %v8927, %v8935
        %v8937 = vrot.slane %v8907, 3
        %v8938 = vsel %vm2563, %v8929, %v8937
        %v8939 = vrot.slane %v8908, 3
        %v8940 = vsel %vm2563, %v8931, %v8939
        %v8953 = vadd.f32 %v8866, %v8921
        %v8954 = vadd.f32 %v8867, %v8922
        %v8955 = vadd.f32 %v8868, %v8923
        %v8956 = vadd.f32 %v8869, %v8924
        %v8957 = vadd.f32 %v8870, %v8926
        %v8958 = vadd.f32 %v8871, %v8928
        %v8959 = vadd.f32 %v8872, %v8930
        %v8960 = vadd.f32 %v8873, %v8932
        %v8961 = vadd.f32 %v8874, %v8934
        %v8962 = vadd.f32 %v8875, %v8936
        %v8963 = vadd.f32 %v8876, %v8938
        %v8964 = vadd.f32 %v8877, %v8940
        %v8965 = vld [vmem:[#allocation3 + $0x20] sm:$0xfc]
        %v8966 = vld [vmem:[#allocation3 + $0x28] sm:$0xfc]
        %v8967 = vld [vmem:[#allocation3 + $0x30] sm:$0xfc]
        %v8968 = vld [vmem:[#allocation3 + $0x38] sm:$0xfc]
        %v8969 = vld [vmem:[#allocation3 + $0x60] sm:$0x3]
        %v8970 = vld [vmem:[#allocation3 + $0x68] sm:$0x3]
        %v8971 = vld [vmem:[#allocation3 + $0x70] sm:$0x3]
        %v8972 = vld [vmem:[#allocation3 + $0x78] sm:$0x3]
        %s8973 = scalar_lea.vmem [#allocation22], 4
        %v8974 = vld [vmem:[%s8973] ss:$8 sm:$0xf]
        %v8976 = vperm.slane %v8974, 0
        %v8977 = vperm.slane %v8974, 1
        %v8978 = vperm.slane %v8974, 2
        %v8979 = vperm.slane %v8974, 3
        %v8984 = vmul.f32 %v8965, %v8976
        %v8985 = vmul.f32 %v8966, %v8977
        %v8986 = vmul.f32 %v8967, %v8978
        %v8987 = vmul.f32 %v8968, %v8979
        %v8988 = vmul.f32 %v8811, %v8976
        %v8989 = vmul.f32 %v8812, %v8977
        %v8990 = vmul.f32 %v8813, %v8978
        %v8991 = vmul.f32 %v8814, %v8979
        %v8992 = vmul.f32 %v8969, %v8976
        %v8993 = vmul.f32 %v8970, %v8977
        %v8994 = vmul.f32 %v8971, %v8978
        %v8995 = vmul.f32 %v8972, %v8979
        %v9008 = vrot.slane %v8984, 4
        %v9009 = vrot.slane %v8985, 4
        %v9010 = vrot.slane %v8986, 4
        %v9011 = vrot.slane %v8987, 4
        %v9012 = vrot.slane %v8988, 4
        %v9013 = vsel %vm3210, %v9008, %v9012
        %v9014 = vrot.slane %v8989, 4
        %v9015 = vsel %vm3210, %v9009, %v9014
        %v9016 = vrot.slane %v8990, 4
        %v9017 = vsel %vm3210, %v9010, %v9016
        %v9018 = vrot.slane %v8991, 4
        %v9019 = vsel %vm3210, %v9011, %v9018
        %v9020 = vrot.slane %v8992, 4
        %v9021 = vsel %vm3210, %v9012, %v9020
        %v9022 = vrot.slane %v8993, 4
        %v9023 = vsel %vm3210, %v9014, %v9022
        %v9024 = vrot.slane %v8994, 4
        %v9025 = vsel %vm3210, %v9016, %v9024
        %v9026 = vrot.slane %v8995, 4
        %v9027 = vsel %vm3210, %v9018, %v9026
        %v9040 = vadd.f32 %v8953, %v9008
        %v9041 = vadd.f32 %v8954, %v9009
        %v9042 = vadd.f32 %v8955, %v9010
        %v9043 = vadd.f32 %v8956, %v9011
        %v9044 = vadd.f32 %v8957, %v9013
        %v9045 = vadd.f32 %v8958, %v9015
        %v9046 = vadd.f32 %v8959, %v9017
        %v9047 = vadd.f32 %v8960, %v9019
        %v9048 = vadd.f32 %v8961, %v9021
        %v9049 = vadd.f32 %v8962, %v9023
        %v9050 = vadd.f32 %v8963, %v9025
        %v9051 = vadd.f32 %v8964, %v9027
        %v9052 = vld [vmem:[#allocation3 + $0x20] sm:$0xf8]
        %v9053 = vld [vmem:[#allocation3 + $0x28] sm:$0xf8]
        %v9054 = vld [vmem:[#allocation3 + $0x30] sm:$0xf8]
        %v9055 = vld [vmem:[#allocation3 + $0x38] sm:$0xf8]
        %v9056 = vld [vmem:[#allocation3 + $0x60] sm:$0x7]
        %v9057 = vld [vmem:[#allocation3 + $0x68] sm:$0x7]
        %v9058 = vld [vmem:[#allocation3 + $0x70] sm:$0x7]
        %v9059 = vld [vmem:[#allocation3 + $0x78] sm:$0x7]
        %s9060 = scalar_lea.vmem [#allocation22], 5
        %v9061 = vld [vmem:[%s9060] ss:$8 sm:$0xf]
        %v9063 = vperm.slane %v9061, 0
        %v9064 = vperm.slane %v9061, 1
        %v9065 = vperm.slane %v9061, 2
        %v9066 = vperm.slane %v9061, 3
        %v9071 = vmul.f32 %v9052, %v9063
        %v9072 = vmul.f32 %v9053, %v9064
        %v9073 = vmul.f32 %v9054, %v9065
        %v9074 = vmul.f32 %v9055, %v9066
        %v9075 = vmul.f32 %v8811, %v9063
        %v9076 = vmul.f32 %v8812, %v9064
        %v9077 = vmul.f32 %v8813, %v9065
        %v9078 = vmul.f32 %v8814, %v9066
        %v9079 = vmul.f32 %v9056, %v9063
        %v9080 = vmul.f32 %v9057, %v9064
        %v9081 = vmul.f32 %v9058, %v9065
        %v9082 = vmul.f32 %v9059, %v9066
        %v9095 = vrot.slane %v9071, 5
        %v9096 = vrot.slane %v9072, 5
        %v9097 = vrot.slane %v9073, 5
        %v9098 = vrot.slane %v9074, 5
        %v9099 = vrot.slane %v9075, 5
        %v9100 = vsel %vm4949, %v9095, %v9099
        %v9101 = vrot.slane %v9076, 5
        %v9102 = vsel %vm4949, %v9096, %v9101
        %v9103 = vrot.slane %v9077, 5
        %v9104 = vsel %vm4949, %v9097, %v9103
        %v9105 = vrot.slane %v9078, 5
        %v9106 = vsel %vm4949, %v9098, %v9105
        %v9107 = vrot.slane %v9079, 5
        %v9108 = vsel %vm4949, %v9099, %v9107
        %v9109 = vrot.slane %v9080, 5
        %v9110 = vsel %vm4949, %v9101, %v9109
        %v9111 = vrot.slane %v9081, 5
        %v9112 = vsel %vm4949, %v9103, %v9111
        %v9113 = vrot.slane %v9082, 5
        %v9114 = vsel %vm4949, %v9105, %v9113
        %v9127 = vadd.f32 %v9040, %v9095
        %v9128 = vadd.f32 %v9041, %v9096
        %v9129 = vadd.f32 %v9042, %v9097
        %v9130 = vadd.f32 %v9043, %v9098
        %v9131 = vadd.f32 %v9044, %v9100
        %v9132 = vadd.f32 %v9045, %v9102
        %v9133 = vadd.f32 %v9046, %v9104
        %v9134 = vadd.f32 %v9047, %v9106
        %v9135 = vadd.f32 %v9048, %v9108
        %v9136 = vadd.f32 %v9049, %v9110
        %v9137 = vadd.f32 %v9050, %v9112
        %v9138 = vadd.f32 %v9051, %v9114
        %v9139 = vld [vmem:[#allocation3 + $0x20] sm:$0xf0]
        %v9140 = vld [vmem:[#allocation3 + $0x28] sm:$0xf0]
        %v9141 = vld [vmem:[#allocation3 + $0x30] sm:$0xf0]
        %v9142 = vld [vmem:[#allocation3 + $0x38] sm:$0xf0]
        %v9143 = vld [vmem:[#allocation3 + $0x60] sm:$0xf]
        %v9144 = vld [vmem:[#allocation3 + $0x68] sm:$0xf]
        %v9145 = vld [vmem:[#allocation3 + $0x70] sm:$0xf]
        %v9146 = vld [vmem:[#allocation3 + $0x78] sm:$0xf]
        %s9147 = scalar_lea.vmem [#allocation22], 6
        %v9148 = vld [vmem:[%s9147] ss:$8 sm:$0xf]
        %v9150 = vperm.slane %v9148, 0
        %v9151 = vperm.slane %v9148, 1
        %v9152 = vperm.slane %v9148, 2
        %v9153 = vperm.slane %v9148, 3
        %v9158 = vmul.f32 %v9139, %v9150
        %v9159 = vmul.f32 %v9140, %v9151
        %v9160 = vmul.f32 %v9141, %v9152
        %v9161 = vmul.f32 %v9142, %v9153
        %v9162 = vmul.f32 %v8811, %v9150
        %v9163 = vmul.f32 %v8812, %v9151
        %v9164 = vmul.f32 %v8813, %v9152
        %v9165 = vmul.f32 %v8814, %v9153
        %v9166 = vmul.f32 %v9143, %v9150
        %v9167 = vmul.f32 %v9144, %v9151
        %v9168 = vmul.f32 %v9145, %v9152
        %v9169 = vmul.f32 %v9146, %v9153
        %v9182 = vrot.slane %v9158, 6
        %v9183 = vrot.slane %v9159, 6
        %v9184 = vrot.slane %v9160, 6
        %v9185 = vrot.slane %v9161, 6
        %v9186 = vrot.slane %v9162, 6
        %v9187 = vsel %vm3846, %v9182, %v9186
        %v9188 = vrot.slane %v9163, 6
        %v9189 = vsel %vm3846, %v9183, %v9188
        %v9190 = vrot.slane %v9164, 6
        %v9191 = vsel %vm3846, %v9184, %v9190
        %v9192 = vrot.slane %v9165, 6
        %v9193 = vsel %vm3846, %v9185, %v9192
        %v9194 = vrot.slane %v9166, 6
        %v9195 = vsel %vm3846, %v9186, %v9194
        %v9196 = vrot.slane %v9167, 6
        %v9197 = vsel %vm3846, %v9188, %v9196
        %v9198 = vrot.slane %v9168, 6
        %v9199 = vsel %vm3846, %v9190, %v9198
        %v9200 = vrot.slane %v9169, 6
        %v9201 = vsel %vm3846, %v9192, %v9200
        %v9214 = vadd.f32 %v9127, %v9182
        %v9215 = vadd.f32 %v9128, %v9183
        %v9216 = vadd.f32 %v9129, %v9184
        %v9217 = vadd.f32 %v9130, %v9185
        %v9218 = vadd.f32 %v9131, %v9187
        %v9219 = vadd.f32 %v9132, %v9189
        %v9220 = vadd.f32 %v9133, %v9191
        %v9221 = vadd.f32 %v9134, %v9193
        %v9222 = vadd.f32 %v9135, %v9195
        %v9223 = vadd.f32 %v9136, %v9197
        %v9224 = vadd.f32 %v9137, %v9199
        %v9225 = vadd.f32 %v9138, %v9201
        %v9226 = vld [vmem:[#allocation3 + $0x20] sm:$0xe0]
        %v9227 = vld [vmem:[#allocation3 + $0x28] sm:$0xe0]
        %v9228 = vld [vmem:[#allocation3 + $0x30] sm:$0xe0]
        %v9229 = vld [vmem:[#allocation3 + $0x38] sm:$0xe0]
        %v9230 = vld [vmem:[#allocation3 + $0x60] sm:$0x1f]
        %v9231 = vld [vmem:[#allocation3 + $0x68] sm:$0x1f]
        %v9232 = vld [vmem:[#allocation3 + $0x70] sm:$0x1f]
        %v9233 = vld [vmem:[#allocation3 + $0x78] sm:$0x1f]
        %s9234 = scalar_lea.vmem [#allocation22], 7
        %v9235 = vld [vmem:[%s9234] ss:$8 sm:$0xf]
        %v9237 = vperm.slane %v9235, 0
        %v9238 = vperm.slane %v9235, 1
        %v9239 = vperm.slane %v9235, 2
        %v9240 = vperm.slane %v9235, 3
        %v9245 = vmul.f32 %v9226, %v9237
        %v9246 = vmul.f32 %v9227, %v9238
        %v9247 = vmul.f32 %v9228, %v9239
        %v9248 = vmul.f32 %v9229, %v9240
        %v9249 = vmul.f32 %v8811, %v9237
        %v9250 = vmul.f32 %v8812, %v9238
        %v9251 = vmul.f32 %v8813, %v9239
        %v9252 = vmul.f32 %v8814, %v9240
        %v9253 = vmul.f32 %v9230, %v9237
        %v9254 = vmul.f32 %v9231, %v9238
        %v9255 = vmul.f32 %v9232, %v9239
        %v9256 = vmul.f32 %v9233, %v9240
        %v9269 = vrot.slane %v9245, 7
        %v9270 = vrot.slane %v9246, 7
        %v9271 = vrot.slane %v9247, 7
        %v9272 = vrot.slane %v9248, 7
        %v9273 = vrot.slane %v9249, 7
        %v9274 = vsel %vm5115, %v9269, %v9273
        %v9275 = vrot.slane %v9250, 7
        %v9276 = vsel %vm5115, %v9270, %v9275
        %v9277 = vrot.slane %v9251, 7
        %v9278 = vsel %vm5115, %v9271, %v9277
        %v9279 = vrot.slane %v9252, 7
        %v9280 = vsel %vm5115, %v9272, %v9279
        %v9281 = vrot.slane %v9253, 7
        %v9282 = vsel %vm5115, %v9273, %v9281
        %v9283 = vrot.slane %v9254, 7
        %v9284 = vsel %vm5115, %v9275, %v9283
        %v9285 = vrot.slane %v9255, 7
        %v9286 = vsel %vm5115, %v9277, %v9285
        %v9287 = vrot.slane %v9256, 7
        %v9288 = vsel %vm5115, %v9279, %v9287
        %v9301 = vadd.f32 %v9214, %v9269
        %v9302 = vadd.f32 %v9215, %v9270
        %v9303 = vadd.f32 %v9216, %v9271
        %v9304 = vadd.f32 %v9217, %v9272
        %v9305 = vadd.f32 %v9218, %v9274
        %v9306 = vadd.f32 %v9219, %v9276
        %v9307 = vadd.f32 %v9220, %v9278
        %v9308 = vadd.f32 %v9221, %v9280
        %v9309 = vadd.f32 %v9222, %v9282
        %v9310 = vadd.f32 %v9223, %v9284
        %v9311 = vadd.f32 %v9224, %v9286
        %v9312 = vadd.f32 %v9225, %v9288
        %v9313 = vld [vmem:[#allocation3 + $0x20] sm:$0xc0]
        %v9314 = vld [vmem:[#allocation3 + $0x28] sm:$0xc0]
        %v9315 = vld [vmem:[#allocation3 + $0x30] sm:$0xc0]
        %v9316 = vld [vmem:[#allocation3 + $0x38] sm:$0xc0]
        %v9317 = vld [vmem:[#allocation3 + $0x60] sm:$0x3f]
        %v9318 = vld [vmem:[#allocation3 + $0x68] sm:$0x3f]
        %v9319 = vld [vmem:[#allocation3 + $0x70] sm:$0x3f]
        %v9320 = vld [vmem:[#allocation3 + $0x78] sm:$0x3f]
        %s9321 = scalar_lea.vmem [#allocation22], 32
        %v9322 = vld [vmem:[%s9321] ss:$8 sm:$0xf]
        %v9324 = vperm.slane %v9322, 0
        %v9325 = vperm.slane %v9322, 1
        %v9326 = vperm.slane %v9322, 2
        %v9327 = vperm.slane %v9322, 3
        %v9332 = vmul.f32 %v9313, %v9324
        %v9333 = vmul.f32 %v9314, %v9325
        %v9334 = vmul.f32 %v9315, %v9326
        %v9335 = vmul.f32 %v9316, %v9327
        %v9336 = vmul.f32 %v8811, %v9324
        %v9337 = vmul.f32 %v8812, %v9325
        %v9338 = vmul.f32 %v8813, %v9326
        %v9339 = vmul.f32 %v8814, %v9327
        %v9340 = vmul.f32 %v9317, %v9324
        %v9341 = vmul.f32 %v9318, %v9325
        %v9342 = vmul.f32 %v9319, %v9326
        %v9343 = vmul.f32 %v9320, %v9327
        %v9344 = vadd.f32 %v9301, %v9332
        %v9345 = vadd.f32 %v9302, %v9333
        %v9346 = vadd.f32 %v9303, %v9334
        %v9347 = vadd.f32 %v9304, %v9335
        %v9348 = vadd.f32 %v9305, %v9336
        %v9349 = vadd.f32 %v9306, %v9337
        %v9350 = vadd.f32 %v9307, %v9338
        %v9351 = vadd.f32 %v9308, %v9339
        %v9352 = vadd.f32 %v9309, %v9340
        %v9353 = vadd.f32 %v9310, %v9341
        %v9354 = vadd.f32 %v9311, %v9342
        %v9355 = vadd.f32 %v9312, %v9343
        %v9356 = vld [vmem:[#allocation3 + $0x20] sm:$0x80]
        %v9357 = vld [vmem:[#allocation3 + $0x28] sm:$0x80]
        %v9358 = vld [vmem:[#allocation3 + $0x30] sm:$0x80]
        %v9359 = vld [vmem:[#allocation3 + $0x38] sm:$0x80]
        %v9360 = vld [vmem:[#allocation3 + $0x60] sm:$0x7f]
        %v9361 = vld [vmem:[#allocation3 + $0x68] sm:$0x7f]
        %v9362 = vld [vmem:[#allocation3 + $0x70] sm:$0x7f]
        %v9363 = vld [vmem:[#allocation3 + $0x78] sm:$0x7f]
        %s9364 = scalar_lea.vmem [#allocation22], 33
        %v9365 = vld [vmem:[%s9364] ss:$8 sm:$0xf]
        %v9367 = vperm.slane %v9365, 0
        %v9368 = vperm.slane %v9365, 1
        %v9369 = vperm.slane %v9365, 2
        %v9370 = vperm.slane %v9365, 3
        %v9375 = vmul.f32 %v9356, %v9367
        %v9376 = vmul.f32 %v9357, %v9368
        %v9377 = vmul.f32 %v9358, %v9369
        %v9378 = vmul.f32 %v9359, %v9370
        %v9379 = vmul.f32 %v8811, %v9367
        %v9380 = vmul.f32 %v8812, %v9368
        %v9381 = vmul.f32 %v8813, %v9369
        %v9382 = vmul.f32 %v8814, %v9370
        %v9383 = vmul.f32 %v9360, %v9367
        %v9384 = vmul.f32 %v9361, %v9368
        %v9385 = vmul.f32 %v9362, %v9369
        %v9386 = vmul.f32 %v9363, %v9370
        %v9399 = vrot.slane %v9375, 1
        %v9400 = vrot.slane %v9379, 1
        %v9401 = vsel %vm1371, %v9399, %v9400
        %v9402 = vrot.slane %v9376, 1
        %v9403 = vrot.slane %v9380, 1
        %v9404 = vsel %vm1371, %v9402, %v9403
        %v9405 = vrot.slane %v9377, 1
        %v9406 = vrot.slane %v9381, 1
        %v9407 = vsel %vm1371, %v9405, %v9406
        %v9408 = vrot.slane %v9378, 1
        %v9409 = vrot.slane %v9382, 1
        %v9410 = vsel %vm1371, %v9408, %v9409
        %v9411 = vrot.slane %v9383, 1
        %v9412 = vsel %vm1371, %v9400, %v9411
        %v9413 = vrot.slane %v9384, 1
        %v9414 = vsel %vm1371, %v9403, %v9413
        %v9415 = vrot.slane %v9385, 1
        %v9416 = vsel %vm1371, %v9406, %v9415
        %v9417 = vrot.slane %v9386, 1
        %v9418 = vsel %vm1371, %v9409, %v9417
        %v9431 = vadd.f32 %v9344, %v9401
        %v9432 = vadd.f32 %v9345, %v9404
        %v9433 = vadd.f32 %v9346, %v9407
        %v9434 = vadd.f32 %v9347, %v9410
        %v9435 = vadd.f32 %v9348, %v9412
        %v9436 = vadd.f32 %v9349, %v9414
        %v9437 = vadd.f32 %v9350, %v9416
        %v9438 = vadd.f32 %v9351, %v9418
        %v9439 = vadd.f32 %v9352, %v9411
        %v9440 = vadd.f32 %v9353, %v9413
        %v9441 = vadd.f32 %v9354, %v9415
        %v9442 = vadd.f32 %v9355, %v9417
        %v9443 = vld [vmem:[#allocation3 + $0x60] sm:$0xff]
        %v9444 = vld [vmem:[#allocation3 + $0x68] sm:$0xff]
        %v9445 = vld [vmem:[#allocation3 + $0x70] sm:$0xff]
        %v9446 = vld [vmem:[#allocation3 + $0x78] sm:$0xff]
        %s9447 = scalar_lea.vmem [#allocation22], 34
        %v9448 = vld [vmem:[%s9447] ss:$8 sm:$0xf]
        %v9450 = vperm.slane %v9448, 0
        %v9451 = vperm.slane %v9448, 1
        %v9452 = vperm.slane %v9448, 2
        %v9453 = vperm.slane %v9448, 3
        %v9458 = vmul.f32 %v8811, %v9450
        %v9459 = vmul.f32 %v8812, %v9451
        %v9460 = vmul.f32 %v8813, %v9452
        %v9461 = vmul.f32 %v8814, %v9453
        %v9462 = vmul.f32 %v9443, %v9450
        %v9463 = vmul.f32 %v9444, %v9451
        %v9464 = vmul.f32 %v9445, %v9452
        %v9465 = vmul.f32 %v9446, %v9453
        %v9474 = vrot.slane %v9458, 2
        %v9475 = vrot.slane %v9459, 2
        %v9476 = vrot.slane %v9460, 2
        %v9477 = vrot.slane %v9461, 2
        %v9478 = vrot.slane %v9462, 2
        %v9479 = vsel %vm2003, %v9474, %v9478
        %v9480 = vrot.slane %v9463, 2
        %v9481 = vsel %vm2003, %v9475, %v9480
        %v9482 = vrot.slane %v9464, 2
        %v9483 = vsel %vm2003, %v9476, %v9482
        %v9484 = vrot.slane %v9465, 2
        %v9485 = vsel %vm2003, %v9477, %v9484
        %v9498 = vadd.f32 %v9431, %v9474
        %v9499 = vadd.f32 %v9432, %v9475
        %v9500 = vadd.f32 %v9433, %v9476
        %v9501 = vadd.f32 %v9434, %v9477
        %v9502 = vadd.f32 %v9435, %v9479
        %v9503 = vadd.f32 %v9436, %v9481
        %v9504 = vadd.f32 %v9437, %v9483
        %v9505 = vadd.f32 %v9438, %v9485
        %v9506 = vadd.f32 %v9439, %v9478
        %v9507 = vadd.f32 %v9440, %v9480
        %v9508 = vadd.f32 %v9441, %v9482
        %v9509 = vadd.f32 %v9442, %v9484
        %v9510 = vld [vmem:[#allocation3 + $0x40] sm:$0xfe]
        %v9511 = vld [vmem:[#allocation3 + $0x48] sm:$0xfe]
        %v9512 = vld [vmem:[#allocation3 + $0x50] sm:$0xfe]
        %v9513 = vld [vmem:[#allocation3 + $0x58] sm:$0xfe]
        %v9514 = vld [vmem:[#allocation3 + $0x80] sm:$0x1]
        %v9515 = vld [vmem:[#allocation3 + $0x88] sm:$0x1]
        %v9516 = vld [vmem:[#allocation3 + $0x90] sm:$0x1]
        %v9517 = vld [vmem:[#allocation3 + $0x98] sm:$0x1]
        %s9518 = scalar_lea.vmem [#allocation22], 35
        %v9519 = vld [vmem:[%s9518] ss:$8 sm:$0xf]
        %v9521 = vperm.slane %v9519, 0
        %v9522 = vperm.slane %v9519, 1
        %v9523 = vperm.slane %v9519, 2
        %v9524 = vperm.slane %v9519, 3
        %v9529 = vmul.f32 %v9510, %v9521
        %v9530 = vmul.f32 %v9511, %v9522
        %v9531 = vmul.f32 %v9512, %v9523
        %v9532 = vmul.f32 %v9513, %v9524
        %v9533 = vmul.f32 %v9443, %v9521
        %v9534 = vmul.f32 %v9444, %v9522
        %v9535 = vmul.f32 %v9445, %v9523
        %v9536 = vmul.f32 %v9446, %v9524
        %v9537 = vmul.f32 %v9514, %v9521
        %v9538 = vmul.f32 %v9515, %v9522
        %v9539 = vmul.f32 %v9516, %v9523
        %v9540 = vmul.f32 %v9517, %v9524
        %v9553 = vrot.slane %v9529, 3
        %v9554 = vrot.slane %v9530, 3
        %v9555 = vrot.slane %v9531, 3
        %v9556 = vrot.slane %v9532, 3
        %v9557 = vrot.slane %v9533, 3
        %v9558 = vsel %vm2563, %v9553, %v9557
        %v9559 = vrot.slane %v9534, 3
        %v9560 = vsel %vm2563, %v9554, %v9559
        %v9561 = vrot.slane %v9535, 3
        %v9562 = vsel %vm2563, %v9555, %v9561
        %v9563 = vrot.slane %v9536, 3
        %v9564 = vsel %vm2563, %v9556, %v9563
        %v9565 = vrot.slane %v9537, 3
        %v9566 = vsel %vm2563, %v9557, %v9565
        %v9567 = vrot.slane %v9538, 3
        %v9568 = vsel %vm2563, %v9559, %v9567
        %v9569 = vrot.slane %v9539, 3
        %v9570 = vsel %vm2563, %v9561, %v9569
        %v9571 = vrot.slane %v9540, 3
        %v9572 = vsel %vm2563, %v9563, %v9571
        %v9585 = vadd.f32 %v9498, %v9553
        %v9586 = vadd.f32 %v9499, %v9554
        %v9587 = vadd.f32 %v9500, %v9555
        %v9588 = vadd.f32 %v9501, %v9556
        %v9589 = vadd.f32 %v9502, %v9558
        %v9590 = vadd.f32 %v9503, %v9560
        %v9591 = vadd.f32 %v9504, %v9562
        %v9592 = vadd.f32 %v9505, %v9564
        %v9593 = vadd.f32 %v9506, %v9566
        %v9594 = vadd.f32 %v9507, %v9568
        %v9595 = vadd.f32 %v9508, %v9570
        %v9596 = vadd.f32 %v9509, %v9572
        %v9597 = vld [vmem:[#allocation3 + $0x40] sm:$0xfc]
        %v9598 = vld [vmem:[#allocation3 + $0x48] sm:$0xfc]
        %v9599 = vld [vmem:[#allocation3 + $0x50] sm:$0xfc]
        %v9600 = vld [vmem:[#allocation3 + $0x58] sm:$0xfc]
        %v9601 = vld [vmem:[#allocation3 + $0x80] sm:$0x3]
        %v9602 = vld [vmem:[#allocation3 + $0x88] sm:$0x3]
        %v9603 = vld [vmem:[#allocation3 + $0x90] sm:$0x3]
        %v9604 = vld [vmem:[#allocation3 + $0x98] sm:$0x3]
        %s9605 = scalar_lea.vmem [#allocation22], 36
        %v9606 = vld [vmem:[%s9605] ss:$8 sm:$0xf]
        %v9608 = vperm.slane %v9606, 0
        %v9609 = vperm.slane %v9606, 1
        %v9610 = vperm.slane %v9606, 2
        %v9611 = vperm.slane %v9606, 3
        %v9616 = vmul.f32 %v9597, %v9608
        %v9617 = vmul.f32 %v9598, %v9609
        %v9618 = vmul.f32 %v9599, %v9610
        %v9619 = vmul.f32 %v9600, %v9611
        %v9620 = vmul.f32 %v9443, %v9608
        %v9621 = vmul.f32 %v9444, %v9609
        %v9622 = vmul.f32 %v9445, %v9610
        %v9623 = vmul.f32 %v9446, %v9611
        %v9624 = vmul.f32 %v9601, %v9608
        %v9625 = vmul.f32 %v9602, %v9609
        %v9626 = vmul.f32 %v9603, %v9610
        %v9627 = vmul.f32 %v9604, %v9611
        %v9640 = vrot.slane %v9616, 4
        %v9641 = vrot.slane %v9617, 4
        %v9642 = vrot.slane %v9618, 4
        %v9643 = vrot.slane %v9619, 4
        %v9644 = vrot.slane %v9620, 4
        %v9645 = vsel %vm3210, %v9640, %v9644
        %v9646 = vrot.slane %v9621, 4
        %v9647 = vsel %vm3210, %v9641, %v9646
        %v9648 = vrot.slane %v9622, 4
        %v9649 = vsel %vm3210, %v9642, %v9648
        %v9650 = vrot.slane %v9623, 4
        %v9651 = vsel %vm3210, %v9643, %v9650
        %v9652 = vrot.slane %v9624, 4
        %v9653 = vsel %vm3210, %v9644, %v9652
        %v9654 = vrot.slane %v9625, 4
        %v9655 = vsel %vm3210, %v9646, %v9654
        %v9656 = vrot.slane %v9626, 4
        %v9657 = vsel %vm3210, %v9648, %v9656
        %v9658 = vrot.slane %v9627, 4
        %v9659 = vsel %vm3210, %v9650, %v9658
        %v9672 = vadd.f32 %v9585, %v9640
        %v9673 = vadd.f32 %v9586, %v9641
        %v9674 = vadd.f32 %v9587, %v9642
        %v9675 = vadd.f32 %v9588, %v9643
        %v9676 = vadd.f32 %v9589, %v9645
        %v9677 = vadd.f32 %v9590, %v9647
        %v9678 = vadd.f32 %v9591, %v9649
        %v9679 = vadd.f32 %v9592, %v9651
        %v9680 = vadd.f32 %v9593, %v9653
        %v9681 = vadd.f32 %v9594, %v9655
        %v9682 = vadd.f32 %v9595, %v9657
        %v9683 = vadd.f32 %v9596, %v9659
        %v9684 = vld [vmem:[#allocation3 + $0x40] sm:$0xf8]
        %v9685 = vld [vmem:[#allocation3 + $0x48] sm:$0xf8]
        %v9686 = vld [vmem:[#allocation3 + $0x50] sm:$0xf8]
        %v9687 = vld [vmem:[#allocation3 + $0x58] sm:$0xf8]
        %v9688 = vld [vmem:[#allocation3 + $0x80] sm:$0x7]
        %v9689 = vld [vmem:[#allocation3 + $0x88] sm:$0x7]
        %v9690 = vld [vmem:[#allocation3 + $0x90] sm:$0x7]
        %v9691 = vld [vmem:[#allocation3 + $0x98] sm:$0x7]
        %s9692 = scalar_lea.vmem [#allocation22], 37
        %v9693 = vld [vmem:[%s9692] ss:$8 sm:$0xf]
        %v9695 = vperm.slane %v9693, 0
        %v9696 = vperm.slane %v9693, 1
        %v9697 = vperm.slane %v9693, 2
        %v9698 = vperm.slane %v9693, 3
        %v9703 = vmul.f32 %v9684, %v9695
        %v9704 = vmul.f32 %v9685, %v9696
        %v9705 = vmul.f32 %v9686, %v9697
        %v9706 = vmul.f32 %v9687, %v9698
        %v9707 = vmul.f32 %v9443, %v9695
        %v9708 = vmul.f32 %v9444, %v9696
        %v9709 = vmul.f32 %v9445, %v9697
        %v9710 = vmul.f32 %v9446, %v9698
        %v9711 = vmul.f32 %v9688, %v9695
        %v9712 = vmul.f32 %v9689, %v9696
        %v9713 = vmul.f32 %v9690, %v9697
        %v9714 = vmul.f32 %v9691, %v9698
        %v9727 = vrot.slane %v9703, 5
        %v9728 = vrot.slane %v9704, 5
        %v9729 = vrot.slane %v9705, 5
        %v9730 = vrot.slane %v9706, 5
        %v9731 = vrot.slane %v9707, 5
        %v9732 = vsel %vm4949, %v9727, %v9731
        %v9733 = vrot.slane %v9708, 5
        %v9734 = vsel %vm4949, %v9728, %v9733
        %v9735 = vrot.slane %v9709, 5
        %v9736 = vsel %vm4949, %v9729, %v9735
        %v9737 = vrot.slane %v9710, 5
        %v9738 = vsel %vm4949, %v9730, %v9737
        %v9739 = vrot.slane %v9711, 5
        %v9740 = vsel %vm4949, %v9731, %v9739
        %v9741 = vrot.slane %v9712, 5
        %v9742 = vsel %vm4949, %v9733, %v9741
        %v9743 = vrot.slane %v9713, 5
        %v9744 = vsel %vm4949, %v9735, %v9743
        %v9745 = vrot.slane %v9714, 5
        %v9746 = vsel %vm4949, %v9737, %v9745
        %v9759 = vadd.f32 %v9672, %v9727
        %v9760 = vadd.f32 %v9673, %v9728
        %v9761 = vadd.f32 %v9674, %v9729
        %v9762 = vadd.f32 %v9675, %v9730
        %v9763 = vadd.f32 %v9676, %v9732
        %v9764 = vadd.f32 %v9677, %v9734
        %v9765 = vadd.f32 %v9678, %v9736
        %v9766 = vadd.f32 %v9679, %v9738
        %v9767 = vadd.f32 %v9680, %v9740
        %v9768 = vadd.f32 %v9681, %v9742
        %v9769 = vadd.f32 %v9682, %v9744
        %v9770 = vadd.f32 %v9683, %v9746
        %v9771 = vld [vmem:[#allocation3 + $0x40] sm:$0xf0]
        %v9772 = vld [vmem:[#allocation3 + $0x48] sm:$0xf0]
        %v9773 = vld [vmem:[#allocation3 + $0x50] sm:$0xf0]
        %v9774 = vld [vmem:[#allocation3 + $0x58] sm:$0xf0]
        %v9775 = vld [vmem:[#allocation3 + $0x80] sm:$0xf]
        %v9776 = vld [vmem:[#allocation3 + $0x88] sm:$0xf]
        %v9777 = vld [vmem:[#allocation3 + $0x90] sm:$0xf]
        %v9778 = vld [vmem:[#allocation3 + $0x98] sm:$0xf]
        %s9779 = scalar_lea.vmem [#allocation22], 38
        %v9780 = vld [vmem:[%s9779] ss:$8 sm:$0xf]
        %v9782 = vperm.slane %v9780, 0
        %v9783 = vperm.slane %v9780, 1
        %v9784 = vperm.slane %v9780, 2
        %v9785 = vperm.slane %v9780, 3
        %v9790 = vmul.f32 %v9771, %v9782
        %v9791 = vmul.f32 %v9772, %v9783
        %v9792 = vmul.f32 %v9773, %v9784
        %v9793 = vmul.f32 %v9774, %v9785
        %v9794 = vmul.f32 %v9443, %v9782
        %v9795 = vmul.f32 %v9444, %v9783
        %v9796 = vmul.f32 %v9445, %v9784
        %v9797 = vmul.f32 %v9446, %v9785
        %v9798 = vmul.f32 %v9775, %v9782
        %v9799 = vmul.f32 %v9776, %v9783
        %v9800 = vmul.f32 %v9777, %v9784
        %v9801 = vmul.f32 %v9778, %v9785
        %v9814 = vrot.slane %v9790, 6
        %v9815 = vrot.slane %v9791, 6
        %v9816 = vrot.slane %v9792, 6
        %v9817 = vrot.slane %v9793, 6
        %v9818 = vrot.slane %v9794, 6
        %v9819 = vsel %vm3846, %v9814, %v9818
        %v9820 = vrot.slane %v9795, 6
        %v9821 = vsel %vm3846, %v9815, %v9820
        %v9822 = vrot.slane %v9796, 6
        %v9823 = vsel %vm3846, %v9816, %v9822
        %v9824 = vrot.slane %v9797, 6
        %v9825 = vsel %vm3846, %v9817, %v9824
        %v9826 = vrot.slane %v9798, 6
        %v9827 = vsel %vm3846, %v9818, %v9826
        %v9828 = vrot.slane %v9799, 6
        %v9829 = vsel %vm3846, %v9820, %v9828
        %v9830 = vrot.slane %v9800, 6
        %v9831 = vsel %vm3846, %v9822, %v9830
        %v9832 = vrot.slane %v9801, 6
        %v9833 = vsel %vm3846, %v9824, %v9832
        %v9846 = vadd.f32 %v9759, %v9814
        %v9847 = vadd.f32 %v9760, %v9815
        %v9848 = vadd.f32 %v9761, %v9816
        %v9849 = vadd.f32 %v9762, %v9817
        %v9850 = vadd.f32 %v9763, %v9819
        %v9851 = vadd.f32 %v9764, %v9821
        %v9852 = vadd.f32 %v9765, %v9823
        %v9853 = vadd.f32 %v9766, %v9825
        %v9854 = vadd.f32 %v9767, %v9827
        %v9855 = vadd.f32 %v9768, %v9829
        %v9856 = vadd.f32 %v9769, %v9831
        %v9857 = vadd.f32 %v9770, %v9833
        %v9858 = vld [vmem:[#allocation3 + $0x40] sm:$0xe0]
        %v9859 = vld [vmem:[#allocation3 + $0x48] sm:$0xe0]
        %v9860 = vld [vmem:[#allocation3 + $0x50] sm:$0xe0]
        %v9861 = vld [vmem:[#allocation3 + $0x58] sm:$0xe0]
        %v9862 = vld [vmem:[#allocation3 + $0x80] sm:$0x1f]
        %v9863 = vld [vmem:[#allocation3 + $0x88] sm:$0x1f]
        %v9864 = vld [vmem:[#allocation3 + $0x90] sm:$0x1f]
        %v9865 = vld [vmem:[#allocation3 + $0x98] sm:$0x1f]
        %s9866 = scalar_lea.vmem [#allocation22], 39
        %v9867 = vld [vmem:[%s9866] ss:$8 sm:$0xf]
        %v9869 = vperm.slane %v9867, 0
        %v9870 = vperm.slane %v9867, 1
        %v9871 = vperm.slane %v9867, 2
        %v9872 = vperm.slane %v9867, 3
        %v9877 = vmul.f32 %v9858, %v9869
        %v9878 = vmul.f32 %v9859, %v9870
        %v9879 = vmul.f32 %v9860, %v9871
        %v9880 = vmul.f32 %v9861, %v9872
        %v9881 = vmul.f32 %v9443, %v9869
        %v9882 = vmul.f32 %v9444, %v9870
        %v9883 = vmul.f32 %v9445, %v9871
        %v9884 = vmul.f32 %v9446, %v9872
        %v9885 = vmul.f32 %v9862, %v9869
        %v9886 = vmul.f32 %v9863, %v9870
        %v9887 = vmul.f32 %v9864, %v9871
        %v9888 = vmul.f32 %v9865, %v9872
        %v9901 = vrot.slane %v9877, 7
        %v9902 = vrot.slane %v9878, 7
        %v9903 = vrot.slane %v9879, 7
        %v9904 = vrot.slane %v9880, 7
        %v9905 = vrot.slane %v9881, 7
        %v9906 = vsel %vm5115, %v9901, %v9905
        %v9907 = vrot.slane %v9882, 7
        %v9908 = vsel %vm5115, %v9902, %v9907
        %v9909 = vrot.slane %v9883, 7
        %v9910 = vsel %vm5115, %v9903, %v9909
        %v9911 = vrot.slane %v9884, 7
        %v9912 = vsel %vm5115, %v9904, %v9911
        %v9913 = vrot.slane %v9885, 7
        %v9914 = vsel %vm5115, %v9905, %v9913
        %v9915 = vrot.slane %v9886, 7
        %v9916 = vsel %vm5115, %v9907, %v9915
        %v9917 = vrot.slane %v9887, 7
        %v9918 = vsel %vm5115, %v9909, %v9917
        %v9919 = vrot.slane %v9888, 7
        %v9920 = vsel %vm5115, %v9911, %v9919
        %v9933 = vadd.f32 %v9846, %v9901
        %v9934 = vadd.f32 %v9847, %v9902
        %v9935 = vadd.f32 %v9848, %v9903
        %v9936 = vadd.f32 %v9849, %v9904
        %v9937 = vadd.f32 %v9850, %v9906
        %v9938 = vadd.f32 %v9851, %v9908
        %v9939 = vadd.f32 %v9852, %v9910
        %v9940 = vadd.f32 %v9853, %v9912
        %v9941 = vadd.f32 %v9854, %v9914
        %v9942 = vadd.f32 %v9855, %v9916
        %v9943 = vadd.f32 %v9856, %v9918
        %v9944 = vadd.f32 %v9857, %v9920
        %v9945 = vld [vmem:[#allocation3 + $0x40] sm:$0xc0]
        %v9946 = vld [vmem:[#allocation3 + $0x48] sm:$0xc0]
        %v9947 = vld [vmem:[#allocation3 + $0x50] sm:$0xc0]
        %v9948 = vld [vmem:[#allocation3 + $0x58] sm:$0xc0]
        %v9949 = vld [vmem:[#allocation3 + $0x80] sm:$0x3f]
        %v9950 = vld [vmem:[#allocation3 + $0x88] sm:$0x3f]
        %v9951 = vld [vmem:[#allocation3 + $0x90] sm:$0x3f]
        %v9952 = vld [vmem:[#allocation3 + $0x98] sm:$0x3f]
        %s9953 = scalar_lea.vmem [#allocation22], 64
        %v9954 = vld [vmem:[%s9953] ss:$8 sm:$0xf]
        %v9956 = vperm.slane %v9954, 0
        %v9957 = vperm.slane %v9954, 1
        %v9958 = vperm.slane %v9954, 2
        %v9959 = vperm.slane %v9954, 3
        %v9964 = vmul.f32 %v9945, %v9956
        %v9965 = vmul.f32 %v9946, %v9957
        %v9966 = vmul.f32 %v9947, %v9958
        %v9967 = vmul.f32 %v9948, %v9959
        %v9968 = vmul.f32 %v9443, %v9956
        %v9969 = vmul.f32 %v9444, %v9957
        %v9970 = vmul.f32 %v9445, %v9958
        %v9971 = vmul.f32 %v9446, %v9959
        %v9972 = vmul.f32 %v9949, %v9956
        %v9973 = vmul.f32 %v9950, %v9957
        %v9974 = vmul.f32 %v9951, %v9958
        %v9975 = vmul.f32 %v9952, %v9959
        %v9976 = vadd.f32 %v9933, %v9964
        %v9977 = vadd.f32 %v9934, %v9965
        %v9978 = vadd.f32 %v9935, %v9966
        %v9979 = vadd.f32 %v9936, %v9967
        %v9980 = vadd.f32 %v9937, %v9968
        %v9981 = vadd.f32 %v9938, %v9969
        %v9982 = vadd.f32 %v9939, %v9970
        %v9983 = vadd.f32 %v9940, %v9971
        %v9984 = vadd.f32 %v9941, %v9972
        %v9985 = vadd.f32 %v9942, %v9973
        %v9986 = vadd.f32 %v9943, %v9974
        %v9987 = vadd.f32 %v9944, %v9975
        %v9988 = vld [vmem:[#allocation3 + $0x40] sm:$0x80]
        %v9989 = vld [vmem:[#allocation3 + $0x48] sm:$0x80]
        %v9990 = vld [vmem:[#allocation3 + $0x50] sm:$0x80]
        %v9991 = vld [vmem:[#allocation3 + $0x58] sm:$0x80]
        %v9992 = vld [vmem:[#allocation3 + $0x80] sm:$0x7f]
        %v9993 = vld [vmem:[#allocation3 + $0x88] sm:$0x7f]
        %v9994 = vld [vmem:[#allocation3 + $0x90] sm:$0x7f]
        %v9995 = vld [vmem:[#allocation3 + $0x98] sm:$0x7f]
        %s9996 = scalar_lea.vmem [#allocation22], 65
        %v9997 = vld [vmem:[%s9996] ss:$8 sm:$0xf]
        %v9999 = vperm.slane %v9997, 0
        %v10000 = vperm.slane %v9997, 1
        %v10001 = vperm.slane %v9997, 2
        %v10002 = vperm.slane %v9997, 3
        %v10007 = vmul.f32 %v9988, %v9999
        %v10008 = vmul.f32 %v9989, %v10000
        %v10009 = vmul.f32 %v9990, %v10001
        %v10010 = vmul.f32 %v9991, %v10002
        %v10011 = vmul.f32 %v9443, %v9999
        %v10012 = vmul.f32 %v9444, %v10000
        %v10013 = vmul.f32 %v9445, %v10001
        %v10014 = vmul.f32 %v9446, %v10002
        %v10015 = vmul.f32 %v9992, %v9999
        %v10016 = vmul.f32 %v9993, %v10000
        %v10017 = vmul.f32 %v9994, %v10001
        %v10018 = vmul.f32 %v9995, %v10002
        %v10031 = vrot.slane %v10007, 1
        %v10032 = vrot.slane %v10011, 1
        %v10033 = vsel %vm1371, %v10031, %v10032
        %v10034 = vrot.slane %v10008, 1
        %v10035 = vrot.slane %v10012, 1
        %v10036 = vsel %vm1371, %v10034, %v10035
        %v10037 = vrot.slane %v10009, 1
        %v10038 = vrot.slane %v10013, 1
        %v10039 = vsel %vm1371, %v10037, %v10038
        %v10040 = vrot.slane %v10010, 1
        %v10041 = vrot.slane %v10014, 1
        %v10042 = vsel %vm1371, %v10040, %v10041
        %v10043 = vrot.slane %v10015, 1
        %v10044 = vsel %vm1371, %v10032, %v10043
        %v10045 = vrot.slane %v10016, 1
        %v10046 = vsel %vm1371, %v10035, %v10045
        %v10047 = vrot.slane %v10017, 1
        %v10048 = vsel %vm1371, %v10038, %v10047
        %v10049 = vrot.slane %v10018, 1
        %v10050 = vsel %vm1371, %v10041, %v10049
        %v10063 = vadd.f32 %v9976, %v10033
        %v10064 = vadd.f32 %v9977, %v10036
        %v10065 = vadd.f32 %v9978, %v10039
        %v10066 = vadd.f32 %v9979, %v10042
        %v10067 = vadd.f32 %v9980, %v10044
        %v10068 = vadd.f32 %v9981, %v10046
        %v10069 = vadd.f32 %v9982, %v10048
        %v10070 = vadd.f32 %v9983, %v10050
        %v10071 = vadd.f32 %v9984, %v10043
        %v10072 = vadd.f32 %v9985, %v10045
        %v10073 = vadd.f32 %v9986, %v10047
        %v10074 = vadd.f32 %v9987, %v10049
        %v10075 = vld [vmem:[#allocation3 + $0x80] sm:$0xff]
        %v10076 = vld [vmem:[#allocation3 + $0x88] sm:$0xff]
        %v10077 = vld [vmem:[#allocation3 + $0x90] sm:$0xff]
        %v10078 = vld [vmem:[#allocation3 + $0x98] sm:$0xff]
        %s10079 = scalar_lea.vmem [#allocation22], 66
        %v10080 = vld [vmem:[%s10079] ss:$8 sm:$0xf]
        %v10082 = vperm.slane %v10080, 0
        %v10083 = vperm.slane %v10080, 1
        %v10084 = vperm.slane %v10080, 2
        %v10085 = vperm.slane %v10080, 3
        %v10090 = vmul.f32 %v9443, %v10082
        %v10091 = vmul.f32 %v9444, %v10083
        %v10092 = vmul.f32 %v9445, %v10084
        %v10093 = vmul.f32 %v9446, %v10085
        %v10094 = vmul.f32 %v10075, %v10082
        %v10095 = vmul.f32 %v10076, %v10083
        %v10096 = vmul.f32 %v10077, %v10084
        %v10097 = vmul.f32 %v10078, %v10085
        %v10106 = vrot.slane %v10090, 2
        %v10107 = vrot.slane %v10091, 2
        %v10108 = vrot.slane %v10092, 2
        %v10109 = vrot.slane %v10093, 2
        %v10110 = vrot.slane %v10094, 2
        %v10111 = vsel %vm2003, %v10106, %v10110
        %v10112 = vrot.slane %v10095, 2
        %v10113 = vsel %vm2003, %v10107, %v10112
        %v10114 = vrot.slane %v10096, 2
        %v10115 = vsel %vm2003, %v10108, %v10114
        %v10116 = vrot.slane %v10097, 2
        %v10117 = vsel %vm2003, %v10109, %v10116
        %v10130 = vadd.f32 %v10063, %v10106
        %v10131 = vadd.f32 %v10064, %v10107
        %v10132 = vadd.f32 %v10065, %v10108
        %v10133 = vadd.f32 %v10066, %v10109
        %v10134 = vadd.f32 %v10067, %v10111
        %v10135 = vadd.f32 %v10068, %v10113
        %v10136 = vadd.f32 %v10069, %v10115
        %v10137 = vadd.f32 %v10070, %v10117
        %v10138 = vadd.f32 %v10071, %v10110
        %v10139 = vadd.f32 %v10072, %v10112
        %v10140 = vadd.f32 %v10073, %v10114
        %v10141 = vadd.f32 %v10074, %v10116
        %v10142 = vld [vmem:[#allocation3 + $0x60] sm:$0xfe]
        %v10143 = vld [vmem:[#allocation3 + $0x68] sm:$0xfe]
        %v10144 = vld [vmem:[#allocation3 + $0x70] sm:$0xfe]
        %v10145 = vld [vmem:[#allocation3 + $0x78] sm:$0xfe]
        %v10146 = vld [vmem:[#allocation3 + $0x80] sm:$0xff]
        %v10147 = vld [vmem:[#allocation3 + $0x88] sm:$0xff]
        %v10148 = vld [vmem:[#allocation3 + $0x90] sm:$0xff]
        %v10149 = vld [vmem:[#allocation3 + $0x98] sm:$0xff]
        %v10150 = vld [vmem:[#allocation3 + $0xa0] sm:$0x1]
        %v10151 = vld [vmem:[#allocation3 + $0xa8] sm:$0x1]
        %v10152 = vld [vmem:[#allocation3 + $0xb0] sm:$0x1]
        %v10153 = vld [vmem:[#allocation3 + $0xb8] sm:$0x1]
        %s10154 = scalar_lea.vmem [#allocation22], 67
        %v10155 = vld [vmem:[%s10154] ss:$8 sm:$0xf]
        %v10157 = vperm.slane %v10155, 0
        %v10158 = vperm.slane %v10155, 1
        %v10159 = vperm.slane %v10155, 2
        %v10160 = vperm.slane %v10155, 3
        %v10165 = vmul.f32 %v10142, %v10157
        %v10166 = vmul.f32 %v10143, %v10158
        %v10167 = vmul.f32 %v10144, %v10159
        %v10168 = vmul.f32 %v10145, %v10160
        %v10169 = vmul.f32 %v10146, %v10157
        %v10170 = vmul.f32 %v10147, %v10158
        %v10171 = vmul.f32 %v10148, %v10159
        %v10172 = vmul.f32 %v10149, %v10160
        %v10173 = vmul.f32 %v10150, %v10157
        %v10174 = vmul.f32 %v10151, %v10158
        %v10175 = vmul.f32 %v10152, %v10159
        %v10176 = vmul.f32 %v10153, %v10160
        %v10189 = vrot.slane %v10165, 3
        %v10190 = vrot.slane %v10166, 3
        %v10191 = vrot.slane %v10167, 3
        %v10192 = vrot.slane %v10168, 3
        %v10193 = vrot.slane %v10169, 3
        %v10194 = vsel %vm2563, %v10189, %v10193
        %v10195 = vrot.slane %v10170, 3
        %v10196 = vsel %vm2563, %v10190, %v10195
        %v10197 = vrot.slane %v10171, 3
        %v10198 = vsel %vm2563, %v10191, %v10197
        %v10199 = vrot.slane %v10172, 3
        %v10200 = vsel %vm2563, %v10192, %v10199
        %v10201 = vrot.slane %v10173, 3
        %v10202 = vsel %vm2563, %v10193, %v10201
        %v10203 = vrot.slane %v10174, 3
        %v10204 = vsel %vm2563, %v10195, %v10203
        %v10205 = vrot.slane %v10175, 3
        %v10206 = vsel %vm2563, %v10197, %v10205
        %v10207 = vrot.slane %v10176, 3
        %v10208 = vsel %vm2563, %v10199, %v10207
        %v10221 = vadd.f32 %v10130, %v10189
        %v10222 = vadd.f32 %v10131, %v10190
        %v10223 = vadd.f32 %v10132, %v10191
        %v10224 = vadd.f32 %v10133, %v10192
        %v10225 = vadd.f32 %v10134, %v10194
        %v10226 = vadd.f32 %v10135, %v10196
        %v10227 = vadd.f32 %v10136, %v10198
        %v10228 = vadd.f32 %v10137, %v10200
        %v10229 = vadd.f32 %v10138, %v10202
        %v10230 = vadd.f32 %v10139, %v10204
        %v10231 = vadd.f32 %v10140, %v10206
        %v10232 = vadd.f32 %v10141, %v10208
        %v10233 = vld [vmem:[#allocation3 + $0x60] sm:$0xfc]
        %v10234 = vld [vmem:[#allocation3 + $0x68] sm:$0xfc]
        %v10235 = vld [vmem:[#allocation3 + $0x70] sm:$0xfc]
        %v10236 = vld [vmem:[#allocation3 + $0x78] sm:$0xfc]
        %v10237 = vld [vmem:[#allocation3 + $0xa0] sm:$0x3]
        %v10238 = vld [vmem:[#allocation3 + $0xa8] sm:$0x3]
        %v10239 = vld [vmem:[#allocation3 + $0xb0] sm:$0x3]
        %v10240 = vld [vmem:[#allocation3 + $0xb8] sm:$0x3]
        %s10241 = scalar_lea.vmem [#allocation22], 68
        %v10242 = vld [vmem:[%s10241] ss:$8 sm:$0xf]
        %v10244 = vperm.slane %v10242, 0
        %v10245 = vperm.slane %v10242, 1
        %v10246 = vperm.slane %v10242, 2
        %v10247 = vperm.slane %v10242, 3
        %v10252 = vmul.f32 %v10233, %v10244
        %v10253 = vmul.f32 %v10234, %v10245
        %v10254 = vmul.f32 %v10235, %v10246
        %v10255 = vmul.f32 %v10236, %v10247
        %v10256 = vmul.f32 %v10146, %v10244
        %v10257 = vmul.f32 %v10147, %v10245
        %v10258 = vmul.f32 %v10148, %v10246
        %v10259 = vmul.f32 %v10149, %v10247
        %v10260 = vmul.f32 %v10237, %v10244
        %v10261 = vmul.f32 %v10238, %v10245
        %v10262 = vmul.f32 %v10239, %v10246
        %v10263 = vmul.f32 %v10240, %v10247
        %v10276 = vrot.slane %v10252, 4
        %v10277 = vrot.slane %v10253, 4
        %v10278 = vrot.slane %v10254, 4
        %v10279 = vrot.slane %v10255, 4
        %v10280 = vrot.slane %v10256, 4
        %v10281 = vsel %vm3210, %v10276, %v10280
        %v10282 = vrot.slane %v10257, 4
        %v10283 = vsel %vm3210, %v10277, %v10282
        %v10284 = vrot.slane %v10258, 4
        %v10285 = vsel %vm3210, %v10278, %v10284
        %v10286 = vrot.slane %v10259, 4
        %v10287 = vsel %vm3210, %v10279, %v10286
        %v10288 = vrot.slane %v10260, 4
        %v10289 = vsel %vm3210, %v10280, %v10288
        %v10290 = vrot.slane %v10261, 4
        %v10291 = vsel %vm3210, %v10282, %v10290
        %v10292 = vrot.slane %v10262, 4
        %v10293 = vsel %vm3210, %v10284, %v10292
        %v10294 = vrot.slane %v10263, 4
        %v10295 = vsel %vm3210, %v10286, %v10294
        %v10308 = vadd.f32 %v10221, %v10276
        %v10309 = vadd.f32 %v10222, %v10277
        %v10310 = vadd.f32 %v10223, %v10278
        %v10311 = vadd.f32 %v10224, %v10279
        %v10312 = vadd.f32 %v10225, %v10281
        %v10313 = vadd.f32 %v10226, %v10283
        %v10314 = vadd.f32 %v10227, %v10285
        %v10315 = vadd.f32 %v10228, %v10287
        %v10316 = vadd.f32 %v10229, %v10289
        %v10317 = vadd.f32 %v10230, %v10291
        %v10318 = vadd.f32 %v10231, %v10293
        %v10319 = vadd.f32 %v10232, %v10295
        %v10320 = vld [vmem:[%s14] sm:$0xf]
        %v10322 = vperm.slane %v10320, 0
        %v10323 = vperm.slane %v10320, 1
        %v10324 = vperm.slane %v10320, 2
        %v10325 = vperm.slane %v10320, 3
        %v10330 = vadd.f32 %v10308, %v10322
        %v10331 = vadd.f32 %v10309, %v10323
        %v10332 = vadd.f32 %v10310, %v10324
        %v10333 = vadd.f32 %v10311, %v10325
        %v10334 = vadd.f32 %v10312, %v10322
        %v10335 = vadd.f32 %v10313, %v10323
        %v10336 = vadd.f32 %v10314, %v10324
        %v10337 = vadd.f32 %v10315, %v10325
        %v10338 = vadd.f32 %v10316, %v10322
        %v10339 = vadd.f32 %v10317, %v10323
        %v10340 = vadd.f32 %v10318, %v10324
        %v10341 = vadd.f32 %v10319, %v10325
        %10354 = vrot.lane.b32.xlu0 %v10330, 64
        %v10355 = vpop.permute.xlu0 %10354
        %10356 = vrot.lane.b32.xlu0 %v10331, 64
        %v10357 = vpop.permute.xlu0 %10356
        %10358 = vrot.lane.b32.xlu0 %v10332, 64
        %v10359 = vpop.permute.xlu0 %10358
        %10360 = vrot.lane.b32.xlu0 %v10333, 64
        %v10361 = vpop.permute.xlu0 %10360
        %10362 = vrot.lane.b32.xlu0 %v10334, 64
        %v10363 = vpop.permute.xlu0 %10362
        %10364 = vrot.lane.b32.xlu0 %v10335, 64
        %v10365 = vpop.permute.xlu0 %10364
        %10366 = vrot.lane.b32.xlu0 %v10336, 64
        %v10367 = vpop.permute.xlu0 %10366
        %10368 = vrot.lane.b32.xlu0 %v10337, 64
        %v10369 = vpop.permute.xlu0 %10368
        %10370 = vrot.lane.b32.xlu0 %v10338, 64
        %v10371 = vpop.permute.xlu0 %10370
        %10372 = vrot.lane.b32.xlu0 %v10339, 64
        %v10373 = vpop.permute.xlu0 %10372
        %10374 = vrot.lane.b32.xlu0 %v10340, 64
        %v10375 = vpop.permute.xlu0 %10374
        %10376 = vrot.lane.b32.xlu0 %v10341, 64
        %v10377 = vpop.permute.xlu0 %10376
        %v10378 = vsel %vm863, %v10355, %v10357
        %v10379 = vsel %vm863, %v10357, %v10359
        %v10380 = vsel %vm863, %v10359, %v10361
        %v10381 = vsel %vm863, %v10363, %v10365
        %v10382 = vsel %vm863, %v10365, %v10367
        %v10383 = vsel %vm863, %v10367, %v10369
        %v10384 = vsel %vm863, %v10371, %v10373
        %v10385 = vsel %vm863, %v10373, %v10375
        %v10386 = vsel %vm863, %v10375, %v10377
        %v10402 = vadd.f32 %v7045, %v10355
        %v10403 = vadd.f32 %v7046, %v10378
        %v10404 = vadd.f32 %v7047, %v10379
        %v10405 = vadd.f32 %v7048, %v10380
        %v10406 = vadd.f32 %v7049, %v10361
        %v10407 = vadd.f32 %v7050, %v10363
        %v10408 = vadd.f32 %v7051, %v10381
        %v10409 = vadd.f32 %v7052, %v10382
        %v10410 = vadd.f32 %v7053, %v10383
        %v10411 = vadd.f32 %v7054, %v10369
        %v10412 = vadd.f32 %v7055, %v10371
        %v10413 = vadd.f32 %v7056, %v10384
        %v10414 = vadd.f32 %v7057, %v10385
        %v10415 = vadd.f32 %v7058, %v10386
        %v10416 = vadd.f32 %v7059, %v10377
        %v10417 = vld [vmem:[#allocation24] sm:$0xff]
        %v10418 = vld [vmem:[#allocation24 + $0x8] sm:$0xff]
        %v10419 = vld [vmem:[#allocation24 + $0x10] sm:$0xff]
        %v10420 = vld [vmem:[#allocation24 + $0x18] sm:$0xff]
        %v10421 = vld [vmem:[#allocation24 + $0x20] sm:$0xff]
        %v10422 = vld [vmem:[#allocation24 + $0x28] sm:$0xff]
        %v10423 = vld [vmem:[#allocation24 + $0x30] sm:$0xff]
        %v10424 = vld [vmem:[#allocation24 + $0x38] sm:$0xff]
        %v10425 = vld [vmem:[#allocation24 + $0x40] sm:$0xff]
        %v10426 = vld [vmem:[#allocation24 + $0x48] sm:$0xff]
        %v10427 = vld [vmem:[#allocation24 + $0x50] sm:$0xff]
        %v10428 = vld [vmem:[#allocation24 + $0x58] sm:$0xff]
        %v10429 = vld [vmem:[#allocation24 + $0x60] sm:$0xff]
        %v10430 = vld [vmem:[#allocation24 + $0x68] sm:$0xff]
        %v10431 = vld [vmem:[#allocation24 + $0x70] sm:$0xff]
        %v10432 = vld [vmem:[#allocation24 + $0x78] sm:$0xff]
        %v10433 = vld [vmem:[#allocation24 + $0x80] sm:$0xff]
        %v10434 = vld [vmem:[#allocation24 + $0x88] sm:$0xff]
        %v10435 = vld [vmem:[#allocation24 + $0x90] sm:$0xff]
        %v10436 = vld [vmem:[#allocation24 + $0x98] sm:$0xff]
        %v10437 = vld [vmem:[#allocation24 + $0xa0] sm:$0xff]
        %v10438 = vld [vmem:[#allocation24 + $0xa8] sm:$0xff]
        %v10439 = vld [vmem:[#allocation24 + $0xb0] sm:$0xff]
        %v10440 = vld [vmem:[#allocation24 + $0xb8] sm:$0xff]
        %v10441 = vld [vmem:[#allocation24 + $0xc0] sm:$0xff]
        %v10442 = vld [vmem:[#allocation24 + $0xc8] sm:$0xff]
        %v10443 = vld [vmem:[#allocation24 + $0xd0] sm:$0xff]
        %v10444 = vld [vmem:[#allocation24 + $0xd8] sm:$0xff]
        %v10445 = vld [vmem:[#allocation24 + $0xe0] sm:$0xff]
        %v10446 = vld [vmem:[#allocation24 + $0xe8] sm:$0xff]
        %v10447 = vld [vmem:[#allocation24 + $0xf0] sm:$0xff]
        %v10448 = vld [vmem:[#allocation24 + $0xf8] sm:$0xff]
        %v10449 = vld [vmem:[#allocation24 + $0x100] sm:$0xff]
        %v10450 = vld [vmem:[#allocation24 + $0x108] sm:$0xff]
        %v10451 = vld [vmem:[#allocation24 + $0x110] sm:$0xff]
        %v10452 = vld [vmem:[#allocation24 + $0x118] sm:$0xff]
        %v10453 = vld [vmem:[#allocation24 + $0x120] sm:$0xff]
        %v10454 = vld [vmem:[#allocation24 + $0x128] sm:$0xff]
        %v10455 = vld [vmem:[#allocation24 + $0x130] sm:$0xff]
        %v10456 = vld [vmem:[#allocation24 + $0x138] sm:$0xff]
        %v10457 = vld [vmem:[#allocation24 + $0x140] sm:$0xff]
        %v10458 = vld [vmem:[#allocation24 + $0x148] sm:$0xff]
        %v10459 = vld [vmem:[#allocation24 + $0x150] sm:$0xff]
        %v10460 = vld [vmem:[#allocation24 + $0x158] sm:$0xff]
        %v10461 = vld [vmem:[#allocation24 + $0x160] sm:$0xff]
        %v10462 = vld [vmem:[#allocation24 + $0x168] sm:$0xff]
        %v10463 = vld [vmem:[#allocation24 + $0x170] sm:$0xff]
        %v10464 = vld [vmem:[#allocation24 + $0x178] sm:$0xff]
        %v10465 = vld [vmem:[#allocation24 + $0x180] sm:$0xff]
        %v10466 = vld [vmem:[#allocation24 + $0x188] sm:$0xff]
        %v10467 = vld [vmem:[#allocation24 + $0x190] sm:$0xff]
        %v10468 = vld [vmem:[#allocation24 + $0x198] sm:$0xff]
        %v10469 = vld [vmem:[#allocation24 + $0x1a0] sm:$0xff]
        %v10470 = vld [vmem:[#allocation24 + $0x1a8] sm:$0xff]
        %v10471 = vld [vmem:[#allocation24 + $0x1b0] sm:$0xff]
        %v10472 = vld [vmem:[#allocation24 + $0x1b8] sm:$0xff]
        %v10473 = vld [vmem:[#allocation24 + $0x1c0] sm:$0xff]
        %v10474 = vld [vmem:[#allocation24 + $0x1c8] sm:$0xff]
        %v10475 = vld [vmem:[#allocation24 + $0x1d0] sm:$0xff]
        %v10476 = vld [vmem:[#allocation24 + $0x1d8] sm:$0xff]
        %v10477 = vld [vmem:[#allocation24 + $0x1e0] sm:$0xff]
        %v10478 = vld [vmem:[#allocation24 + $0x1e8] sm:$0xff]
        %v10479 = vld [vmem:[#allocation24 + $0x1f0] sm:$0xff]
        %v10480 = vld [vmem:[#allocation24 + $0x1f8] sm:$0xff]
        %v10481 = vld [vmem:[#allocation24 + $0x200] sm:$0xff]
        %v10482 = vld [vmem:[#allocation24 + $0x208] sm:$0xff]
        %v10483 = vld [vmem:[#allocation24 + $0x210] sm:$0xff]
        %v10484 = vld [vmem:[#allocation24 + $0x218] sm:$0xff]
        %v10485 = vld [vmem:[#allocation24 + $0x220] sm:$0xff]
        %v10486 = vld [vmem:[#allocation24 + $0x228] sm:$0xff]
        %v10487 = vld [vmem:[#allocation24 + $0x230] sm:$0xff]
        %v10488 = vld [vmem:[#allocation24 + $0x238] sm:$0xff]
        %v10489 = vld [vmem:[#allocation24 + $0x240] sm:$0xff]
        %v10490 = vld [vmem:[#allocation24 + $0x248] sm:$0xff]
        %v10491 = vld [vmem:[#allocation24 + $0x250] sm:$0xff]
        %v10492 = vld [vmem:[#allocation24 + $0x258] sm:$0xff]
        %v10493 = vld [vmem:[#allocation24 + $0x260] sm:$0xff]
        %v10494 = vld [vmem:[#allocation24 + $0x268] sm:$0xff]
        %v10495 = vld [vmem:[#allocation24 + $0x270] sm:$0xff]
        %v10496 = vld [vmem:[#allocation24 + $0x278] sm:$0xff]
        %v10497 = vld [vmem:[#allocation24 + $0x280] sm:$0xff]
        %v10498 = vld [vmem:[#allocation24 + $0x288] sm:$0xff]
        %v10499 = vld [vmem:[#allocation24 + $0x290] sm:$0xff]
        %v10500 = vld [vmem:[#allocation24 + $0x298] sm:$0xff]
        %v10501 = vld [vmem:[#allocation24 + $0x2a0] sm:$0xff]
        %v10502 = vld [vmem:[#allocation24 + $0x2a8] sm:$0xff]
        %v10503 = vld [vmem:[#allocation24 + $0x2b0] sm:$0xff]
        %v10504 = vld [vmem:[#allocation24 + $0x2b8] sm:$0xff]
        %v10505 = vld [vmem:[#allocation24 + $0x2c0] sm:$0xff]
        %v10506 = vld [vmem:[#allocation24 + $0x2c8] sm:$0xff]
        %v10507 = vld [vmem:[#allocation24 + $0x2d0] sm:$0xff]
        %v10508 = vld [vmem:[#allocation24 + $0x2d8] sm:$0xff]
        %v10509 = vld [vmem:[#allocation24 + $0x2e0] sm:$0xff]
        %v10510 = vld [vmem:[#allocation24 + $0x2e8] sm:$0xff]
        %v10511 = vld [vmem:[#allocation24 + $0x2f0] sm:$0xff]
        %v10512 = vld [vmem:[#allocation24 + $0x2f8] sm:$0xff]
        %v10513 = vld [vmem:[#allocation24 + $0x300] sm:$0xff]
        %v10514 = vld [vmem:[#allocation24 + $0x308] sm:$0xff]
        %v10515 = vld [vmem:[#allocation24 + $0x310] sm:$0xff]
        %v10516 = vld [vmem:[#allocation24 + $0x318] sm:$0xff]
        %v10517 = vld [vmem:[#allocation24 + $0x320] sm:$0xff]
        %v10518 = vld [vmem:[#allocation24 + $0x328] sm:$0xff]
        %v10519 = vld [vmem:[#allocation24 + $0x330] sm:$0xff]
        %v10520 = vld [vmem:[#allocation24 + $0x338] sm:$0xff]
        %v10521 = vld [vmem:[#allocation24 + $0x340] sm:$0xff]
        %v10522 = vld [vmem:[#allocation24 + $0x348] sm:$0xff]
        %v10523 = vld [vmem:[#allocation24 + $0x350] sm:$0xff]
        %v10524 = vld [vmem:[#allocation24 + $0x358] sm:$0xff]
        %v10525 = vld [vmem:[#allocation24 + $0x360] sm:$0xff]
        %v10526 = vld [vmem:[#allocation24 + $0x368] sm:$0xff]
        %v10527 = vld [vmem:[#allocation24 + $0x370] sm:$0xff]
        %v10528 = vld [vmem:[#allocation24 + $0x378] sm:$0xff]
        %v10529 = vld [vmem:[#allocation24 + $0x380] sm:$0xff]
        %v10530 = vld [vmem:[#allocation24 + $0x388] sm:$0xff]
        %v10531 = vld [vmem:[#allocation24 + $0x390] sm:$0xff]
        %v10532 = vld [vmem:[#allocation24 + $0x398] sm:$0xff]
        %v10533 = vld [vmem:[#allocation24 + $0x3a0] sm:$0xff]
        %v10534 = vld [vmem:[#allocation24 + $0x3a8] sm:$0xff]
        %v10535 = vld [vmem:[#allocation24 + $0x3b0] sm:$0xff]
        %v10536 = vld [vmem:[#allocation24 + $0x3b8] sm:$0xff]
        %v10537 = vld [vmem:[#allocation24 + $0x3c0] sm:$0xff]
        %v10538 = vld [vmem:[#allocation24 + $0x3c8] sm:$0xff]
        %v10539 = vld [vmem:[#allocation24 + $0x3d0] sm:$0xff]
        %v10540 = vld [vmem:[#allocation24 + $0x3d8] sm:$0xff]
        %v10541 = vld [vmem:[#allocation24 + $0x3e0] sm:$0xff]
        %v10542 = vld [vmem:[#allocation24 + $0x3e8] sm:$0xff]
        %v10543 = vld [vmem:[#allocation24 + $0x3f0] sm:$0xff]
        %v10544 = vld [vmem:[#allocation24 + $0x3f8] sm:$0xff]
        %v10545 = vld [vmem:[#allocation24 + $0x400] sm:$0xff]
        %v10546 = vld [vmem:[#allocation24 + $0x408] sm:$0xff]
        %v10547 = vld [vmem:[#allocation24 + $0x410] sm:$0xff]
        %v10548 = vld [vmem:[#allocation24 + $0x418] sm:$0xff]
        %v10549 = vld [vmem:[#allocation24 + $0x420] sm:$0xff]
        %v10550 = vld [vmem:[#allocation24 + $0x428] sm:$0xff]
        %v10551 = vld [vmem:[#allocation24 + $0x430] sm:$0xff]
        %v10552 = vld [vmem:[#allocation24 + $0x438] sm:$0xff]
        %v10553 = vld [vmem:[#allocation24 + $0x440] sm:$0xff]
        %v10554 = vld [vmem:[#allocation24 + $0x448] sm:$0xff]
        %v10555 = vld [vmem:[#allocation24 + $0x450] sm:$0xff]
        %v10556 = vld [vmem:[#allocation24 + $0x458] sm:$0xff]
        %v10557 = vld [vmem:[#allocation24 + $0x460] sm:$0xff]
        %v10558 = vld [vmem:[#allocation24 + $0x468] sm:$0xff]
        %v10559 = vld [vmem:[#allocation24 + $0x470] sm:$0xff]
        %v10560 = vld [vmem:[#allocation24 + $0x478] sm:$0xff]
        %v10561 = vld [vmem:[#allocation24 + $0x480] sm:$0xff]
        %v10562 = vld [vmem:[#allocation24 + $0x488] sm:$0xff]
        %v10563 = vld [vmem:[#allocation24 + $0x490] sm:$0xff]
        %v10564 = vld [vmem:[#allocation24 + $0x498] sm:$0xff]
        %v10565 = vld [vmem:[#allocation24 + $0x4a0] sm:$0xff]
        %v10566 = vld [vmem:[#allocation24 + $0x4a8] sm:$0xff]
        %v10567 = vld [vmem:[#allocation24 + $0x4b0] sm:$0xff]
        %v10568 = vld [vmem:[#allocation24 + $0x4b8] sm:$0xff]
        %v10569 = vld [vmem:[#allocation24 + $0x4c0] sm:$0xff]
        %v10570 = vld [vmem:[#allocation24 + $0x4c8] sm:$0xff]
        %v10571 = vld [vmem:[#allocation24 + $0x4d0] sm:$0xff]
        %v10572 = vld [vmem:[#allocation24 + $0x4d8] sm:$0xff]
        %v10573 = vld [vmem:[#allocation24 + $0x4e0] sm:$0xff]
        %v10574 = vld [vmem:[#allocation24 + $0x4e8] sm:$0xff]
        %v10575 = vld [vmem:[#allocation24 + $0x4f0] sm:$0xff]
        %v10576 = vld [vmem:[#allocation24 + $0x4f8] sm:$0xff]
        %v10577 = vld [vmem:[#allocation24 + $0x500] sm:$0xff]
        %v10578 = vld [vmem:[#allocation24 + $0x508] sm:$0xff]
        %v10579 = vld [vmem:[#allocation24 + $0x510] sm:$0xff]
        %v10580 = vld [vmem:[#allocation24 + $0x518] sm:$0xff]
        %v10581 = vld [vmem:[#allocation24 + $0x520] sm:$0xff]
        %v10582 = vld [vmem:[#allocation24 + $0x528] sm:$0xff]
        %v10583 = vld [vmem:[#allocation24 + $0x530] sm:$0xff]
        %v10584 = vld [vmem:[#allocation24 + $0x538] sm:$0xff]
        %v10585 = vld [vmem:[#allocation24 + $0x540] sm:$0xff]
        %v10586 = vld [vmem:[#allocation24 + $0x548] sm:$0xff]
        %v10587 = vld [vmem:[#allocation24 + $0x550] sm:$0xff]
        %v10588 = vld [vmem:[#allocation24 + $0x558] sm:$0xff]
        %v10589 = vld [vmem:[#allocation24 + $0x560] sm:$0xff]
        %v10590 = vld [vmem:[#allocation24 + $0x568] sm:$0xff]
        %v10591 = vld [vmem:[#allocation24 + $0x570] sm:$0xff]
        %v10592 = vld [vmem:[#allocation24 + $0x578] sm:$0xff]
        %v10593 = vld [vmem:[#allocation24 + $0x580] sm:$0xff]
        %v10594 = vld [vmem:[#allocation24 + $0x588] sm:$0xff]
        %v10595 = vld [vmem:[#allocation24 + $0x590] sm:$0xff]
        %v10596 = vld [vmem:[#allocation24 + $0x598] sm:$0xff]
        %v10597 = vld [vmem:[#allocation24 + $0x5a0] sm:$0xff]
        %v10598 = vld [vmem:[#allocation24 + $0x5a8] sm:$0xff]
        %v10599 = vld [vmem:[#allocation24 + $0x5b0] sm:$0xff]
        %v10600 = vld [vmem:[#allocation24 + $0x5b8] sm:$0xff]
        %v10601 = vld [vmem:[#allocation24 + $0x5c0] sm:$0xff]
        %v10602 = vld [vmem:[#allocation24 + $0x5c8] sm:$0xff]
        %v10603 = vld [vmem:[#allocation24 + $0x5d0] sm:$0xff]
        %v10604 = vld [vmem:[#allocation24 + $0x5d8] sm:$0xff]
        %v10605 = vld [vmem:[#allocation24 + $0x5e0] sm:$0xff]
        %v10606 = vld [vmem:[#allocation24 + $0x5e8] sm:$0xff]
        %v10607 = vld [vmem:[#allocation24 + $0x5f0] sm:$0xff]
        %v10608 = vld [vmem:[#allocation24 + $0x5f8] sm:$0xff]
        %v10609 = vld [vmem:[#allocation24 + $0x600] sm:$0xff]
        %v10610 = vld [vmem:[#allocation24 + $0x608] sm:$0xff]
        %v10611 = vld [vmem:[#allocation24 + $0x610] sm:$0xff]
        %v10612 = vld [vmem:[#allocation24 + $0x618] sm:$0xff]
        %v10613 = vld [vmem:[#allocation24 + $0x620] sm:$0xff]
        %v10614 = vld [vmem:[#allocation24 + $0x628] sm:$0xff]
        %v10615 = vld [vmem:[#allocation24 + $0x630] sm:$0xff]
        %v10616 = vld [vmem:[#allocation24 + $0x638] sm:$0xff]
        %v10617 = vld [vmem:[#allocation24 + $0x640] sm:$0xff]
        %v10618 = vld [vmem:[#allocation24 + $0x648] sm:$0xff]
        %v10619 = vld [vmem:[#allocation24 + $0x650] sm:$0xff]
        %v10620 = vld [vmem:[#allocation24 + $0x658] sm:$0xff]
        %v10621 = vld [vmem:[#allocation24 + $0x660] sm:$0xff]
        %v10622 = vld [vmem:[#allocation24 + $0x668] sm:$0xff]
        %v10623 = vld [vmem:[#allocation24 + $0x670] sm:$0xff]
        %v10624 = vld [vmem:[#allocation24 + $0x678] sm:$0xff]
        %v10625 = vld [vmem:[#allocation24 + $0x680] sm:$0xff]
        %v10626 = vld [vmem:[#allocation24 + $0x688] sm:$0xff]
        %v10627 = vld [vmem:[#allocation24 + $0x690] sm:$0xff]
        %v10628 = vld [vmem:[#allocation24 + $0x698] sm:$0xff]
        %v10629 = vld [vmem:[#allocation24 + $0x6a0] sm:$0xff]
        %v10630 = vld [vmem:[#allocation24 + $0x6a8] sm:$0xff]
        %v10631 = vld [vmem:[#allocation24 + $0x6b0] sm:$0xff]
        %v10632 = vld [vmem:[#allocation24 + $0x6b8] sm:$0xff]
        %v10633 = vld [vmem:[#allocation24 + $0x6c0] sm:$0xff]
        %v10634 = vld [vmem:[#allocation24 + $0x6c8] sm:$0xff]
        %v10635 = vld [vmem:[#allocation24 + $0x6d0] sm:$0xff]
        %v10636 = vld [vmem:[#allocation24 + $0x6d8] sm:$0xff]
        %v10637 = vld [vmem:[#allocation24 + $0x6e0] sm:$0xff]
        %v10638 = vld [vmem:[#allocation24 + $0x6e8] sm:$0xff]
        %v10639 = vld [vmem:[#allocation24 + $0x6f0] sm:$0xff]
        %v10640 = vld [vmem:[#allocation24 + $0x6f8] sm:$0xff]
        %v10641 = vld [vmem:[#allocation24 + $0x700] sm:$0xff]
        %v10642 = vld [vmem:[#allocation24 + $0x708] sm:$0xff]
        %v10643 = vld [vmem:[#allocation24 + $0x710] sm:$0xff]
        %v10644 = vld [vmem:[#allocation24 + $0x718] sm:$0xff]
        %v10645 = vld [vmem:[#allocation24 + $0x720] sm:$0xff]
        %v10646 = vld [vmem:[#allocation24 + $0x728] sm:$0xff]
        %v10647 = vld [vmem:[#allocation24 + $0x730] sm:$0xff]
        %v10648 = vld [vmem:[#allocation24 + $0x738] sm:$0xff]
        %v10649 = vld [vmem:[#allocation24 + $0x740] sm:$0xff]
        %v10650 = vld [vmem:[#allocation24 + $0x748] sm:$0xff]
        %v10651 = vld [vmem:[#allocation24 + $0x750] sm:$0xff]
        %v10652 = vld [vmem:[#allocation24 + $0x758] sm:$0xff]
        %v10653 = vld [vmem:[#allocation24 + $0x760] sm:$0xff]
        %v10654 = vld [vmem:[#allocation24 + $0x768] sm:$0xff]
        %v10655 = vld [vmem:[#allocation24 + $0x770] sm:$0xff]
        %v10656 = vld [vmem:[#allocation24 + $0x778] sm:$0xff]
        %v10657 = vld [vmem:[#allocation24 + $0x780] sm:$0xff]
        %v10658 = vld [vmem:[#allocation24 + $0x788] sm:$0xff]
        %v10659 = vld [vmem:[#allocation24 + $0x790] sm:$0xff]
        %v10660 = vld [vmem:[#allocation24 + $0x798] sm:$0xff]
        %v10661 = vld [vmem:[#allocation24 + $0x7a0] sm:$0xff]
        %v10662 = vld [vmem:[#allocation24 + $0x7a8] sm:$0xff]
        %v10663 = vld [vmem:[#allocation24 + $0x7b0] sm:$0xff]
        %v10664 = vld [vmem:[#allocation24 + $0x7b8] sm:$0xff]
        %v10665 = vld [vmem:[#allocation24 + $0x7c0] sm:$0xff]
        %v10666 = vld [vmem:[#allocation24 + $0x7c8] sm:$0xff]
        %v10667 = vld [vmem:[#allocation24 + $0x7d0] sm:$0xff]
        %v10668 = vld [vmem:[#allocation24 + $0x7d8] sm:$0xff]
        %v10669 = vld [vmem:[#allocation24 + $0x7e0] sm:$0xff]
        %v10670 = vld [vmem:[#allocation24 + $0x7e8] sm:$0xff]
        %v10671 = vld [vmem:[#allocation24 + $0x7f0] sm:$0xff]
        %v10672 = vld [vmem:[#allocation24 + $0x7f8] sm:$0xff]
        %v10673 = vld [vmem:[#allocation25] sm:$0xf]
        %v10675 = vperm.slane %v10673, 0
        %v10676 = vperm.slane %v10673, 1
        %v10677 = vperm.slane %v10673, 2
        %v10678 = vperm.slane %v10673, 3
        %v10698 = vrot.slane %v10402, 6
        %v10699 = vrot.slane %v10407, 6
        %v10700 = vsel %vm3846, %v10698, %v10699
        %v10701 = vrot.slane %v10403, 6
        %v10702 = vrot.slane %v10408, 6
        %v10703 = vsel %vm3846, %v10701, %v10702
        %v10704 = vrot.slane %v10404, 6
        %v10705 = vrot.slane %v10409, 6
        %v10706 = vsel %vm3846, %v10704, %v10705
        %v10707 = vrot.slane %v10405, 6
        %v10708 = vrot.slane %v10410, 6
        %v10709 = vsel %vm3846, %v10707, %v10708
        %v10710 = vrot.slane %v10406, 6
        %v10711 = vrot.slane %v10411, 6
        %v10712 = vsel %vm3846, %v10710, %v10711
        %v10713 = vrot.slane %v10412, 6
        %v10714 = vsel %vm3846, %v10699, %v10713
        %v10715 = vrot.slane %v10413, 6
        %v10716 = vsel %vm3846, %v10702, %v10715
        %v10717 = vrot.slane %v10414, 6
        %v10718 = vsel %vm3846, %v10705, %v10717
        %v10719 = vrot.slane %v10415, 6
        %v10720 = vsel %vm3846, %v10708, %v10719
        %v10721 = vrot.slane %v10416, 6
        %v10722 = vsel %vm3846, %v10711, %v10721
        %10723 = vrot.lane.b32.xlu0 %v10700, 64
        %v10724 = vpop.permute.xlu0 %10723
        %10725 = vrot.lane.b32.xlu0 %v10703, 64
        %v10726 = vpop.permute.xlu0 %10725
        %10727 = vrot.lane.b32.xlu0 %v10706, 64
        %v10728 = vpop.permute.xlu0 %10727
        %10729 = vrot.lane.b32.xlu0 %v10709, 64
        %v10730 = vpop.permute.xlu0 %10729
        %10731 = vrot.lane.b32.xlu0 %v10712, 64
        %v10732 = vpop.permute.xlu0 %10731
        %10733 = vrot.lane.b32.xlu0 %v10714, 64
        %v10734 = vpop.permute.xlu0 %10733
        %10735 = vrot.lane.b32.xlu0 %v10716, 64
        %v10736 = vpop.permute.xlu0 %10735
        %10737 = vrot.lane.b32.xlu0 %v10718, 64
        %v10738 = vpop.permute.xlu0 %10737
        %10739 = vrot.lane.b32.xlu0 %v10720, 64
        %v10740 = vpop.permute.xlu0 %10739
        %10741 = vrot.lane.b32.xlu0 %v10722, 64
        %v10742 = vpop.permute.xlu0 %10741
        %v10743 = vsel %vm863, %v10724, %v10726
        %v10744 = vsel %vm863, %v10726, %v10728
        %v10745 = vsel %vm863, %v10728, %v10730
        %v10746 = vsel %vm863, %v10730, %v10732
        %v10747 = vsel %vm863, %v10734, %v10736
        %v10748 = vsel %vm863, %v10736, %v10738
        %v10749 = vsel %vm863, %v10738, %v10740
        %v10750 = vsel %vm863, %v10740, %v10742
        %10759 = vmatpush.msra.mxu0 %v10477
        %10760 = vmatpush.msra.mxu0 %v10473
        %10761 = vmatpush.msra.mxu0 %v10469
        %10762 = vmatpush.msra.mxu0 %v10465
        %10763 = vmatpush.msra.mxu0 %v10461
        %10764 = vmatpush.msra.mxu0 %v10457
        %10765 = vmatpush.msra.mxu0 %v10453
        %10766 = vmatpush.msra.mxu0 %v10449
        %10767 = vmatpush.msra.mxu0 %v10445
        %10768 = vmatpush.msra.mxu0 %v10441
        %10769 = vmatpush.msra.mxu0 %v10437
        %10770 = vmatpush.msra.mxu0 %v10433
        %10771 = vmatpush.msra.mxu0 %v10429
        %10772 = vmatpush.msra.mxu0 %v10425
        %10773 = vmatpush.msra.mxu0 %v10421
        %10774 = vmatpush.msra.mxu0 %v10417
        %10775 = vmatmul.f32.gmra.mxu0 %v10743
        %v10776 = vpop.f32.mrf.mxu0
        %v10777 = vadd.f32 %v10675, %v10776
        %10778 = vmatmul.f32.gmra.mxu0 %v10747
        %v10779 = vpop.f32.mrf.mxu0
        %v10780 = vadd.f32 %v10675, %v10779
        %10781 = vdwg.mxu0
        %10782 = vmatpush.msra.mxu0 %v10541
        %10783 = vmatpush.msra.mxu0 %v10537
        %10784 = vmatpush.msra.mxu0 %v10533
        %10785 = vmatpush.msra.mxu0 %v10529
        %10786 = vmatpush.msra.mxu0 %v10525
        %10787 = vmatpush.msra.mxu0 %v10521
        %10788 = vmatpush.msra.mxu0 %v10517
        %10789 = vmatpush.msra.mxu0 %v10513
        %10790 = vmatpush.msra.mxu0 %v10509
        %10791 = vmatpush.msra.mxu0 %v10505
        %10792 = vmatpush.msra.mxu0 %v10501
        %10793 = vmatpush.msra.mxu0 %v10497
        %10794 = vmatpush.msra.mxu0 %v10493
        %10795 = vmatpush.msra.mxu0 %v10489
        %10796 = vmatpush.msra.mxu0 %v10485
        %10797 = vmatpush.msra.mxu0 %v10481
        %10798 = vmatmul.f32.gmra.mxu0 %v10744
        %v10799 = vpop.f32.mrf.mxu0
        %v10800 = vadd.f32 %v10777, %v10799
        %10801 = vmatmul.f32.gmra.mxu0 %v10748
        %v10802 = vpop.f32.mrf.mxu0
        %v10803 = vadd.f32 %v10780, %v10802
        %10804 = vdwg.mxu0
        %10805 = vmatpush.msra.mxu0 %v10605
        %10806 = vmatpush.msra.mxu0 %v10601
        %10807 = vmatpush.msra.mxu0 %v10597
        %10808 = vmatpush.msra.mxu0 %v10593
        %10809 = vmatpush.msra.mxu0 %v10589
        %10810 = vmatpush.msra.mxu0 %v10585
        %10811 = vmatpush.msra.mxu0 %v10581
        %10812 = vmatpush.msra.mxu0 %v10577
        %10813 = vmatpush.msra.mxu0 %v10573
        %10814 = vmatpush.msra.mxu0 %v10569
        %10815 = vmatpush.msra.mxu0 %v10565
        %10816 = vmatpush.msra.mxu0 %v10561
        %10817 = vmatpush.msra.mxu0 %v10557
        %10818 = vmatpush.msra.mxu0 %v10553
        %10819 = vmatpush.msra.mxu0 %v10549
        %10820 = vmatpush.msra.mxu0 %v10545
        %10821 = vmatmul.f32.gmra.mxu0 %v10745
        %v10822 = vpop.f32.mrf.mxu0
        %v10823 = vadd.f32 %v10800, %v10822
        %10824 = vmatmul.f32.gmra.mxu0 %v10749
        %v10825 = vpop.f32.mrf.mxu0
        %v10826 = vadd.f32 %v10803, %v10825
        %10827 = vdwg.mxu0
        %10828 = vmatpush.msra.mxu0 %v10669
        %10829 = vmatpush.msra.mxu0 %v10665
        %10830 = vmatpush.msra.mxu0 %v10661
        %10831 = vmatpush.msra.mxu0 %v10657
        %10832 = vmatpush.msra.mxu0 %v10653
        %10833 = vmatpush.msra.mxu0 %v10649
        %10834 = vmatpush.msra.mxu0 %v10645
        %10835 = vmatpush.msra.mxu0 %v10641
        %10836 = vmatpush.msra.mxu0 %v10637
        %10837 = vmatpush.msra.mxu0 %v10633
        %10838 = vmatpush.msra.mxu0 %v10629
        %10839 = vmatpush.msra.mxu0 %v10625
        %10840 = vmatpush.msra.mxu0 %v10621
        %10841 = vmatpush.msra.mxu0 %v10617
        %10842 = vmatpush.msra.mxu0 %v10613
        %10843 = vmatpush.msra.mxu0 %v10609
        %10844 = vmatmul.f32.gmra.mxu0 %v10746
        %v10845 = vpop.f32.mrf.mxu0
        %v10846 = vadd.f32 %v10823, %v10845
        %10847 = vmatmul.f32.gmra.mxu0 %v10750
        %v10848 = vpop.f32.mrf.mxu0
        %v10849 = vadd.f32 %v10826, %v10848
        %10850 = vdwg.mxu0
        %10851 = vmatpush.msra.mxu0 %v10478
        %10852 = vmatpush.msra.mxu0 %v10474
        %10853 = vmatpush.msra.mxu0 %v10470
        %10854 = vmatpush.msra.mxu0 %v10466
        %10855 = vmatpush.msra.mxu0 %v10462
        %10856 = vmatpush.msra.mxu0 %v10458
        %10857 = vmatpush.msra.mxu0 %v10454
        %10858 = vmatpush.msra.mxu0 %v10450
        %10859 = vmatpush.msra.mxu0 %v10446
        %10860 = vmatpush.msra.mxu0 %v10442
        %10861 = vmatpush.msra.mxu0 %v10438
        %10862 = vmatpush.msra.mxu0 %v10434
        %10863 = vmatpush.msra.mxu0 %v10430
        %10864 = vmatpush.msra.mxu0 %v10426
        %10865 = vmatpush.msra.mxu0 %v10422
        %10866 = vmatpush.msra.mxu0 %v10418
        %10867 = vmatmul.f32.gmra.mxu0 %v10743
        %v10868 = vpop.f32.mrf.mxu0
        %v10869 = vadd.f32 %v10676, %v10868
        %10870 = vmatmul.f32.gmra.mxu0 %v10747
        %v10871 = vpop.f32.mrf.mxu0
        %v10872 = vadd.f32 %v10676, %v10871
        %10873 = vdwg.mxu0
        %10874 = vmatpush.msra.mxu0 %v10542
        %10875 = vmatpush.msra.mxu0 %v10538
        %10876 = vmatpush.msra.mxu0 %v10534
        %10877 = vmatpush.msra.mxu0 %v10530
        %10878 = vmatpush.msra.mxu0 %v10526
        %10879 = vmatpush.msra.mxu0 %v10522
        %10880 = vmatpush.msra.mxu0 %v10518
        %10881 = vmatpush.msra.mxu0 %v10514
        %10882 = vmatpush.msra.mxu0 %v10510
        %10883 = vmatpush.msra.mxu0 %v10506
        %10884 = vmatpush.msra.mxu0 %v10502
        %10885 = vmatpush.msra.mxu0 %v10498
        %10886 = vmatpush.msra.mxu0 %v10494
        %10887 = vmatpush.msra.mxu0 %v10490
        %10888 = vmatpush.msra.mxu0 %v10486
        %10889 = vmatpush.msra.mxu0 %v10482
        %10890 = vmatmul.f32.gmra.mxu0 %v10744
        %v10891 = vpop.f32.mrf.mxu0
        %v10892 = vadd.f32 %v10869, %v10891
        %10893 = vmatmul.f32.gmra.mxu0 %v10748
        %v10894 = vpop.f32.mrf.mxu0
        %v10895 = vadd.f32 %v10872, %v10894
        %10896 = vdwg.mxu0
        %10897 = vmatpush.msra.mxu0 %v10606
        %10898 = vmatpush.msra.mxu0 %v10602
        %10899 = vmatpush.msra.mxu0 %v10598
        %10900 = vmatpush.msra.mxu0 %v10594
        %10901 = vmatpush.msra.mxu0 %v10590
        %10902 = vmatpush.msra.mxu0 %v10586
        %10903 = vmatpush.msra.mxu0 %v10582
        %10904 = vmatpush.msra.mxu0 %v10578
        %10905 = vmatpush.msra.mxu0 %v10574
        %10906 = vmatpush.msra.mxu0 %v10570
        %10907 = vmatpush.msra.mxu0 %v10566
        %10908 = vmatpush.msra.mxu0 %v10562
        %10909 = vmatpush.msra.mxu0 %v10558
        %10910 = vmatpush.msra.mxu0 %v10554
        %10911 = vmatpush.msra.mxu0 %v10550
        %10912 = vmatpush.msra.mxu0 %v10546
        %10913 = vmatmul.f32.gmra.mxu0 %v10745
        %v10914 = vpop.f32.mrf.mxu0
        %v10915 = vadd.f32 %v10892, %v10914
        %10916 = vmatmul.f32.gmra.mxu0 %v10749
        %v10917 = vpop.f32.mrf.mxu0
        %v10918 = vadd.f32 %v10895, %v10917
        %10919 = vdwg.mxu0
        %10920 = vmatpush.msra.mxu0 %v10670
        %10921 = vmatpush.msra.mxu0 %v10666
        %10922 = vmatpush.msra.mxu0 %v10662
        %10923 = vmatpush.msra.mxu0 %v10658
        %10924 = vmatpush.msra.mxu0 %v10654
        %10925 = vmatpush.msra.mxu0 %v10650
        %10926 = vmatpush.msra.mxu0 %v10646
        %10927 = vmatpush.msra.mxu0 %v10642
        %10928 = vmatpush.msra.mxu0 %v10638
        %10929 = vmatpush.msra.mxu0 %v10634
        %10930 = vmatpush.msra.mxu0 %v10630
        %10931 = vmatpush.msra.mxu0 %v10626
        %10932 = vmatpush.msra.mxu0 %v10622
        %10933 = vmatpush.msra.mxu0 %v10618
        %10934 = vmatpush.msra.mxu0 %v10614
        %10935 = vmatpush.msra.mxu0 %v10610
        %10936 = vmatmul.f32.gmra.mxu0 %v10746
        %v10937 = vpop.f32.mrf.mxu0
        %v10938 = vadd.f32 %v10915, %v10937
        %10939 = vmatmul.f32.gmra.mxu0 %v10750
        %v10940 = vpop.f32.mrf.mxu0
        %v10941 = vadd.f32 %v10918, %v10940
        %10942 = vdwg.mxu0
        %10943 = vmatpush.msra.mxu0 %v10479
        %10944 = vmatpush.msra.mxu0 %v10475
        %10945 = vmatpush.msra.mxu0 %v10471
        %10946 = vmatpush.msra.mxu0 %v10467
        %10947 = vmatpush.msra.mxu0 %v10463
        %10948 = vmatpush.msra.mxu0 %v10459
        %10949 = vmatpush.msra.mxu0 %v10455
        %10950 = vmatpush.msra.mxu0 %v10451
        %10951 = vmatpush.msra.mxu0 %v10447
        %10952 = vmatpush.msra.mxu0 %v10443
        %10953 = vmatpush.msra.mxu0 %v10439
        %10954 = vmatpush.msra.mxu0 %v10435
        %10955 = vmatpush.msra.mxu0 %v10431
        %10956 = vmatpush.msra.mxu0 %v10427
        %10957 = vmatpush.msra.mxu0 %v10423
        %10958 = vmatpush.msra.mxu0 %v10419
        %10959 = vmatmul.f32.gmra.mxu0 %v10743
        %v10960 = vpop.f32.mrf.mxu0
        %v10961 = vadd.f32 %v10677, %v10960
        %10962 = vmatmul.f32.gmra.mxu0 %v10747
        %v10963 = vpop.f32.mrf.mxu0
        %v10964 = vadd.f32 %v10677, %v10963
        %10965 = vdwg.mxu0
        %10966 = vmatpush.msra.mxu0 %v10543
        %10967 = vmatpush.msra.mxu0 %v10539
        %10968 = vmatpush.msra.mxu0 %v10535
        %10969 = vmatpush.msra.mxu0 %v10531
        %10970 = vmatpush.msra.mxu0 %v10527
        %10971 = vmatpush.msra.mxu0 %v10523
        %10972 = vmatpush.msra.mxu0 %v10519
        %10973 = vmatpush.msra.mxu0 %v10515
        %10974 = vmatpush.msra.mxu0 %v10511
        %10975 = vmatpush.msra.mxu0 %v10507
        %10976 = vmatpush.msra.mxu0 %v10503
        %10977 = vmatpush.msra.mxu0 %v10499
        %10978 = vmatpush.msra.mxu0 %v10495
        %10979 = vmatpush.msra.mxu0 %v10491
        %10980 = vmatpush.msra.mxu0 %v10487
        %10981 = vmatpush.msra.mxu0 %v10483
        %10982 = vmatmul.f32.gmra.mxu0 %v10744
        %v10983 = vpop.f32.mrf.mxu0
        %v10984 = vadd.f32 %v10961, %v10983
        %10985 = vmatmul.f32.gmra.mxu0 %v10748
        %v10986 = vpop.f32.mrf.mxu0
        %v10987 = vadd.f32 %v10964, %v10986
        %10988 = vdwg.mxu0
        %10989 = vmatpush.msra.mxu0 %v10607
        %10990 = vmatpush.msra.mxu0 %v10603
        %10991 = vmatpush.msra.mxu0 %v10599
        %10992 = vmatpush.msra.mxu0 %v10595
        %10993 = vmatpush.msra.mxu0 %v10591
        %10994 = vmatpush.msra.mxu0 %v10587
        %10995 = vmatpush.msra.mxu0 %v10583
        %10996 = vmatpush.msra.mxu0 %v10579
        %10997 = vmatpush.msra.mxu0 %v10575
        %10998 = vmatpush.msra.mxu0 %v10571
        %10999 = vmatpush.msra.mxu0 %v10567
        %11000 = vmatpush.msra.mxu0 %v10563
        %11001 = vmatpush.msra.mxu0 %v10559
        %11002 = vmatpush.msra.mxu0 %v10555
        %11003 = vmatpush.msra.mxu0 %v10551
        %11004 = vmatpush.msra.mxu0 %v10547
        %11005 = vmatmul.f32.gmra.mxu0 %v10745
        %v11006 = vpop.f32.mrf.mxu0
        %v11007 = vadd.f32 %v10984, %v11006
        %11008 = vmatmul.f32.gmra.mxu0 %v10749
        %v11009 = vpop.f32.mrf.mxu0
        %v11010 = vadd.f32 %v10987, %v11009
        %11011 = vdwg.mxu0
        %11012 = vmatpush.msra.mxu0 %v10671
        %11013 = vmatpush.msra.mxu0 %v10667
        %11014 = vmatpush.msra.mxu0 %v10663
        %11015 = vmatpush.msra.mxu0 %v10659
        %11016 = vmatpush.msra.mxu0 %v10655
        %11017 = vmatpush.msra.mxu0 %v10651
        %11018 = vmatpush.msra.mxu0 %v10647
        %11019 = vmatpush.msra.mxu0 %v10643
        %11020 = vmatpush.msra.mxu0 %v10639
        %11021 = vmatpush.msra.mxu0 %v10635
        %11022 = vmatpush.msra.mxu0 %v10631
        %11023 = vmatpush.msra.mxu0 %v10627
        %11024 = vmatpush.msra.mxu0 %v10623
        %11025 = vmatpush.msra.mxu0 %v10619
        %11026 = vmatpush.msra.mxu0 %v10615
        %11027 = vmatpush.msra.mxu0 %v10611
        %11028 = vmatmul.f32.gmra.mxu0 %v10746
        %v11029 = vpop.f32.mrf.mxu0
        %v11030 = vadd.f32 %v11007, %v11029
        %11031 = vmatmul.f32.gmra.mxu0 %v10750
        %v11032 = vpop.f32.mrf.mxu0
        %v11033 = vadd.f32 %v11010, %v11032
        %11034 = vdwg.mxu0
        %11035 = vmatpush.msra.mxu0 %v10480
        %11036 = vmatpush.msra.mxu0 %v10476
        %11037 = vmatpush.msra.mxu0 %v10472
        %11038 = vmatpush.msra.mxu0 %v10468
        %11039 = vmatpush.msra.mxu0 %v10464
        %11040 = vmatpush.msra.mxu0 %v10460
        %11041 = vmatpush.msra.mxu0 %v10456
        %11042 = vmatpush.msra.mxu0 %v10452
        %11043 = vmatpush.msra.mxu0 %v10448
        %11044 = vmatpush.msra.mxu0 %v10444
        %11045 = vmatpush.msra.mxu0 %v10440
        %11046 = vmatpush.msra.mxu0 %v10436
        %11047 = vmatpush.msra.mxu0 %v10432
        %11048 = vmatpush.msra.mxu0 %v10428
        %11049 = vmatpush.msra.mxu0 %v10424
        %11050 = vmatpush.msra.mxu0 %v10420
        %11051 = vmatmul.f32.gmra.mxu0 %v10743
        %v11052 = vpop.f32.mrf.mxu0
        %v11053 = vadd.f32 %v10678, %v11052
        %11054 = vmatmul.f32.gmra.mxu0 %v10747
        %v11055 = vpop.f32.mrf.mxu0
        %v11056 = vadd.f32 %v10678, %v11055
        %11057 = vdwg.mxu0
        %11058 = vmatpush.msra.mxu0 %v10544
        %11059 = vmatpush.msra.mxu0 %v10540
        %11060 = vmatpush.msra.mxu0 %v10536
        %11061 = vmatpush.msra.mxu0 %v10532
        %11062 = vmatpush.msra.mxu0 %v10528
        %11063 = vmatpush.msra.mxu0 %v10524
        %11064 = vmatpush.msra.mxu0 %v10520
        %11065 = vmatpush.msra.mxu0 %v10516
        %11066 = vmatpush.msra.mxu0 %v10512
        %11067 = vmatpush.msra.mxu0 %v10508
        %11068 = vmatpush.msra.mxu0 %v10504
        %11069 = vmatpush.msra.mxu0 %v10500
        %11070 = vmatpush.msra.mxu0 %v10496
        %11071 = vmatpush.msra.mxu0 %v10492
        %11072 = vmatpush.msra.mxu0 %v10488
        %11073 = vmatpush.msra.mxu0 %v10484
        %11074 = vmatmul.f32.gmra.mxu0 %v10744
        %v11075 = vpop.f32.mrf.mxu0
        %v11076 = vadd.f32 %v11053, %v11075
        %11077 = vmatmul.f32.gmra.mxu0 %v10748
        %v11078 = vpop.f32.mrf.mxu0
        %v11079 = vadd.f32 %v11056, %v11078
        %11080 = vdwg.mxu0
        %11081 = vmatpush.msra.mxu0 %v10608
        %11082 = vmatpush.msra.mxu0 %v10604
        %11083 = vmatpush.msra.mxu0 %v10600
        %11084 = vmatpush.msra.mxu0 %v10596
        %11085 = vmatpush.msra.mxu0 %v10592
        %11086 = vmatpush.msra.mxu0 %v10588
        %11087 = vmatpush.msra.mxu0 %v10584
        %11088 = vmatpush.msra.mxu0 %v10580
        %11089 = vmatpush.msra.mxu0 %v10576
        %11090 = vmatpush.msra.mxu0 %v10572
        %11091 = vmatpush.msra.mxu0 %v10568
        %11092 = vmatpush.msra.mxu0 %v10564
        %11093 = vmatpush.msra.mxu0 %v10560
        %11094 = vmatpush.msra.mxu0 %v10556
        %11095 = vmatpush.msra.mxu0 %v10552
        %11096 = vmatpush.msra.mxu0 %v10548
        %11097 = vmatmul.f32.gmra.mxu0 %v10745
        %v11098 = vpop.f32.mrf.mxu0
        %v11099 = vadd.f32 %v11076, %v11098
        %11100 = vmatmul.f32.gmra.mxu0 %v10749
        %v11101 = vpop.f32.mrf.mxu0
        %v11102 = vadd.f32 %v11079, %v11101
        %11103 = vdwg.mxu0
        %11104 = vmatpush.msra.mxu0 %v10672
        %11105 = vmatpush.msra.mxu0 %v10668
        %11106 = vmatpush.msra.mxu0 %v10664
        %11107 = vmatpush.msra.mxu0 %v10660
        %11108 = vmatpush.msra.mxu0 %v10656
        %11109 = vmatpush.msra.mxu0 %v10652
        %11110 = vmatpush.msra.mxu0 %v10648
        %11111 = vmatpush.msra.mxu0 %v10644
        %11112 = vmatpush.msra.mxu0 %v10640
        %11113 = vmatpush.msra.mxu0 %v10636
        %11114 = vmatpush.msra.mxu0 %v10632
        %11115 = vmatpush.msra.mxu0 %v10628
        %11116 = vmatpush.msra.mxu0 %v10624
        %11117 = vmatpush.msra.mxu0 %v10620
        %11118 = vmatpush.msra.mxu0 %v10616
        %11119 = vmatpush.msra.mxu0 %v10612
        %11120 = vmatmul.f32.gmra.mxu0 %v10746
        %v11121 = vpop.f32.mrf.mxu0
        %v11122 = vadd.f32 %v11099, %v11121
        %11123 = vmatmul.f32.gmra.mxu0 %v10750
        %v11124 = vpop.f32.mrf.mxu0
        %v11125 = vadd.f32 %v11102, %v11124
        %11126 = vdwg.mxu0
        %v11127 = vld [vmem:[%s653] sm:$0xff]
        %v11128 = vld [vmem:[%s653 + $0x8] sm:$0xff]
        %v11129 = vld [vmem:[%s653 + $0x10] sm:$0xff]
        %v11130 = vld [vmem:[%s653 + $0x18] sm:$0xff]
        %v11131 = vld [vmem:[%s653 + $0x20] sm:$0xff]
        %v11132 = vld [vmem:[%s653 + $0x28] sm:$0xff]
        %v11133 = vld [vmem:[%s653 + $0x30] sm:$0xff]
        %v11134 = vld [vmem:[%s653 + $0x38] sm:$0xff]
        %v11135 = vmul.f32 %v10846, %v11127
        %v11136 = vmul.f32 %v10938, %v11128
        %v11137 = vmul.f32 %v11030, %v11129
        %v11138 = vmul.f32 %v11122, %v11130
        %v11139 = vmul.f32 %v10849, %v11131
        %v11140 = vmul.f32 %v10941, %v11132
        %v11141 = vmul.f32 %v11033, %v11133
        %v11142 = vmul.f32 %v11125, %v11134
        %11143 = vst [vmem:[%s769] sm:$0xff] %v11135
        %11144 = vst [vmem:[%s769 + $0x8] sm:$0xff] %v11136
        %11145 = vst [vmem:[%s769 + $0x10] sm:$0xff] %v11137
        %11146 = vst [vmem:[%s769 + $0x18] sm:$0xff] %v11138
        %11147 = vst [vmem:[%s769 + $0x20] sm:$0xff] %v11139
        %11148 = vst [vmem:[%s769 + $0x28] sm:$0xff] %v11140
        %11149 = vst [vmem:[%s769 + $0x30] sm:$0xff] %v11141
        %11150 = vst [vmem:[%s769 + $0x38] sm:$0xff] %v11142
        %s11151 = sand.u32 %s411, 1
        %s11152 = scalar_lea.sflag [#allocation6], %s11151
        %s11153 = sand.u32 %s411, 1
        %s11154 = smul.addr %s11153, 64
        %s11155 = scalar_lea.vmem [#allocation27], %s11154
        // Predicated region
        $region145: #{tpu_custom_call.1} parent=87 // pred_check
          %p11156 = pneg %p421
        $region146: #{tpu_custom_call.1} parent=87 // pred_check_branch
          %11158 = sbr.rel (%p11156) target = $region148
        $region147: #{tpu_custom_call.1} parent=87 // pred_region
          %11160 = vsyncadd %s11152, 0
          %s11161 = smul.addr %s41, 8
          %s11162 = smul.addr %s11161, 8
          %s11163 = scalar_lea.hbm %s17, %s11162
          %s11164 = sshll.u32 %s11155, 4
          %s11165 = int_to_ptr.vmem [resolvable:$true] %s11164
          %s11166 = sshll.u32 %s11163, 4
          %s11167 = int_to_ptr.hbm [resolvable:$true] %s11166
          %11172 = dma.vmem_to_hbm [thread:$0]  %s11165, 1024, %s11167, %s11152, 512, 512, 32
        $region148: #{tpu_custom_call.1} parent=87 // pred_fallthru
          _
      $region88: #{tpu_custom_call.1} parent=5 // pred_fallthru
        _
      %p11173 = scmp.le.s32.totalorder 2, %s36
      // Predicated region
      $region149: #{tpu_custom_call.1} parent=5 // pred_check
        %p11174 = pneg %p11173
      $region150: #{tpu_custom_call.1} parent=5 // pred_check_branch
        %11176 = sbr.rel (%p11174) target = $region152
      $region151: #{tpu_custom_call.1} parent=5 // pred_region
        %s11177 = ssub.s32 %s36, 2
        // Predicated region
        $region153: #{tpu_custom_call.1} parent=151 // pred_check
          %p11178 = pneg %p427
        $region154: #{tpu_custom_call.1} parent=151 // pred_check_branch
          %11180 = sbr.rel (%p11178) target = $region156
        $region155: #{tpu_custom_call.1} parent=151 // pred_region
          %s11181 = sand.u32 %s412, 1
          %s11182 = scalar_lea.sflag [#allocation6], %s11181
          %s11183 = sand.u32 %s412, 1
          %s11184 = smul.addr %s11183, 64
          %s11185 = scalar_lea.vmem [#allocation27], %s11184
          %11187 = dma.done %s11182, 1024
        $region156: #{tpu_custom_call.1} parent=151 // pred_fallthru
          _
      $region152: #{tpu_custom_call.1} parent=5 // pred_fallthru
        _
    $region6: #{tpu_custom_call.1} parent=1 // loop_footer
      %s40 = sadd.s32 1, %s36
    $region7: #{tpu_custom_call.1} parent=1 // loop_footer_branch
      %35 = sbr.rel target = $region3
    $region8: #{tpu_custom_call.1} parent=1 // loop_exit
      _
    %11188 = vsyncpa [#allocation5], 1
    %s11189 = scalar_lea.sflag [#allocation5], 1
    %11190 = vsyncpa %s11189, 1
    %11191 = vsyncpa [#allocation8], 1
    %11192 = vsyncpa [#allocation11], 1
    %11193 = vsyncpa [#allocation14], 1
    %11194 = vsyncpa [#allocation17], 1
    %11195 = vsyncpa [#allocation20], 1
    %11196 = vsyncpa [#allocation23], 1
    %11197 = vsyncpa [#allocation26], 1
    %11198 = vsyncpa [#allocation6], 1
    %s11199 = scalar_lea.sflag [#allocation6], 1
    %11200 = vsyncpa %s11199, 1

</llo_original>
